<compile_context>
chip_gen: v7x
topology: tpu7x:2x2x1
jax: 0.10.0
libtpu: 0.0.40
codegen_flags: <defaults>
</compile_context>

<pallas_src>
import jax
import jax.numpy as jnp
from jax.experimental import pallas as pl
from jax.experimental.pallas import tpu as pltpu

# ---- model config (AutoformerTiny defaults) ----
INPUT_DIM = 15
IN_PAD = 16            # input features zero-padded to 16
NUM_CLASSES = 4
OUT_PAD = 128          # classifier output padded to a lane-dense 128
D_MODEL = 64
NUM_HEADS = 4
HEAD_DIM = D_MODEL // NUM_HEADS
DIM_FF = 128
NUM_LAYERS = 3
MOVING_AVG = 25        # SeriesDecomposition kernel size
LN_EPS = 1e-5          # nn.LayerNorm default
MAX_BATCH_BLOCK = 32   # batch rows per grid step (32*T rows feed the MXU per step)


def _layer_norm(x, w, b):
    mu = jnp.mean(x, axis=-1, keepdims=True)
    var = jnp.mean(jnp.square(x - mu), axis=-1, keepdims=True)
    return (x - mu) * jax.lax.rsqrt(var + LN_EPS) * w + b


def _erf(x):
    # Abramowitz & Stegun 7.1.26 rational approximation (max abs err ~1.5e-7 — exact in f32),
    # built only from exp / mul / add / div so it lowers cleanly on the VPU/EUP.
    a1, a2, a3, a4, a5 = 0.254829592, -0.284496736, 1.421413741, -1.453152027, 1.061405429
    p = 0.3275911
    sgn = jnp.where(x >= 0.0, 1.0, -1.0)
    ax = jnp.abs(x)
    t = 1.0 / (1.0 + p * ax)
    poly = ((((a5 * t + a4) * t + a3) * t + a2) * t + a1) * t
    return sgn * (1.0 - poly * jnp.exp(-ax * ax))


def _gelu_exact(x):
    # PyTorch nn.GELU() default (erf-based)
    return 0.5 * x * (1.0 + _erf(x * 0.7071067811865476))


def autoformer_tiny_kernel(
    x_ref, pool_ref, mean_ref, pos_ref,
    emb_w_ref, emb_b_ref, trd_w_ref, trd_b_ref,
    qkv_w_ref, qkv_b_ref, out_w_ref, out_b_ref,
    ln1_w_ref, ln1_b_ref, ff1_w_ref, ff1_b_ref, ff2_w_ref, ff2_b_ref,
    ln2_w_ref, ln2_b_ref,
    c1_w_ref, c1_b_ref, c2_w_ref, c2_b_ref,
    o_ref,
):
    TB, T, C = x_ref.shape
    R = TB * T
    f32 = jnp.float32

    x2 = x_ref[...].reshape(R, C)                                       # (R, 16)

    # ---------- series decomposition (AvgPool1d as a block-diagonal matmul) ----------
    trend2 = jnp.dot(pool_ref[...], x2, preferred_element_type=f32)     # (R, 16)
    seasonal2 = x2 - trend2

    # ---------- seasonal branch: embed + learnable positional encoding ----------
    h = jnp.dot(seasonal2, emb_w_ref[...], preferred_element_type=f32) + emb_b_ref[...]
    h = h + pos_ref[...]                                                # (R, D)

    scale = 1.0 / (HEAD_DIM ** 0.5)
    for l in range(NUM_LAYERS):
        # ----- multi-head self attention (post-norm; dropout = identity) -----
        # fused QKV: one (R, D) @ (D, 3D) matmul
        qkv = jnp.dot(h, qkv_w_ref[l], preferred_element_type=f32) + qkv_b_ref[l]   # (R, 3D)
        q = qkv[:, 0 * D_MODEL:1 * D_MODEL].reshape(TB, T, D_MODEL)
        k = qkv[:, 1 * D_MODEL:2 * D_MODEL].reshape(TB, T, D_MODEL)
        v = qkv[:, 2 * D_MODEL:3 * D_MODEL].reshape(TB, T, D_MODEL)

        ctx_heads = []
        for hd in range(NUM_HEADS):
            lo = hd * HEAD_DIM
            qh = q[:, :, lo:lo + HEAD_DIM]
            kh = k[:, :, lo:lo + HEAD_DIM]
            vh = v[:, :, lo:lo + HEAD_DIM]
            s = jnp.einsum('btd,bsd->bts', qh, kh, preferred_element_type=f32) * scale
            m = jnp.max(s, axis=-1, keepdims=True)
            e = jnp.exp(s - m)
            p = e / jnp.sum(e, axis=-1, keepdims=True)
            ctx_heads.append(jnp.einsum('bts,bsd->btd', p, vh, preferred_element_type=f32))
        ctx = jnp.concatenate(ctx_heads, axis=-1).reshape(R, D_MODEL)   # concat heads -> (R, D)

        # single output projection (R, D) @ (D, D)
        attn = jnp.dot(ctx, out_w_ref[l], preferred_element_type=f32) + out_b_ref[l]
        h = _layer_norm(h + attn, ln1_w_ref[l], ln1_b_ref[l])

        # ----- feed forward (ReLU, PyTorch default) -----
        f = jnp.dot(h, ff1_w_ref[l], preferred_element_type=f32) + ff1_b_ref[l]
        f = jnp.maximum(f, 0.0)
        f = jnp.dot(f, ff2_w_ref[l], preferred_element_type=f32) + ff2_b_ref[l]
        h = _layer_norm(h + f, ln2_w_ref[l], ln2_b_ref[l])

    # ---------- mean pooling over the sequence (as 2D matmuls) ----------
    pooled_enc = jnp.dot(mean_ref[...], h, preferred_element_type=f32)       # (TB, D)
    trend_mean = jnp.dot(mean_ref[...], trend2, preferred_element_type=f32)  # (TB, 16)
    # mean(Linear(trend)) == Linear(mean(trend)) since Linear is affine
    trend_feat = jnp.dot(trend_mean, trd_w_ref[...], preferred_element_type=f32) + trd_b_ref[...]

    feat = jnp.concatenate([pooled_enc, trend_feat], axis=-1)                # (TB, 2D)

    # ---------- classifier: Linear -> GELU -> (Dropout=id) -> Linear (lane-dense padded) ----------
    c = jnp.dot(feat, c1_w_ref[...], preferred_element_type=f32) + c1_b_ref[...]
    c = _gelu_exact(c)
    o_ref[...] = jnp.dot(c, c2_w_ref[...], preferred_element_type=f32) + c2_b_ref[...]


def init_params(key):
    ks = jax.random.split(key, 8)
    std = 0.02
    f32 = jnp.float32
    return {
        'emb_w': jax.random.normal(ks[0], (INPUT_DIM, D_MODEL), f32) * std,
        'emb_b': jnp.zeros((1, D_MODEL), f32),
        'trd_w': jax.random.normal(ks[1], (INPUT_DIM, D_MODEL), f32) * std,
        'trd_b': jnp.zeros((1, D_MODEL), f32),
        # fused, pre-transposed QKV weights: columns are [Wq^T | Wk^T | Wv^T]
        'qkv_w': jax.random.normal(ks[2], (NUM_LAYERS, D_MODEL, 3 * D_MODEL), f32) * std,
        'qkv_b': jnp.zeros((NUM_LAYERS, 1, 3 * D_MODEL), f32),
        'out_w': jax.random.normal(ks[3], (NUM_LAYERS, D_MODEL, D_MODEL), f32) * std,
        'out_b': jnp.zeros((NUM_LAYERS, 1, D_MODEL), f32),
        'ln1_w': jnp.ones((NUM_LAYERS, 1, D_MODEL), f32),
        'ln1_b': jnp.zeros((NUM_LAYERS, 1, D_MODEL), f32),
        'ff1_w': jax.random.normal(ks[4], (NUM_LAYERS, D_MODEL, DIM_FF), f32) * std,
        'ff1_b': jnp.zeros((NUM_LAYERS, 1, DIM_FF), f32),
        'ff2_w': jax.random.normal(ks[5], (NUM_LAYERS, DIM_FF, D_MODEL), f32) * std,
        'ff2_b': jnp.zeros((NUM_LAYERS, 1, D_MODEL), f32),
        'ln2_w': jnp.ones((NUM_LAYERS, 1, D_MODEL), f32),
        'ln2_b': jnp.zeros((NUM_LAYERS, 1, D_MODEL), f32),
        'c1_w': jax.random.normal(ks[6], (2 * D_MODEL, D_MODEL), f32) * std,
        'c1_b': jnp.zeros((1, D_MODEL), f32),
        'c2_w': jax.random.normal(ks[7], (D_MODEL, NUM_CLASSES), f32) * std,
        'c2_b': jnp.zeros((1, NUM_CLASSES), f32),
    }


def autoformer_tiny_forward(x, pos_embed, params):
    B, T, C = x.shape
    assert C == INPUT_DIM and pos_embed.shape[0] >= T
    f32 = jnp.float32

    # --- batch tiling for the grid ---
    TB = B if B <= MAX_BATCH_BLOCK else MAX_BATCH_BLOCK
    B_pad = ((B + TB - 1) // TB) * TB
    R = TB * T

    # --- pad input features 15 -> 16 (sublane alignment); pad batch to a multiple of TB ---
    x_p = jnp.pad(x, ((0, B_pad - B), (0, 0), (0, IN_PAD - C))).astype(f32)

    # --- precomputed pooling / averaging matrices (exact AvgPool1d, count_include_pad=True) ---
    idx = jnp.arange(T)
    pool_T = (jnp.abs(idx[:, None] - idx[None, :]) <= MOVING_AVG // 2).astype(f32) / MOVING_AVG
    pool_big = jnp.kron(jnp.eye(TB, dtype=f32), pool_T)                       # (R, R)
    mean_mat = jnp.kron(jnp.eye(TB, dtype=f32), jnp.full((1, T), 1.0 / T, f32))  # (TB, R)
    pos_flat = jnp.tile(pos_embed[:T, :].astype(f32), (TB, 1))                # (R, D)

    # --- zero-pad weights touching the padded dims ---
    emb_w = jnp.pad(params['emb_w'], ((0, IN_PAD - C), (0, 0)))
    trd_w = jnp.pad(params['trd_w'], ((0, IN_PAD - C), (0, 0)))
    c2_w = jnp.pad(params['c2_w'], ((0, 0), (0, OUT_PAD - NUM_CLASSES)))
    c2_b = jnp.pad(params['c2_b'], ((0, 0), (0, OUT_PAD - NUM_CLASSES)))

    weight_args = (
        pool_big, mean_mat, pos_flat,
        emb_w, params['emb_b'], trd_w, params['trd_b'],
        params['qkv_w'], params['qkv_b'], params['out_w'], params['out_b'],
        params['ln1_w'], params['ln1_b'],
        params['ff1_w'], params['ff1_b'], params['ff2_w'], params['ff2_b'],
        params['ln2_w'], params['ln2_b'],
        params['c1_w'], params['c1_b'], c2_w, c2_b,
    )

    def _resident(shape):
        # full-array block, constant index map -> stays VMEM resident across grid steps
        n = len(shape)
        return pl.BlockSpec(shape, lambda b, _n=n: (0,) * _n)

    in_specs = [pl.BlockSpec((TB, T, IN_PAD), lambda b: (b, 0, 0))]
    in_specs += [_resident(a.shape) for a in weight_args]

    out = pl.pallas_call(
        autoformer_tiny_kernel,
        out_shape=jax.ShapeDtypeStruct((B_pad, OUT_PAD), jnp.float32),
        grid=(B_pad // TB,),
        in_specs=in_specs,
        out_specs=pl.BlockSpec((TB, OUT_PAD), lambda b: (b, 0)),
        compiler_params=pltpu.CompilerParams(
            dimension_semantics=("parallel",)),
    )(x_p, *weight_args)

    # slice away batch padding and the lane-dense class padding
    return out[:B, :NUM_CLASSES]


if __name__ == "__main__":
    key = jax.random.PRNGKey(0)
    k_x, k_pos, k_p = jax.random.split(key, 3)

    B, T = 2, 8
    x = jax.random.normal(k_x, (B, T, INPUT_DIM), jnp.float32)
    # learnable positional encoding table (stand-in for max_len=5000; sliced to seq len T)
    pos_embed = jax.random.normal(k_pos, (64, D_MODEL), jnp.float32) * 0.02
    params = init_params(k_p)

    out = autoformer_tiny_forward(x, pos_embed, params)
    jax.block_until_ready(out)
    assert out.shape == (B, NUM_CLASSES)
    assert bool(jnp.all(jnp.isfinite(out)))
    print("KERNEL_OK")
</pallas_src>

<mosaic_0001>
module attributes {stable_mosaic.version = 11 : i64} {
  func.func @autoformer_tiny_kernel(%arg0: i32, %arg1: memref<2x8x16xf32, #tpu.memory_space<vmem>>, %arg2: memref<16x16xf32, #tpu.memory_space<vmem>>, %arg3: memref<2x16xf32, #tpu.memory_space<vmem>>, %arg4: memref<16x64xf32, #tpu.memory_space<vmem>>, %arg5: memref<16x64xf32, #tpu.memory_space<vmem>>, %arg6: memref<1x64xf32, #tpu.memory_space<vmem>>, %arg7: memref<16x64xf32, #tpu.memory_space<vmem>>, %arg8: memref<1x64xf32, #tpu.memory_space<vmem>>, %arg9: memref<3x64x192xf32, #tpu.memory_space<vmem>>, %arg10: memref<3x1x192xf32, #tpu.memory_space<vmem>>, %arg11: memref<3x64x64xf32, #tpu.memory_space<vmem>>, %arg12: memref<3x1x64xf32, #tpu.memory_space<vmem>>, %arg13: memref<3x1x64xf32, #tpu.memory_space<vmem>>, %arg14: memref<3x1x64xf32, #tpu.memory_space<vmem>>, %arg15: memref<3x64x128xf32, #tpu.memory_space<vmem>>, %arg16: memref<3x1x128xf32, #tpu.memory_space<vmem>>, %arg17: memref<3x128x64xf32, #tpu.memory_space<vmem>>, %arg18: memref<3x1x64xf32, #tpu.memory_space<vmem>>, %arg19: memref<3x1x64xf32, #tpu.memory_space<vmem>>, %arg20: memref<3x1x64xf32, #tpu.memory_space<vmem>>, %arg21: memref<128x64xf32, #tpu.memory_space<vmem>>, %arg22: memref<1x64xf32, #tpu.memory_space<vmem>>, %arg23: memref<64x128xf32, #tpu.memory_space<vmem>>, %arg24: memref<1x128xf32, #tpu.memory_space<vmem>>, %arg25: memref<2x128xf32, #tpu.memory_space<vmem>>) attributes {dimension_semantics = [#tpu.dimension_semantics<parallel>], iteration_bounds = array<i64: 1>, scalar_prefetch = 0 : i64, scratch_operands = 0 : i64, tpu.core_type = #tpu.core_type<tc>, window_params = [{transform_indices = @transform_0, window_bounds = array<i64: 2, 8, 16>}, {pipeline_mode = #tpu.pipeline_mode<synchronous>, transform_indices = @transform_1, window_bounds = array<i64: 16, 16>}, {pipeline_mode = #tpu.pipeline_mode<synchronous>, transform_indices = @transform_2, window_bounds = array<i64: 2, 16>}, {pipeline_mode = #tpu.pipeline_mode<synchronous>, transform_indices = @transform_3, window_bounds = array<i64: 16, 64>}, {pipeline_mode = #tpu.pipeline_mode<synchronous>, transform_indices = @transform_4, window_bounds = array<i64: 16, 64>}, {pipeline_mode = #tpu.pipeline_mode<synchronous>, transform_indices = @transform_5, window_bounds = array<i64: 1, 64>}, {pipeline_mode = #tpu.pipeline_mode<synchronous>, transform_indices = @transform_6, window_bounds = array<i64: 16, 64>}, {pipeline_mode = #tpu.pipeline_mode<synchronous>, transform_indices = @transform_7, window_bounds = array<i64: 1, 64>}, {pipeline_mode = #tpu.pipeline_mode<synchronous>, transform_indices = @transform_8, window_bounds = array<i64: 3, 64, 192>}, {pipeline_mode = #tpu.pipeline_mode<synchronous>, transform_indices = @transform_9, window_bounds = array<i64: 3, 1, 192>}, {pipeline_mode = #tpu.pipeline_mode<synchronous>, transform_indices = @transform_10, window_bounds = array<i64: 3, 64, 64>}, {pipeline_mode = #tpu.pipeline_mode<synchronous>, transform_indices = @transform_11, window_bounds = array<i64: 3, 1, 64>}, {pipeline_mode = #tpu.pipeline_mode<synchronous>, transform_indices = @transform_12, window_bounds = array<i64: 3, 1, 64>}, {pipeline_mode = #tpu.pipeline_mode<synchronous>, transform_indices = @transform_13, window_bounds = array<i64: 3, 1, 64>}, {pipeline_mode = #tpu.pipeline_mode<synchronous>, transform_indices = @transform_14, window_bounds = array<i64: 3, 64, 128>}, {pipeline_mode = #tpu.pipeline_mode<synchronous>, transform_indices = @transform_15, window_bounds = array<i64: 3, 1, 128>}, {pipeline_mode = #tpu.pipeline_mode<synchronous>, transform_indices = @transform_16, window_bounds = array<i64: 3, 128, 64>}, {pipeline_mode = #tpu.pipeline_mode<synchronous>, transform_indices = @transform_17, window_bounds = array<i64: 3, 1, 64>}, {pipeline_mode = #tpu.pipeline_mode<synchronous>, transform_indices = @transform_18, window_bounds = array<i64: 3, 1, 64>}, {pipeline_mode = #tpu.pipeline_mode<synchronous>, transform_indices = @transform_19, window_bounds = array<i64: 3, 1, 64>}, {pipeline_mode = #tpu.pipeline_mode<synchronous>, transform_indices = @transform_20, window_bounds = array<i64: 128, 64>}, {pipeline_mode = #tpu.pipeline_mode<synchronous>, transform_indices = @transform_21, window_bounds = array<i64: 1, 64>}, {pipeline_mode = #tpu.pipeline_mode<synchronous>, transform_indices = @transform_22, window_bounds = array<i64: 64, 128>}, {pipeline_mode = #tpu.pipeline_mode<synchronous>, transform_indices = @transform_23, window_bounds = array<i64: 1, 128>}, {transform_indices = @transform_24, window_bounds = array<i64: 2, 128>}]} {
    %c0 = arith.constant 0 : index
    %c0_0 = arith.constant 0 : index
    %c0_1 = arith.constant 0 : index
    %0 = vector.load %arg1[%c0, %c0_0, %c0_1] : memref<2x8x16xf32, #tpu.memory_space<vmem>>, vector<2x8x16xf32>
    %1 = vector.shape_cast %0 : vector<2x8x16xf32> to vector<16x16xf32>
    %c0_2 = arith.constant 0 : index
    %c0_3 = arith.constant 0 : index
    %2 = vector.load %arg2[%c0_2, %c0_3] : memref<16x16xf32, #tpu.memory_space<vmem>>, vector<16x16xf32>
    %cst = arith.constant dense<0.000000e+00> : vector<16x16xf32>
    %3 = tpu.matmul %2, %1, %cst {dimension_numbers = #tpu.dot_dimension_numbers<[1], [0], [0], [1], [0, 0, 1, 1], [], []>} : vector<16x16xf32>, vector<16x16xf32>, vector<16x16xf32> -> vector<16x16xf32>
    %4 = arith.subf %1, %3 : vector<16x16xf32>
    %c0_4 = arith.constant 0 : index
    %c0_5 = arith.constant 0 : index
    %5 = vector.load %arg5[%c0_4, %c0_5] : memref<16x64xf32, #tpu.memory_space<vmem>>, vector<16x64xf32>
    %cst_6 = arith.constant dense<0.000000e+00> : vector<16x64xf32>
    %6 = tpu.matmul %4, %5, %cst_6 {dimension_numbers = #tpu.dot_dimension_numbers<[1], [0], [0], [1], [0, 0, 1, 1], [], []>} : vector<16x16xf32>, vector<16x64xf32>, vector<16x64xf32> -> vector<16x64xf32>
    %c0_7 = arith.constant 0 : index
    %c0_8 = arith.constant 0 : index
    %7 = vector.load %arg6[%c0_7, %c0_8] : memref<1x64xf32, #tpu.memory_space<vmem>>, vector<1x64xf32>
    %8 = vector.broadcast %7 : vector<1x64xf32> to vector<16x64xf32>
    %9 = arith.addf %6, %8 : vector<16x64xf32>
    %c0_9 = arith.constant 0 : index
    %c0_10 = arith.constant 0 : index
    %10 = vector.load %arg4[%c0_9, %c0_10] : memref<16x64xf32, #tpu.memory_space<vmem>>, vector<16x64xf32>
    %11 = arith.addf %9, %10 : vector<16x64xf32>
    %c0_11 = arith.constant 0 : index
    %c0_12 = arith.constant 0 : index
    %c0_13 = arith.constant 0 : index
    %12 = vector.load %arg9[%c0_11, %c0_12, %c0_13] : memref<3x64x192xf32, #tpu.memory_space<vmem>>, vector<1x64x192xf32>
    %13 = vector.shape_cast %12 : vector<1x64x192xf32> to vector<64x192xf32>
    %cst_14 = arith.constant dense<0.000000e+00> : vector<16x192xf32>
    %14 = tpu.matmul %11, %13, %cst_14 {dimension_numbers = #tpu.dot_dimension_numbers<[1], [0], [0], [1], [0, 0, 1, 1], [], []>} : vector<16x64xf32>, vector<64x192xf32>, vector<16x192xf32> -> vector<16x192xf32>
    %c0_15 = arith.constant 0 : index
    %c0_16 = arith.constant 0 : index
    %c0_17 = arith.constant 0 : index
    %15 = vector.load %arg10[%c0_15, %c0_16, %c0_17] : memref<3x1x192xf32, #tpu.memory_space<vmem>>, vector<1x1x192xf32>
    %16 = vector.shape_cast %15 : vector<1x1x192xf32> to vector<1x192xf32>
    %17 = vector.broadcast %16 : vector<1x192xf32> to vector<16x192xf32>
    %18 = arith.addf %14, %17 : vector<16x192xf32>
    %19 = vector.extract_strided_slice %18 {offsets = [0, 0], sizes = [16, 64], strides = [1, 1]} : vector<16x192xf32> to vector<16x64xf32>
    %20 = vector.shape_cast %19 : vector<16x64xf32> to vector<2x8x64xf32>
    %21 = vector.extract_strided_slice %18 {offsets = [0, 64], sizes = [16, 64], strides = [1, 1]} : vector<16x192xf32> to vector<16x64xf32>
    %22 = vector.shape_cast %21 : vector<16x64xf32> to vector<2x8x64xf32>
    %23 = vector.extract_strided_slice %18 {offsets = [0, 128], sizes = [16, 64], strides = [1, 1]} : vector<16x192xf32> to vector<16x64xf32>
    %24 = vector.shape_cast %23 : vector<16x64xf32> to vector<2x8x64xf32>
    %25 = vector.extract_strided_slice %20 {offsets = [0, 0, 0], sizes = [2, 8, 16], strides = [1, 1, 1]} : vector<2x8x64xf32> to vector<2x8x16xf32>
    %26 = vector.extract_strided_slice %22 {offsets = [0, 0, 0], sizes = [2, 8, 16], strides = [1, 1, 1]} : vector<2x8x64xf32> to vector<2x8x16xf32>
    %27 = vector.extract_strided_slice %24 {offsets = [0, 0, 0], sizes = [2, 8, 16], strides = [1, 1, 1]} : vector<2x8x64xf32> to vector<2x8x16xf32>
    "tpu.trace_start"() <{level = 10 : i32, message = "btd,bsd->bts"}> : () -> ()
    %cst_18 = arith.constant dense<0.000000e+00> : vector<2x8x8xf32>
    %28 = tpu.matmul %25, %26, %cst_18 {dimension_numbers = #tpu.dot_dimension_numbers<[2], [2], [1], [1], [0, 0, 0, 1, 1, 1], [0], [0]>} : vector<2x8x16xf32>, vector<2x8x16xf32>, vector<2x8x8xf32> -> vector<2x8x8xf32>
    "tpu.trace_stop"() : () -> ()
    %cst_19 = arith.constant 2.500000e-01 : f32
    %29 = vector.broadcast %cst_19 : f32 to vector<2x8x8xf32>
    %30 = arith.mulf %28, %29 : vector<2x8x8xf32>
    %cst_20 = arith.constant dense<0xFF800000> : vector<2x8xf32>
    %31 = vector.multi_reduction <maximumf>, %30, %cst_20 [2] : vector<2x8x8xf32> to vector<2x8xf32>
    %32 = vector.shape_cast %31 : vector<2x8xf32> to vector<2x8x1xf32>
    %33 = vector.broadcast %32 : vector<2x8x1xf32> to vector<2x8x8xf32>
    %34 = arith.subf %30, %33 : vector<2x8x8xf32>
    %35 = math.exp %34 : vector<2x8x8xf32>
    %cst_21 = arith.constant dense<0.000000e+00> : vector<2x8xf32>
    %36 = vector.multi_reduction <add>, %35, %cst_21 [2] : vector<2x8x8xf32> to vector<2x8xf32>
    %37 = vector.shape_cast %36 : vector<2x8xf32> to vector<2x8x1xf32>
    %38 = vector.broadcast %37 : vector<2x8x1xf32> to vector<2x8x8xf32>
    %39 = arith.divf %35, %38 : vector<2x8x8xf32>
    "tpu.trace_start"() <{level = 10 : i32, message = "bts,bsd->btd"}> : () -> ()
    %cst_22 = arith.constant dense<0.000000e+00> : vector<2x8x16xf32>
    %40 = tpu.matmul %39, %27, %cst_22 {dimension_numbers = #tpu.dot_dimension_numbers<[2], [1], [1], [2], [0, 0, 0, 1, 1, 2], [0], [0]>} : vector<2x8x8xf32>, vector<2x8x16xf32>, vector<2x8x16xf32> -> vector<2x8x16xf32>
    "tpu.trace_stop"() : () -> ()
    %41 = vector.extract_strided_slice %20 {offsets = [0, 0, 16], sizes = [2, 8, 16], strides = [1, 1, 1]} : vector<2x8x64xf32> to vector<2x8x16xf32>
    %42 = vector.extract_strided_slice %22 {offsets = [0, 0, 16], sizes = [2, 8, 16], strides = [1, 1, 1]} : vector<2x8x64xf32> to vector<2x8x16xf32>
    %43 = vector.extract_strided_slice %24 {offsets = [0, 0, 16], sizes = [2, 8, 16], strides = [1, 1, 1]} : vector<2x8x64xf32> to vector<2x8x16xf32>
    "tpu.trace_start"() <{level = 10 : i32, message = "btd,bsd->bts"}> : () -> ()
    %cst_23 = arith.constant dense<0.000000e+00> : vector<2x8x8xf32>
    %44 = tpu.matmul %41, %42, %cst_23 {dimension_numbers = #tpu.dot_dimension_numbers<[2], [2], [1], [1], [0, 0, 0, 1, 1, 1], [0], [0]>} : vector<2x8x16xf32>, vector<2x8x16xf32>, vector<2x8x8xf32> -> vector<2x8x8xf32>
    "tpu.trace_stop"() : () -> ()
    %cst_24 = arith.constant 2.500000e-01 : f32
    %45 = vector.broadcast %cst_24 : f32 to vector<2x8x8xf32>
    %46 = arith.mulf %44, %45 : vector<2x8x8xf32>
    %cst_25 = arith.constant dense<0xFF800000> : vector<2x8xf32>
    %47 = vector.multi_reduction <maximumf>, %46, %cst_25 [2] : vector<2x8x8xf32> to vector<2x8xf32>
    %48 = vector.shape_cast %47 : vector<2x8xf32> to vector<2x8x1xf32>
    %49 = vector.broadcast %48 : vector<2x8x1xf32> to vector<2x8x8xf32>
    %50 = arith.subf %46, %49 : vector<2x8x8xf32>
    %51 = math.exp %50 : vector<2x8x8xf32>
    %cst_26 = arith.constant dense<0.000000e+00> : vector<2x8xf32>
    %52 = vector.multi_reduction <add>, %51, %cst_26 [2] : vector<2x8x8xf32> to vector<2x8xf32>
    %53 = vector.shape_cast %52 : vector<2x8xf32> to vector<2x8x1xf32>
    %54 = vector.broadcast %53 : vector<2x8x1xf32> to vector<2x8x8xf32>
    %55 = arith.divf %51, %54 : vector<2x8x8xf32>
    "tpu.trace_start"() <{level = 10 : i32, message = "bts,bsd->btd"}> : () -> ()
    %cst_27 = arith.constant dense<0.000000e+00> : vector<2x8x16xf32>
    %56 = tpu.matmul %55, %43, %cst_27 {dimension_numbers = #tpu.dot_dimension_numbers<[2], [1], [1], [2], [0, 0, 0, 1, 1, 2], [0], [0]>} : vector<2x8x8xf32>, vector<2x8x16xf32>, vector<2x8x16xf32> -> vector<2x8x16xf32>
    "tpu.trace_stop"() : () -> ()
    %57 = vector.extract_strided_slice %20 {offsets = [0, 0, 32], sizes = [2, 8, 16], strides = [1, 1, 1]} : vector<2x8x64xf32> to vector<2x8x16xf32>
    %58 = vector.extract_strided_slice %22 {offsets = [0, 0, 32], sizes = [2, 8, 16], strides = [1, 1, 1]} : vector<2x8x64xf32> to vector<2x8x16xf32>
    %59 = vector.extract_strided_slice %24 {offsets = [0, 0, 32], sizes = [2, 8, 16], strides = [1, 1, 1]} : vector<2x8x64xf32> to vector<2x8x16xf32>
    "tpu.trace_start"() <{level = 10 : i32, message = "btd,bsd->bts"}> : () -> ()
    %cst_28 = arith.constant dense<0.000000e+00> : vector<2x8x8xf32>
    %60 = tpu.matmul %57, %58, %cst_28 {dimension_numbers = #tpu.dot_dimension_numbers<[2], [2], [1], [1], [0, 0, 0, 1, 1, 1], [0], [0]>} : vector<2x8x16xf32>, vector<2x8x16xf32>, vector<2x8x8xf32> -> vector<2x8x8xf32>
    "tpu.trace_stop"() : () -> ()
    %cst_29 = arith.constant 2.500000e-01 : f32
    %61 = vector.broadcast %cst_29 : f32 to vector<2x8x8xf32>
    %62 = arith.mulf %60, %61 : vector<2x8x8xf32>
    %cst_30 = arith.constant dense<0xFF800000> : vector<2x8xf32>
    %63 = vector.multi_reduction <maximumf>, %62, %cst_30 [2] : vector<2x8x8xf32> to vector<2x8xf32>
    %64 = vector.shape_cast %63 : vector<2x8xf32> to vector<2x8x1xf32>
    %65 = vector.broadcast %64 : vector<2x8x1xf32> to vector<2x8x8xf32>
    %66 = arith.subf %62, %65 : vector<2x8x8xf32>
    %67 = math.exp %66 : vector<2x8x8xf32>
    %cst_31 = arith.constant dense<0.000000e+00> : vector<2x8xf32>
    %68 = vector.multi_reduction <add>, %67, %cst_31 [2] : vector<2x8x8xf32> to vector<2x8xf32>
    %69 = vector.shape_cast %68 : vector<2x8xf32> to vector<2x8x1xf32>
    %70 = vector.broadcast %69 : vector<2x8x1xf32> to vector<2x8x8xf32>
    %71 = arith.divf %67, %70 : vector<2x8x8xf32>
    "tpu.trace_start"() <{level = 10 : i32, message = "bts,bsd->btd"}> : () -> ()
    %cst_32 = arith.constant dense<0.000000e+00> : vector<2x8x16xf32>
    %72 = tpu.matmul %71, %59, %cst_32 {dimension_numbers = #tpu.dot_dimension_numbers<[2], [1], [1], [2], [0, 0, 0, 1, 1, 2], [0], [0]>} : vector<2x8x8xf32>, vector<2x8x16xf32>, vector<2x8x16xf32> -> vector<2x8x16xf32>
    "tpu.trace_stop"() : () -> ()
    %73 = vector.extract_strided_slice %20 {offsets = [0, 0, 48], sizes = [2, 8, 16], strides = [1, 1, 1]} : vector<2x8x64xf32> to vector<2x8x16xf32>
    %74 = vector.extract_strided_slice %22 {offsets = [0, 0, 48], sizes = [2, 8, 16], strides = [1, 1, 1]} : vector<2x8x64xf32> to vector<2x8x16xf32>
    %75 = vector.extract_strided_slice %24 {offsets = [0, 0, 48], sizes = [2, 8, 16], strides = [1, 1, 1]} : vector<2x8x64xf32> to vector<2x8x16xf32>
    "tpu.trace_start"() <{level = 10 : i32, message = "btd,bsd->bts"}> : () -> ()
    %cst_33 = arith.constant dense<0.000000e+00> : vector<2x8x8xf32>
    %76 = tpu.matmul %73, %74, %cst_33 {dimension_numbers = #tpu.dot_dimension_numbers<[2], [2], [1], [1], [0, 0, 0, 1, 1, 1], [0], [0]>} : vector<2x8x16xf32>, vector<2x8x16xf32>, vector<2x8x8xf32> -> vector<2x8x8xf32>
    "tpu.trace_stop"() : () -> ()
    %cst_34 = arith.constant 2.500000e-01 : f32
    %77 = vector.broadcast %cst_34 : f32 to vector<2x8x8xf32>
    %78 = arith.mulf %76, %77 : vector<2x8x8xf32>
    %cst_35 = arith.constant dense<0xFF800000> : vector<2x8xf32>
    %79 = vector.multi_reduction <maximumf>, %78, %cst_35 [2] : vector<2x8x8xf32> to vector<2x8xf32>
    %80 = vector.shape_cast %79 : vector<2x8xf32> to vector<2x8x1xf32>
    %81 = vector.broadcast %80 : vector<2x8x1xf32> to vector<2x8x8xf32>
    %82 = arith.subf %78, %81 : vector<2x8x8xf32>
    %83 = math.exp %82 : vector<2x8x8xf32>
    %cst_36 = arith.constant dense<0.000000e+00> : vector<2x8xf32>
    %84 = vector.multi_reduction <add>, %83, %cst_36 [2] : vector<2x8x8xf32> to vector<2x8xf32>
    %85 = vector.shape_cast %84 : vector<2x8xf32> to vector<2x8x1xf32>
    %86 = vector.broadcast %85 : vector<2x8x1xf32> to vector<2x8x8xf32>
    %87 = arith.divf %83, %86 : vector<2x8x8xf32>
    "tpu.trace_start"() <{level = 10 : i32, message = "bts,bsd->btd"}> : () -> ()
    %cst_37 = arith.constant dense<0.000000e+00> : vector<2x8x16xf32>
    %88 = tpu.matmul %87, %75, %cst_37 {dimension_numbers = #tpu.dot_dimension_numbers<[2], [1], [1], [2], [0, 0, 0, 1, 1, 2], [0], [0]>} : vector<2x8x8xf32>, vector<2x8x16xf32>, vector<2x8x16xf32> -> vector<2x8x16xf32>
    "tpu.trace_stop"() : () -> ()
    %89 = tpu.concatenate %40, %56, %72, %88 in 2 : vector<2x8x16xf32>, vector<2x8x16xf32>, vector<2x8x16xf32>, vector<2x8x16xf32> -> vector<2x8x64xf32>
    %90 = vector.shape_cast %89 : vector<2x8x64xf32> to vector<16x64xf32>
    %c0_38 = arith.constant 0 : index
    %c0_39 = arith.constant 0 : index
    %c0_40 = arith.constant 0 : index
    %91 = vector.load %arg11[%c0_38, %c0_39, %c0_40] : memref<3x64x64xf32, #tpu.memory_space<vmem>>, vector<1x64x64xf32>
    %92 = vector.shape_cast %91 : vector<1x64x64xf32> to vector<64x64xf32>
    %cst_41 = arith.constant dense<0.000000e+00> : vector<16x64xf32>
    %93 = tpu.matmul %90, %92, %cst_41 {dimension_numbers = #tpu.dot_dimension_numbers<[1], [0], [0], [1], [0, 0, 1, 1], [], []>} : vector<16x64xf32>, vector<64x64xf32>, vector<16x64xf32> -> vector<16x64xf32>
    %c0_42 = arith.constant 0 : index
    %c0_43 = arith.constant 0 : index
    %c0_44 = arith.constant 0 : index
    %94 = vector.load %arg12[%c0_42, %c0_43, %c0_44] : memref<3x1x64xf32, #tpu.memory_space<vmem>>, vector<1x1x64xf32>
    %95 = vector.shape_cast %94 : vector<1x1x64xf32> to vector<1x64xf32>
    %96 = vector.broadcast %95 : vector<1x64xf32> to vector<16x64xf32>
    %97 = arith.addf %93, %96 : vector<16x64xf32>
    %98 = arith.addf %11, %97 : vector<16x64xf32>
    %c0_45 = arith.constant 0 : index
    %c0_46 = arith.constant 0 : index
    %c0_47 = arith.constant 0 : index
    %99 = vector.load %arg13[%c0_45, %c0_46, %c0_47] : memref<3x1x64xf32, #tpu.memory_space<vmem>>, vector<1x1x64xf32>
    %100 = vector.shape_cast %99 : vector<1x1x64xf32> to vector<1x64xf32>
    %c0_48 = arith.constant 0 : index
    %c0_49 = arith.constant 0 : index
    %c0_50 = arith.constant 0 : index
    %101 = vector.load %arg14[%c0_48, %c0_49, %c0_50] : memref<3x1x64xf32, #tpu.memory_space<vmem>>, vector<1x1x64xf32>
    %102 = vector.shape_cast %101 : vector<1x1x64xf32> to vector<1x64xf32>
    %cst_51 = arith.constant dense<0.000000e+00> : vector<16xf32>
    %103 = vector.multi_reduction <add>, %98, %cst_51 [1] : vector<16x64xf32> to vector<16xf32>
    %104 = vector.shape_cast %103 : vector<16xf32> to vector<16x1xf32>
    %cst_52 = arith.constant 6.400000e+01 : f32
    %105 = vector.broadcast %cst_52 : f32 to vector<16x1xf32>
    %106 = arith.divf %104, %105 : vector<16x1xf32>
    %107 = vector.broadcast %106 : vector<16x1xf32> to vector<16x64xf32>
    %108 = arith.subf %98, %107 : vector<16x64xf32>
    %109 = arith.mulf %108, %108 : vector<16x64xf32>
    %cst_53 = arith.constant dense<0.000000e+00> : vector<16xf32>
    %110 = vector.multi_reduction <add>, %109, %cst_53 [1] : vector<16x64xf32> to vector<16xf32>
    %111 = vector.shape_cast %110 : vector<16xf32> to vector<16x1xf32>
    %cst_54 = arith.constant 6.400000e+01 : f32
    %112 = vector.broadcast %cst_54 : f32 to vector<16x1xf32>
    %113 = arith.divf %111, %112 : vector<16x1xf32>
    %114 = vector.broadcast %106 : vector<16x1xf32> to vector<16x64xf32>
    %115 = arith.subf %98, %114 : vector<16x64xf32>
    %cst_55 = arith.constant 9.99999974E-6 : f32
    %116 = vector.broadcast %cst_55 : f32 to vector<16x1xf32>
    %117 = arith.addf %113, %116 : vector<16x1xf32>
    %118 = math.rsqrt %117 : vector<16x1xf32>
    %119 = vector.broadcast %118 : vector<16x1xf32> to vector<16x64xf32>
    %120 = arith.mulf %115, %119 : vector<16x64xf32>
    %121 = vector.broadcast %100 : vector<1x64xf32> to vector<16x64xf32>
    %122 = arith.mulf %120, %121 : vector<16x64xf32>
    %123 = vector.broadcast %102 : vector<1x64xf32> to vector<16x64xf32>
    %124 = arith.addf %122, %123 : vector<16x64xf32>
    %c0_56 = arith.constant 0 : index
    %c0_57 = arith.constant 0 : index
    %c0_58 = arith.constant 0 : index
    %125 = vector.load %arg15[%c0_56, %c0_57, %c0_58] : memref<3x64x128xf32, #tpu.memory_space<vmem>>, vector<1x64x128xf32>
    %126 = vector.shape_cast %125 : vector<1x64x128xf32> to vector<64x128xf32>
    %cst_59 = arith.constant dense<0.000000e+00> : vector<16x128xf32>
    %127 = tpu.matmul %124, %126, %cst_59 {dimension_numbers = #tpu.dot_dimension_numbers<[1], [0], [0], [1], [0, 0, 1, 1], [], []>} : vector<16x64xf32>, vector<64x128xf32>, vector<16x128xf32> -> vector<16x128xf32>
    %c0_60 = arith.constant 0 : index
    %c0_61 = arith.constant 0 : index
    %c0_62 = arith.constant 0 : index
    %128 = vector.load %arg16[%c0_60, %c0_61, %c0_62] : memref<3x1x128xf32, #tpu.memory_space<vmem>>, vector<1x1x128xf32>
    %129 = vector.shape_cast %128 : vector<1x1x128xf32> to vector<1x128xf32>
    %130 = vector.broadcast %129 : vector<1x128xf32> to vector<16x128xf32>
    %131 = arith.addf %127, %130 : vector<16x128xf32>
    %cst_63 = arith.constant 0.000000e+00 : f32
    %132 = vector.broadcast %cst_63 : f32 to vector<16x128xf32>
    %133 = arith.maximumf %131, %132 : vector<16x128xf32>
    %c0_64 = arith.constant 0 : index
    %c0_65 = arith.constant 0 : index
    %c0_66 = arith.constant 0 : index
    %134 = vector.load %arg17[%c0_64, %c0_65, %c0_66] : memref<3x128x64xf32, #tpu.memory_space<vmem>>, vector<1x128x64xf32>
    %135 = vector.shape_cast %134 : vector<1x128x64xf32> to vector<128x64xf32>
    %cst_67 = arith.constant dense<0.000000e+00> : vector<16x64xf32>
    %136 = tpu.matmul %133, %135, %cst_67 {dimension_numbers = #tpu.dot_dimension_numbers<[1], [0], [0], [1], [0, 0, 1, 1], [], []>} : vector<16x128xf32>, vector<128x64xf32>, vector<16x64xf32> -> vector<16x64xf32>
    %c0_68 = arith.constant 0 : index
    %c0_69 = arith.constant 0 : index
    %c0_70 = arith.constant 0 : index
    %137 = vector.load %arg18[%c0_68, %c0_69, %c0_70] : memref<3x1x64xf32, #tpu.memory_space<vmem>>, vector<1x1x64xf32>
    %138 = vector.shape_cast %137 : vector<1x1x64xf32> to vector<1x64xf32>
    %139 = vector.broadcast %138 : vector<1x64xf32> to vector<16x64xf32>
    %140 = arith.addf %136, %139 : vector<16x64xf32>
    %141 = arith.addf %124, %140 : vector<16x64xf32>
    %c0_71 = arith.constant 0 : index
    %c0_72 = arith.constant 0 : index
    %c0_73 = arith.constant 0 : index
    %142 = vector.load %arg19[%c0_71, %c0_72, %c0_73] : memref<3x1x64xf32, #tpu.memory_space<vmem>>, vector<1x1x64xf32>
    %143 = vector.shape_cast %142 : vector<1x1x64xf32> to vector<1x64xf32>
    %c0_74 = arith.constant 0 : index
    %c0_75 = arith.constant 0 : index
    %c0_76 = arith.constant 0 : index
    %144 = vector.load %arg20[%c0_74, %c0_75, %c0_76] : memref<3x1x64xf32, #tpu.memory_space<vmem>>, vector<1x1x64xf32>
    %145 = vector.shape_cast %144 : vector<1x1x64xf32> to vector<1x64xf32>
    %cst_77 = arith.constant dense<0.000000e+00> : vector<16xf32>
    %146 = vector.multi_reduction <add>, %141, %cst_77 [1] : vector<16x64xf32> to vector<16xf32>
    %147 = vector.shape_cast %146 : vector<16xf32> to vector<16x1xf32>
    %cst_78 = arith.constant 6.400000e+01 : f32
    %148 = vector.broadcast %cst_78 : f32 to vector<16x1xf32>
    %149 = arith.divf %147, %148 : vector<16x1xf32>
    %150 = vector.broadcast %149 : vector<16x1xf32> to vector<16x64xf32>
    %151 = arith.subf %141, %150 : vector<16x64xf32>
    %152 = arith.mulf %151, %151 : vector<16x64xf32>
    %cst_79 = arith.constant dense<0.000000e+00> : vector<16xf32>
    %153 = vector.multi_reduction <add>, %152, %cst_79 [1] : vector<16x64xf32> to vector<16xf32>
    %154 = vector.shape_cast %153 : vector<16xf32> to vector<16x1xf32>
    %cst_80 = arith.constant 6.400000e+01 : f32
    %155 = vector.broadcast %cst_80 : f32 to vector<16x1xf32>
    %156 = arith.divf %154, %155 : vector<16x1xf32>
    %157 = vector.broadcast %149 : vector<16x1xf32> to vector<16x64xf32>
    %158 = arith.subf %141, %157 : vector<16x64xf32>
    %cst_81 = arith.constant 9.99999974E-6 : f32
    %159 = vector.broadcast %cst_81 : f32 to vector<16x1xf32>
    %160 = arith.addf %156, %159 : vector<16x1xf32>
    %161 = math.rsqrt %160 : vector<16x1xf32>
    %162 = vector.broadcast %161 : vector<16x1xf32> to vector<16x64xf32>
    %163 = arith.mulf %158, %162 : vector<16x64xf32>
    %164 = vector.broadcast %143 : vector<1x64xf32> to vector<16x64xf32>
    %165 = arith.mulf %163, %164 : vector<16x64xf32>
    %166 = vector.broadcast %145 : vector<1x64xf32> to vector<16x64xf32>
    %167 = arith.addf %165, %166 : vector<16x64xf32>
    %c1 = arith.constant 1 : index
    %c0_82 = arith.constant 0 : index
    %c0_83 = arith.constant 0 : index
    %168 = vector.load %arg9[%c1, %c0_82, %c0_83] : memref<3x64x192xf32, #tpu.memory_space<vmem>>, vector<1x64x192xf32>
    %169 = vector.shape_cast %168 : vector<1x64x192xf32> to vector<64x192xf32>
    %cst_84 = arith.constant dense<0.000000e+00> : vector<16x192xf32>
    %170 = tpu.matmul %167, %169, %cst_84 {dimension_numbers = #tpu.dot_dimension_numbers<[1], [0], [0], [1], [0, 0, 1, 1], [], []>} : vector<16x64xf32>, vector<64x192xf32>, vector<16x192xf32> -> vector<16x192xf32>
    %c1_85 = arith.constant 1 : index
    %c0_86 = arith.constant 0 : index
    %c0_87 = arith.constant 0 : index
    %171 = vector.load %arg10[%c1_85, %c0_86, %c0_87] : memref<3x1x192xf32, #tpu.memory_space<vmem>>, vector<1x1x192xf32>
    %172 = vector.shape_cast %171 : vector<1x1x192xf32> to vector<1x192xf32>
    %173 = vector.broadcast %172 : vector<1x192xf32> to vector<16x192xf32>
    %174 = arith.addf %170, %173 : vector<16x192xf32>
    %175 = vector.extract_strided_slice %174 {offsets = [0, 0], sizes = [16, 64], strides = [1, 1]} : vector<16x192xf32> to vector<16x64xf32>
    %176 = vector.shape_cast %175 : vector<16x64xf32> to vector<2x8x64xf32>
    %177 = vector.extract_strided_slice %174 {offsets = [0, 64], sizes = [16, 64], strides = [1, 1]} : vector<16x192xf32> to vector<16x64xf32>
    %178 = vector.shape_cast %177 : vector<16x64xf32> to vector<2x8x64xf32>
    %179 = vector.extract_strided_slice %174 {offsets = [0, 128], sizes = [16, 64], strides = [1, 1]} : vector<16x192xf32> to vector<16x64xf32>
    %180 = vector.shape_cast %179 : vector<16x64xf32> to vector<2x8x64xf32>
    %181 = vector.extract_strided_slice %176 {offsets = [0, 0, 0], sizes = [2, 8, 16], strides = [1, 1, 1]} : vector<2x8x64xf32> to vector<2x8x16xf32>
    %182 = vector.extract_strided_slice %178 {offsets = [0, 0, 0], sizes = [2, 8, 16], strides = [1, 1, 1]} : vector<2x8x64xf32> to vector<2x8x16xf32>
    %183 = vector.extract_strided_slice %180 {offsets = [0, 0, 0], sizes = [2, 8, 16], strides = [1, 1, 1]} : vector<2x8x64xf32> to vector<2x8x16xf32>
    "tpu.trace_start"() <{level = 10 : i32, message = "btd,bsd->bts"}> : () -> ()
    %cst_88 = arith.constant dense<0.000000e+00> : vector<2x8x8xf32>
    %184 = tpu.matmul %181, %182, %cst_88 {dimension_numbers = #tpu.dot_dimension_numbers<[2], [2], [1], [1], [0, 0, 0, 1, 1, 1], [0], [0]>} : vector<2x8x16xf32>, vector<2x8x16xf32>, vector<2x8x8xf32> -> vector<2x8x8xf32>
    "tpu.trace_stop"() : () -> ()
    %cst_89 = arith.constant 2.500000e-01 : f32
    %185 = vector.broadcast %cst_89 : f32 to vector<2x8x8xf32>
    %186 = arith.mulf %184, %185 : vector<2x8x8xf32>
    %cst_90 = arith.constant dense<0xFF800000> : vector<2x8xf32>
    %187 = vector.multi_reduction <maximumf>, %186, %cst_90 [2] : vector<2x8x8xf32> to vector<2x8xf32>
    %188 = vector.shape_cast %187 : vector<2x8xf32> to vector<2x8x1xf32>
    %189 = vector.broadcast %188 : vector<2x8x1xf32> to vector<2x8x8xf32>
    %190 = arith.subf %186, %189 : vector<2x8x8xf32>
    %191 = math.exp %190 : vector<2x8x8xf32>
    %cst_91 = arith.constant dense<0.000000e+00> : vector<2x8xf32>
    %192 = vector.multi_reduction <add>, %191, %cst_91 [2] : vector<2x8x8xf32> to vector<2x8xf32>
    %193 = vector.shape_cast %192 : vector<2x8xf32> to vector<2x8x1xf32>
    %194 = vector.broadcast %193 : vector<2x8x1xf32> to vector<2x8x8xf32>
    %195 = arith.divf %191, %194 : vector<2x8x8xf32>
    "tpu.trace_start"() <{level = 10 : i32, message = "bts,bsd->btd"}> : () -> ()
    %cst_92 = arith.constant dense<0.000000e+00> : vector<2x8x16xf32>
    %196 = tpu.matmul %195, %183, %cst_92 {dimension_numbers = #tpu.dot_dimension_numbers<[2], [1], [1], [2], [0, 0, 0, 1, 1, 2], [0], [0]>} : vector<2x8x8xf32>, vector<2x8x16xf32>, vector<2x8x16xf32> -> vector<2x8x16xf32>
    "tpu.trace_stop"() : () -> ()
    %197 = vector.extract_strided_slice %176 {offsets = [0, 0, 16], sizes = [2, 8, 16], strides = [1, 1, 1]} : vector<2x8x64xf32> to vector<2x8x16xf32>
    %198 = vector.extract_strided_slice %178 {offsets = [0, 0, 16], sizes = [2, 8, 16], strides = [1, 1, 1]} : vector<2x8x64xf32> to vector<2x8x16xf32>
    %199 = vector.extract_strided_slice %180 {offsets = [0, 0, 16], sizes = [2, 8, 16], strides = [1, 1, 1]} : vector<2x8x64xf32> to vector<2x8x16xf32>
    "tpu.trace_start"() <{level = 10 : i32, message = "btd,bsd->bts"}> : () -> ()
    %cst_93 = arith.constant dense<0.000000e+00> : vector<2x8x8xf32>
    %200 = tpu.matmul %197, %198, %cst_93 {dimension_numbers = #tpu.dot_dimension_numbers<[2], [2], [1], [1], [0, 0, 0, 1, 1, 1], [0], [0]>} : vector<2x8x16xf32>, vector<2x8x16xf32>, vector<2x8x8xf32> -> vector<2x8x8xf32>
    "tpu.trace_stop"() : () -> ()
    %cst_94 = arith.constant 2.500000e-01 : f32
    %201 = vector.broadcast %cst_94 : f32 to vector<2x8x8xf32>
    %202 = arith.mulf %200, %201 : vector<2x8x8xf32>
    %cst_95 = arith.constant dense<0xFF800000> : vector<2x8xf32>
    %203 = vector.multi_reduction <maximumf>, %202, %cst_95 [2] : vector<2x8x8xf32> to vector<2x8xf32>
    %204 = vector.shape_cast %203 : vector<2x8xf32> to vector<2x8x1xf32>
    %205 = vector.broadcast %204 : vector<2x8x1xf32> to vector<2x8x8xf32>
    %206 = arith.subf %202, %205 : vector<2x8x8xf32>
    %207 = math.exp %206 : vector<2x8x8xf32>
    %cst_96 = arith.constant dense<0.000000e+00> : vector<2x8xf32>
    %208 = vector.multi_reduction <add>, %207, %cst_96 [2] : vector<2x8x8xf32> to vector<2x8xf32>
    %209 = vector.shape_cast %208 : vector<2x8xf32> to vector<2x8x1xf32>
    %210 = vector.broadcast %209 : vector<2x8x1xf32> to vector<2x8x8xf32>
    %211 = arith.divf %207, %210 : vector<2x8x8xf32>
    "tpu.trace_start"() <{level = 10 : i32, message = "bts,bsd->btd"}> : () -> ()
    %cst_97 = arith.constant dense<0.000000e+00> : vector<2x8x16xf32>
    %212 = tpu.matmul %211, %199, %cst_97 {dimension_numbers = #tpu.dot_dimension_numbers<[2], [1], [1], [2], [0, 0, 0, 1, 1, 2], [0], [0]>} : vector<2x8x8xf32>, vector<2x8x16xf32>, vector<2x8x16xf32> -> vector<2x8x16xf32>
    "tpu.trace_stop"() : () -> ()
    %213 = vector.extract_strided_slice %176 {offsets = [0, 0, 32], sizes = [2, 8, 16], strides = [1, 1, 1]} : vector<2x8x64xf32> to vector<2x8x16xf32>
    %214 = vector.extract_strided_slice %178 {offsets = [0, 0, 32], sizes = [2, 8, 16], strides = [1, 1, 1]} : vector<2x8x64xf32> to vector<2x8x16xf32>
    %215 = vector.extract_strided_slice %180 {offsets = [0, 0, 32], sizes = [2, 8, 16], strides = [1, 1, 1]} : vector<2x8x64xf32> to vector<2x8x16xf32>
    "tpu.trace_start"() <{level = 10 : i32, message = "btd,bsd->bts"}> : () -> ()
    %cst_98 = arith.constant dense<0.000000e+00> : vector<2x8x8xf32>
    %216 = tpu.matmul %213, %214, %cst_98 {dimension_numbers = #tpu.dot_dimension_numbers<[2], [2], [1], [1], [0, 0, 0, 1, 1, 1], [0], [0]>} : vector<2x8x16xf32>, vector<2x8x16xf32>, vector<2x8x8xf32> -> vector<2x8x8xf32>
    "tpu.trace_stop"() : () -> ()
    %cst_99 = arith.constant 2.500000e-01 : f32
    %217 = vector.broadcast %cst_99 : f32 to vector<2x8x8xf32>
    %218 = arith.mulf %216, %217 : vector<2x8x8xf32>
    %cst_100 = arith.constant dense<0xFF800000> : vector<2x8xf32>
    %219 = vector.multi_reduction <maximumf>, %218, %cst_100 [2] : vector<2x8x8xf32> to vector<2x8xf32>
    %220 = vector.shape_cast %219 : vector<2x8xf32> to vector<2x8x1xf32>
    %221 = vector.broadcast %220 : vector<2x8x1xf32> to vector<2x8x8xf32>
    %222 = arith.subf %218, %221 : vector<2x8x8xf32>
    %223 = math.exp %222 : vector<2x8x8xf32>
    %cst_101 = arith.constant dense<0.000000e+00> : vector<2x8xf32>
    %224 = vector.multi_reduction <add>, %223, %cst_101 [2] : vector<2x8x8xf32> to vector<2x8xf32>
    %225 = vector.shape_cast %224 : vector<2x8xf32> to vector<2x8x1xf32>
    %226 = vector.broadcast %225 : vector<2x8x1xf32> to vector<2x8x8xf32>
    %227 = arith.divf %223, %226 : vector<2x8x8xf32>
    "tpu.trace_start"() <{level = 10 : i32, message = "bts,bsd->btd"}> : () -> ()
    %cst_102 = arith.constant dense<0.000000e+00> : vector<2x8x16xf32>
    %228 = tpu.matmul %227, %215, %cst_102 {dimension_numbers = #tpu.dot_dimension_numbers<[2], [1], [1], [2], [0, 0, 0, 1, 1, 2], [0], [0]>} : vector<2x8x8xf32>, vector<2x8x16xf32>, vector<2x8x16xf32> -> vector<2x8x16xf32>
    "tpu.trace_stop"() : () -> ()
    %229 = vector.extract_strided_slice %176 {offsets = [0, 0, 48], sizes = [2, 8, 16], strides = [1, 1, 1]} : vector<2x8x64xf32> to vector<2x8x16xf32>
    %230 = vector.extract_strided_slice %178 {offsets = [0, 0, 48], sizes = [2, 8, 16], strides = [1, 1, 1]} : vector<2x8x64xf32> to vector<2x8x16xf32>
    %231 = vector.extract_strided_slice %180 {offsets = [0, 0, 48], sizes = [2, 8, 16], strides = [1, 1, 1]} : vector<2x8x64xf32> to vector<2x8x16xf32>
    "tpu.trace_start"() <{level = 10 : i32, message = "btd,bsd->bts"}> : () -> ()
    %cst_103 = arith.constant dense<0.000000e+00> : vector<2x8x8xf32>
    %232 = tpu.matmul %229, %230, %cst_103 {dimension_numbers = #tpu.dot_dimension_numbers<[2], [2], [1], [1], [0, 0, 0, 1, 1, 1], [0], [0]>} : vector<2x8x16xf32>, vector<2x8x16xf32>, vector<2x8x8xf32> -> vector<2x8x8xf32>
    "tpu.trace_stop"() : () -> ()
    %cst_104 = arith.constant 2.500000e-01 : f32
    %233 = vector.broadcast %cst_104 : f32 to vector<2x8x8xf32>
    %234 = arith.mulf %232, %233 : vector<2x8x8xf32>
    %cst_105 = arith.constant dense<0xFF800000> : vector<2x8xf32>
    %235 = vector.multi_reduction <maximumf>, %234, %cst_105 [2] : vector<2x8x8xf32> to vector<2x8xf32>
    %236 = vector.shape_cast %235 : vector<2x8xf32> to vector<2x8x1xf32>
    %237 = vector.broadcast %236 : vector<2x8x1xf32> to vector<2x8x8xf32>
    %238 = arith.subf %234, %237 : vector<2x8x8xf32>
    %239 = math.exp %238 : vector<2x8x8xf32>
    %cst_106 = arith.constant dense<0.000000e+00> : vector<2x8xf32>
    %240 = vector.multi_reduction <add>, %239, %cst_106 [2] : vector<2x8x8xf32> to vector<2x8xf32>
    %241 = vector.shape_cast %240 : vector<2x8xf32> to vector<2x8x1xf32>
    %242 = vector.broadcast %241 : vector<2x8x1xf32> to vector<2x8x8xf32>
    %243 = arith.divf %239, %242 : vector<2x8x8xf32>
    "tpu.trace_start"() <{level = 10 : i32, message = "bts,bsd->btd"}> : () -> ()
    %cst_107 = arith.constant dense<0.000000e+00> : vector<2x8x16xf32>
    %244 = tpu.matmul %243, %231, %cst_107 {dimension_numbers = #tpu.dot_dimension_numbers<[2], [1], [1], [2], [0, 0, 0, 1, 1, 2], [0], [0]>} : vector<2x8x8xf32>, vector<2x8x16xf32>, vector<2x8x16xf32> -> vector<2x8x16xf32>
    "tpu.trace_stop"() : () -> ()
    %245 = tpu.concatenate %196, %212, %228, %244 in 2 : vector<2x8x16xf32>, vector<2x8x16xf32>, vector<2x8x16xf32>, vector<2x8x16xf32> -> vector<2x8x64xf32>
    %246 = vector.shape_cast %245 : vector<2x8x64xf32> to vector<16x64xf32>
    %c1_108 = arith.constant 1 : index
    %c0_109 = arith.constant 0 : index
    %c0_110 = arith.constant 0 : index
    %247 = vector.load %arg11[%c1_108, %c0_109, %c0_110] : memref<3x64x64xf32, #tpu.memory_space<vmem>>, vector<1x64x64xf32>
    %248 = vector.shape_cast %247 : vector<1x64x64xf32> to vector<64x64xf32>
    %cst_111 = arith.constant dense<0.000000e+00> : vector<16x64xf32>
    %249 = tpu.matmul %246, %248, %cst_111 {dimension_numbers = #tpu.dot_dimension_numbers<[1], [0], [0], [1], [0, 0, 1, 1], [], []>} : vector<16x64xf32>, vector<64x64xf32>, vector<16x64xf32> -> vector<16x64xf32>
    %c1_112 = arith.constant 1 : index
    %c0_113 = arith.constant 0 : index
    %c0_114 = arith.constant 0 : index
    %250 = vector.load %arg12[%c1_112, %c0_113, %c0_114] : memref<3x1x64xf32, #tpu.memory_space<vmem>>, vector<1x1x64xf32>
    %251 = vector.shape_cast %250 : vector<1x1x64xf32> to vector<1x64xf32>
    %252 = vector.broadcast %251 : vector<1x64xf32> to vector<16x64xf32>
    %253 = arith.addf %249, %252 : vector<16x64xf32>
    %254 = arith.addf %167, %253 : vector<16x64xf32>
    %c1_115 = arith.constant 1 : index
    %c0_116 = arith.constant 0 : index
    %c0_117 = arith.constant 0 : index
    %255 = vector.load %arg13[%c1_115, %c0_116, %c0_117] : memref<3x1x64xf32, #tpu.memory_space<vmem>>, vector<1x1x64xf32>
    %256 = vector.shape_cast %255 : vector<1x1x64xf32> to vector<1x64xf32>
    %c1_118 = arith.constant 1 : index
    %c0_119 = arith.constant 0 : index
    %c0_120 = arith.constant 0 : index
    %257 = vector.load %arg14[%c1_118, %c0_119, %c0_120] : memref<3x1x64xf32, #tpu.memory_space<vmem>>, vector<1x1x64xf32>
    %258 = vector.shape_cast %257 : vector<1x1x64xf32> to vector<1x64xf32>
    %cst_121 = arith.constant dense<0.000000e+00> : vector<16xf32>
    %259 = vector.multi_reduction <add>, %254, %cst_121 [1] : vector<16x64xf32> to vector<16xf32>
    %260 = vector.shape_cast %259 : vector<16xf32> to vector<16x1xf32>
    %cst_122 = arith.constant 6.400000e+01 : f32
    %261 = vector.broadcast %cst_122 : f32 to vector<16x1xf32>
    %262 = arith.divf %260, %261 : vector<16x1xf32>
    %263 = vector.broadcast %262 : vector<16x1xf32> to vector<16x64xf32>
    %264 = arith.subf %254, %263 : vector<16x64xf32>
    %265 = arith.mulf %264, %264 : vector<16x64xf32>
    %cst_123 = arith.constant dense<0.000000e+00> : vector<16xf32>
    %266 = vector.multi_reduction <add>, %265, %cst_123 [1] : vector<16x64xf32> to vector<16xf32>
    %267 = vector.shape_cast %266 : vector<16xf32> to vector<16x1xf32>
    %cst_124 = arith.constant 6.400000e+01 : f32
    %268 = vector.broadcast %cst_124 : f32 to vector<16x1xf32>
    %269 = arith.divf %267, %268 : vector<16x1xf32>
    %270 = vector.broadcast %262 : vector<16x1xf32> to vector<16x64xf32>
    %271 = arith.subf %254, %270 : vector<16x64xf32>
    %cst_125 = arith.constant 9.99999974E-6 : f32
    %272 = vector.broadcast %cst_125 : f32 to vector<16x1xf32>
    %273 = arith.addf %269, %272 : vector<16x1xf32>
    %274 = math.rsqrt %273 : vector<16x1xf32>
    %275 = vector.broadcast %274 : vector<16x1xf32> to vector<16x64xf32>
    %276 = arith.mulf %271, %275 : vector<16x64xf32>
    %277 = vector.broadcast %256 : vector<1x64xf32> to vector<16x64xf32>
    %278 = arith.mulf %276, %277 : vector<16x64xf32>
    %279 = vector.broadcast %258 : vector<1x64xf32> to vector<16x64xf32>
    %280 = arith.addf %278, %279 : vector<16x64xf32>
    %c1_126 = arith.constant 1 : index
    %c0_127 = arith.constant 0 : index
    %c0_128 = arith.constant 0 : index
    %281 = vector.load %arg15[%c1_126, %c0_127, %c0_128] : memref<3x64x128xf32, #tpu.memory_space<vmem>>, vector<1x64x128xf32>
    %282 = vector.shape_cast %281 : vector<1x64x128xf32> to vector<64x128xf32>
    %cst_129 = arith.constant dense<0.000000e+00> : vector<16x128xf32>
    %283 = tpu.matmul %280, %282, %cst_129 {dimension_numbers = #tpu.dot_dimension_numbers<[1], [0], [0], [1], [0, 0, 1, 1], [], []>} : vector<16x64xf32>, vector<64x128xf32>, vector<16x128xf32> -> vector<16x128xf32>
    %c1_130 = arith.constant 1 : index
    %c0_131 = arith.constant 0 : index
    %c0_132 = arith.constant 0 : index
    %284 = vector.load %arg16[%c1_130, %c0_131, %c0_132] : memref<3x1x128xf32, #tpu.memory_space<vmem>>, vector<1x1x128xf32>
    %285 = vector.shape_cast %284 : vector<1x1x128xf32> to vector<1x128xf32>
    %286 = vector.broadcast %285 : vector<1x128xf32> to vector<16x128xf32>
    %287 = arith.addf %283, %286 : vector<16x128xf32>
    %cst_133 = arith.constant 0.000000e+00 : f32
    %288 = vector.broadcast %cst_133 : f32 to vector<16x128xf32>
    %289 = arith.maximumf %287, %288 : vector<16x128xf32>
    %c1_134 = arith.constant 1 : index
    %c0_135 = arith.constant 0 : index
    %c0_136 = arith.constant 0 : index
    %290 = vector.load %arg17[%c1_134, %c0_135, %c0_136] : memref<3x128x64xf32, #tpu.memory_space<vmem>>, vector<1x128x64xf32>
    %291 = vector.shape_cast %290 : vector<1x128x64xf32> to vector<128x64xf32>
    %cst_137 = arith.constant dense<0.000000e+00> : vector<16x64xf32>
    %292 = tpu.matmul %289, %291, %cst_137 {dimension_numbers = #tpu.dot_dimension_numbers<[1], [0], [0], [1], [0, 0, 1, 1], [], []>} : vector<16x128xf32>, vector<128x64xf32>, vector<16x64xf32> -> vector<16x64xf32>
    %c1_138 = arith.constant 1 : index
    %c0_139 = arith.constant 0 : index
    %c0_140 = arith.constant 0 : index
    %293 = vector.load %arg18[%c1_138, %c0_139, %c0_140] : memref<3x1x64xf32, #tpu.memory_space<vmem>>, vector<1x1x64xf32>
    %294 = vector.shape_cast %293 : vector<1x1x64xf32> to vector<1x64xf32>
    %295 = vector.broadcast %294 : vector<1x64xf32> to vector<16x64xf32>
    %296 = arith.addf %292, %295 : vector<16x64xf32>
    %297 = arith.addf %280, %296 : vector<16x64xf32>
    %c1_141 = arith.constant 1 : index
    %c0_142 = arith.constant 0 : index
    %c0_143 = arith.constant 0 : index
    %298 = vector.load %arg19[%c1_141, %c0_142, %c0_143] : memref<3x1x64xf32, #tpu.memory_space<vmem>>, vector<1x1x64xf32>
    %299 = vector.shape_cast %298 : vector<1x1x64xf32> to vector<1x64xf32>
    %c1_144 = arith.constant 1 : index
    %c0_145 = arith.constant 0 : index
    %c0_146 = arith.constant 0 : index
    %300 = vector.load %arg20[%c1_144, %c0_145, %c0_146] : memref<3x1x64xf32, #tpu.memory_space<vmem>>, vector<1x1x64xf32>
    %301 = vector.shape_cast %300 : vector<1x1x64xf32> to vector<1x64xf32>
    %cst_147 = arith.constant dense<0.000000e+00> : vector<16xf32>
    %302 = vector.multi_reduction <add>, %297, %cst_147 [1] : vector<16x64xf32> to vector<16xf32>
    %303 = vector.shape_cast %302 : vector<16xf32> to vector<16x1xf32>
    %cst_148 = arith.constant 6.400000e+01 : f32
    %304 = vector.broadcast %cst_148 : f32 to vector<16x1xf32>
    %305 = arith.divf %303, %304 : vector<16x1xf32>
    %306 = vector.broadcast %305 : vector<16x1xf32> to vector<16x64xf32>
    %307 = arith.subf %297, %306 : vector<16x64xf32>
    %308 = arith.mulf %307, %307 : vector<16x64xf32>
    %cst_149 = arith.constant dense<0.000000e+00> : vector<16xf32>
    %309 = vector.multi_reduction <add>, %308, %cst_149 [1] : vector<16x64xf32> to vector<16xf32>
    %310 = vector.shape_cast %309 : vector<16xf32> to vector<16x1xf32>
    %cst_150 = arith.constant 6.400000e+01 : f32
    %311 = vector.broadcast %cst_150 : f32 to vector<16x1xf32>
    %312 = arith.divf %310, %311 : vector<16x1xf32>
    %313 = vector.broadcast %305 : vector<16x1xf32> to vector<16x64xf32>
    %314 = arith.subf %297, %313 : vector<16x64xf32>
    %cst_151 = arith.constant 9.99999974E-6 : f32
    %315 = vector.broadcast %cst_151 : f32 to vector<16x1xf32>
    %316 = arith.addf %312, %315 : vector<16x1xf32>
    %317 = math.rsqrt %316 : vector<16x1xf32>
    %318 = vector.broadcast %317 : vector<16x1xf32> to vector<16x64xf32>
    %319 = arith.mulf %314, %318 : vector<16x64xf32>
    %320 = vector.broadcast %299 : vector<1x64xf32> to vector<16x64xf32>
    %321 = arith.mulf %319, %320 : vector<16x64xf32>
    %322 = vector.broadcast %301 : vector<1x64xf32> to vector<16x64xf32>
    %323 = arith.addf %321, %322 : vector<16x64xf32>
    %c2 = arith.constant 2 : index
    %c0_152 = arith.constant 0 : index
    %c0_153 = arith.constant 0 : index
    %324 = vector.load %arg9[%c2, %c0_152, %c0_153] : memref<3x64x192xf32, #tpu.memory_space<vmem>>, vector<1x64x192xf32>
    %325 = vector.shape_cast %324 : vector<1x64x192xf32> to vector<64x192xf32>
    %cst_154 = arith.constant dense<0.000000e+00> : vector<16x192xf32>
    %326 = tpu.matmul %323, %325, %cst_154 {dimension_numbers = #tpu.dot_dimension_numbers<[1], [0], [0], [1], [0, 0, 1, 1], [], []>} : vector<16x64xf32>, vector<64x192xf32>, vector<16x192xf32> -> vector<16x192xf32>
    %c2_155 = arith.constant 2 : index
    %c0_156 = arith.constant 0 : index
    %c0_157 = arith.constant 0 : index
    %327 = vector.load %arg10[%c2_155, %c0_156, %c0_157] : memref<3x1x192xf32, #tpu.memory_space<vmem>>, vector<1x1x192xf32>
    %328 = vector.shape_cast %327 : vector<1x1x192xf32> to vector<1x192xf32>
    %329 = vector.broadcast %328 : vector<1x192xf32> to vector<16x192xf32>
    %330 = arith.addf %326, %329 : vector<16x192xf32>
    %331 = vector.extract_strided_slice %330 {offsets = [0, 0], sizes = [16, 64], strides = [1, 1]} : vector<16x192xf32> to vector<16x64xf32>
    %332 = vector.shape_cast %331 : vector<16x64xf32> to vector<2x8x64xf32>
    %333 = vector.extract_strided_slice %330 {offsets = [0, 64], sizes = [16, 64], strides = [1, 1]} : vector<16x192xf32> to vector<16x64xf32>
    %334 = vector.shape_cast %333 : vector<16x64xf32> to vector<2x8x64xf32>
    %335 = vector.extract_strided_slice %330 {offsets = [0, 128], sizes = [16, 64], strides = [1, 1]} : vector<16x192xf32> to vector<16x64xf32>
    %336 = vector.shape_cast %335 : vector<16x64xf32> to vector<2x8x64xf32>
    %337 = vector.extract_strided_slice %332 {offsets = [0, 0, 0], sizes = [2, 8, 16], strides = [1, 1, 1]} : vector<2x8x64xf32> to vector<2x8x16xf32>
    %338 = vector.extract_strided_slice %334 {offsets = [0, 0, 0], sizes = [2, 8, 16], strides = [1, 1, 1]} : vector<2x8x64xf32> to vector<2x8x16xf32>
    %339 = vector.extract_strided_slice %336 {offsets = [0, 0, 0], sizes = [2, 8, 16], strides = [1, 1, 1]} : vector<2x8x64xf32> to vector<2x8x16xf32>
    "tpu.trace_start"() <{level = 10 : i32, message = "btd,bsd->bts"}> : () -> ()
    %cst_158 = arith.constant dense<0.000000e+00> : vector<2x8x8xf32>
    %340 = tpu.matmul %337, %338, %cst_158 {dimension_numbers = #tpu.dot_dimension_numbers<[2], [2], [1], [1], [0, 0, 0, 1, 1, 1], [0], [0]>} : vector<2x8x16xf32>, vector<2x8x16xf32>, vector<2x8x8xf32> -> vector<2x8x8xf32>
    "tpu.trace_stop"() : () -> ()
    %cst_159 = arith.constant 2.500000e-01 : f32
    %341 = vector.broadcast %cst_159 : f32 to vector<2x8x8xf32>
    %342 = arith.mulf %340, %341 : vector<2x8x8xf32>
    %cst_160 = arith.constant dense<0xFF800000> : vector<2x8xf32>
    %343 = vector.multi_reduction <maximumf>, %342, %cst_160 [2] : vector<2x8x8xf32> to vector<2x8xf32>
    %344 = vector.shape_cast %343 : vector<2x8xf32> to vector<2x8x1xf32>
    %345 = vector.broadcast %344 : vector<2x8x1xf32> to vector<2x8x8xf32>
    %346 = arith.subf %342, %345 : vector<2x8x8xf32>
    %347 = math.exp %346 : vector<2x8x8xf32>
    %cst_161 = arith.constant dense<0.000000e+00> : vector<2x8xf32>
    %348 = vector.multi_reduction <add>, %347, %cst_161 [2] : vector<2x8x8xf32> to vector<2x8xf32>
    %349 = vector.shape_cast %348 : vector<2x8xf32> to vector<2x8x1xf32>
    %350 = vector.broadcast %349 : vector<2x8x1xf32> to vector<2x8x8xf32>
    %351 = arith.divf %347, %350 : vector<2x8x8xf32>
    "tpu.trace_start"() <{level = 10 : i32, message = "bts,bsd->btd"}> : () -> ()
    %cst_162 = arith.constant dense<0.000000e+00> : vector<2x8x16xf32>
    %352 = tpu.matmul %351, %339, %cst_162 {dimension_numbers = #tpu.dot_dimension_numbers<[2], [1], [1], [2], [0, 0, 0, 1, 1, 2], [0], [0]>} : vector<2x8x8xf32>, vector<2x8x16xf32>, vector<2x8x16xf32> -> vector<2x8x16xf32>
    "tpu.trace_stop"() : () -> ()
    %353 = vector.extract_strided_slice %332 {offsets = [0, 0, 16], sizes = [2, 8, 16], strides = [1, 1, 1]} : vector<2x8x64xf32> to vector<2x8x16xf32>
    %354 = vector.extract_strided_slice %334 {offsets = [0, 0, 16], sizes = [2, 8, 16], strides = [1, 1, 1]} : vector<2x8x64xf32> to vector<2x8x16xf32>
    %355 = vector.extract_strided_slice %336 {offsets = [0, 0, 16], sizes = [2, 8, 16], strides = [1, 1, 1]} : vector<2x8x64xf32> to vector<2x8x16xf32>
    "tpu.trace_start"() <{level = 10 : i32, message = "btd,bsd->bts"}> : () -> ()
    %cst_163 = arith.constant dense<0.000000e+00> : vector<2x8x8xf32>
    %356 = tpu.matmul %353, %354, %cst_163 {dimension_numbers = #tpu.dot_dimension_numbers<[2], [2], [1], [1], [0, 0, 0, 1, 1, 1], [0], [0]>} : vector<2x8x16xf32>, vector<2x8x16xf32>, vector<2x8x8xf32> -> vector<2x8x8xf32>
    "tpu.trace_stop"() : () -> ()
    %cst_164 = arith.constant 2.500000e-01 : f32
    %357 = vector.broadcast %cst_164 : f32 to vector<2x8x8xf32>
    %358 = arith.mulf %356, %357 : vector<2x8x8xf32>
    %cst_165 = arith.constant dense<0xFF800000> : vector<2x8xf32>
    %359 = vector.multi_reduction <maximumf>, %358, %cst_165 [2] : vector<2x8x8xf32> to vector<2x8xf32>
    %360 = vector.shape_cast %359 : vector<2x8xf32> to vector<2x8x1xf32>
    %361 = vector.broadcast %360 : vector<2x8x1xf32> to vector<2x8x8xf32>
    %362 = arith.subf %358, %361 : vector<2x8x8xf32>
    %363 = math.exp %362 : vector<2x8x8xf32>
    %cst_166 = arith.constant dense<0.000000e+00> : vector<2x8xf32>
    %364 = vector.multi_reduction <add>, %363, %cst_166 [2] : vector<2x8x8xf32> to vector<2x8xf32>
    %365 = vector.shape_cast %364 : vector<2x8xf32> to vector<2x8x1xf32>
    %366 = vector.broadcast %365 : vector<2x8x1xf32> to vector<2x8x8xf32>
    %367 = arith.divf %363, %366 : vector<2x8x8xf32>
    "tpu.trace_start"() <{level = 10 : i32, message = "bts,bsd->btd"}> : () -> ()
    %cst_167 = arith.constant dense<0.000000e+00> : vector<2x8x16xf32>
    %368 = tpu.matmul %367, %355, %cst_167 {dimension_numbers = #tpu.dot_dimension_numbers<[2], [1], [1], [2], [0, 0, 0, 1, 1, 2], [0], [0]>} : vector<2x8x8xf32>, vector<2x8x16xf32>, vector<2x8x16xf32> -> vector<2x8x16xf32>
    "tpu.trace_stop"() : () -> ()
    %369 = vector.extract_strided_slice %332 {offsets = [0, 0, 32], sizes = [2, 8, 16], strides = [1, 1, 1]} : vector<2x8x64xf32> to vector<2x8x16xf32>
    %370 = vector.extract_strided_slice %334 {offsets = [0, 0, 32], sizes = [2, 8, 16], strides = [1, 1, 1]} : vector<2x8x64xf32> to vector<2x8x16xf32>
    %371 = vector.extract_strided_slice %336 {offsets = [0, 0, 32], sizes = [2, 8, 16], strides = [1, 1, 1]} : vector<2x8x64xf32> to vector<2x8x16xf32>
    "tpu.trace_start"() <{level = 10 : i32, message = "btd,bsd->bts"}> : () -> ()
    %cst_168 = arith.constant dense<0.000000e+00> : vector<2x8x8xf32>
    %372 = tpu.matmul %369, %370, %cst_168 {dimension_numbers = #tpu.dot_dimension_numbers<[2], [2], [1], [1], [0, 0, 0, 1, 1, 1], [0], [0]>} : vector<2x8x16xf32>, vector<2x8x16xf32>, vector<2x8x8xf32> -> vector<2x8x8xf32>
    "tpu.trace_stop"() : () -> ()
    %cst_169 = arith.constant 2.500000e-01 : f32
    %373 = vector.broadcast %cst_169 : f32 to vector<2x8x8xf32>
    %374 = arith.mulf %372, %373 : vector<2x8x8xf32>
    %cst_170 = arith.constant dense<0xFF800000> : vector<2x8xf32>
    %375 = vector.multi_reduction <maximumf>, %374, %cst_170 [2] : vector<2x8x8xf32> to vector<2x8xf32>
    %376 = vector.shape_cast %375 : vector<2x8xf32> to vector<2x8x1xf32>
    %377 = vector.broadcast %376 : vector<2x8x1xf32> to vector<2x8x8xf32>
    %378 = arith.subf %374, %377 : vector<2x8x8xf32>
    %379 = math.exp %378 : vector<2x8x8xf32>
    %cst_171 = arith.constant dense<0.000000e+00> : vector<2x8xf32>
    %380 = vector.multi_reduction <add>, %379, %cst_171 [2] : vector<2x8x8xf32> to vector<2x8xf32>
    %381 = vector.shape_cast %380 : vector<2x8xf32> to vector<2x8x1xf32>
    %382 = vector.broadcast %381 : vector<2x8x1xf32> to vector<2x8x8xf32>
    %383 = arith.divf %379, %382 : vector<2x8x8xf32>
    "tpu.trace_start"() <{level = 10 : i32, message = "bts,bsd->btd"}> : () -> ()
    %cst_172 = arith.constant dense<0.000000e+00> : vector<2x8x16xf32>
    %384 = tpu.matmul %383, %371, %cst_172 {dimension_numbers = #tpu.dot_dimension_numbers<[2], [1], [1], [2], [0, 0, 0, 1, 1, 2], [0], [0]>} : vector<2x8x8xf32>, vector<2x8x16xf32>, vector<2x8x16xf32> -> vector<2x8x16xf32>
    "tpu.trace_stop"() : () -> ()
    %385 = vector.extract_strided_slice %332 {offsets = [0, 0, 48], sizes = [2, 8, 16], strides = [1, 1, 1]} : vector<2x8x64xf32> to vector<2x8x16xf32>
    %386 = vector.extract_strided_slice %334 {offsets = [0, 0, 48], sizes = [2, 8, 16], strides = [1, 1, 1]} : vector<2x8x64xf32> to vector<2x8x16xf32>
    %387 = vector.extract_strided_slice %336 {offsets = [0, 0, 48], sizes = [2, 8, 16], strides = [1, 1, 1]} : vector<2x8x64xf32> to vector<2x8x16xf32>
    "tpu.trace_start"() <{level = 10 : i32, message = "btd,bsd->bts"}> : () -> ()
    %cst_173 = arith.constant dense<0.000000e+00> : vector<2x8x8xf32>
    %388 = tpu.matmul %385, %386, %cst_173 {dimension_numbers = #tpu.dot_dimension_numbers<[2], [2], [1], [1], [0, 0, 0, 1, 1, 1], [0], [0]>} : vector<2x8x16xf32>, vector<2x8x16xf32>, vector<2x8x8xf32> -> vector<2x8x8xf32>
    "tpu.trace_stop"() : () -> ()
    %cst_174 = arith.constant 2.500000e-01 : f32
    %389 = vector.broadcast %cst_174 : f32 to vector<2x8x8xf32>
    %390 = arith.mulf %388, %389 : vector<2x8x8xf32>
    %cst_175 = arith.constant dense<0xFF800000> : vector<2x8xf32>
    %391 = vector.multi_reduction <maximumf>, %390, %cst_175 [2] : vector<2x8x8xf32> to vector<2x8xf32>
    %392 = vector.shape_cast %391 : vector<2x8xf32> to vector<2x8x1xf32>
    %393 = vector.broadcast %392 : vector<2x8x1xf32> to vector<2x8x8xf32>
    %394 = arith.subf %390, %393 : vector<2x8x8xf32>
    %395 = math.exp %394 : vector<2x8x8xf32>
    %cst_176 = arith.constant dense<0.000000e+00> : vector<2x8xf32>
    %396 = vector.multi_reduction <add>, %395, %cst_176 [2] : vector<2x8x8xf32> to vector<2x8xf32>
    %397 = vector.shape_cast %396 : vector<2x8xf32> to vector<2x8x1xf32>
    %398 = vector.broadcast %397 : vector<2x8x1xf32> to vector<2x8x8xf32>
    %399 = arith.divf %395, %398 : vector<2x8x8xf32>
    "tpu.trace_start"() <{level = 10 : i32, message = "bts,bsd->btd"}> : () -> ()
    %cst_177 = arith.constant dense<0.000000e+00> : vector<2x8x16xf32>
    %400 = tpu.matmul %399, %387, %cst_177 {dimension_numbers = #tpu.dot_dimension_numbers<[2], [1], [1], [2], [0, 0, 0, 1, 1, 2], [0], [0]>} : vector<2x8x8xf32>, vector<2x8x16xf32>, vector<2x8x16xf32> -> vector<2x8x16xf32>
    "tpu.trace_stop"() : () -> ()
    %401 = tpu.concatenate %352, %368, %384, %400 in 2 : vector<2x8x16xf32>, vector<2x8x16xf32>, vector<2x8x16xf32>, vector<2x8x16xf32> -> vector<2x8x64xf32>
    %402 = vector.shape_cast %401 : vector<2x8x64xf32> to vector<16x64xf32>
    %c2_178 = arith.constant 2 : index
    %c0_179 = arith.constant 0 : index
    %c0_180 = arith.constant 0 : index
    %403 = vector.load %arg11[%c2_178, %c0_179, %c0_180] : memref<3x64x64xf32, #tpu.memory_space<vmem>>, vector<1x64x64xf32>
    %404 = vector.shape_cast %403 : vector<1x64x64xf32> to vector<64x64xf32>
    %cst_181 = arith.constant dense<0.000000e+00> : vector<16x64xf32>
    %405 = tpu.matmul %402, %404, %cst_181 {dimension_numbers = #tpu.dot_dimension_numbers<[1], [0], [0], [1], [0, 0, 1, 1], [], []>} : vector<16x64xf32>, vector<64x64xf32>, vector<16x64xf32> -> vector<16x64xf32>
    %c2_182 = arith.constant 2 : index
    %c0_183 = arith.constant 0 : index
    %c0_184 = arith.constant 0 : index
    %406 = vector.load %arg12[%c2_182, %c0_183, %c0_184] : memref<3x1x64xf32, #tpu.memory_space<vmem>>, vector<1x1x64xf32>
    %407 = vector.shape_cast %406 : vector<1x1x64xf32> to vector<1x64xf32>
    %408 = vector.broadcast %407 : vector<1x64xf32> to vector<16x64xf32>
    %409 = arith.addf %405, %408 : vector<16x64xf32>
    %410 = arith.addf %323, %409 : vector<16x64xf32>
    %c2_185 = arith.constant 2 : index
    %c0_186 = arith.constant 0 : index
    %c0_187 = arith.constant 0 : index
    %411 = vector.load %arg13[%c2_185, %c0_186, %c0_187] : memref<3x1x64xf32, #tpu.memory_space<vmem>>, vector<1x1x64xf32>
    %412 = vector.shape_cast %411 : vector<1x1x64xf32> to vector<1x64xf32>
    %c2_188 = arith.constant 2 : index
    %c0_189 = arith.constant 0 : index
    %c0_190 = arith.constant 0 : index
    %413 = vector.load %arg14[%c2_188, %c0_189, %c0_190] : memref<3x1x64xf32, #tpu.memory_space<vmem>>, vector<1x1x64xf32>
    %414 = vector.shape_cast %413 : vector<1x1x64xf32> to vector<1x64xf32>
    %cst_191 = arith.constant dense<0.000000e+00> : vector<16xf32>
    %415 = vector.multi_reduction <add>, %410, %cst_191 [1] : vector<16x64xf32> to vector<16xf32>
    %416 = vector.shape_cast %415 : vector<16xf32> to vector<16x1xf32>
    %cst_192 = arith.constant 6.400000e+01 : f32
    %417 = vector.broadcast %cst_192 : f32 to vector<16x1xf32>
    %418 = arith.divf %416, %417 : vector<16x1xf32>
    %419 = vector.broadcast %418 : vector<16x1xf32> to vector<16x64xf32>
    %420 = arith.subf %410, %419 : vector<16x64xf32>
    %421 = arith.mulf %420, %420 : vector<16x64xf32>
    %cst_193 = arith.constant dense<0.000000e+00> : vector<16xf32>
    %422 = vector.multi_reduction <add>, %421, %cst_193 [1] : vector<16x64xf32> to vector<16xf32>
    %423 = vector.shape_cast %422 : vector<16xf32> to vector<16x1xf32>
    %cst_194 = arith.constant 6.400000e+01 : f32
    %424 = vector.broadcast %cst_194 : f32 to vector<16x1xf32>
    %425 = arith.divf %423, %424 : vector<16x1xf32>
    %426 = vector.broadcast %418 : vector<16x1xf32> to vector<16x64xf32>
    %427 = arith.subf %410, %426 : vector<16x64xf32>
    %cst_195 = arith.constant 9.99999974E-6 : f32
    %428 = vector.broadcast %cst_195 : f32 to vector<16x1xf32>
    %429 = arith.addf %425, %428 : vector<16x1xf32>
    %430 = math.rsqrt %429 : vector<16x1xf32>
    %431 = vector.broadcast %430 : vector<16x1xf32> to vector<16x64xf32>
    %432 = arith.mulf %427, %431 : vector<16x64xf32>
    %433 = vector.broadcast %412 : vector<1x64xf32> to vector<16x64xf32>
    %434 = arith.mulf %432, %433 : vector<16x64xf32>
    %435 = vector.broadcast %414 : vector<1x64xf32> to vector<16x64xf32>
    %436 = arith.addf %434, %435 : vector<16x64xf32>
    %c2_196 = arith.constant 2 : index
    %c0_197 = arith.constant 0 : index
    %c0_198 = arith.constant 0 : index
    %437 = vector.load %arg15[%c2_196, %c0_197, %c0_198] : memref<3x64x128xf32, #tpu.memory_space<vmem>>, vector<1x64x128xf32>
    %438 = vector.shape_cast %437 : vector<1x64x128xf32> to vector<64x128xf32>
    %cst_199 = arith.constant dense<0.000000e+00> : vector<16x128xf32>
    %439 = tpu.matmul %436, %438, %cst_199 {dimension_numbers = #tpu.dot_dimension_numbers<[1], [0], [0], [1], [0, 0, 1, 1], [], []>} : vector<16x64xf32>, vector<64x128xf32>, vector<16x128xf32> -> vector<16x128xf32>
    %c2_200 = arith.constant 2 : index
    %c0_201 = arith.constant 0 : index
    %c0_202 = arith.constant 0 : index
    %440 = vector.load %arg16[%c2_200, %c0_201, %c0_202] : memref<3x1x128xf32, #tpu.memory_space<vmem>>, vector<1x1x128xf32>
    %441 = vector.shape_cast %440 : vector<1x1x128xf32> to vector<1x128xf32>
    %442 = vector.broadcast %441 : vector<1x128xf32> to vector<16x128xf32>
    %443 = arith.addf %439, %442 : vector<16x128xf32>
    %cst_203 = arith.constant 0.000000e+00 : f32
    %444 = vector.broadcast %cst_203 : f32 to vector<16x128xf32>
    %445 = arith.maximumf %443, %444 : vector<16x128xf32>
    %c2_204 = arith.constant 2 : index
    %c0_205 = arith.constant 0 : index
    %c0_206 = arith.constant 0 : index
    %446 = vector.load %arg17[%c2_204, %c0_205, %c0_206] : memref<3x128x64xf32, #tpu.memory_space<vmem>>, vector<1x128x64xf32>
    %447 = vector.shape_cast %446 : vector<1x128x64xf32> to vector<128x64xf32>
    %cst_207 = arith.constant dense<0.000000e+00> : vector<16x64xf32>
    %448 = tpu.matmul %445, %447, %cst_207 {dimension_numbers = #tpu.dot_dimension_numbers<[1], [0], [0], [1], [0, 0, 1, 1], [], []>} : vector<16x128xf32>, vector<128x64xf32>, vector<16x64xf32> -> vector<16x64xf32>
    %c2_208 = arith.constant 2 : index
    %c0_209 = arith.constant 0 : index
    %c0_210 = arith.constant 0 : index
    %449 = vector.load %arg18[%c2_208, %c0_209, %c0_210] : memref<3x1x64xf32, #tpu.memory_space<vmem>>, vector<1x1x64xf32>
    %450 = vector.shape_cast %449 : vector<1x1x64xf32> to vector<1x64xf32>
    %451 = vector.broadcast %450 : vector<1x64xf32> to vector<16x64xf32>
    %452 = arith.addf %448, %451 : vector<16x64xf32>
    %453 = arith.addf %436, %452 : vector<16x64xf32>
    %c2_211 = arith.constant 2 : index
    %c0_212 = arith.constant 0 : index
    %c0_213 = arith.constant 0 : index
    %454 = vector.load %arg19[%c2_211, %c0_212, %c0_213] : memref<3x1x64xf32, #tpu.memory_space<vmem>>, vector<1x1x64xf32>
    %455 = vector.shape_cast %454 : vector<1x1x64xf32> to vector<1x64xf32>
    %c2_214 = arith.constant 2 : index
    %c0_215 = arith.constant 0 : index
    %c0_216 = arith.constant 0 : index
    %456 = vector.load %arg20[%c2_214, %c0_215, %c0_216] : memref<3x1x64xf32, #tpu.memory_space<vmem>>, vector<1x1x64xf32>
    %457 = vector.shape_cast %456 : vector<1x1x64xf32> to vector<1x64xf32>
    %cst_217 = arith.constant dense<0.000000e+00> : vector<16xf32>
    %458 = vector.multi_reduction <add>, %453, %cst_217 [1] : vector<16x64xf32> to vector<16xf32>
    %459 = vector.shape_cast %458 : vector<16xf32> to vector<16x1xf32>
    %cst_218 = arith.constant 6.400000e+01 : f32
    %460 = vector.broadcast %cst_218 : f32 to vector<16x1xf32>
    %461 = arith.divf %459, %460 : vector<16x1xf32>
    %462 = vector.broadcast %461 : vector<16x1xf32> to vector<16x64xf32>
    %463 = arith.subf %453, %462 : vector<16x64xf32>
    %464 = arith.mulf %463, %463 : vector<16x64xf32>
    %cst_219 = arith.constant dense<0.000000e+00> : vector<16xf32>
    %465 = vector.multi_reduction <add>, %464, %cst_219 [1] : vector<16x64xf32> to vector<16xf32>
    %466 = vector.shape_cast %465 : vector<16xf32> to vector<16x1xf32>
    %cst_220 = arith.constant 6.400000e+01 : f32
    %467 = vector.broadcast %cst_220 : f32 to vector<16x1xf32>
    %468 = arith.divf %466, %467 : vector<16x1xf32>
    %469 = vector.broadcast %461 : vector<16x1xf32> to vector<16x64xf32>
    %470 = arith.subf %453, %469 : vector<16x64xf32>
    %cst_221 = arith.constant 9.99999974E-6 : f32
    %471 = vector.broadcast %cst_221 : f32 to vector<16x1xf32>
    %472 = arith.addf %468, %471 : vector<16x1xf32>
    %473 = math.rsqrt %472 : vector<16x1xf32>
    %474 = vector.broadcast %473 : vector<16x1xf32> to vector<16x64xf32>
    %475 = arith.mulf %470, %474 : vector<16x64xf32>
    %476 = vector.broadcast %455 : vector<1x64xf32> to vector<16x64xf32>
    %477 = arith.mulf %475, %476 : vector<16x64xf32>
    %478 = vector.broadcast %457 : vector<1x64xf32> to vector<16x64xf32>
    %479 = arith.addf %477, %478 : vector<16x64xf32>
    %c0_222 = arith.constant 0 : index
    %c0_223 = arith.constant 0 : index
    %480 = vector.load %arg3[%c0_222, %c0_223] : memref<2x16xf32, #tpu.memory_space<vmem>>, vector<2x16xf32>
    %cst_224 = arith.constant dense<0.000000e+00> : vector<2x64xf32>
    %481 = tpu.matmul %480, %479, %cst_224 {dimension_numbers = #tpu.dot_dimension_numbers<[1], [0], [0], [1], [0, 0, 1, 1], [], []>} : vector<2x16xf32>, vector<16x64xf32>, vector<2x64xf32> -> vector<2x64xf32>
    %c0_225 = arith.constant 0 : index
    %c0_226 = arith.constant 0 : index
    %482 = vector.load %arg3[%c0_225, %c0_226] : memref<2x16xf32, #tpu.memory_space<vmem>>, vector<2x16xf32>
    %cst_227 = arith.constant dense<0.000000e+00> : vector<2x16xf32>
    %483 = tpu.matmul %482, %3, %cst_227 {dimension_numbers = #tpu.dot_dimension_numbers<[1], [0], [0], [1], [0, 0, 1, 1], [], []>} : vector<2x16xf32>, vector<16x16xf32>, vector<2x16xf32> -> vector<2x16xf32>
    %c0_228 = arith.constant 0 : index
    %c0_229 = arith.constant 0 : index
    %484 = vector.load %arg7[%c0_228, %c0_229] : memref<16x64xf32, #tpu.memory_space<vmem>>, vector<16x64xf32>
    %cst_230 = arith.constant dense<0.000000e+00> : vector<2x64xf32>
    %485 = tpu.matmul %483, %484, %cst_230 {dimension_numbers = #tpu.dot_dimension_numbers<[1], [0], [0], [1], [0, 0, 1, 1], [], []>} : vector<2x16xf32>, vector<16x64xf32>, vector<2x64xf32> -> vector<2x64xf32>
    %c0_231 = arith.constant 0 : index
    %c0_232 = arith.constant 0 : index
    %486 = vector.load %arg8[%c0_231, %c0_232] : memref<1x64xf32, #tpu.memory_space<vmem>>, vector<1x64xf32>
    %487 = vector.broadcast %486 : vector<1x64xf32> to vector<2x64xf32>
    %488 = arith.addf %485, %487 : vector<2x64xf32>
    %489 = tpu.concatenate %481, %488 in 1 : vector<2x64xf32>, vector<2x64xf32> -> vector<2x128xf32>
    %c0_233 = arith.constant 0 : index
    %c0_234 = arith.constant 0 : index
    %490 = vector.load %arg21[%c0_233, %c0_234] : memref<128x64xf32, #tpu.memory_space<vmem>>, vector<128x64xf32>
    %cst_235 = arith.constant dense<0.000000e+00> : vector<2x64xf32>
    %491 = tpu.matmul %489, %490, %cst_235 {dimension_numbers = #tpu.dot_dimension_numbers<[1], [0], [0], [1], [0, 0, 1, 1], [], []>} : vector<2x128xf32>, vector<128x64xf32>, vector<2x64xf32> -> vector<2x64xf32>
    %c0_236 = arith.constant 0 : index
    %c0_237 = arith.constant 0 : index
    %492 = vector.load %arg22[%c0_236, %c0_237] : memref<1x64xf32, #tpu.memory_space<vmem>>, vector<1x64xf32>
    %493 = vector.broadcast %492 : vector<1x64xf32> to vector<2x64xf32>
    %494 = arith.addf %491, %493 : vector<2x64xf32>
    %cst_238 = arith.constant 5.000000e-01 : f32
    %495 = vector.broadcast %cst_238 : f32 to vector<2x64xf32>
    %496 = arith.mulf %495, %494 : vector<2x64xf32>
    %cst_239 = arith.constant 0.707106769 : f32
    %497 = vector.broadcast %cst_239 : f32 to vector<2x64xf32>
    %498 = arith.mulf %494, %497 : vector<2x64xf32>
    %cst_240 = arith.constant 0.000000e+00 : f32
    %499 = vector.broadcast %cst_240 : f32 to vector<2x64xf32>
    %500 = arith.cmpf oge, %498, %499 : vector<2x64xf32>
    %cst_241 = arith.constant 1.000000e+00 : f32
    %cst_242 = arith.constant -1.000000e+00 : f32
    %501 = vector.broadcast %cst_241 : f32 to vector<2x64xf32>
    %502 = vector.broadcast %cst_242 : f32 to vector<2x64xf32>
    %503 = arith.select %500, %501, %502 : vector<2x64xi1>, vector<2x64xf32>
    %504 = math.absf %498 : vector<2x64xf32>
    %cst_243 = arith.constant 0.327591091 : f32
    %505 = vector.broadcast %cst_243 : f32 to vector<2x64xf32>
    %506 = arith.mulf %505, %504 : vector<2x64xf32>
    %cst_244 = arith.constant 1.000000e+00 : f32
    %507 = vector.broadcast %cst_244 : f32 to vector<2x64xf32>
    %508 = arith.addf %507, %506 : vector<2x64xf32>
    %cst_245 = arith.constant 1.000000e+00 : f32
    %509 = vector.broadcast %cst_245 : f32 to vector<2x64xf32>
    %510 = arith.divf %509, %508 : vector<2x64xf32>
    %cst_246 = arith.constant 1.06140542 : f32
    %511 = vector.broadcast %cst_246 : f32 to vector<2x64xf32>
    %512 = arith.mulf %511, %510 : vector<2x64xf32>
    %cst_247 = arith.constant -1.45315206 : f32
    %513 = vector.broadcast %cst_247 : f32 to vector<2x64xf32>
    %514 = arith.addf %512, %513 : vector<2x64xf32>
    %515 = arith.mulf %514, %510 : vector<2x64xf32>
    %cst_248 = arith.constant 1.42141378 : f32
    %516 = vector.broadcast %cst_248 : f32 to vector<2x64xf32>
    %517 = arith.addf %515, %516 : vector<2x64xf32>
    %518 = arith.mulf %517, %510 : vector<2x64xf32>
    %cst_249 = arith.constant -0.284496725 : f32
    %519 = vector.broadcast %cst_249 : f32 to vector<2x64xf32>
    %520 = arith.addf %518, %519 : vector<2x64xf32>
    %521 = arith.mulf %520, %510 : vector<2x64xf32>
    %cst_250 = arith.constant 0.254829586 : f32
    %522 = vector.broadcast %cst_250 : f32 to vector<2x64xf32>
    %523 = arith.addf %521, %522 : vector<2x64xf32>
    %524 = arith.mulf %523, %510 : vector<2x64xf32>
    %cst_251 = arith.constant 0.000000e+00 : f32
    %525 = vector.broadcast %cst_251 : f32 to vector<2x64xf32>
    %526 = arith.subf %525, %504 : vector<2x64xf32>
    %527 = arith.mulf %526, %504 : vector<2x64xf32>
    %528 = math.exp %527 : vector<2x64xf32>
    %529 = arith.mulf %524, %528 : vector<2x64xf32>
    %cst_252 = arith.constant 1.000000e+00 : f32
    %530 = vector.broadcast %cst_252 : f32 to vector<2x64xf32>
    %531 = arith.subf %530, %529 : vector<2x64xf32>
    %532 = arith.mulf %503, %531 : vector<2x64xf32>
    %cst_253 = arith.constant 1.000000e+00 : f32
    %533 = vector.broadcast %cst_253 : f32 to vector<2x64xf32>
    %534 = arith.addf %533, %532 : vector<2x64xf32>
    %535 = arith.mulf %496, %534 : vector<2x64xf32>
    %c0_254 = arith.constant 0 : index
    %c0_255 = arith.constant 0 : index
    %536 = vector.load %arg23[%c0_254, %c0_255] : memref<64x128xf32, #tpu.memory_space<vmem>>, vector<64x128xf32>
    %cst_256 = arith.constant dense<0.000000e+00> : vector<2x128xf32>
    %537 = tpu.matmul %535, %536, %cst_256 {dimension_numbers = #tpu.dot_dimension_numbers<[1], [0], [0], [1], [0, 0, 1, 1], [], []>} : vector<2x64xf32>, vector<64x128xf32>, vector<2x128xf32> -> vector<2x128xf32>
    %c0_257 = arith.constant 0 : index
    %c0_258 = arith.constant 0 : index
    %538 = vector.load %arg24[%c0_257, %c0_258] : memref<1x128xf32, #tpu.memory_space<vmem>>, vector<1x128xf32>
    %539 = vector.broadcast %538 : vector<1x128xf32> to vector<2x128xf32>
    %540 = arith.addf %537, %539 : vector<2x128xf32>
    %c0_259 = arith.constant 0 : index
    %c0_260 = arith.constant 0 : index
    %541 = vector.load %arg25[%c0_259, %c0_260] : memref<2x128xf32, #tpu.memory_space<vmem>>, vector<2x128xf32>
    tpu.vector_store %arg25[%c0_259, %c0_260], %540 {strides = array<i32>} : memref<2x128xf32, #tpu.memory_space<vmem>>, vector<2x128xf32>,
    return
  }
  func.func @transform_0(%arg0: i32) -> (i32, i32, i32) {
    %c0_i32 = arith.constant 0 : i32
    %c0_i32_0 = arith.constant 0 : i32
    %c0_i32_1 = arith.constant 0 : i32
    return %arg0, %c0_i32, %c0_i32_0 : i32, i32, i32
  }
  func.func @transform_1(%arg0: i32) -> (i32, i32) {
    %c0_i32 = arith.constant 0 : i32
    %c0_i32_0 = arith.constant 0 : i32
    %c0_i32_1 = arith.constant 0 : i32
    return %c0_i32, %c0_i32_0 : i32, i32
  }
  func.func @transform_2(%arg0: i32) -> (i32, i32) {
    %c0_i32 = arith.constant 0 : i32
    %c0_i32_0 = arith.constant 0 : i32
    %c0_i32_1 = arith.constant 0 : i32
    return %c0_i32, %c0_i32_0 : i32, i32
  }
  func.func @transform_3(%arg0: i32) -> (i32, i32) {
    %c0_i32 = arith.constant 0 : i32
    %c0_i32_0 = arith.constant 0 : i32
    %c0_i32_1 = arith.constant 0 : i32
    return %c0_i32, %c0_i32_0 : i32, i32
  }
  func.func @transform_4(%arg0: i32) -> (i32, i32) {
    %c0_i32 = arith.constant 0 : i32
    %c0_i32_0 = arith.constant 0 : i32
    %c0_i32_1 = arith.constant 0 : i32
    return %c0_i32, %c0_i32_0 : i32, i32
  }
  func.func @transform_5(%arg0: i32) -> (i32, i32) {
    %c0_i32 = arith.constant 0 : i32
    %c0_i32_0 = arith.constant 0 : i32
    %c0_i32_1 = arith.constant 0 : i32
    return %c0_i32, %c0_i32_0 : i32, i32
  }
  func.func @transform_6(%arg0: i32) -> (i32, i32) {
    %c0_i32 = arith.constant 0 : i32
    %c0_i32_0 = arith.constant 0 : i32
    %c0_i32_1 = arith.constant 0 : i32
    return %c0_i32, %c0_i32_0 : i32, i32
  }
  func.func @transform_7(%arg0: i32) -> (i32, i32) {
    %c0_i32 = arith.constant 0 : i32
    %c0_i32_0 = arith.constant 0 : i32
    %c0_i32_1 = arith.constant 0 : i32
    return %c0_i32, %c0_i32_0 : i32, i32
  }
  func.func @transform_8(%arg0: i32) -> (i32, i32, i32) {
    %c0_i32 = arith.constant 0 : i32
    %c0_i32_0 = arith.constant 0 : i32
    %c0_i32_1 = arith.constant 0 : i32
    %c0_i32_2 = arith.constant 0 : i32
    return %c0_i32, %c0_i32_0, %c0_i32_1 : i32, i32, i32
  }
  func.func @transform_9(%arg0: i32) -> (i32, i32, i32) {
    %c0_i32 = arith.constant 0 : i32
    %c0_i32_0 = arith.constant 0 : i32
    %c0_i32_1 = arith.constant 0 : i32
    %c0_i32_2 = arith.constant 0 : i32
    return %c0_i32, %c0_i32_0, %c0_i32_1 : i32, i32, i32
  }
  func.func @transform_10(%arg0: i32) -> (i32, i32, i32) {
    %c0_i32 = arith.constant 0 : i32
    %c0_i32_0 = arith.constant 0 : i32
    %c0_i32_1 = arith.constant 0 : i32
    %c0_i32_2 = arith.constant 0 : i32
    return %c0_i32, %c0_i32_0, %c0_i32_1 : i32, i32, i32
  }
  func.func @transform_11(%arg0: i32) -> (i32, i32, i32) {
    %c0_i32 = arith.constant 0 : i32
    %c0_i32_0 = arith.constant 0 : i32
    %c0_i32_1 = arith.constant 0 : i32
    %c0_i32_2 = arith.constant 0 : i32
    return %c0_i32, %c0_i32_0, %c0_i32_1 : i32, i32, i32
  }
  func.func @transform_12(%arg0: i32) -> (i32, i32, i32) {
    %c0_i32 = arith.constant 0 : i32
    %c0_i32_0 = arith.constant 0 : i32
    %c0_i32_1 = arith.constant 0 : i32
    %c0_i32_2 = arith.constant 0 : i32
    return %c0_i32, %c0_i32_0, %c0_i32_1 : i32, i32, i32
  }
  func.func @transform_13(%arg0: i32) -> (i32, i32, i32) {
    %c0_i32 = arith.constant 0 : i32
    %c0_i32_0 = arith.constant 0 : i32
    %c0_i32_1 = arith.constant 0 : i32
    %c0_i32_2 = arith.constant 0 : i32
    return %c0_i32, %c0_i32_0, %c0_i32_1 : i32, i32, i32
  }
  func.func @transform_14(%arg0: i32) -> (i32, i32, i32) {
    %c0_i32 = arith.constant 0 : i32
    %c0_i32_0 = arith.constant 0 : i32
    %c0_i32_1 = arith.constant 0 : i32
    %c0_i32_2 = arith.constant 0 : i32
    return %c0_i32, %c0_i32_0, %c0_i32_1 : i32, i32, i32
  }
  func.func @transform_15(%arg0: i32) -> (i32, i32, i32) {
    %c0_i32 = arith.constant 0 : i32
    %c0_i32_0 = arith.constant 0 : i32
    %c0_i32_1 = arith.constant 0 : i32
    %c0_i32_2 = arith.constant 0 : i32
    return %c0_i32, %c0_i32_0, %c0_i32_1 : i32, i32, i32
  }
  func.func @transform_16(%arg0: i32) -> (i32, i32, i32) {
    %c0_i32 = arith.constant 0 : i32
    %c0_i32_0 = arith.constant 0 : i32
    %c0_i32_1 = arith.constant 0 : i32
    %c0_i32_2 = arith.constant 0 : i32
    return %c0_i32, %c0_i32_0, %c0_i32_1 : i32, i32, i32
  }
  func.func @transform_17(%arg0: i32) -> (i32, i32, i32) {
    %c0_i32 = arith.constant 0 : i32
    %c0_i32_0 = arith.constant 0 : i32
    %c0_i32_1 = arith.constant 0 : i32
    %c0_i32_2 = arith.constant 0 : i32
    return %c0_i32, %c0_i32_0, %c0_i32_1 : i32, i32, i32
  }
  func.func @transform_18(%arg0: i32) -> (i32, i32, i32) {
    %c0_i32 = arith.constant 0 : i32
    %c0_i32_0 = arith.constant 0 : i32
    %c0_i32_1 = arith.constant 0 : i32
    %c0_i32_2 = arith.constant 0 : i32
    return %c0_i32, %c0_i32_0, %c0_i32_1 : i32, i32, i32
  }
  func.func @transform_19(%arg0: i32) -> (i32, i32, i32) {
    %c0_i32 = arith.constant 0 : i32
    %c0_i32_0 = arith.constant 0 : i32
    %c0_i32_1 = arith.constant 0 : i32
    %c0_i32_2 = arith.constant 0 : i32
    return %c0_i32, %c0_i32_0, %c0_i32_1 : i32, i32, i32
  }
  func.func @transform_20(%arg0: i32) -> (i32, i32) {
    %c0_i32 = arith.constant 0 : i32
    %c0_i32_0 = arith.constant 0 : i32
    %c0_i32_1 = arith.constant 0 : i32
    return %c0_i32, %c0_i32_0 : i32, i32
  }
  func.func @transform_21(%arg0: i32) -> (i32, i32) {
    %c0_i32 = arith.constant 0 : i32
    %c0_i32_0 = arith.constant 0 : i32
    %c0_i32_1 = arith.constant 0 : i32
    return %c0_i32, %c0_i32_0 : i32, i32
  }
  func.func @transform_22(%arg0: i32) -> (i32, i32) {
    %c0_i32 = arith.constant 0 : i32
    %c0_i32_0 = arith.constant 0 : i32
    %c0_i32_1 = arith.constant 0 : i32
    return %c0_i32, %c0_i32_0 : i32, i32
  }
  func.func @transform_23(%arg0: i32) -> (i32, i32) {
    %c0_i32 = arith.constant 0 : i32
    %c0_i32_0 = arith.constant 0 : i32
    %c0_i32_1 = arith.constant 0 : i32
    return %c0_i32, %c0_i32_0 : i32, i32
  }
  func.func @transform_24(%arg0: i32) -> (i32, i32) {
    %c0_i32 = arith.constant 0 : i32
    %c0_i32_0 = arith.constant 0 : i32
    return %arg0, %c0_i32 : i32, i32
  }
}

</mosaic_0001>

<llo_original>
// kernel: tpu_custom_call.1
$region0: #{tpu_custom_call.1}
  #allocation0 [shape = 'u32[]', space=smem, size = 0x4, offset = 0x4, fixed_abs, tag = 'smem constant byte address 0x4 - core index']
  #allocation1 [shape = 'u32[144,128]{1,0:T(1,128)}', space=vmem, size = 0x12000, scoped, tag = 'internal scratch']
  %s0 = inlined_call_operand.hbm [shape: f32[2,8,16], index: 0, kind: input, shape index: {}]
  %s1 = inlined_call_operand.hbm [shape: f32[16,16], index: 1, kind: input, shape index: {}]
  %s2 = inlined_call_operand.hbm [shape: f32[2,16], index: 2, kind: input, shape index: {}]
  %s3 = inlined_call_operand.hbm [shape: f32[16,64], index: 3, kind: input, shape index: {}]
  %s4 = inlined_call_operand.hbm [shape: f32[16,64], index: 4, kind: input, shape index: {}]
  %s5 = inlined_call_operand.vmem [shape: f32[1,64], index: 5, kind: input, shape index: {}]
  %s6 = inlined_call_operand.hbm [shape: f32[16,64], index: 6, kind: input, shape index: {}]
  %s7 = inlined_call_operand.vmem [shape: f32[1,64], index: 7, kind: input, shape index: {}]
  %s8 = inlined_call_operand.vmem [shape: f32[3,64,192], index: 8, kind: input, shape index: {}]
  %s9 = inlined_call_operand.vmem [shape: f32[3,1,192], index: 9, kind: input, shape index: {}]
  %s10 = inlined_call_operand.vmem [shape: f32[3,64,64], index: 10, kind: input, shape index: {}]
  %s11 = inlined_call_operand.vmem [shape: f32[3,1,64], index: 11, kind: input, shape index: {}]
  %s12 = inlined_call_operand.hbm [shape: f32[3,1,64], index: 12, kind: input, shape index: {}]
  %s13 = inlined_call_operand.hbm [shape: f32[3,1,64], index: 13, kind: input, shape index: {}]
  %s14 = inlined_call_operand.vmem [shape: f32[3,64,128], index: 14, kind: input, shape index: {}]
  %s15 = inlined_call_operand.hbm [shape: f32[3,1,128], index: 15, kind: input, shape index: {}]
  %s16 = inlined_call_operand.vmem [shape: f32[3,128,64], index: 16, kind: input, shape index: {}]
  %s17 = inlined_call_operand.hbm [shape: f32[3,1,64], index: 17, kind: input, shape index: {}]
  %s18 = inlined_call_operand.hbm [shape: f32[3,1,64], index: 18, kind: input, shape index: {}]
  %s19 = inlined_call_operand.hbm [shape: f32[3,1,64], index: 19, kind: input, shape index: {}]
  %s20 = inlined_call_operand.vmem [shape: f32[128,64], index: 20, kind: input, shape index: {}]
  %s21 = inlined_call_operand.vmem [shape: f32[1,64], index: 21, kind: input, shape index: {}]
  %s22 = inlined_call_operand.hbm [shape: f32[64,128], index: 22, kind: input, shape index: {}]
  %s23 = inlined_call_operand.vmem [shape: f32[1,128], index: 23, kind: input, shape index: {}]
  %s24 = inlined_call_operand.hbm [shape: f32[2,128], index: 24, kind: output, shape index: {}]
  %s25 = sld [smem:[#allocation0]]
  $region158: #{tpu_custom_call.1} parent=0
    _
  %s27 = ssub.s32 1, %s25
  %s28 = scalar_select 0, %s27, %s25
  $region1: #{tpu_custom_call.1} parent=0
    #allocation2 [shape = 'u8[8192]{0}', space=vmem, size = 0x2000, scoped, tag = 'input window, operand 0, single buffered']
    #allocation3 [shape = 's32[1]{0}', space=sflag, size = 0x4, scoped, tag = 'scoped memory for tpu_custom_call.1']
    #allocation4 [shape = 's32[1]{0}', space=sflag, size = 0x4, scoped, tag = 'scoped memory for tpu_custom_call.1']
    #allocation5 [shape = 'u8[8192]{0}', space=vmem, size = 0x2000, scoped, tag = 'input window, operand 1, single buffered']
    #allocation6 [shape = 's32[1]{0}', space=sflag, size = 0x4, scoped, tag = 'scoped memory for tpu_custom_call.1']
    #allocation7 [shape = 'u8[1024]{0}', space=vmem, size = 0x400, scoped, tag = 'input window, operand 2, single buffered']
    #allocation8 [shape = 'u8[8192]{0}', space=vmem, size = 0x2000, scoped, tag = 'input window, operand 3, single buffered']
    #allocation9 [shape = 's32[1]{0}', space=sflag, size = 0x4, scoped, tag = 'scoped memory for tpu_custom_call.1']
    #allocation10 [shape = 'u8[8192]{0}', space=vmem, size = 0x2000, scoped, tag = 'input window, operand 4, single buffered']
    #allocation11 [shape = 'u8[8192]{0}', space=vmem, size = 0x2000, scoped, tag = 'input window, operand 6, single buffered']
    #allocation12 [shape = 's32[1]{0}', space=sflag, size = 0x4, scoped, tag = 'scoped memory for tpu_custom_call.1']
    #allocation13 [shape = 'u8[1536]{0}', space=vmem, size = 0x800, scoped, tag = 'input window, operand 12, single buffered']
    #allocation14 [shape = 'u8[1536]{0}', space=vmem, size = 0x800, scoped, tag = 'input window, operand 13, single buffered']
    #allocation15 [shape = 's32[1]{0}', space=sflag, size = 0x4, scoped, tag = 'scoped memory for tpu_custom_call.1']
    #allocation16 [shape = 'u8[1536]{0}', space=vmem, size = 0x800, scoped, tag = 'input window, operand 15, single buffered']
    #allocation17 [shape = 'u8[1536]{0}', space=vmem, size = 0x800, scoped, tag = 'input window, operand 17, single buffered']
    #allocation18 [shape = 's32[1]{0}', space=sflag, size = 0x4, scoped, tag = 'scoped memory for tpu_custom_call.1']
    #allocation19 [shape = 'u8[1536]{0}', space=vmem, size = 0x800, scoped, tag = 'input window, operand 18, single buffered']
    #allocation20 [shape = 'u8[1536]{0}', space=vmem, size = 0x800, scoped, tag = 'input window, operand 19, single buffered']
    #allocation21 [shape = 's32[1]{0}', space=sflag, size = 0x4, scoped, tag = 'scoped memory for tpu_custom_call.1']
    #allocation22 [shape = 'u8[32768]{0}', space=vmem, size = 0x8000, scoped, tag = 'input window, operand 22, single buffered']
    #allocation23 [shape = 'u8[1024]{0}', space=vmem, size = 0x400, scoped, tag = 'output window, operand 0, single buffered']
    %29 = vsyncpa [#allocation3], 0
    %30 = vsyncpa [#allocation6], 0
    %31 = vsyncpa [#allocation9], 0
    %32 = vsyncpa [#allocation12], 0
    %33 = vsyncpa [#allocation15], 0
    %34 = vsyncpa [#allocation18], 0
    %35 = vsyncpa [#allocation21], 0
    %36 = vsyncpa [#allocation4], 0
    // Predicated region
    $region2: #{tpu_custom_call.1} parent=1 // pred_check
      _
    $region3: #{tpu_custom_call.1} parent=1 // pred_check_branch
      %38 = sbr.rel (0) target = $region5
    $region4: #{tpu_custom_call.1} parent=1 // pred_region
      %s40 = ssub.s32 256, 256
      %41 = vsyncadd [#allocation3], %s40
      %s42 = sshll.u32 [#allocation2], 4
      %s43 = int_to_ptr.vmem [resolvable:$true] %s42
      %48 = dma.hbm_to_vmem [thread:$0]  %s0, 256, %s43, [#allocation3], 128, 128, 8
    $region5: #{tpu_custom_call.1} parent=1 // pred_fallthru
      _
    // Predicated region
    $region6: #{tpu_custom_call.1} parent=1 // pred_check
      _
    $region7: #{tpu_custom_call.1} parent=1 // pred_check_branch
      %50 = sbr.rel (0) target = $region9
    $region8: #{tpu_custom_call.1} parent=1 // pred_region
      %s52 = ssub.s32 256, 256
      %53 = vsyncadd [#allocation6], %s52
      %s54 = sshll.u32 [#allocation5], 4
      %s55 = int_to_ptr.vmem [resolvable:$true] %s54
      %60 = dma.hbm_to_vmem [thread:$0]  %s1, 256, %s55, [#allocation6], 128, 128, 8
    $region9: #{tpu_custom_call.1} parent=1 // pred_fallthru
      _
    // Predicated region
    $region10: #{tpu_custom_call.1} parent=1 // pred_check
      _
    $region11: #{tpu_custom_call.1} parent=1 // pred_check_branch
      %62 = sbr.rel (0) target = $region13
    $region12: #{tpu_custom_call.1} parent=1 // pred_region
      %s64 = ssub.s32 32, 32
      %65 = vsyncadd [#allocation6], %s64
      %s67 = sshll.u32 [#allocation7], 4
      %s68 = int_to_ptr.vmem [resolvable:$true] %s67
      %70 = dma.hbm_to_vmem [thread:$0]  %s2, 32, %s68, [#allocation6]
    $region13: #{tpu_custom_call.1} parent=1 // pred_fallthru
      _
    // Predicated region
    $region14: #{tpu_custom_call.1} parent=1 // pred_check
      _
    $region15: #{tpu_custom_call.1} parent=1 // pred_check_branch
      %72 = sbr.rel (0) target = $region17
    $region16: #{tpu_custom_call.1} parent=1 // pred_region
      %s74 = ssub.s32 256, 256
      %75 = vsyncadd [#allocation9], %s74
      %s76 = sshll.u32 [#allocation8], 4
      %s77 = int_to_ptr.vmem [resolvable:$true] %s76
      %82 = dma.hbm_to_vmem [thread:$0]  %s3, 256, %s77, [#allocation9], 128, 128, 8
    $region17: #{tpu_custom_call.1} parent=1 // pred_fallthru
      _
    // Predicated region
    $region18: #{tpu_custom_call.1} parent=1 // pred_check
      _
    $region19: #{tpu_custom_call.1} parent=1 // pred_check_branch
      %84 = sbr.rel (0) target = $region21
    $region20: #{tpu_custom_call.1} parent=1 // pred_region
      %s86 = ssub.s32 256, 256
      %87 = vsyncadd [#allocation9], %s86
      %s88 = sshll.u32 [#allocation10], 4
      %s89 = int_to_ptr.vmem [resolvable:$true] %s88
      %94 = dma.hbm_to_vmem [thread:$0]  %s4, 256, %s89, [#allocation9], 128, 128, 8
    $region21: #{tpu_custom_call.1} parent=1 // pred_fallthru
      _
    // Predicated region
    $region22: #{tpu_custom_call.1} parent=1 // pred_check
      _
    $region23: #{tpu_custom_call.1} parent=1 // pred_check_branch
      %96 = sbr.rel (0) target = $region25
    $region24: #{tpu_custom_call.1} parent=1 // pred_region
      _
    $region25: #{tpu_custom_call.1} parent=1 // pred_fallthru
      _
    // Predicated region
    $region26: #{tpu_custom_call.1} parent=1 // pred_check
      _
    $region27: #{tpu_custom_call.1} parent=1 // pred_check_branch
      %98 = sbr.rel (0) target = $region29
    $region28: #{tpu_custom_call.1} parent=1 // pred_region
      %s100 = ssub.s32 256, 256
      %101 = vsyncadd [#allocation12], %s100
      %s102 = sshll.u32 [#allocation11], 4
      %s103 = int_to_ptr.vmem [resolvable:$true] %s102
      %108 = dma.hbm_to_vmem [thread:$0]  %s6, 256, %s103, [#allocation12], 128, 128, 8
    $region29: #{tpu_custom_call.1} parent=1 // pred_fallthru
      _
    // Predicated region
    $region30: #{tpu_custom_call.1} parent=1 // pred_check
      _
    $region31: #{tpu_custom_call.1} parent=1 // pred_check_branch
      %110 = sbr.rel (0) target = $region33
    $region32: #{tpu_custom_call.1} parent=1 // pred_region
      _
    $region33: #{tpu_custom_call.1} parent=1 // pred_fallthru
      _
    // Predicated region
    $region34: #{tpu_custom_call.1} parent=1 // pred_check
      _
    $region35: #{tpu_custom_call.1} parent=1 // pred_check_branch
      %112 = sbr.rel (0) target = $region37
    $region36: #{tpu_custom_call.1} parent=1 // pred_region
      _
    $region37: #{tpu_custom_call.1} parent=1 // pred_fallthru
      _
    // Predicated region
    $region38: #{tpu_custom_call.1} parent=1 // pred_check
      _
    $region39: #{tpu_custom_call.1} parent=1 // pred_check_branch
      %114 = sbr.rel (0) target = $region41
    $region40: #{tpu_custom_call.1} parent=1 // pred_region
      _
    $region41: #{tpu_custom_call.1} parent=1 // pred_fallthru
      _
    // Predicated region
    $region42: #{tpu_custom_call.1} parent=1 // pred_check
      _
    $region43: #{tpu_custom_call.1} parent=1 // pred_check_branch
      %116 = sbr.rel (0) target = $region45
    $region44: #{tpu_custom_call.1} parent=1 // pred_region
      _
    $region45: #{tpu_custom_call.1} parent=1 // pred_fallthru
      _
    // Predicated region
    $region46: #{tpu_custom_call.1} parent=1 // pred_check
      _
    $region47: #{tpu_custom_call.1} parent=1 // pred_check_branch
      %118 = sbr.rel (0) target = $region49
    $region48: #{tpu_custom_call.1} parent=1 // pred_region
      _
    $region49: #{tpu_custom_call.1} parent=1 // pred_fallthru
      _
    // Predicated region
    $region50: #{tpu_custom_call.1} parent=1 // pred_check
      _
    $region51: #{tpu_custom_call.1} parent=1 // pred_check_branch
      %120 = sbr.rel (0) target = $region53
    $region52: #{tpu_custom_call.1} parent=1 // pred_region
      %s122 = ssub.s32 48, 48
      %123 = vsyncadd [#allocation12], %s122
      %s124 = sshll.u32 [#allocation13], 4
      %s125 = int_to_ptr.vmem [resolvable:$true] %s124
      %130 = dma.hbm_to_vmem [thread:$0]  %s12, 48, %s125, [#allocation12], 16, 16, 1
    $region53: #{tpu_custom_call.1} parent=1 // pred_fallthru
      _
    // Predicated region
    $region54: #{tpu_custom_call.1} parent=1 // pred_check
      _
    $region55: #{tpu_custom_call.1} parent=1 // pred_check_branch
      %132 = sbr.rel (0) target = $region57
    $region56: #{tpu_custom_call.1} parent=1 // pred_region
      %s134 = ssub.s32 48, 48
      %135 = vsyncadd [#allocation15], %s134
      %s136 = sshll.u32 [#allocation14], 4
      %s137 = int_to_ptr.vmem [resolvable:$true] %s136
      %142 = dma.hbm_to_vmem [thread:$0]  %s13, 48, %s137, [#allocation15], 16, 16, 1
    $region57: #{tpu_custom_call.1} parent=1 // pred_fallthru
      _
    // Predicated region
    $region58: #{tpu_custom_call.1} parent=1 // pred_check
      _
    $region59: #{tpu_custom_call.1} parent=1 // pred_check_branch
      %144 = sbr.rel (0) target = $region61
    $region60: #{tpu_custom_call.1} parent=1 // pred_region
      _
    $region61: #{tpu_custom_call.1} parent=1 // pred_fallthru
      _
    // Predicated region
    $region62: #{tpu_custom_call.1} parent=1 // pred_check
      _
    $region63: #{tpu_custom_call.1} parent=1 // pred_check_branch
      %146 = sbr.rel (0) target = $region65
    $region64: #{tpu_custom_call.1} parent=1 // pred_region
      %s148 = ssub.s32 48, 48
      %149 = vsyncadd [#allocation15], %s148
      %s150 = sshll.u32 [#allocation16], 4
      %s151 = int_to_ptr.vmem [resolvable:$true] %s150
      %156 = dma.hbm_to_vmem [thread:$0]  %s15, 48, %s151, [#allocation15], 16, 16, 1
    $region65: #{tpu_custom_call.1} parent=1 // pred_fallthru
      _
    // Predicated region
    $region66: #{tpu_custom_call.1} parent=1 // pred_check
      _
    $region67: #{tpu_custom_call.1} parent=1 // pred_check_branch
      %158 = sbr.rel (0) target = $region69
    $region68: #{tpu_custom_call.1} parent=1 // pred_region
      _
    $region69: #{tpu_custom_call.1} parent=1 // pred_fallthru
      _
    // Predicated region
    $region70: #{tpu_custom_call.1} parent=1 // pred_check
      _
    $region71: #{tpu_custom_call.1} parent=1 // pred_check_branch
      %160 = sbr.rel (0) target = $region73
    $region72: #{tpu_custom_call.1} parent=1 // pred_region
      %s162 = ssub.s32 48, 48
      %163 = vsyncadd [#allocation18], %s162
      %s164 = sshll.u32 [#allocation17], 4
      %s165 = int_to_ptr.vmem [resolvable:$true] %s164
      %170 = dma.hbm_to_vmem [thread:$0]  %s17, 48, %s165, [#allocation18], 16, 16, 1
    $region73: #{tpu_custom_call.1} parent=1 // pred_fallthru
      _
    // Predicated region
    $region74: #{tpu_custom_call.1} parent=1 // pred_check
      _
    $region75: #{tpu_custom_call.1} parent=1 // pred_check_branch
      %172 = sbr.rel (0) target = $region77
    $region76: #{tpu_custom_call.1} parent=1 // pred_region
      %s174 = ssub.s32 48, 48
      %175 = vsyncadd [#allocation18], %s174
      %s176 = sshll.u32 [#allocation19], 4
      %s177 = int_to_ptr.vmem [resolvable:$true] %s176
      %182 = dma.hbm_to_vmem [thread:$0]  %s18, 48, %s177, [#allocation18], 16, 16, 1
    $region77: #{tpu_custom_call.1} parent=1 // pred_fallthru
      _
    // Predicated region
    $region78: #{tpu_custom_call.1} parent=1 // pred_check
      _
    $region79: #{tpu_custom_call.1} parent=1 // pred_check_branch
      %184 = sbr.rel (0) target = $region81
    $region80: #{tpu_custom_call.1} parent=1 // pred_region
      %s186 = ssub.s32 48, 48
      %187 = vsyncadd [#allocation21], %s186
      %s188 = sshll.u32 [#allocation20], 4
      %s189 = int_to_ptr.vmem [resolvable:$true] %s188
      %194 = dma.hbm_to_vmem [thread:$0]  %s19, 48, %s189, [#allocation21], 16, 16, 1
    $region81: #{tpu_custom_call.1} parent=1 // pred_fallthru
      _
    // Predicated region
    $region82: #{tpu_custom_call.1} parent=1 // pred_check
      _
    $region83: #{tpu_custom_call.1} parent=1 // pred_check_branch
      %196 = sbr.rel (0) target = $region85
    $region84: #{tpu_custom_call.1} parent=1 // pred_region
      _
    $region85: #{tpu_custom_call.1} parent=1 // pred_fallthru
      _
    // Predicated region
    $region86: #{tpu_custom_call.1} parent=1 // pred_check
      _
    $region87: #{tpu_custom_call.1} parent=1 // pred_check_branch
      %198 = sbr.rel (0) target = $region89
    $region88: #{tpu_custom_call.1} parent=1 // pred_region
      _
    $region89: #{tpu_custom_call.1} parent=1 // pred_fallthru
      _
    // Predicated region
    $region90: #{tpu_custom_call.1} parent=1 // pred_check
      _
    $region91: #{tpu_custom_call.1} parent=1 // pred_check_branch
      %200 = sbr.rel (0) target = $region93
    $region92: #{tpu_custom_call.1} parent=1 // pred_region
      %s202 = ssub.s32 1024, 1024
      %203 = vsyncadd [#allocation21], %s202
      %s204 = sshll.u32 [#allocation22], 4
      %s205 = int_to_ptr.vmem [resolvable:$true] %s204
      %210 = dma.hbm_to_vmem [thread:$0]  %s22, 1024, %s205, [#allocation21], 128, 128, 8
    $region93: #{tpu_custom_call.1} parent=1 // pred_fallthru
      _
    // Predicated region
    $region94: #{tpu_custom_call.1} parent=1 // pred_check
      _
    $region95: #{tpu_custom_call.1} parent=1 // pred_check_branch
      %212 = sbr.rel (0) target = $region97
    $region96: #{tpu_custom_call.1} parent=1 // pred_region
      _
    $region97: #{tpu_custom_call.1} parent=1 // pred_fallthru
      _
    // Predicated region
    $region98: #{tpu_custom_call.1} parent=1 // pred_check
      _
    $region99: #{tpu_custom_call.1} parent=1 // pred_check_branch
      %214 = sbr.rel (0) target = $region101
    $region100: #{tpu_custom_call.1} parent=1 // pred_region
      %215 = dma.done [#allocation3], 256
    $region101: #{tpu_custom_call.1} parent=1 // pred_fallthru
      _
    // Predicated region
    $region102: #{tpu_custom_call.1} parent=1 // pred_check
      _
    $region103: #{tpu_custom_call.1} parent=1 // pred_check_branch
      %217 = sbr.rel (0) target = $region105
    $region104: #{tpu_custom_call.1} parent=1 // pred_region
      %218 = dma.done [#allocation6], 256
    $region105: #{tpu_custom_call.1} parent=1 // pred_fallthru
      _
    // Predicated region
    $region106: #{tpu_custom_call.1} parent=1 // pred_check
      _
    $region107: #{tpu_custom_call.1} parent=1 // pred_check_branch
      %220 = sbr.rel (0) target = $region109
    $region108: #{tpu_custom_call.1} parent=1 // pred_region
      %221 = dma.done [#allocation6], 32
    $region109: #{tpu_custom_call.1} parent=1 // pred_fallthru
      _
    // Predicated region
    $region110: #{tpu_custom_call.1} parent=1 // pred_check
      _
    $region111: #{tpu_custom_call.1} parent=1 // pred_check_branch
      %223 = sbr.rel (0) target = $region113
    $region112: #{tpu_custom_call.1} parent=1 // pred_region
      %224 = dma.done [#allocation9], 256
    $region113: #{tpu_custom_call.1} parent=1 // pred_fallthru
      _
    // Predicated region
    $region114: #{tpu_custom_call.1} parent=1 // pred_check
      _
    $region115: #{tpu_custom_call.1} parent=1 // pred_check_branch
      %226 = sbr.rel (0) target = $region117
    $region116: #{tpu_custom_call.1} parent=1 // pred_region
      %227 = dma.done [#allocation9], 256
    $region117: #{tpu_custom_call.1} parent=1 // pred_fallthru
      _
    // Predicated region
    $region118: #{tpu_custom_call.1} parent=1 // pred_check
      _
    $region119: #{tpu_custom_call.1} parent=1 // pred_check_branch
      %229 = sbr.rel (0) target = $region121
    $region120: #{tpu_custom_call.1} parent=1 // pred_region
      %230 = dma.done [#allocation12], 256
    $region121: #{tpu_custom_call.1} parent=1 // pred_fallthru
      _
    // Predicated region
    $region122: #{tpu_custom_call.1} parent=1 // pred_check
      _
    $region123: #{tpu_custom_call.1} parent=1 // pred_check_branch
      %232 = sbr.rel (0) target = $region125
    $region124: #{tpu_custom_call.1} parent=1 // pred_region
      %233 = dma.done [#allocation12], 48
    $region125: #{tpu_custom_call.1} parent=1 // pred_fallthru
      _
    // Predicated region
    $region126: #{tpu_custom_call.1} parent=1 // pred_check
      _
    $region127: #{tpu_custom_call.1} parent=1 // pred_check_branch
      %235 = sbr.rel (0) target = $region129
    $region128: #{tpu_custom_call.1} parent=1 // pred_region
      %236 = dma.done [#allocation15], 48
    $region129: #{tpu_custom_call.1} parent=1 // pred_fallthru
      _
    // Predicated region
    $region130: #{tpu_custom_call.1} parent=1 // pred_check
      _
    $region131: #{tpu_custom_call.1} parent=1 // pred_check_branch
      %238 = sbr.rel (0) target = $region133
    $region132: #{tpu_custom_call.1} parent=1 // pred_region
      %239 = dma.done [#allocation15], 48
    $region133: #{tpu_custom_call.1} parent=1 // pred_fallthru
      _
    // Predicated region
    $region134: #{tpu_custom_call.1} parent=1 // pred_check
      _
    $region135: #{tpu_custom_call.1} parent=1 // pred_check_branch
      %241 = sbr.rel (0) target = $region137
    $region136: #{tpu_custom_call.1} parent=1 // pred_region
      %242 = dma.done [#allocation18], 48
    $region137: #{tpu_custom_call.1} parent=1 // pred_fallthru
      _
    // Predicated region
    $region138: #{tpu_custom_call.1} parent=1 // pred_check
      _
    $region139: #{tpu_custom_call.1} parent=1 // pred_check_branch
      %244 = sbr.rel (0) target = $region141
    $region140: #{tpu_custom_call.1} parent=1 // pred_region
      %245 = dma.done [#allocation18], 48
    $region141: #{tpu_custom_call.1} parent=1 // pred_fallthru
      _
    // Predicated region
    $region142: #{tpu_custom_call.1} parent=1 // pred_check
      _
    $region143: #{tpu_custom_call.1} parent=1 // pred_check_branch
      %247 = sbr.rel (0) target = $region145
    $region144: #{tpu_custom_call.1} parent=1 // pred_region
      %248 = dma.done [#allocation21], 48
    $region145: #{tpu_custom_call.1} parent=1 // pred_fallthru
      _
    // Predicated region
    $region146: #{tpu_custom_call.1} parent=1 // pred_check
      _
    $region147: #{tpu_custom_call.1} parent=1 // pred_check_branch
      %250 = sbr.rel (0) target = $region149
    $region148: #{tpu_custom_call.1} parent=1 // pred_region
      %251 = dma.done [#allocation21], 1024
    $region149: #{tpu_custom_call.1} parent=1 // pred_fallthru
      _
    %v252 = vld [vmem:[#allocation2] sm:$0xff]
    %v253 = vld [vmem:[#allocation2 + $0x8] sm:$0xff]
    %v254 = vld [vmem:[#allocation5] sm:$0xff]
    %v255 = vld [vmem:[#allocation5 + $0x8] sm:$0xff]
    %vm256 = vcmask 130048
    %v258 = vsel %vm256, %v254, 0
    %v261 = vsel %vm256, %v255, 0
    %263 = vmatprep.subr.mxu0 0.0
    %264 = vmatpush1.msra.mxu0 %v252
    %265 = vmatprep.subr.mxu0 0.0
    %266 = vmatpush1.msra.mxu0 %v253
    %267 = vmatprep.subr.mxu0 0.0
    %268 = vmatpush1.msra.mxu0 0.0
    %269 = vmatprep.subr.mxu0 0.0
    %270 = vmatpush1.msra.mxu0 0.0
    %271 = vmatprep.subr.mxu0 0.0
    %272 = vmatpush1.msra.mxu0 0.0
    %273 = vmatprep.subr.mxu0 0.0
    %274 = vmatpush1.msra.mxu0 0.0
    %275 = vmatprep.subr.mxu0 0.0
    %276 = vmatpush1.msra.mxu0 0.0
    %277 = vmatprep.subr.mxu0 0.0
    %278 = vmatpush1.msra.mxu0 0.0
    %279 = vmatprep.subr.mxu0 0.0
    %280 = vmatpush1.msra.mxu0 0.0
    %281 = vmatprep.subr.mxu0 0.0
    %282 = vmatpush1.msra.mxu0 0.0
    %283 = vmatprep.subr.mxu0 0.0
    %284 = vmatpush1.msra.mxu0 0.0
    %285 = vmatprep.subr.mxu0 0.0
    %286 = vmatpush1.msra.mxu0 0.0
    %287 = vmatprep.subr.mxu0 0.0
    %288 = vmatpush1.msra.mxu0 0.0
    %289 = vmatprep.subr.mxu0 0.0
    %290 = vmatpush1.msra.mxu0 0.0
    %291 = vmatprep.subr.mxu0 0.0
    %292 = vmatpush1.msra.mxu0 0.0
    %293 = vmatprep.subr.mxu0 0.0
    %294 = vmatpush1.msra.mxu0 0.0
    %295 = vmatprep.subr.mxu0 0.0
    %296 = vmatpush1.msra.mxu0 0.0
    %297 = vmatprep.subr.mxu0 0.0
    %298 = vmatpush1.msra.mxu0 0.0
    %299 = vmatprep.subr.mxu0 0.0
    %300 = vmatpush1.msra.mxu0 0.0
    %301 = vmatprep.subr.mxu0 0.0
    %302 = vmatpush1.msra.mxu0 0.0
    %303 = vmatprep.subr.mxu0 0.0
    %304 = vmatpush1.msra.mxu0 0.0
    %305 = vmatprep.subr.mxu0 0.0
    %306 = vmatpush1.msra.mxu0 0.0
    %307 = vmatprep.subr.mxu0 0.0
    %308 = vmatpush1.msra.mxu0 0.0
    %309 = vmatprep.subr.mxu0 0.0
    %310 = vmatpush1.msra.mxu0 0.0
    %311 = vmatprep.subr.mxu0 0.0
    %312 = vmatpush1.msra.mxu0 0.0
    %313 = vmatprep.subr.mxu0 0.0
    %314 = vmatpush1.msra.mxu0 0.0
    %315 = vmatprep.subr.mxu0 0.0
    %316 = vmatpush1.msra.mxu0 0.0
    %317 = vmatprep.subr.mxu0 0.0
    %318 = vmatpush1.msra.mxu0 0.0
    %319 = vmatprep.subr.mxu0 0.0
    %320 = vmatpush1.msra.mxu0 0.0
    %321 = vmatprep.subr.mxu0 0.0
    %322 = vmatpush1.msra.mxu0 0.0
    %323 = vmatprep.subr.mxu0 0.0
    %324 = vmatpush1.msra.mxu0 0.0
    %325 = vmatprep.subr.mxu0 0.0
    %326 = vmatpush1.msra.mxu0 0.0
    %327 = vmatprep.mubr.f32.mxu0 0.0
    %328 = vmatmul.mubr.f32.gmra.mrb[0].mxu0 %v258
    %v329 = vpop.f32.mrb[0].mxu0
    %v330 = vadd.f32 0.0, %v329
    %v331 = vpop.f32.mrb[0].mxu0
    %332 = vmatprep.mubr.f32.mxu0 0.0
    %333 = vmatmul.mubr.f32.gmra.mrb[0].mxu0 %v261
    %v334 = vpop.f32.mrb[0].mxu0
    %v335 = vadd.f32 0.0, %v334
    %v336 = vpop.f32.mrb[0].mxu0
    %337 = vdwg.mxu0
    %v338 = vsub.f32 %v252, %v330
    %v339 = vsub.f32 %v253, %v335
    %v340 = vld [vmem:[#allocation10] sm:$0xff]
    %v341 = vld [vmem:[#allocation10 + $0x8] sm:$0xff]
    %v342 = vld [vmem:[%s5] sm:$0x1]
    %v344 = vlaneseq
    %v345 = vshrl.u32 %v344, 7
    %v346 = vsub.s32 0, %v345
    %v347 = vrot.slane %v342, %v346
    %v350 = vsel %vm256, %v338, 0
    %v353 = vsel %vm256, %v339, 0
    %355 = vmatprep.subr.mxu0 0.0
    %356 = vmatpush1.msra.mxu0 %v340
    %357 = vmatprep.subr.mxu0 0.0
    %358 = vmatpush1.msra.mxu0 %v341
    %359 = vmatprep.subr.mxu0 0.0
    %360 = vmatpush1.msra.mxu0 0.0
    %361 = vmatprep.subr.mxu0 0.0
    %362 = vmatpush1.msra.mxu0 0.0
    %363 = vmatprep.subr.mxu0 0.0
    %364 = vmatpush1.msra.mxu0 0.0
    %365 = vmatprep.subr.mxu0 0.0
    %366 = vmatpush1.msra.mxu0 0.0
    %367 = vmatprep.subr.mxu0 0.0
    %368 = vmatpush1.msra.mxu0 0.0
    %369 = vmatprep.subr.mxu0 0.0
    %370 = vmatpush1.msra.mxu0 0.0
    %371 = vmatprep.subr.mxu0 0.0
    %372 = vmatpush1.msra.mxu0 0.0
    %373 = vmatprep.subr.mxu0 0.0
    %374 = vmatpush1.msra.mxu0 0.0
    %375 = vmatprep.subr.mxu0 0.0
    %376 = vmatpush1.msra.mxu0 0.0
    %377 = vmatprep.subr.mxu0 0.0
    %378 = vmatpush1.msra.mxu0 0.0
    %379 = vmatprep.subr.mxu0 0.0
    %380 = vmatpush1.msra.mxu0 0.0
    %381 = vmatprep.subr.mxu0 0.0
    %382 = vmatpush1.msra.mxu0 0.0
    %383 = vmatprep.subr.mxu0 0.0
    %384 = vmatpush1.msra.mxu0 0.0
    %385 = vmatprep.subr.mxu0 0.0
    %386 = vmatpush1.msra.mxu0 0.0
    %387 = vmatprep.subr.mxu0 0.0
    %388 = vmatpush1.msra.mxu0 0.0
    %389 = vmatprep.subr.mxu0 0.0
    %390 = vmatpush1.msra.mxu0 0.0
    %391 = vmatprep.subr.mxu0 0.0
    %392 = vmatpush1.msra.mxu0 0.0
    %393 = vmatprep.subr.mxu0 0.0
    %394 = vmatpush1.msra.mxu0 0.0
    %395 = vmatprep.subr.mxu0 0.0
    %396 = vmatpush1.msra.mxu0 0.0
    %397 = vmatprep.subr.mxu0 0.0
    %398 = vmatpush1.msra.mxu0 0.0
    %399 = vmatprep.subr.mxu0 0.0
    %400 = vmatpush1.msra.mxu0 0.0
    %401 = vmatprep.subr.mxu0 0.0
    %402 = vmatpush1.msra.mxu0 0.0
    %403 = vmatprep.subr.mxu0 0.0
    %404 = vmatpush1.msra.mxu0 0.0
    %405 = vmatprep.subr.mxu0 0.0
    %406 = vmatpush1.msra.mxu0 0.0
    %407 = vmatprep.subr.mxu0 0.0
    %408 = vmatpush1.msra.mxu0 0.0
    %409 = vmatprep.subr.mxu0 0.0
    %410 = vmatpush1.msra.mxu0 0.0
    %411 = vmatprep.subr.mxu0 0.0
    %412 = vmatpush1.msra.mxu0 0.0
    %413 = vmatprep.subr.mxu0 0.0
    %414 = vmatpush1.msra.mxu0 0.0
    %415 = vmatprep.subr.mxu0 0.0
    %416 = vmatpush1.msra.mxu0 0.0
    %417 = vmatprep.subr.mxu0 0.0
    %418 = vmatpush1.msra.mxu0 0.0
    %419 = vmatprep.mubr.f32.mxu0 0.0
    %420 = vmatmul.mubr.f32.gmra.mrb[0].mxu0 %v350
    %v421 = vpop.f32.mrb[0].mxu0
    %v422 = vadd.f32 %v347, %v421
    %v423 = vpop.f32.mrb[0].mxu0
    %424 = vmatprep.mubr.f32.mxu0 0.0
    %425 = vmatmul.mubr.f32.gmra.mrb[0].mxu0 %v353
    %v426 = vpop.f32.mrb[0].mxu0
    %v427 = vadd.f32 %v347, %v426
    %v428 = vpop.f32.mrb[0].mxu0
    %429 = vdwg.mxu0
    %v430 = vld [vmem:[#allocation8] sm:$0xff]
    %v431 = vld [vmem:[#allocation8 + $0x8] sm:$0xff]
    %v432 = vadd.f32 %v422, %v430
    %v433 = vadd.f32 %v427, %v431
    %v434 = vld [vmem:[%s8] sm:$0xff]
    %v435 = vld [vmem:[%s8 + $0x8] sm:$0xff]
    %v436 = vld [vmem:[%s8 + $0x10] sm:$0xff]
    %v437 = vld [vmem:[%s8 + $0x18] sm:$0xff]
    %v438 = vld [vmem:[%s8 + $0x20] sm:$0xff]
    %v439 = vld [vmem:[%s8 + $0x28] sm:$0xff]
    %v440 = vld [vmem:[%s8 + $0x30] sm:$0xff]
    %v441 = vld [vmem:[%s8 + $0x38] sm:$0xff]
    %v442 = vld [vmem:[%s8 + $0x40] sm:$0xff]
    %v443 = vld [vmem:[%s8 + $0x48] sm:$0xff]
    %v444 = vld [vmem:[%s8 + $0x50] sm:$0xff]
    %v445 = vld [vmem:[%s8 + $0x58] sm:$0xff]
    %v446 = vld [vmem:[%s8 + $0x60] sm:$0xff]
    %v447 = vld [vmem:[%s8 + $0x68] sm:$0xff]
    %v448 = vld [vmem:[%s8 + $0x70] sm:$0xff]
    %v449 = vld [vmem:[%s8 + $0x78] sm:$0xff]
    %v450 = vld [vmem:[%s9] sm:$0x3]
    %v452 = vlaneseq
    %v453 = vshrl.u32 %v452, 7
    %v454 = vsub.s32 0, %v453
    %v455 = vrot.slane %v450, %v454
    %v456 = vlaneseq
    %v457 = vshrl.u32 %v456, 7
    %v458 = vsub.s32 1, %v457
    %v459 = vrot.slane %v450, %v458
    %vm462 = vcmask 523264
    %v464 = vsel %vm462, %v432, 0
    %v467 = vsel %vm462, %v433, 0
    %469 = vmatprep.subr.mxu0 %v435
    %470 = vmatpush1.msra.mxu0 %v434
    %471 = vmatprep.subr.mxu0 %v437
    %472 = vmatpush1.msra.mxu0 %v436
    %473 = vmatprep.subr.mxu0 %v439
    %474 = vmatpush1.msra.mxu0 %v438
    %475 = vmatprep.subr.mxu0 %v441
    %476 = vmatpush1.msra.mxu0 %v440
    %477 = vmatprep.subr.mxu0 %v443
    %478 = vmatpush1.msra.mxu0 %v442
    %479 = vmatprep.subr.mxu0 %v445
    %480 = vmatpush1.msra.mxu0 %v444
    %481 = vmatprep.subr.mxu0 %v447
    %482 = vmatpush1.msra.mxu0 %v446
    %483 = vmatprep.subr.mxu0 %v449
    %484 = vmatpush1.msra.mxu0 %v448
    %485 = vmatprep.subr.mxu0 0.0
    %486 = vmatpush1.msra.mxu0 0.0
    %487 = vmatprep.subr.mxu0 0.0
    %488 = vmatpush1.msra.mxu0 0.0
    %489 = vmatprep.subr.mxu0 0.0
    %490 = vmatpush1.msra.mxu0 0.0
    %491 = vmatprep.subr.mxu0 0.0
    %492 = vmatpush1.msra.mxu0 0.0
    %493 = vmatprep.subr.mxu0 0.0
    %494 = vmatpush1.msra.mxu0 0.0
    %495 = vmatprep.subr.mxu0 0.0
    %496 = vmatpush1.msra.mxu0 0.0
    %497 = vmatprep.subr.mxu0 0.0
    %498 = vmatpush1.msra.mxu0 0.0
    %499 = vmatprep.subr.mxu0 0.0
    %500 = vmatpush1.msra.mxu0 0.0
    %501 = vmatprep.subr.mxu0 0.0
    %502 = vmatpush1.msra.mxu0 0.0
    %503 = vmatprep.subr.mxu0 0.0
    %504 = vmatpush1.msra.mxu0 0.0
    %505 = vmatprep.subr.mxu0 0.0
    %506 = vmatpush1.msra.mxu0 0.0
    %507 = vmatprep.subr.mxu0 0.0
    %508 = vmatpush1.msra.mxu0 0.0
    %509 = vmatprep.subr.mxu0 0.0
    %510 = vmatpush1.msra.mxu0 0.0
    %511 = vmatprep.subr.mxu0 0.0
    %512 = vmatpush1.msra.mxu0 0.0
    %513 = vmatprep.subr.mxu0 0.0
    %514 = vmatpush1.msra.mxu0 0.0
    %515 = vmatprep.subr.mxu0 0.0
    %516 = vmatpush1.msra.mxu0 0.0
    %517 = vmatprep.subr.mxu0 0.0
    %518 = vmatpush1.msra.mxu0 0.0
    %519 = vmatprep.subr.mxu0 0.0
    %520 = vmatpush1.msra.mxu0 0.0
    %521 = vmatprep.subr.mxu0 0.0
    %522 = vmatpush1.msra.mxu0 0.0
    %523 = vmatprep.subr.mxu0 0.0
    %524 = vmatpush1.msra.mxu0 0.0
    %525 = vmatprep.subr.mxu0 0.0
    %526 = vmatpush1.msra.mxu0 0.0
    %527 = vmatprep.subr.mxu0 0.0
    %528 = vmatpush1.msra.mxu0 0.0
    %529 = vmatprep.subr.mxu0 0.0
    %530 = vmatpush1.msra.mxu0 0.0
    %531 = vmatprep.subr.mxu0 0.0
    %532 = vmatpush1.msra.mxu0 0.0
    %533 = vmatprep.mubr.f32.mxu0 0.0
    %534 = vmatmul.mubr.f32.gmra.mrb[0].mxu0 %v464
    %v535 = vpop.f32.mrb[0].mxu0
    %v536 = vadd.f32 %v455, %v535
    %v537 = vpop.f32.mrb[0].mxu0
    %v538 = vadd.f32 %v459, %v537
    %539 = vmatprep.mubr.f32.mxu0 0.0
    %540 = vmatmul.mubr.f32.gmra.mrb[0].mxu0 %v467
    %v541 = vpop.f32.mrb[0].mxu0
    %v542 = vadd.f32 %v455, %v541
    %v543 = vpop.f32.mrb[0].mxu0
    %v544 = vadd.f32 %v459, %v543
    %545 = vdwg.mxu0
    %547 = vrot.lane.b32.xlu0 %v536, 64
    %v548 = vpop.permute.xlu0 %547
    %v549 = vsel %vm256, %v536, 0
    %v551 = vsel %vm256, %v548, 0
    %553 = vmatprep.subr.mxu0 0.0
    %554 = vmatpush1.xpose.msra.mxu0 %v551
    %555 = vmatprep.subr.mxu0 0.0
    %556 = vmatpush1.xpose.msra.mxu0 0.0
    %557 = vmatprep.subr.mxu0 0.0
    %558 = vmatpush1.xpose.msra.mxu0 0.0
    %559 = vmatprep.subr.mxu0 0.0
    %560 = vmatpush1.xpose.msra.mxu0 0.0
    %561 = vmatprep.subr.mxu0 0.0
    %562 = vmatpush1.xpose.msra.mxu0 0.0
    %563 = vmatprep.subr.mxu0 0.0
    %564 = vmatpush1.xpose.msra.mxu0 0.0
    %565 = vmatprep.subr.mxu0 0.0
    %566 = vmatpush1.xpose.msra.mxu0 0.0
    %567 = vmatprep.subr.mxu0 0.0
    %568 = vmatpush1.xpose.msra.mxu0 0.0
    %569 = vmatprep.subr.mxu0 0.0
    %570 = vmatpush1.xpose.msra.mxu0 0.0
    %571 = vmatprep.subr.mxu0 0.0
    %572 = vmatpush1.xpose.msra.mxu0 0.0
    %573 = vmatprep.subr.mxu0 0.0
    %574 = vmatpush1.xpose.msra.mxu0 0.0
    %575 = vmatprep.subr.mxu0 0.0
    %576 = vmatpush1.xpose.msra.mxu0 0.0
    %577 = vmatprep.subr.mxu0 0.0
    %578 = vmatpush1.xpose.msra.mxu0 0.0
    %579 = vmatprep.subr.mxu0 0.0
    %580 = vmatpush1.xpose.msra.mxu0 0.0
    %581 = vmatprep.subr.mxu0 0.0
    %582 = vmatpush1.xpose.msra.mxu0 0.0
    %583 = vmatprep.subr.mxu0 0.0
    %584 = vmatpush1.xpose.msra.mxu0 0.0
    %585 = vmatprep.subr.mxu0 0.0
    %586 = vmatpush1.xpose.msra.mxu0 0.0
    %587 = vmatprep.subr.mxu0 0.0
    %588 = vmatpush1.xpose.msra.mxu0 0.0
    %589 = vmatprep.subr.mxu0 0.0
    %590 = vmatpush1.xpose.msra.mxu0 0.0
    %591 = vmatprep.subr.mxu0 0.0
    %592 = vmatpush1.xpose.msra.mxu0 0.0
    %593 = vmatprep.subr.mxu0 0.0
    %594 = vmatpush1.xpose.msra.mxu0 0.0
    %595 = vmatprep.subr.mxu0 0.0
    %596 = vmatpush1.xpose.msra.mxu0 0.0
    %597 = vmatprep.subr.mxu0 0.0
    %598 = vmatpush1.xpose.msra.mxu0 0.0
    %599 = vmatprep.subr.mxu0 0.0
    %600 = vmatpush1.xpose.msra.mxu0 0.0
    %601 = vmatprep.subr.mxu0 0.0
    %602 = vmatpush1.xpose.msra.mxu0 0.0
    %603 = vmatprep.subr.mxu0 0.0
    %604 = vmatpush1.xpose.msra.mxu0 0.0
    %605 = vmatprep.subr.mxu0 0.0
    %606 = vmatpush1.xpose.msra.mxu0 0.0
    %607 = vmatprep.subr.mxu0 0.0
    %608 = vmatpush1.xpose.msra.mxu0 0.0
    %609 = vmatprep.subr.mxu0 0.0
    %610 = vmatpush1.xpose.msra.mxu0 0.0
    %611 = vmatprep.subr.mxu0 0.0
    %612 = vmatpush1.xpose.msra.mxu0 0.0
    %613 = vmatprep.subr.mxu0 0.0
    %614 = vmatpush1.xpose.msra.mxu0 0.0
    %615 = vmatprep.subr.mxu0 0.0
    %616 = vmatpush1.xpose.msra.mxu0 0.0
    %617 = vmatprep.mubr.f32.mxu0 0.0
    %618 = vmatmul.mubr.f32.gmra.mrb[0].mxu0 %v549
    %v619 = vpop.f32.mrb[0].mxu0
    %v620 = vadd.f32 0.0, %v619
    %v621 = vpop.f32.mrb[0].mxu0
    %622 = vdwg.mxu0
    %624 = vrot.lane.b32.xlu0 %v542, 64
    %v625 = vpop.permute.xlu0 %624
    %v626 = vsel %vm256, %v542, 0
    %v628 = vsel %vm256, %v625, 0
    %630 = vmatprep.subr.mxu0 0.0
    %631 = vmatpush1.xpose.msra.mxu0 %v628
    %632 = vmatprep.subr.mxu0 0.0
    %633 = vmatpush1.xpose.msra.mxu0 0.0
    %634 = vmatprep.subr.mxu0 0.0
    %635 = vmatpush1.xpose.msra.mxu0 0.0
    %636 = vmatprep.subr.mxu0 0.0
    %637 = vmatpush1.xpose.msra.mxu0 0.0
    %638 = vmatprep.subr.mxu0 0.0
    %639 = vmatpush1.xpose.msra.mxu0 0.0
    %640 = vmatprep.subr.mxu0 0.0
    %641 = vmatpush1.xpose.msra.mxu0 0.0
    %642 = vmatprep.subr.mxu0 0.0
    %643 = vmatpush1.xpose.msra.mxu0 0.0
    %644 = vmatprep.subr.mxu0 0.0
    %645 = vmatpush1.xpose.msra.mxu0 0.0
    %646 = vmatprep.subr.mxu0 0.0
    %647 = vmatpush1.xpose.msra.mxu0 0.0
    %648 = vmatprep.subr.mxu0 0.0
    %649 = vmatpush1.xpose.msra.mxu0 0.0
    %650 = vmatprep.subr.mxu0 0.0
    %651 = vmatpush1.xpose.msra.mxu0 0.0
    %652 = vmatprep.subr.mxu0 0.0
    %653 = vmatpush1.xpose.msra.mxu0 0.0
    %654 = vmatprep.subr.mxu0 0.0
    %655 = vmatpush1.xpose.msra.mxu0 0.0
    %656 = vmatprep.subr.mxu0 0.0
    %657 = vmatpush1.xpose.msra.mxu0 0.0
    %658 = vmatprep.subr.mxu0 0.0
    %659 = vmatpush1.xpose.msra.mxu0 0.0
    %660 = vmatprep.subr.mxu0 0.0
    %661 = vmatpush1.xpose.msra.mxu0 0.0
    %662 = vmatprep.subr.mxu0 0.0
    %663 = vmatpush1.xpose.msra.mxu0 0.0
    %664 = vmatprep.subr.mxu0 0.0
    %665 = vmatpush1.xpose.msra.mxu0 0.0
    %666 = vmatprep.subr.mxu0 0.0
    %667 = vmatpush1.xpose.msra.mxu0 0.0
    %668 = vmatprep.subr.mxu0 0.0
    %669 = vmatpush1.xpose.msra.mxu0 0.0
    %670 = vmatprep.subr.mxu0 0.0
    %671 = vmatpush1.xpose.msra.mxu0 0.0
    %672 = vmatprep.subr.mxu0 0.0
    %673 = vmatpush1.xpose.msra.mxu0 0.0
    %674 = vmatprep.subr.mxu0 0.0
    %675 = vmatpush1.xpose.msra.mxu0 0.0
    %676 = vmatprep.subr.mxu0 0.0
    %677 = vmatpush1.xpose.msra.mxu0 0.0
    %678 = vmatprep.subr.mxu0 0.0
    %679 = vmatpush1.xpose.msra.mxu0 0.0
    %680 = vmatprep.subr.mxu0 0.0
    %681 = vmatpush1.xpose.msra.mxu0 0.0
    %682 = vmatprep.subr.mxu0 0.0
    %683 = vmatpush1.xpose.msra.mxu0 0.0
    %684 = vmatprep.subr.mxu0 0.0
    %685 = vmatpush1.xpose.msra.mxu0 0.0
    %686 = vmatprep.subr.mxu0 0.0
    %687 = vmatpush1.xpose.msra.mxu0 0.0
    %688 = vmatprep.subr.mxu0 0.0
    %689 = vmatpush1.xpose.msra.mxu0 0.0
    %690 = vmatprep.subr.mxu0 0.0
    %691 = vmatpush1.xpose.msra.mxu0 0.0
    %692 = vmatprep.subr.mxu0 0.0
    %693 = vmatpush1.xpose.msra.mxu0 0.0
    %694 = vmatprep.mubr.f32.mxu0 0.0
    %695 = vmatmul.mubr.f32.gmra.mrb[0].mxu0 %v626
    %v696 = vpop.f32.mrb[0].mxu0
    %v697 = vadd.f32 0.0, %v696
    %v698 = vpop.f32.mrb[0].mxu0
    %699 = vdwg.mxu0
    %v700 = vmul.f32 %v620, 0.25
    %v701 = vmul.f32 %v697, 0.25
    %vm702 = vcmask 64512
    %v703 = vsel %vm702, %v700, -inf
    %704 = vmax.xlane.f32.xlu0 %v703
    %v705 = vpop.xlane.xlu0 %704
    %v706 = vsel %vm702, %v701, -inf
    %707 = vmax.xlane.f32.xlu0 %v706
    %v708 = vpop.xlane.xlu0 %707
    %v709 = vsub.f32 %v700, %v705
    %v710 = vsub.f32 %v701, %v708
    %v711 = vmul.f32 %v709, 1.442695
    %v712 = vpow.pop %v711
    %v713 = vmul.f32 %v710, 1.442695
    %v714 = vpow.pop %v713
    %v715 = vsel %vm702, %v712, 0.0
    %716 = vadd.xlane.f32.xlu0 %v715
    %v717 = vpop.xlane.xlu0 %716
    %v718 = vsel %vm702, %v714, 0.0
    %719 = vadd.xlane.f32.xlu0 %v718
    %v720 = vpop.xlane.xlu0 %719
    %v721 = vrcp.pop %v717
    %v722 = vmul.f32 %v712, %v721
    %v723 = vrcp.pop %v720
    %v724 = vmul.f32 %v714, %v723
    %v726 = vsel %vm702, %v722, 0
    %728 = vmatprep.subr.mxu0 0.0
    %729 = vmatpush1.msra.mxu0 %v538
    %730 = vmatprep.subr.mxu0 0.0
    %731 = vmatpush1.msra.mxu0 0.0
    %732 = vmatprep.subr.mxu0 0.0
    %733 = vmatpush1.msra.mxu0 0.0
    %734 = vmatprep.subr.mxu0 0.0
    %735 = vmatpush1.msra.mxu0 0.0
    %736 = vmatprep.subr.mxu0 0.0
    %737 = vmatpush1.msra.mxu0 0.0
    %738 = vmatprep.subr.mxu0 0.0
    %739 = vmatpush1.msra.mxu0 0.0
    %740 = vmatprep.subr.mxu0 0.0
    %741 = vmatpush1.msra.mxu0 0.0
    %742 = vmatprep.subr.mxu0 0.0
    %743 = vmatpush1.msra.mxu0 0.0
    %744 = vmatprep.subr.mxu0 0.0
    %745 = vmatpush1.msra.mxu0 0.0
    %746 = vmatprep.subr.mxu0 0.0
    %747 = vmatpush1.msra.mxu0 0.0
    %748 = vmatprep.subr.mxu0 0.0
    %749 = vmatpush1.msra.mxu0 0.0
    %750 = vmatprep.subr.mxu0 0.0
    %751 = vmatpush1.msra.mxu0 0.0
    %752 = vmatprep.subr.mxu0 0.0
    %753 = vmatpush1.msra.mxu0 0.0
    %754 = vmatprep.subr.mxu0 0.0
    %755 = vmatpush1.msra.mxu0 0.0
    %756 = vmatprep.subr.mxu0 0.0
    %757 = vmatpush1.msra.mxu0 0.0
    %758 = vmatprep.subr.mxu0 0.0
    %759 = vmatpush1.msra.mxu0 0.0
    %760 = vmatprep.subr.mxu0 0.0
    %761 = vmatpush1.msra.mxu0 0.0
    %762 = vmatprep.subr.mxu0 0.0
    %763 = vmatpush1.msra.mxu0 0.0
    %764 = vmatprep.subr.mxu0 0.0
    %765 = vmatpush1.msra.mxu0 0.0
    %766 = vmatprep.subr.mxu0 0.0
    %767 = vmatpush1.msra.mxu0 0.0
    %768 = vmatprep.subr.mxu0 0.0
    %769 = vmatpush1.msra.mxu0 0.0
    %770 = vmatprep.subr.mxu0 0.0
    %771 = vmatpush1.msra.mxu0 0.0
    %772 = vmatprep.subr.mxu0 0.0
    %773 = vmatpush1.msra.mxu0 0.0
    %774 = vmatprep.subr.mxu0 0.0
    %775 = vmatpush1.msra.mxu0 0.0
    %776 = vmatprep.subr.mxu0 0.0
    %777 = vmatpush1.msra.mxu0 0.0
    %778 = vmatprep.subr.mxu0 0.0
    %779 = vmatpush1.msra.mxu0 0.0
    %780 = vmatprep.subr.mxu0 0.0
    %781 = vmatpush1.msra.mxu0 0.0
    %782 = vmatprep.subr.mxu0 0.0
    %783 = vmatpush1.msra.mxu0 0.0
    %784 = vmatprep.subr.mxu0 0.0
    %785 = vmatpush1.msra.mxu0 0.0
    %786 = vmatprep.subr.mxu0 0.0
    %787 = vmatpush1.msra.mxu0 0.0
    %788 = vmatprep.subr.mxu0 0.0
    %789 = vmatpush1.msra.mxu0 0.0
    %790 = vmatprep.subr.mxu0 0.0
    %791 = vmatpush1.msra.mxu0 0.0
    %792 = vmatprep.mubr.f32.mxu0 0.0
    %793 = vmatmul.mubr.f32.gmra.mrb[0].mxu0 %v726
    %v794 = vpop.f32.mrb[0].mxu0
    %v795 = vadd.f32 0.0, %v794
    %v796 = vpop.f32.mrb[0].mxu0
    %797 = vdwg.mxu0
    %v799 = vsel %vm702, %v724, 0
    %801 = vmatprep.subr.mxu0 0.0
    %802 = vmatpush1.msra.mxu0 %v544
    %803 = vmatprep.subr.mxu0 0.0
    %804 = vmatpush1.msra.mxu0 0.0
    %805 = vmatprep.subr.mxu0 0.0
    %806 = vmatpush1.msra.mxu0 0.0
    %807 = vmatprep.subr.mxu0 0.0
    %808 = vmatpush1.msra.mxu0 0.0
    %809 = vmatprep.subr.mxu0 0.0
    %810 = vmatpush1.msra.mxu0 0.0
    %811 = vmatprep.subr.mxu0 0.0
    %812 = vmatpush1.msra.mxu0 0.0
    %813 = vmatprep.subr.mxu0 0.0
    %814 = vmatpush1.msra.mxu0 0.0
    %815 = vmatprep.subr.mxu0 0.0
    %816 = vmatpush1.msra.mxu0 0.0
    %817 = vmatprep.subr.mxu0 0.0
    %818 = vmatpush1.msra.mxu0 0.0
    %819 = vmatprep.subr.mxu0 0.0
    %820 = vmatpush1.msra.mxu0 0.0
    %821 = vmatprep.subr.mxu0 0.0
    %822 = vmatpush1.msra.mxu0 0.0
    %823 = vmatprep.subr.mxu0 0.0
    %824 = vmatpush1.msra.mxu0 0.0
    %825 = vmatprep.subr.mxu0 0.0
    %826 = vmatpush1.msra.mxu0 0.0
    %827 = vmatprep.subr.mxu0 0.0
    %828 = vmatpush1.msra.mxu0 0.0
    %829 = vmatprep.subr.mxu0 0.0
    %830 = vmatpush1.msra.mxu0 0.0
    %831 = vmatprep.subr.mxu0 0.0
    %832 = vmatpush1.msra.mxu0 0.0
    %833 = vmatprep.subr.mxu0 0.0
    %834 = vmatpush1.msra.mxu0 0.0
    %835 = vmatprep.subr.mxu0 0.0
    %836 = vmatpush1.msra.mxu0 0.0
    %837 = vmatprep.subr.mxu0 0.0
    %838 = vmatpush1.msra.mxu0 0.0
    %839 = vmatprep.subr.mxu0 0.0
    %840 = vmatpush1.msra.mxu0 0.0
    %841 = vmatprep.subr.mxu0 0.0
    %842 = vmatpush1.msra.mxu0 0.0
    %843 = vmatprep.subr.mxu0 0.0
    %844 = vmatpush1.msra.mxu0 0.0
    %845 = vmatprep.subr.mxu0 0.0
    %846 = vmatpush1.msra.mxu0 0.0
    %847 = vmatprep.subr.mxu0 0.0
    %848 = vmatpush1.msra.mxu0 0.0
    %849 = vmatprep.subr.mxu0 0.0
    %850 = vmatpush1.msra.mxu0 0.0
    %851 = vmatprep.subr.mxu0 0.0
    %852 = vmatpush1.msra.mxu0 0.0
    %853 = vmatprep.subr.mxu0 0.0
    %854 = vmatpush1.msra.mxu0 0.0
    %855 = vmatprep.subr.mxu0 0.0
    %856 = vmatpush1.msra.mxu0 0.0
    %857 = vmatprep.subr.mxu0 0.0
    %858 = vmatpush1.msra.mxu0 0.0
    %859 = vmatprep.subr.mxu0 0.0
    %860 = vmatpush1.msra.mxu0 0.0
    %861 = vmatprep.subr.mxu0 0.0
    %862 = vmatpush1.msra.mxu0 0.0
    %863 = vmatprep.subr.mxu0 0.0
    %864 = vmatpush1.msra.mxu0 0.0
    %865 = vmatprep.mubr.f32.mxu0 0.0
    %866 = vmatmul.mubr.f32.gmra.mrb[0].mxu0 %v799
    %v867 = vpop.f32.mrb[0].mxu0
    %v868 = vadd.f32 0.0, %v867
    %v869 = vpop.f32.mrb[0].mxu0
    %870 = vdwg.mxu0
    %871 = vrot.lane.b32.xlu0 %v536, 112
    %v872 = vpop.permute.xlu0 %871
    %873 = vrot.lane.b32.xlu0 %v536, 48
    %v874 = vpop.permute.xlu0 %873
    %v875 = vsel %vm256, %v872, 0
    %v877 = vsel %vm256, %v874, 0
    %879 = vmatprep.subr.mxu0 0.0
    %880 = vmatpush1.xpose.msra.mxu0 %v877
    %881 = vmatprep.subr.mxu0 0.0
    %882 = vmatpush1.xpose.msra.mxu0 0.0
    %883 = vmatprep.subr.mxu0 0.0
    %884 = vmatpush1.xpose.msra.mxu0 0.0
    %885 = vmatprep.subr.mxu0 0.0
    %886 = vmatpush1.xpose.msra.mxu0 0.0
    %887 = vmatprep.subr.mxu0 0.0
    %888 = vmatpush1.xpose.msra.mxu0 0.0
    %889 = vmatprep.subr.mxu0 0.0
    %890 = vmatpush1.xpose.msra.mxu0 0.0
    %891 = vmatprep.subr.mxu0 0.0
    %892 = vmatpush1.xpose.msra.mxu0 0.0
    %893 = vmatprep.subr.mxu0 0.0
    %894 = vmatpush1.xpose.msra.mxu0 0.0
    %895 = vmatprep.subr.mxu0 0.0
    %896 = vmatpush1.xpose.msra.mxu0 0.0
    %897 = vmatprep.subr.mxu0 0.0
    %898 = vmatpush1.xpose.msra.mxu0 0.0
    %899 = vmatprep.subr.mxu0 0.0
    %900 = vmatpush1.xpose.msra.mxu0 0.0
    %901 = vmatprep.subr.mxu0 0.0
    %902 = vmatpush1.xpose.msra.mxu0 0.0
    %903 = vmatprep.subr.mxu0 0.0
    %904 = vmatpush1.xpose.msra.mxu0 0.0
    %905 = vmatprep.subr.mxu0 0.0
    %906 = vmatpush1.xpose.msra.mxu0 0.0
    %907 = vmatprep.subr.mxu0 0.0
    %908 = vmatpush1.xpose.msra.mxu0 0.0
    %909 = vmatprep.subr.mxu0 0.0
    %910 = vmatpush1.xpose.msra.mxu0 0.0
    %911 = vmatprep.subr.mxu0 0.0
    %912 = vmatpush1.xpose.msra.mxu0 0.0
    %913 = vmatprep.subr.mxu0 0.0
    %914 = vmatpush1.xpose.msra.mxu0 0.0
    %915 = vmatprep.subr.mxu0 0.0
    %916 = vmatpush1.xpose.msra.mxu0 0.0
    %917 = vmatprep.subr.mxu0 0.0
    %918 = vmatpush1.xpose.msra.mxu0 0.0
    %919 = vmatprep.subr.mxu0 0.0
    %920 = vmatpush1.xpose.msra.mxu0 0.0
    %921 = vmatprep.subr.mxu0 0.0
    %922 = vmatpush1.xpose.msra.mxu0 0.0
    %923 = vmatprep.subr.mxu0 0.0
    %924 = vmatpush1.xpose.msra.mxu0 0.0
    %925 = vmatprep.subr.mxu0 0.0
    %926 = vmatpush1.xpose.msra.mxu0 0.0
    %927 = vmatprep.subr.mxu0 0.0
    %928 = vmatpush1.xpose.msra.mxu0 0.0
    %929 = vmatprep.subr.mxu0 0.0
    %930 = vmatpush1.xpose.msra.mxu0 0.0
    %931 = vmatprep.subr.mxu0 0.0
    %932 = vmatpush1.xpose.msra.mxu0 0.0
    %933 = vmatprep.subr.mxu0 0.0
    %934 = vmatpush1.xpose.msra.mxu0 0.0
    %935 = vmatprep.subr.mxu0 0.0
    %936 = vmatpush1.xpose.msra.mxu0 0.0
    %937 = vmatprep.subr.mxu0 0.0
    %938 = vmatpush1.xpose.msra.mxu0 0.0
    %939 = vmatprep.subr.mxu0 0.0
    %940 = vmatpush1.xpose.msra.mxu0 0.0
    %941 = vmatprep.subr.mxu0 0.0
    %942 = vmatpush1.xpose.msra.mxu0 0.0
    %943 = vmatprep.mubr.f32.mxu0 0.0
    %944 = vmatmul.mubr.f32.gmra.mrb[0].mxu0 %v875
    %v945 = vpop.f32.mrb[0].mxu0
    %v946 = vadd.f32 0.0, %v945
    %v947 = vpop.f32.mrb[0].mxu0
    %948 = vdwg.mxu0
    %949 = vrot.lane.b32.xlu0 %v542, 112
    %v950 = vpop.permute.xlu0 %949
    %951 = vrot.lane.b32.xlu0 %v542, 48
    %v952 = vpop.permute.xlu0 %951
    %v953 = vsel %vm256, %v950, 0
    %v955 = vsel %vm256, %v952, 0
    %957 = vmatprep.subr.mxu0 0.0
    %958 = vmatpush1.xpose.msra.mxu0 %v955
    %959 = vmatprep.subr.mxu0 0.0
    %960 = vmatpush1.xpose.msra.mxu0 0.0
    %961 = vmatprep.subr.mxu0 0.0
    %962 = vmatpush1.xpose.msra.mxu0 0.0
    %963 = vmatprep.subr.mxu0 0.0
    %964 = vmatpush1.xpose.msra.mxu0 0.0
    %965 = vmatprep.subr.mxu0 0.0
    %966 = vmatpush1.xpose.msra.mxu0 0.0
    %967 = vmatprep.subr.mxu0 0.0
    %968 = vmatpush1.xpose.msra.mxu0 0.0
    %969 = vmatprep.subr.mxu0 0.0
    %970 = vmatpush1.xpose.msra.mxu0 0.0
    %971 = vmatprep.subr.mxu0 0.0
    %972 = vmatpush1.xpose.msra.mxu0 0.0
    %973 = vmatprep.subr.mxu0 0.0
    %974 = vmatpush1.xpose.msra.mxu0 0.0
    %975 = vmatprep.subr.mxu0 0.0
    %976 = vmatpush1.xpose.msra.mxu0 0.0
    %977 = vmatprep.subr.mxu0 0.0
    %978 = vmatpush1.xpose.msra.mxu0 0.0
    %979 = vmatprep.subr.mxu0 0.0
    %980 = vmatpush1.xpose.msra.mxu0 0.0
    %981 = vmatprep.subr.mxu0 0.0
    %982 = vmatpush1.xpose.msra.mxu0 0.0
    %983 = vmatprep.subr.mxu0 0.0
    %984 = vmatpush1.xpose.msra.mxu0 0.0
    %985 = vmatprep.subr.mxu0 0.0
    %986 = vmatpush1.xpose.msra.mxu0 0.0
    %987 = vmatprep.subr.mxu0 0.0
    %988 = vmatpush1.xpose.msra.mxu0 0.0
    %989 = vmatprep.subr.mxu0 0.0
    %990 = vmatpush1.xpose.msra.mxu0 0.0
    %991 = vmatprep.subr.mxu0 0.0
    %992 = vmatpush1.xpose.msra.mxu0 0.0
    %993 = vmatprep.subr.mxu0 0.0
    %994 = vmatpush1.xpose.msra.mxu0 0.0
    %995 = vmatprep.subr.mxu0 0.0
    %996 = vmatpush1.xpose.msra.mxu0 0.0
    %997 = vmatprep.subr.mxu0 0.0
    %998 = vmatpush1.xpose.msra.mxu0 0.0
    %999 = vmatprep.subr.mxu0 0.0
    %1000 = vmatpush1.xpose.msra.mxu0 0.0
    %1001 = vmatprep.subr.mxu0 0.0
    %1002 = vmatpush1.xpose.msra.mxu0 0.0
    %1003 = vmatprep.subr.mxu0 0.0
    %1004 = vmatpush1.xpose.msra.mxu0 0.0
    %1005 = vmatprep.subr.mxu0 0.0
    %1006 = vmatpush1.xpose.msra.mxu0 0.0
    %1007 = vmatprep.subr.mxu0 0.0
    %1008 = vmatpush1.xpose.msra.mxu0 0.0
    %1009 = vmatprep.subr.mxu0 0.0
    %1010 = vmatpush1.xpose.msra.mxu0 0.0
    %1011 = vmatprep.subr.mxu0 0.0
    %1012 = vmatpush1.xpose.msra.mxu0 0.0
    %1013 = vmatprep.subr.mxu0 0.0
    %1014 = vmatpush1.xpose.msra.mxu0 0.0
    %1015 = vmatprep.subr.mxu0 0.0
    %1016 = vmatpush1.xpose.msra.mxu0 0.0
    %1017 = vmatprep.subr.mxu0 0.0
    %1018 = vmatpush1.xpose.msra.mxu0 0.0
    %1019 = vmatprep.subr.mxu0 0.0
    %1020 = vmatpush1.xpose.msra.mxu0 0.0
    %1021 = vmatprep.mubr.f32.mxu0 0.0
    %1022 = vmatmul.mubr.f32.gmra.mrb[0].mxu0 %v953
    %v1023 = vpop.f32.mrb[0].mxu0
    %v1024 = vadd.f32 0.0, %v1023
    %v1025 = vpop.f32.mrb[0].mxu0
    %1026 = vdwg.mxu0
    %v1027 = vmul.f32 %v946, 0.25
    %v1028 = vmul.f32 %v1024, 0.25
    %v1029 = vsel %vm702, %v1027, -inf
    %1030 = vmax.xlane.f32.xlu0 %v1029
    %v1031 = vpop.xlane.xlu0 %1030
    %v1032 = vsel %vm702, %v1028, -inf
    %1033 = vmax.xlane.f32.xlu0 %v1032
    %v1034 = vpop.xlane.xlu0 %1033
    %v1035 = vsub.f32 %v1027, %v1031
    %v1036 = vsub.f32 %v1028, %v1034
    %v1037 = vmul.f32 %v1035, 1.442695
    %v1038 = vpow.pop %v1037
    %v1039 = vmul.f32 %v1036, 1.442695
    %v1040 = vpow.pop %v1039
    %v1041 = vsel %vm702, %v1038, 0.0
    %1042 = vadd.xlane.f32.xlu0 %v1041
    %v1043 = vpop.xlane.xlu0 %1042
    %v1044 = vsel %vm702, %v1040, 0.0
    %1045 = vadd.xlane.f32.xlu0 %v1044
    %v1046 = vpop.xlane.xlu0 %1045
    %v1047 = vrcp.pop %v1043
    %v1048 = vmul.f32 %v1038, %v1047
    %v1049 = vrcp.pop %v1046
    %v1050 = vmul.f32 %v1040, %v1049
    %1052 = vrot.lane.b32.xlu0 %v538, 112
    %v1053 = vpop.permute.xlu0 %1052
    %v1056 = vsel %vm702, %v1048, 0
    %1058 = vmatprep.subr.mxu0 0.0
    %1059 = vmatpush1.msra.mxu0 %v1053
    %1060 = vmatprep.subr.mxu0 0.0
    %1061 = vmatpush1.msra.mxu0 0.0
    %1062 = vmatprep.subr.mxu0 0.0
    %1063 = vmatpush1.msra.mxu0 0.0
    %1064 = vmatprep.subr.mxu0 0.0
    %1065 = vmatpush1.msra.mxu0 0.0
    %1066 = vmatprep.subr.mxu0 0.0
    %1067 = vmatpush1.msra.mxu0 0.0
    %1068 = vmatprep.subr.mxu0 0.0
    %1069 = vmatpush1.msra.mxu0 0.0
    %1070 = vmatprep.subr.mxu0 0.0
    %1071 = vmatpush1.msra.mxu0 0.0
    %1072 = vmatprep.subr.mxu0 0.0
    %1073 = vmatpush1.msra.mxu0 0.0
    %1074 = vmatprep.subr.mxu0 0.0
    %1075 = vmatpush1.msra.mxu0 0.0
    %1076 = vmatprep.subr.mxu0 0.0
    %1077 = vmatpush1.msra.mxu0 0.0
    %1078 = vmatprep.subr.mxu0 0.0
    %1079 = vmatpush1.msra.mxu0 0.0
    %1080 = vmatprep.subr.mxu0 0.0
    %1081 = vmatpush1.msra.mxu0 0.0
    %1082 = vmatprep.subr.mxu0 0.0
    %1083 = vmatpush1.msra.mxu0 0.0
    %1084 = vmatprep.subr.mxu0 0.0
    %1085 = vmatpush1.msra.mxu0 0.0
    %1086 = vmatprep.subr.mxu0 0.0
    %1087 = vmatpush1.msra.mxu0 0.0
    %1088 = vmatprep.subr.mxu0 0.0
    %1089 = vmatpush1.msra.mxu0 0.0
    %1090 = vmatprep.subr.mxu0 0.0
    %1091 = vmatpush1.msra.mxu0 0.0
    %1092 = vmatprep.subr.mxu0 0.0
    %1093 = vmatpush1.msra.mxu0 0.0
    %1094 = vmatprep.subr.mxu0 0.0
    %1095 = vmatpush1.msra.mxu0 0.0
    %1096 = vmatprep.subr.mxu0 0.0
    %1097 = vmatpush1.msra.mxu0 0.0
    %1098 = vmatprep.subr.mxu0 0.0
    %1099 = vmatpush1.msra.mxu0 0.0
    %1100 = vmatprep.subr.mxu0 0.0
    %1101 = vmatpush1.msra.mxu0 0.0
    %1102 = vmatprep.subr.mxu0 0.0
    %1103 = vmatpush1.msra.mxu0 0.0
    %1104 = vmatprep.subr.mxu0 0.0
    %1105 = vmatpush1.msra.mxu0 0.0
    %1106 = vmatprep.subr.mxu0 0.0
    %1107 = vmatpush1.msra.mxu0 0.0
    %1108 = vmatprep.subr.mxu0 0.0
    %1109 = vmatpush1.msra.mxu0 0.0
    %1110 = vmatprep.subr.mxu0 0.0
    %1111 = vmatpush1.msra.mxu0 0.0
    %1112 = vmatprep.subr.mxu0 0.0
    %1113 = vmatpush1.msra.mxu0 0.0
    %1114 = vmatprep.subr.mxu0 0.0
    %1115 = vmatpush1.msra.mxu0 0.0
    %1116 = vmatprep.subr.mxu0 0.0
    %1117 = vmatpush1.msra.mxu0 0.0
    %1118 = vmatprep.subr.mxu0 0.0
    %1119 = vmatpush1.msra.mxu0 0.0
    %1120 = vmatprep.subr.mxu0 0.0
    %1121 = vmatpush1.msra.mxu0 0.0
    %1122 = vmatprep.mubr.f32.mxu0 0.0
    %1123 = vmatmul.mubr.f32.gmra.mrb[0].mxu0 %v1056
    %v1124 = vpop.f32.mrb[0].mxu0
    %v1125 = vadd.f32 0.0, %v1124
    %v1126 = vpop.f32.mrb[0].mxu0
    %1127 = vdwg.mxu0
    %1129 = vrot.lane.b32.xlu0 %v544, 112
    %v1130 = vpop.permute.xlu0 %1129
    %v1133 = vsel %vm702, %v1050, 0
    %1135 = vmatprep.subr.mxu0 0.0
    %1136 = vmatpush1.msra.mxu0 %v1130
    %1137 = vmatprep.subr.mxu0 0.0
    %1138 = vmatpush1.msra.mxu0 0.0
    %1139 = vmatprep.subr.mxu0 0.0
    %1140 = vmatpush1.msra.mxu0 0.0
    %1141 = vmatprep.subr.mxu0 0.0
    %1142 = vmatpush1.msra.mxu0 0.0
    %1143 = vmatprep.subr.mxu0 0.0
    %1144 = vmatpush1.msra.mxu0 0.0
    %1145 = vmatprep.subr.mxu0 0.0
    %1146 = vmatpush1.msra.mxu0 0.0
    %1147 = vmatprep.subr.mxu0 0.0
    %1148 = vmatpush1.msra.mxu0 0.0
    %1149 = vmatprep.subr.mxu0 0.0
    %1150 = vmatpush1.msra.mxu0 0.0
    %1151 = vmatprep.subr.mxu0 0.0
    %1152 = vmatpush1.msra.mxu0 0.0
    %1153 = vmatprep.subr.mxu0 0.0
    %1154 = vmatpush1.msra.mxu0 0.0
    %1155 = vmatprep.subr.mxu0 0.0
    %1156 = vmatpush1.msra.mxu0 0.0
    %1157 = vmatprep.subr.mxu0 0.0
    %1158 = vmatpush1.msra.mxu0 0.0
    %1159 = vmatprep.subr.mxu0 0.0
    %1160 = vmatpush1.msra.mxu0 0.0
    %1161 = vmatprep.subr.mxu0 0.0
    %1162 = vmatpush1.msra.mxu0 0.0
    %1163 = vmatprep.subr.mxu0 0.0
    %1164 = vmatpush1.msra.mxu0 0.0
    %1165 = vmatprep.subr.mxu0 0.0
    %1166 = vmatpush1.msra.mxu0 0.0
    %1167 = vmatprep.subr.mxu0 0.0
    %1168 = vmatpush1.msra.mxu0 0.0
    %1169 = vmatprep.subr.mxu0 0.0
    %1170 = vmatpush1.msra.mxu0 0.0
    %1171 = vmatprep.subr.mxu0 0.0
    %1172 = vmatpush1.msra.mxu0 0.0
    %1173 = vmatprep.subr.mxu0 0.0
    %1174 = vmatpush1.msra.mxu0 0.0
    %1175 = vmatprep.subr.mxu0 0.0
    %1176 = vmatpush1.msra.mxu0 0.0
    %1177 = vmatprep.subr.mxu0 0.0
    %1178 = vmatpush1.msra.mxu0 0.0
    %1179 = vmatprep.subr.mxu0 0.0
    %1180 = vmatpush1.msra.mxu0 0.0
    %1181 = vmatprep.subr.mxu0 0.0
    %1182 = vmatpush1.msra.mxu0 0.0
    %1183 = vmatprep.subr.mxu0 0.0
    %1184 = vmatpush1.msra.mxu0 0.0
    %1185 = vmatprep.subr.mxu0 0.0
    %1186 = vmatpush1.msra.mxu0 0.0
    %1187 = vmatprep.subr.mxu0 0.0
    %1188 = vmatpush1.msra.mxu0 0.0
    %1189 = vmatprep.subr.mxu0 0.0
    %1190 = vmatpush1.msra.mxu0 0.0
    %1191 = vmatprep.subr.mxu0 0.0
    %1192 = vmatpush1.msra.mxu0 0.0
    %1193 = vmatprep.subr.mxu0 0.0
    %1194 = vmatpush1.msra.mxu0 0.0
    %1195 = vmatprep.subr.mxu0 0.0
    %1196 = vmatpush1.msra.mxu0 0.0
    %1197 = vmatprep.subr.mxu0 0.0
    %1198 = vmatpush1.msra.mxu0 0.0
    %1199 = vmatprep.mubr.f32.mxu0 0.0
    %1200 = vmatmul.mubr.f32.gmra.mrb[0].mxu0 %v1133
    %v1201 = vpop.f32.mrb[0].mxu0
    %v1202 = vadd.f32 0.0, %v1201
    %v1203 = vpop.f32.mrb[0].mxu0
    %1204 = vdwg.mxu0
    %1205 = vrot.lane.b32.xlu0 %v536, 96
    %v1206 = vpop.permute.xlu0 %1205
    %1207 = vrot.lane.b32.xlu0 %v536, 32
    %v1208 = vpop.permute.xlu0 %1207
    %v1209 = vsel %vm256, %v1206, 0
    %v1211 = vsel %vm256, %v1208, 0
    %1213 = vmatprep.subr.mxu0 0.0
    %1214 = vmatpush1.xpose.msra.mxu0 %v1211
    %1215 = vmatprep.subr.mxu0 0.0
    %1216 = vmatpush1.xpose.msra.mxu0 0.0
    %1217 = vmatprep.subr.mxu0 0.0
    %1218 = vmatpush1.xpose.msra.mxu0 0.0
    %1219 = vmatprep.subr.mxu0 0.0
    %1220 = vmatpush1.xpose.msra.mxu0 0.0
    %1221 = vmatprep.subr.mxu0 0.0
    %1222 = vmatpush1.xpose.msra.mxu0 0.0
    %1223 = vmatprep.subr.mxu0 0.0
    %1224 = vmatpush1.xpose.msra.mxu0 0.0
    %1225 = vmatprep.subr.mxu0 0.0
    %1226 = vmatpush1.xpose.msra.mxu0 0.0
    %1227 = vmatprep.subr.mxu0 0.0
    %1228 = vmatpush1.xpose.msra.mxu0 0.0
    %1229 = vmatprep.subr.mxu0 0.0
    %1230 = vmatpush1.xpose.msra.mxu0 0.0
    %1231 = vmatprep.subr.mxu0 0.0
    %1232 = vmatpush1.xpose.msra.mxu0 0.0
    %1233 = vmatprep.subr.mxu0 0.0
    %1234 = vmatpush1.xpose.msra.mxu0 0.0
    %1235 = vmatprep.subr.mxu0 0.0
    %1236 = vmatpush1.xpose.msra.mxu0 0.0
    %1237 = vmatprep.subr.mxu0 0.0
    %1238 = vmatpush1.xpose.msra.mxu0 0.0
    %1239 = vmatprep.subr.mxu0 0.0
    %1240 = vmatpush1.xpose.msra.mxu0 0.0
    %1241 = vmatprep.subr.mxu0 0.0
    %1242 = vmatpush1.xpose.msra.mxu0 0.0
    %1243 = vmatprep.subr.mxu0 0.0
    %1244 = vmatpush1.xpose.msra.mxu0 0.0
    %1245 = vmatprep.subr.mxu0 0.0
    %1246 = vmatpush1.xpose.msra.mxu0 0.0
    %1247 = vmatprep.subr.mxu0 0.0
    %1248 = vmatpush1.xpose.msra.mxu0 0.0
    %1249 = vmatprep.subr.mxu0 0.0
    %1250 = vmatpush1.xpose.msra.mxu0 0.0
    %1251 = vmatprep.subr.mxu0 0.0
    %1252 = vmatpush1.xpose.msra.mxu0 0.0
    %1253 = vmatprep.subr.mxu0 0.0
    %1254 = vmatpush1.xpose.msra.mxu0 0.0
    %1255 = vmatprep.subr.mxu0 0.0
    %1256 = vmatpush1.xpose.msra.mxu0 0.0
    %1257 = vmatprep.subr.mxu0 0.0
    %1258 = vmatpush1.xpose.msra.mxu0 0.0
    %1259 = vmatprep.subr.mxu0 0.0
    %1260 = vmatpush1.xpose.msra.mxu0 0.0
    %1261 = vmatprep.subr.mxu0 0.0
    %1262 = vmatpush1.xpose.msra.mxu0 0.0
    %1263 = vmatprep.subr.mxu0 0.0
    %1264 = vmatpush1.xpose.msra.mxu0 0.0
    %1265 = vmatprep.subr.mxu0 0.0
    %1266 = vmatpush1.xpose.msra.mxu0 0.0
    %1267 = vmatprep.subr.mxu0 0.0
    %1268 = vmatpush1.xpose.msra.mxu0 0.0
    %1269 = vmatprep.subr.mxu0 0.0
    %1270 = vmatpush1.xpose.msra.mxu0 0.0
    %1271 = vmatprep.subr.mxu0 0.0
    %1272 = vmatpush1.xpose.msra.mxu0 0.0
    %1273 = vmatprep.subr.mxu0 0.0
    %1274 = vmatpush1.xpose.msra.mxu0 0.0
    %1275 = vmatprep.subr.mxu0 0.0
    %1276 = vmatpush1.xpose.msra.mxu0 0.0
    %1277 = vmatprep.mubr.f32.mxu0 0.0
    %1278 = vmatmul.mubr.f32.gmra.mrb[0].mxu0 %v1209
    %v1279 = vpop.f32.mrb[0].mxu0
    %v1280 = vadd.f32 0.0, %v1279
    %v1281 = vpop.f32.mrb[0].mxu0
    %1282 = vdwg.mxu0
    %1283 = vrot.lane.b32.xlu0 %v542, 96
    %v1284 = vpop.permute.xlu0 %1283
    %1285 = vrot.lane.b32.xlu0 %v542, 32
    %v1286 = vpop.permute.xlu0 %1285
    %v1287 = vsel %vm256, %v1284, 0
    %v1289 = vsel %vm256, %v1286, 0
    %1291 = vmatprep.subr.mxu0 0.0
    %1292 = vmatpush1.xpose.msra.mxu0 %v1289
    %1293 = vmatprep.subr.mxu0 0.0
    %1294 = vmatpush1.xpose.msra.mxu0 0.0
    %1295 = vmatprep.subr.mxu0 0.0
    %1296 = vmatpush1.xpose.msra.mxu0 0.0
    %1297 = vmatprep.subr.mxu0 0.0
    %1298 = vmatpush1.xpose.msra.mxu0 0.0
    %1299 = vmatprep.subr.mxu0 0.0
    %1300 = vmatpush1.xpose.msra.mxu0 0.0
    %1301 = vmatprep.subr.mxu0 0.0
    %1302 = vmatpush1.xpose.msra.mxu0 0.0
    %1303 = vmatprep.subr.mxu0 0.0
    %1304 = vmatpush1.xpose.msra.mxu0 0.0
    %1305 = vmatprep.subr.mxu0 0.0
    %1306 = vmatpush1.xpose.msra.mxu0 0.0
    %1307 = vmatprep.subr.mxu0 0.0
    %1308 = vmatpush1.xpose.msra.mxu0 0.0
    %1309 = vmatprep.subr.mxu0 0.0
    %1310 = vmatpush1.xpose.msra.mxu0 0.0
    %1311 = vmatprep.subr.mxu0 0.0
    %1312 = vmatpush1.xpose.msra.mxu0 0.0
    %1313 = vmatprep.subr.mxu0 0.0
    %1314 = vmatpush1.xpose.msra.mxu0 0.0
    %1315 = vmatprep.subr.mxu0 0.0
    %1316 = vmatpush1.xpose.msra.mxu0 0.0
    %1317 = vmatprep.subr.mxu0 0.0
    %1318 = vmatpush1.xpose.msra.mxu0 0.0
    %1319 = vmatprep.subr.mxu0 0.0
    %1320 = vmatpush1.xpose.msra.mxu0 0.0
    %1321 = vmatprep.subr.mxu0 0.0
    %1322 = vmatpush1.xpose.msra.mxu0 0.0
    %1323 = vmatprep.subr.mxu0 0.0
    %1324 = vmatpush1.xpose.msra.mxu0 0.0
    %1325 = vmatprep.subr.mxu0 0.0
    %1326 = vmatpush1.xpose.msra.mxu0 0.0
    %1327 = vmatprep.subr.mxu0 0.0
    %1328 = vmatpush1.xpose.msra.mxu0 0.0
    %1329 = vmatprep.subr.mxu0 0.0
    %1330 = vmatpush1.xpose.msra.mxu0 0.0
    %1331 = vmatprep.subr.mxu0 0.0
    %1332 = vmatpush1.xpose.msra.mxu0 0.0
    %1333 = vmatprep.subr.mxu0 0.0
    %1334 = vmatpush1.xpose.msra.mxu0 0.0
    %1335 = vmatprep.subr.mxu0 0.0
    %1336 = vmatpush1.xpose.msra.mxu0 0.0
    %1337 = vmatprep.subr.mxu0 0.0
    %1338 = vmatpush1.xpose.msra.mxu0 0.0
    %1339 = vmatprep.subr.mxu0 0.0
    %1340 = vmatpush1.xpose.msra.mxu0 0.0
    %1341 = vmatprep.subr.mxu0 0.0
    %1342 = vmatpush1.xpose.msra.mxu0 0.0
    %1343 = vmatprep.subr.mxu0 0.0
    %1344 = vmatpush1.xpose.msra.mxu0 0.0
    %1345 = vmatprep.subr.mxu0 0.0
    %1346 = vmatpush1.xpose.msra.mxu0 0.0
    %1347 = vmatprep.subr.mxu0 0.0
    %1348 = vmatpush1.xpose.msra.mxu0 0.0
    %1349 = vmatprep.subr.mxu0 0.0
    %1350 = vmatpush1.xpose.msra.mxu0 0.0
    %1351 = vmatprep.subr.mxu0 0.0
    %1352 = vmatpush1.xpose.msra.mxu0 0.0
    %1353 = vmatprep.subr.mxu0 0.0
    %1354 = vmatpush1.xpose.msra.mxu0 0.0
    %1355 = vmatprep.mubr.f32.mxu0 0.0
    %1356 = vmatmul.mubr.f32.gmra.mrb[0].mxu0 %v1287
    %v1357 = vpop.f32.mrb[0].mxu0
    %v1358 = vadd.f32 0.0, %v1357
    %v1359 = vpop.f32.mrb[0].mxu0
    %1360 = vdwg.mxu0
    %v1361 = vmul.f32 %v1280, 0.25
    %v1362 = vmul.f32 %v1358, 0.25
    %v1363 = vsel %vm702, %v1361, -inf
    %1364 = vmax.xlane.f32.xlu0 %v1363
    %v1365 = vpop.xlane.xlu0 %1364
    %v1366 = vsel %vm702, %v1362, -inf
    %1367 = vmax.xlane.f32.xlu0 %v1366
    %v1368 = vpop.xlane.xlu0 %1367
    %v1369 = vsub.f32 %v1361, %v1365
    %v1370 = vsub.f32 %v1362, %v1368
    %v1371 = vmul.f32 %v1369, 1.442695
    %v1372 = vpow.pop %v1371
    %v1373 = vmul.f32 %v1370, 1.442695
    %v1374 = vpow.pop %v1373
    %v1375 = vsel %vm702, %v1372, 0.0
    %1376 = vadd.xlane.f32.xlu0 %v1375
    %v1377 = vpop.xlane.xlu0 %1376
    %v1378 = vsel %vm702, %v1374, 0.0
    %1379 = vadd.xlane.f32.xlu0 %v1378
    %v1380 = vpop.xlane.xlu0 %1379
    %v1381 = vrcp.pop %v1377
    %v1382 = vmul.f32 %v1372, %v1381
    %v1383 = vrcp.pop %v1380
    %v1384 = vmul.f32 %v1374, %v1383
    %1385 = vrot.lane.b32.xlu0 %v538, 96
    %v1386 = vpop.permute.xlu0 %1385
    %v1389 = vsel %vm702, %v1382, 0
    %1391 = vmatprep.subr.mxu0 0.0
    %1392 = vmatpush1.msra.mxu0 %v1386
    %1393 = vmatprep.subr.mxu0 0.0
    %1394 = vmatpush1.msra.mxu0 0.0
    %1395 = vmatprep.subr.mxu0 0.0
    %1396 = vmatpush1.msra.mxu0 0.0
    %1397 = vmatprep.subr.mxu0 0.0
    %1398 = vmatpush1.msra.mxu0 0.0
    %1399 = vmatprep.subr.mxu0 0.0
    %1400 = vmatpush1.msra.mxu0 0.0
    %1401 = vmatprep.subr.mxu0 0.0
    %1402 = vmatpush1.msra.mxu0 0.0
    %1403 = vmatprep.subr.mxu0 0.0
    %1404 = vmatpush1.msra.mxu0 0.0
    %1405 = vmatprep.subr.mxu0 0.0
    %1406 = vmatpush1.msra.mxu0 0.0
    %1407 = vmatprep.subr.mxu0 0.0
    %1408 = vmatpush1.msra.mxu0 0.0
    %1409 = vmatprep.subr.mxu0 0.0
    %1410 = vmatpush1.msra.mxu0 0.0
    %1411 = vmatprep.subr.mxu0 0.0
    %1412 = vmatpush1.msra.mxu0 0.0
    %1413 = vmatprep.subr.mxu0 0.0
    %1414 = vmatpush1.msra.mxu0 0.0
    %1415 = vmatprep.subr.mxu0 0.0
    %1416 = vmatpush1.msra.mxu0 0.0
    %1417 = vmatprep.subr.mxu0 0.0
    %1418 = vmatpush1.msra.mxu0 0.0
    %1419 = vmatprep.subr.mxu0 0.0
    %1420 = vmatpush1.msra.mxu0 0.0
    %1421 = vmatprep.subr.mxu0 0.0
    %1422 = vmatpush1.msra.mxu0 0.0
    %1423 = vmatprep.subr.mxu0 0.0
    %1424 = vmatpush1.msra.mxu0 0.0
    %1425 = vmatprep.subr.mxu0 0.0
    %1426 = vmatpush1.msra.mxu0 0.0
    %1427 = vmatprep.subr.mxu0 0.0
    %1428 = vmatpush1.msra.mxu0 0.0
    %1429 = vmatprep.subr.mxu0 0.0
    %1430 = vmatpush1.msra.mxu0 0.0
    %1431 = vmatprep.subr.mxu0 0.0
    %1432 = vmatpush1.msra.mxu0 0.0
    %1433 = vmatprep.subr.mxu0 0.0
    %1434 = vmatpush1.msra.mxu0 0.0
    %1435 = vmatprep.subr.mxu0 0.0
    %1436 = vmatpush1.msra.mxu0 0.0
    %1437 = vmatprep.subr.mxu0 0.0
    %1438 = vmatpush1.msra.mxu0 0.0
    %1439 = vmatprep.subr.mxu0 0.0
    %1440 = vmatpush1.msra.mxu0 0.0
    %1441 = vmatprep.subr.mxu0 0.0
    %1442 = vmatpush1.msra.mxu0 0.0
    %1443 = vmatprep.subr.mxu0 0.0
    %1444 = vmatpush1.msra.mxu0 0.0
    %1445 = vmatprep.subr.mxu0 0.0
    %1446 = vmatpush1.msra.mxu0 0.0
    %1447 = vmatprep.subr.mxu0 0.0
    %1448 = vmatpush1.msra.mxu0 0.0
    %1449 = vmatprep.subr.mxu0 0.0
    %1450 = vmatpush1.msra.mxu0 0.0
    %1451 = vmatprep.subr.mxu0 0.0
    %1452 = vmatpush1.msra.mxu0 0.0
    %1453 = vmatprep.subr.mxu0 0.0
    %1454 = vmatpush1.msra.mxu0 0.0
    %1455 = vmatprep.mubr.f32.mxu0 0.0
    %1456 = vmatmul.mubr.f32.gmra.mrb[0].mxu0 %v1389
    %v1457 = vpop.f32.mrb[0].mxu0
    %v1458 = vadd.f32 0.0, %v1457
    %v1459 = vpop.f32.mrb[0].mxu0
    %1460 = vdwg.mxu0
    %1461 = vrot.lane.b32.xlu0 %v544, 96
    %v1462 = vpop.permute.xlu0 %1461
    %v1465 = vsel %vm702, %v1384, 0
    %1467 = vmatprep.subr.mxu0 0.0
    %1468 = vmatpush1.msra.mxu0 %v1462
    %1469 = vmatprep.subr.mxu0 0.0
    %1470 = vmatpush1.msra.mxu0 0.0
    %1471 = vmatprep.subr.mxu0 0.0
    %1472 = vmatpush1.msra.mxu0 0.0
    %1473 = vmatprep.subr.mxu0 0.0
    %1474 = vmatpush1.msra.mxu0 0.0
    %1475 = vmatprep.subr.mxu0 0.0
    %1476 = vmatpush1.msra.mxu0 0.0
    %1477 = vmatprep.subr.mxu0 0.0
    %1478 = vmatpush1.msra.mxu0 0.0
    %1479 = vmatprep.subr.mxu0 0.0
    %1480 = vmatpush1.msra.mxu0 0.0
    %1481 = vmatprep.subr.mxu0 0.0
    %1482 = vmatpush1.msra.mxu0 0.0
    %1483 = vmatprep.subr.mxu0 0.0
    %1484 = vmatpush1.msra.mxu0 0.0
    %1485 = vmatprep.subr.mxu0 0.0
    %1486 = vmatpush1.msra.mxu0 0.0
    %1487 = vmatprep.subr.mxu0 0.0
    %1488 = vmatpush1.msra.mxu0 0.0
    %1489 = vmatprep.subr.mxu0 0.0
    %1490 = vmatpush1.msra.mxu0 0.0
    %1491 = vmatprep.subr.mxu0 0.0
    %1492 = vmatpush1.msra.mxu0 0.0
    %1493 = vmatprep.subr.mxu0 0.0
    %1494 = vmatpush1.msra.mxu0 0.0
    %1495 = vmatprep.subr.mxu0 0.0
    %1496 = vmatpush1.msra.mxu0 0.0
    %1497 = vmatprep.subr.mxu0 0.0
    %1498 = vmatpush1.msra.mxu0 0.0
    %1499 = vmatprep.subr.mxu0 0.0
    %1500 = vmatpush1.msra.mxu0 0.0
    %1501 = vmatprep.subr.mxu0 0.0
    %1502 = vmatpush1.msra.mxu0 0.0
    %1503 = vmatprep.subr.mxu0 0.0
    %1504 = vmatpush1.msra.mxu0 0.0
    %1505 = vmatprep.subr.mxu0 0.0
    %1506 = vmatpush1.msra.mxu0 0.0
    %1507 = vmatprep.subr.mxu0 0.0
    %1508 = vmatpush1.msra.mxu0 0.0
    %1509 = vmatprep.subr.mxu0 0.0
    %1510 = vmatpush1.msra.mxu0 0.0
    %1511 = vmatprep.subr.mxu0 0.0
    %1512 = vmatpush1.msra.mxu0 0.0
    %1513 = vmatprep.subr.mxu0 0.0
    %1514 = vmatpush1.msra.mxu0 0.0
    %1515 = vmatprep.subr.mxu0 0.0
    %1516 = vmatpush1.msra.mxu0 0.0
    %1517 = vmatprep.subr.mxu0 0.0
    %1518 = vmatpush1.msra.mxu0 0.0
    %1519 = vmatprep.subr.mxu0 0.0
    %1520 = vmatpush1.msra.mxu0 0.0
    %1521 = vmatprep.subr.mxu0 0.0
    %1522 = vmatpush1.msra.mxu0 0.0
    %1523 = vmatprep.subr.mxu0 0.0
    %1524 = vmatpush1.msra.mxu0 0.0
    %1525 = vmatprep.subr.mxu0 0.0
    %1526 = vmatpush1.msra.mxu0 0.0
    %1527 = vmatprep.subr.mxu0 0.0
    %1528 = vmatpush1.msra.mxu0 0.0
    %1529 = vmatprep.subr.mxu0 0.0
    %1530 = vmatpush1.msra.mxu0 0.0
    %1531 = vmatprep.mubr.f32.mxu0 0.0
    %1532 = vmatmul.mubr.f32.gmra.mrb[0].mxu0 %v1465
    %v1533 = vpop.f32.mrb[0].mxu0
    %v1534 = vadd.f32 0.0, %v1533
    %v1535 = vpop.f32.mrb[0].mxu0
    %1536 = vdwg.mxu0
    %1537 = vrot.lane.b32.xlu0 %v536, 80
    %v1538 = vpop.permute.xlu0 %1537
    %1539 = vrot.lane.b32.xlu0 %v536, 16
    %v1540 = vpop.permute.xlu0 %1539
    %v1541 = vsel %vm256, %v1538, 0
    %v1543 = vsel %vm256, %v1540, 0
    %1545 = vmatprep.subr.mxu0 0.0
    %1546 = vmatpush1.xpose.msra.mxu0 %v1543
    %1547 = vmatprep.subr.mxu0 0.0
    %1548 = vmatpush1.xpose.msra.mxu0 0.0
    %1549 = vmatprep.subr.mxu0 0.0
    %1550 = vmatpush1.xpose.msra.mxu0 0.0
    %1551 = vmatprep.subr.mxu0 0.0
    %1552 = vmatpush1.xpose.msra.mxu0 0.0
    %1553 = vmatprep.subr.mxu0 0.0
    %1554 = vmatpush1.xpose.msra.mxu0 0.0
    %1555 = vmatprep.subr.mxu0 0.0
    %1556 = vmatpush1.xpose.msra.mxu0 0.0
    %1557 = vmatprep.subr.mxu0 0.0
    %1558 = vmatpush1.xpose.msra.mxu0 0.0
    %1559 = vmatprep.subr.mxu0 0.0
    %1560 = vmatpush1.xpose.msra.mxu0 0.0
    %1561 = vmatprep.subr.mxu0 0.0
    %1562 = vmatpush1.xpose.msra.mxu0 0.0
    %1563 = vmatprep.subr.mxu0 0.0
    %1564 = vmatpush1.xpose.msra.mxu0 0.0
    %1565 = vmatprep.subr.mxu0 0.0
    %1566 = vmatpush1.xpose.msra.mxu0 0.0
    %1567 = vmatprep.subr.mxu0 0.0
    %1568 = vmatpush1.xpose.msra.mxu0 0.0
    %1569 = vmatprep.subr.mxu0 0.0
    %1570 = vmatpush1.xpose.msra.mxu0 0.0
    %1571 = vmatprep.subr.mxu0 0.0
    %1572 = vmatpush1.xpose.msra.mxu0 0.0
    %1573 = vmatprep.subr.mxu0 0.0
    %1574 = vmatpush1.xpose.msra.mxu0 0.0
    %1575 = vmatprep.subr.mxu0 0.0
    %1576 = vmatpush1.xpose.msra.mxu0 0.0
    %1577 = vmatprep.subr.mxu0 0.0
    %1578 = vmatpush1.xpose.msra.mxu0 0.0
    %1579 = vmatprep.subr.mxu0 0.0
    %1580 = vmatpush1.xpose.msra.mxu0 0.0
    %1581 = vmatprep.subr.mxu0 0.0
    %1582 = vmatpush1.xpose.msra.mxu0 0.0
    %1583 = vmatprep.subr.mxu0 0.0
    %1584 = vmatpush1.xpose.msra.mxu0 0.0
    %1585 = vmatprep.subr.mxu0 0.0
    %1586 = vmatpush1.xpose.msra.mxu0 0.0
    %1587 = vmatprep.subr.mxu0 0.0
    %1588 = vmatpush1.xpose.msra.mxu0 0.0
    %1589 = vmatprep.subr.mxu0 0.0
    %1590 = vmatpush1.xpose.msra.mxu0 0.0
    %1591 = vmatprep.subr.mxu0 0.0
    %1592 = vmatpush1.xpose.msra.mxu0 0.0
    %1593 = vmatprep.subr.mxu0 0.0
    %1594 = vmatpush1.xpose.msra.mxu0 0.0
    %1595 = vmatprep.subr.mxu0 0.0
    %1596 = vmatpush1.xpose.msra.mxu0 0.0
    %1597 = vmatprep.subr.mxu0 0.0
    %1598 = vmatpush1.xpose.msra.mxu0 0.0
    %1599 = vmatprep.subr.mxu0 0.0
    %1600 = vmatpush1.xpose.msra.mxu0 0.0
    %1601 = vmatprep.subr.mxu0 0.0
    %1602 = vmatpush1.xpose.msra.mxu0 0.0
    %1603 = vmatprep.subr.mxu0 0.0
    %1604 = vmatpush1.xpose.msra.mxu0 0.0
    %1605 = vmatprep.subr.mxu0 0.0
    %1606 = vmatpush1.xpose.msra.mxu0 0.0
    %1607 = vmatprep.subr.mxu0 0.0
    %1608 = vmatpush1.xpose.msra.mxu0 0.0
    %1609 = vmatprep.mubr.f32.mxu0 0.0
    %1610 = vmatmul.mubr.f32.gmra.mrb[0].mxu0 %v1541
    %v1611 = vpop.f32.mrb[0].mxu0
    %v1612 = vadd.f32 0.0, %v1611
    %v1613 = vpop.f32.mrb[0].mxu0
    %1614 = vdwg.mxu0
    %1615 = vrot.lane.b32.xlu0 %v542, 80
    %v1616 = vpop.permute.xlu0 %1615
    %1617 = vrot.lane.b32.xlu0 %v542, 16
    %v1618 = vpop.permute.xlu0 %1617
    %v1619 = vsel %vm256, %v1616, 0
    %v1621 = vsel %vm256, %v1618, 0
    %1623 = vmatprep.subr.mxu0 0.0
    %1624 = vmatpush1.xpose.msra.mxu0 %v1621
    %1625 = vmatprep.subr.mxu0 0.0
    %1626 = vmatpush1.xpose.msra.mxu0 0.0
    %1627 = vmatprep.subr.mxu0 0.0
    %1628 = vmatpush1.xpose.msra.mxu0 0.0
    %1629 = vmatprep.subr.mxu0 0.0
    %1630 = vmatpush1.xpose.msra.mxu0 0.0
    %1631 = vmatprep.subr.mxu0 0.0
    %1632 = vmatpush1.xpose.msra.mxu0 0.0
    %1633 = vmatprep.subr.mxu0 0.0
    %1634 = vmatpush1.xpose.msra.mxu0 0.0
    %1635 = vmatprep.subr.mxu0 0.0
    %1636 = vmatpush1.xpose.msra.mxu0 0.0
    %1637 = vmatprep.subr.mxu0 0.0
    %1638 = vmatpush1.xpose.msra.mxu0 0.0
    %1639 = vmatprep.subr.mxu0 0.0
    %1640 = vmatpush1.xpose.msra.mxu0 0.0
    %1641 = vmatprep.subr.mxu0 0.0
    %1642 = vmatpush1.xpose.msra.mxu0 0.0
    %1643 = vmatprep.subr.mxu0 0.0
    %1644 = vmatpush1.xpose.msra.mxu0 0.0
    %1645 = vmatprep.subr.mxu0 0.0
    %1646 = vmatpush1.xpose.msra.mxu0 0.0
    %1647 = vmatprep.subr.mxu0 0.0
    %1648 = vmatpush1.xpose.msra.mxu0 0.0
    %1649 = vmatprep.subr.mxu0 0.0
    %1650 = vmatpush1.xpose.msra.mxu0 0.0
    %1651 = vmatprep.subr.mxu0 0.0
    %1652 = vmatpush1.xpose.msra.mxu0 0.0
    %1653 = vmatprep.subr.mxu0 0.0
    %1654 = vmatpush1.xpose.msra.mxu0 0.0
    %1655 = vmatprep.subr.mxu0 0.0
    %1656 = vmatpush1.xpose.msra.mxu0 0.0
    %1657 = vmatprep.subr.mxu0 0.0
    %1658 = vmatpush1.xpose.msra.mxu0 0.0
    %1659 = vmatprep.subr.mxu0 0.0
    %1660 = vmatpush1.xpose.msra.mxu0 0.0
    %1661 = vmatprep.subr.mxu0 0.0
    %1662 = vmatpush1.xpose.msra.mxu0 0.0
    %1663 = vmatprep.subr.mxu0 0.0
    %1664 = vmatpush1.xpose.msra.mxu0 0.0
    %1665 = vmatprep.subr.mxu0 0.0
    %1666 = vmatpush1.xpose.msra.mxu0 0.0
    %1667 = vmatprep.subr.mxu0 0.0
    %1668 = vmatpush1.xpose.msra.mxu0 0.0
    %1669 = vmatprep.subr.mxu0 0.0
    %1670 = vmatpush1.xpose.msra.mxu0 0.0
    %1671 = vmatprep.subr.mxu0 0.0
    %1672 = vmatpush1.xpose.msra.mxu0 0.0
    %1673 = vmatprep.subr.mxu0 0.0
    %1674 = vmatpush1.xpose.msra.mxu0 0.0
    %1675 = vmatprep.subr.mxu0 0.0
    %1676 = vmatpush1.xpose.msra.mxu0 0.0
    %1677 = vmatprep.subr.mxu0 0.0
    %1678 = vmatpush1.xpose.msra.mxu0 0.0
    %1679 = vmatprep.subr.mxu0 0.0
    %1680 = vmatpush1.xpose.msra.mxu0 0.0
    %1681 = vmatprep.subr.mxu0 0.0
    %1682 = vmatpush1.xpose.msra.mxu0 0.0
    %1683 = vmatprep.subr.mxu0 0.0
    %1684 = vmatpush1.xpose.msra.mxu0 0.0
    %1685 = vmatprep.subr.mxu0 0.0
    %1686 = vmatpush1.xpose.msra.mxu0 0.0
    %1687 = vmatprep.mubr.f32.mxu0 0.0
    %1688 = vmatmul.mubr.f32.gmra.mrb[0].mxu0 %v1619
    %v1689 = vpop.f32.mrb[0].mxu0
    %v1690 = vadd.f32 0.0, %v1689
    %v1691 = vpop.f32.mrb[0].mxu0
    %1692 = vdwg.mxu0
    %v1693 = vmul.f32 %v1612, 0.25
    %v1694 = vmul.f32 %v1690, 0.25
    %v1695 = vsel %vm702, %v1693, -inf
    %1696 = vmax.xlane.f32.xlu0 %v1695
    %v1697 = vpop.xlane.xlu0 %1696
    %v1698 = vsel %vm702, %v1694, -inf
    %1699 = vmax.xlane.f32.xlu0 %v1698
    %v1700 = vpop.xlane.xlu0 %1699
    %v1701 = vsub.f32 %v1693, %v1697
    %v1702 = vsub.f32 %v1694, %v1700
    %v1703 = vmul.f32 %v1701, 1.442695
    %v1704 = vpow.pop %v1703
    %v1705 = vmul.f32 %v1702, 1.442695
    %v1706 = vpow.pop %v1705
    %v1707 = vsel %vm702, %v1704, 0.0
    %1708 = vadd.xlane.f32.xlu0 %v1707
    %v1709 = vpop.xlane.xlu0 %1708
    %v1710 = vsel %vm702, %v1706, 0.0
    %1711 = vadd.xlane.f32.xlu0 %v1710
    %v1712 = vpop.xlane.xlu0 %1711
    %v1713 = vrcp.pop %v1709
    %v1714 = vmul.f32 %v1704, %v1713
    %v1715 = vrcp.pop %v1712
    %v1716 = vmul.f32 %v1706, %v1715
    %1717 = vrot.lane.b32.xlu0 %v538, 80
    %v1718 = vpop.permute.xlu0 %1717
    %v1721 = vsel %vm702, %v1714, 0
    %1723 = vmatprep.subr.mxu0 0.0
    %1724 = vmatpush1.msra.mxu0 %v1718
    %1725 = vmatprep.subr.mxu0 0.0
    %1726 = vmatpush1.msra.mxu0 0.0
    %1727 = vmatprep.subr.mxu0 0.0
    %1728 = vmatpush1.msra.mxu0 0.0
    %1729 = vmatprep.subr.mxu0 0.0
    %1730 = vmatpush1.msra.mxu0 0.0
    %1731 = vmatprep.subr.mxu0 0.0
    %1732 = vmatpush1.msra.mxu0 0.0
    %1733 = vmatprep.subr.mxu0 0.0
    %1734 = vmatpush1.msra.mxu0 0.0
    %1735 = vmatprep.subr.mxu0 0.0
    %1736 = vmatpush1.msra.mxu0 0.0
    %1737 = vmatprep.subr.mxu0 0.0
    %1738 = vmatpush1.msra.mxu0 0.0
    %1739 = vmatprep.subr.mxu0 0.0
    %1740 = vmatpush1.msra.mxu0 0.0
    %1741 = vmatprep.subr.mxu0 0.0
    %1742 = vmatpush1.msra.mxu0 0.0
    %1743 = vmatprep.subr.mxu0 0.0
    %1744 = vmatpush1.msra.mxu0 0.0
    %1745 = vmatprep.subr.mxu0 0.0
    %1746 = vmatpush1.msra.mxu0 0.0
    %1747 = vmatprep.subr.mxu0 0.0
    %1748 = vmatpush1.msra.mxu0 0.0
    %1749 = vmatprep.subr.mxu0 0.0
    %1750 = vmatpush1.msra.mxu0 0.0
    %1751 = vmatprep.subr.mxu0 0.0
    %1752 = vmatpush1.msra.mxu0 0.0
    %1753 = vmatprep.subr.mxu0 0.0
    %1754 = vmatpush1.msra.mxu0 0.0
    %1755 = vmatprep.subr.mxu0 0.0
    %1756 = vmatpush1.msra.mxu0 0.0
    %1757 = vmatprep.subr.mxu0 0.0
    %1758 = vmatpush1.msra.mxu0 0.0
    %1759 = vmatprep.subr.mxu0 0.0
    %1760 = vmatpush1.msra.mxu0 0.0
    %1761 = vmatprep.subr.mxu0 0.0
    %1762 = vmatpush1.msra.mxu0 0.0
    %1763 = vmatprep.subr.mxu0 0.0
    %1764 = vmatpush1.msra.mxu0 0.0
    %1765 = vmatprep.subr.mxu0 0.0
    %1766 = vmatpush1.msra.mxu0 0.0
    %1767 = vmatprep.subr.mxu0 0.0
    %1768 = vmatpush1.msra.mxu0 0.0
    %1769 = vmatprep.subr.mxu0 0.0
    %1770 = vmatpush1.msra.mxu0 0.0
    %1771 = vmatprep.subr.mxu0 0.0
    %1772 = vmatpush1.msra.mxu0 0.0
    %1773 = vmatprep.subr.mxu0 0.0
    %1774 = vmatpush1.msra.mxu0 0.0
    %1775 = vmatprep.subr.mxu0 0.0
    %1776 = vmatpush1.msra.mxu0 0.0
    %1777 = vmatprep.subr.mxu0 0.0
    %1778 = vmatpush1.msra.mxu0 0.0
    %1779 = vmatprep.subr.mxu0 0.0
    %1780 = vmatpush1.msra.mxu0 0.0
    %1781 = vmatprep.subr.mxu0 0.0
    %1782 = vmatpush1.msra.mxu0 0.0
    %1783 = vmatprep.subr.mxu0 0.0
    %1784 = vmatpush1.msra.mxu0 0.0
    %1785 = vmatprep.subr.mxu0 0.0
    %1786 = vmatpush1.msra.mxu0 0.0
    %1787 = vmatprep.mubr.f32.mxu0 0.0
    %1788 = vmatmul.mubr.f32.gmra.mrb[0].mxu0 %v1721
    %v1789 = vpop.f32.mrb[0].mxu0
    %v1790 = vadd.f32 0.0, %v1789
    %v1791 = vpop.f32.mrb[0].mxu0
    %1792 = vdwg.mxu0
    %1793 = vrot.lane.b32.xlu0 %v544, 80
    %v1794 = vpop.permute.xlu0 %1793
    %v1797 = vsel %vm702, %v1716, 0
    %1799 = vmatprep.subr.mxu0 0.0
    %1800 = vmatpush1.msra.mxu0 %v1794
    %1801 = vmatprep.subr.mxu0 0.0
    %1802 = vmatpush1.msra.mxu0 0.0
    %1803 = vmatprep.subr.mxu0 0.0
    %1804 = vmatpush1.msra.mxu0 0.0
    %1805 = vmatprep.subr.mxu0 0.0
    %1806 = vmatpush1.msra.mxu0 0.0
    %1807 = vmatprep.subr.mxu0 0.0
    %1808 = vmatpush1.msra.mxu0 0.0
    %1809 = vmatprep.subr.mxu0 0.0
    %1810 = vmatpush1.msra.mxu0 0.0
    %1811 = vmatprep.subr.mxu0 0.0
    %1812 = vmatpush1.msra.mxu0 0.0
    %1813 = vmatprep.subr.mxu0 0.0
    %1814 = vmatpush1.msra.mxu0 0.0
    %1815 = vmatprep.subr.mxu0 0.0
    %1816 = vmatpush1.msra.mxu0 0.0
    %1817 = vmatprep.subr.mxu0 0.0
    %1818 = vmatpush1.msra.mxu0 0.0
    %1819 = vmatprep.subr.mxu0 0.0
    %1820 = vmatpush1.msra.mxu0 0.0
    %1821 = vmatprep.subr.mxu0 0.0
    %1822 = vmatpush1.msra.mxu0 0.0
    %1823 = vmatprep.subr.mxu0 0.0
    %1824 = vmatpush1.msra.mxu0 0.0
    %1825 = vmatprep.subr.mxu0 0.0
    %1826 = vmatpush1.msra.mxu0 0.0
    %1827 = vmatprep.subr.mxu0 0.0
    %1828 = vmatpush1.msra.mxu0 0.0
    %1829 = vmatprep.subr.mxu0 0.0
    %1830 = vmatpush1.msra.mxu0 0.0
    %1831 = vmatprep.subr.mxu0 0.0
    %1832 = vmatpush1.msra.mxu0 0.0
    %1833 = vmatprep.subr.mxu0 0.0
    %1834 = vmatpush1.msra.mxu0 0.0
    %1835 = vmatprep.subr.mxu0 0.0
    %1836 = vmatpush1.msra.mxu0 0.0
    %1837 = vmatprep.subr.mxu0 0.0
    %1838 = vmatpush1.msra.mxu0 0.0
    %1839 = vmatprep.subr.mxu0 0.0
    %1840 = vmatpush1.msra.mxu0 0.0
    %1841 = vmatprep.subr.mxu0 0.0
    %1842 = vmatpush1.msra.mxu0 0.0
    %1843 = vmatprep.subr.mxu0 0.0
    %1844 = vmatpush1.msra.mxu0 0.0
    %1845 = vmatprep.subr.mxu0 0.0
    %1846 = vmatpush1.msra.mxu0 0.0
    %1847 = vmatprep.subr.mxu0 0.0
    %1848 = vmatpush1.msra.mxu0 0.0
    %1849 = vmatprep.subr.mxu0 0.0
    %1850 = vmatpush1.msra.mxu0 0.0
    %1851 = vmatprep.subr.mxu0 0.0
    %1852 = vmatpush1.msra.mxu0 0.0
    %1853 = vmatprep.subr.mxu0 0.0
    %1854 = vmatpush1.msra.mxu0 0.0
    %1855 = vmatprep.subr.mxu0 0.0
    %1856 = vmatpush1.msra.mxu0 0.0
    %1857 = vmatprep.subr.mxu0 0.0
    %1858 = vmatpush1.msra.mxu0 0.0
    %1859 = vmatprep.subr.mxu0 0.0
    %1860 = vmatpush1.msra.mxu0 0.0
    %1861 = vmatprep.subr.mxu0 0.0
    %1862 = vmatpush1.msra.mxu0 0.0
    %1863 = vmatprep.mubr.f32.mxu0 0.0
    %1864 = vmatmul.mubr.f32.gmra.mrb[0].mxu0 %v1797
    %v1865 = vpop.f32.mrb[0].mxu0
    %v1866 = vadd.f32 0.0, %v1865
    %v1867 = vpop.f32.mrb[0].mxu0
    %1868 = vdwg.mxu0
    %1871 = vrot.lane.b32.xlu0 %v1125, 16
    %v1872 = vpop.permute.xlu0 %1871
    %1873 = vrot.lane.b32.xlu0 %v1202, 16
    %v1874 = vpop.permute.xlu0 %1873
    %1879 = vrot.lane.b32.xlu0 %v1458, 32
    %v1880 = vpop.permute.xlu0 %1879
    %1881 = vrot.lane.b32.xlu0 %v1534, 32
    %v1882 = vpop.permute.xlu0 %1881
    %1887 = vrot.lane.b32.xlu0 %v1790, 48
    %v1888 = vpop.permute.xlu0 %1887
    %1889 = vrot.lane.b32.xlu0 %v1866, 48
    %v1890 = vpop.permute.xlu0 %1889
    %v1893 = vsel %vm256, %v795, %v1872
    %v1894 = vsel %vm256, %v868, %v1874
    %vm1895 = vcmask 261120
    %v1896 = vsel %vm1895, %v1893, %v1880
    %v1897 = vsel %vm1895, %v1894, %v1882
    %vm1898 = vcmask 392192
    %v1899 = vsel %vm1898, %v1896, %v1888
    %v1900 = vsel %vm1898, %v1897, %v1890
    %v1901 = vld [vmem:[%s10] sm:$0xff]
    %v1902 = vld [vmem:[%s10 + $0x8] sm:$0xff]
    %v1903 = vld [vmem:[%s10 + $0x10] sm:$0xff]
    %v1904 = vld [vmem:[%s10 + $0x18] sm:$0xff]
    %v1905 = vld [vmem:[%s10 + $0x20] sm:$0xff]
    %v1906 = vld [vmem:[%s10 + $0x28] sm:$0xff]
    %v1907 = vld [vmem:[%s10 + $0x30] sm:$0xff]
    %v1908 = vld [vmem:[%s10 + $0x38] sm:$0xff]
    %v1909 = vld [vmem:[%s11] sm:$0x1]
    %v1911 = vlaneseq
    %v1912 = vshrl.u32 %v1911, 7
    %v1913 = vsub.s32 0, %v1912
    %v1914 = vrot.slane %v1909, %v1913
    %v1917 = vsel %vm462, %v1899, 0
    %v1920 = vsel %vm462, %v1900, 0
    %1922 = vmatprep.subr.mxu0 0.0
    %1923 = vmatpush1.msra.mxu0 %v1901
    %1924 = vmatprep.subr.mxu0 0.0
    %1925 = vmatpush1.msra.mxu0 %v1902
    %1926 = vmatprep.subr.mxu0 0.0
    %1927 = vmatpush1.msra.mxu0 %v1903
    %1928 = vmatprep.subr.mxu0 0.0
    %1929 = vmatpush1.msra.mxu0 %v1904
    %1930 = vmatprep.subr.mxu0 0.0
    %1931 = vmatpush1.msra.mxu0 %v1905
    %1932 = vmatprep.subr.mxu0 0.0
    %1933 = vmatpush1.msra.mxu0 %v1906
    %1934 = vmatprep.subr.mxu0 0.0
    %1935 = vmatpush1.msra.mxu0 %v1907
    %1936 = vmatprep.subr.mxu0 0.0
    %1937 = vmatpush1.msra.mxu0 %v1908
    %1938 = vmatprep.subr.mxu0 0.0
    %1939 = vmatpush1.msra.mxu0 0.0
    %1940 = vmatprep.subr.mxu0 0.0
    %1941 = vmatpush1.msra.mxu0 0.0
    %1942 = vmatprep.subr.mxu0 0.0
    %1943 = vmatpush1.msra.mxu0 0.0
    %1944 = vmatprep.subr.mxu0 0.0
    %1945 = vmatpush1.msra.mxu0 0.0
    %1946 = vmatprep.subr.mxu0 0.0
    %1947 = vmatpush1.msra.mxu0 0.0
    %1948 = vmatprep.subr.mxu0 0.0
    %1949 = vmatpush1.msra.mxu0 0.0
    %1950 = vmatprep.subr.mxu0 0.0
    %1951 = vmatpush1.msra.mxu0 0.0
    %1952 = vmatprep.subr.mxu0 0.0
    %1953 = vmatpush1.msra.mxu0 0.0
    %1954 = vmatprep.subr.mxu0 0.0
    %1955 = vmatpush1.msra.mxu0 0.0
    %1956 = vmatprep.subr.mxu0 0.0
    %1957 = vmatpush1.msra.mxu0 0.0
    %1958 = vmatprep.subr.mxu0 0.0
    %1959 = vmatpush1.msra.mxu0 0.0
    %1960 = vmatprep.subr.mxu0 0.0
    %1961 = vmatpush1.msra.mxu0 0.0
    %1962 = vmatprep.subr.mxu0 0.0
    %1963 = vmatpush1.msra.mxu0 0.0
    %1964 = vmatprep.subr.mxu0 0.0
    %1965 = vmatpush1.msra.mxu0 0.0
    %1966 = vmatprep.subr.mxu0 0.0
    %1967 = vmatpush1.msra.mxu0 0.0
    %1968 = vmatprep.subr.mxu0 0.0
    %1969 = vmatpush1.msra.mxu0 0.0
    %1970 = vmatprep.subr.mxu0 0.0
    %1971 = vmatpush1.msra.mxu0 0.0
    %1972 = vmatprep.subr.mxu0 0.0
    %1973 = vmatpush1.msra.mxu0 0.0
    %1974 = vmatprep.subr.mxu0 0.0
    %1975 = vmatpush1.msra.mxu0 0.0
    %1976 = vmatprep.subr.mxu0 0.0
    %1977 = vmatpush1.msra.mxu0 0.0
    %1978 = vmatprep.subr.mxu0 0.0
    %1979 = vmatpush1.msra.mxu0 0.0
    %1980 = vmatprep.subr.mxu0 0.0
    %1981 = vmatpush1.msra.mxu0 0.0
    %1982 = vmatprep.subr.mxu0 0.0
    %1983 = vmatpush1.msra.mxu0 0.0
    %1984 = vmatprep.subr.mxu0 0.0
    %1985 = vmatpush1.msra.mxu0 0.0
    %1986 = vmatprep.mubr.f32.mxu0 0.0
    %1987 = vmatmul.mubr.f32.gmra.mrb[0].mxu0 %v1917
    %v1988 = vpop.f32.mrb[0].mxu0
    %v1989 = vadd.f32 %v1914, %v1988
    %v1990 = vpop.f32.mrb[0].mxu0
    %1991 = vmatprep.mubr.f32.mxu0 0.0
    %1992 = vmatmul.mubr.f32.gmra.mrb[0].mxu0 %v1920
    %v1993 = vpop.f32.mrb[0].mxu0
    %v1994 = vadd.f32 %v1914, %v1993
    %v1995 = vpop.f32.mrb[0].mxu0
    %1996 = vdwg.mxu0
    %v1997 = vadd.f32 %v432, %v1989
    %v1998 = vadd.f32 %v433, %v1994
    %v1999 = vld [vmem:[#allocation13] sm:$0x1]
    %v2000 = vld [vmem:[#allocation14] sm:$0x1]
    %v2001 = vsel %vm462, %v1997, 0.0
    %2002 = vadd.xlane.f32.xlu0 %v2001
    %v2003 = vpop.xlane.xlu0 %2002
    %v2004 = vsel %vm462, %v1998, 0.0
    %2005 = vadd.xlane.f32.xlu0 %v2004
    %v2006 = vpop.xlane.xlu0 %2005
    %v2007 = vrcp.pop 64.0
    %v2008 = vmul.f32 %v2003, %v2007
    %v2009 = vmul.f32 %v2006, %v2007
    %v2010 = vsub.f32 %v1997, %v2008
    %v2011 = vsub.f32 %v1998, %v2009
    %v2012 = vmul.f32 %v2010, %v2010
    %v2013 = vmul.f32 %v2011, %v2011
    %v2014 = vsel %vm462, %v2012, 0.0
    %2015 = vadd.xlane.f32.xlu0 %v2014
    %v2016 = vpop.xlane.xlu0 %2015
    %v2017 = vsel %vm462, %v2013, 0.0
    %2018 = vadd.xlane.f32.xlu0 %v2017
    %v2019 = vpop.xlane.xlu0 %2018
    %v2020 = vmul.f32 %v2016, %v2007
    %v2021 = vmul.f32 %v2019, %v2007
    %v2022 = vadd.f32 %v2020, 1e-05
    %v2023 = vadd.f32 %v2021, 1e-05
    %v2024 = vrsqrt.pop %v2022
    %v2025 = vrsqrt.pop %v2023
    %v2026 = vmul.f32 %v2010, %v2024
    %v2027 = vmul.f32 %v2011, %v2025
    %v2029 = vlaneseq
    %v2030 = vshrl.u32 %v2029, 7
    %v2031 = vsub.s32 0, %v2030
    %v2032 = vrot.slane %v1999, %v2031
    %v2034 = vmul.f32 %v2026, %v2032
    %v2035 = vmul.f32 %v2027, %v2032
    %v2037 = vlaneseq
    %v2038 = vshrl.u32 %v2037, 7
    %v2039 = vsub.s32 0, %v2038
    %v2040 = vrot.slane %v2000, %v2039
    %v2042 = vadd.f32 %v2034, %v2040
    %v2043 = vadd.f32 %v2035, %v2040
    %v2044 = vld [vmem:[%s14] sm:$0xff]
    %v2045 = vld [vmem:[%s14 + $0x8] sm:$0xff]
    %v2046 = vld [vmem:[%s14 + $0x10] sm:$0xff]
    %v2047 = vld [vmem:[%s14 + $0x18] sm:$0xff]
    %v2048 = vld [vmem:[%s14 + $0x20] sm:$0xff]
    %v2049 = vld [vmem:[%s14 + $0x28] sm:$0xff]
    %v2050 = vld [vmem:[%s14 + $0x30] sm:$0xff]
    %v2051 = vld [vmem:[%s14 + $0x38] sm:$0xff]
    %v2052 = vld [vmem:[#allocation16] sm:$0x1]
    %v2054 = vlaneseq
    %v2055 = vshrl.u32 %v2054, 7
    %v2056 = vsub.s32 0, %v2055
    %v2057 = vrot.slane %v2052, %v2056
    %v2060 = vsel %vm462, %v2042, 0
    %v2063 = vsel %vm462, %v2043, 0
    %2065 = vmatprep.subr.mxu0 0.0
    %2066 = vmatpush1.msra.mxu0 %v2044
    %2067 = vmatprep.subr.mxu0 0.0
    %2068 = vmatpush1.msra.mxu0 %v2045
    %2069 = vmatprep.subr.mxu0 0.0
    %2070 = vmatpush1.msra.mxu0 %v2046
    %2071 = vmatprep.subr.mxu0 0.0
    %2072 = vmatpush1.msra.mxu0 %v2047
    %2073 = vmatprep.subr.mxu0 0.0
    %2074 = vmatpush1.msra.mxu0 %v2048
    %2075 = vmatprep.subr.mxu0 0.0
    %2076 = vmatpush1.msra.mxu0 %v2049
    %2077 = vmatprep.subr.mxu0 0.0
    %2078 = vmatpush1.msra.mxu0 %v2050
    %2079 = vmatprep.subr.mxu0 0.0
    %2080 = vmatpush1.msra.mxu0 %v2051
    %2081 = vmatprep.subr.mxu0 0.0
    %2082 = vmatpush1.msra.mxu0 0.0
    %2083 = vmatprep.subr.mxu0 0.0
    %2084 = vmatpush1.msra.mxu0 0.0
    %2085 = vmatprep.subr.mxu0 0.0
    %2086 = vmatpush1.msra.mxu0 0.0
    %2087 = vmatprep.subr.mxu0 0.0
    %2088 = vmatpush1.msra.mxu0 0.0
    %2089 = vmatprep.subr.mxu0 0.0
    %2090 = vmatpush1.msra.mxu0 0.0
    %2091 = vmatprep.subr.mxu0 0.0
    %2092 = vmatpush1.msra.mxu0 0.0
    %2093 = vmatprep.subr.mxu0 0.0
    %2094 = vmatpush1.msra.mxu0 0.0
    %2095 = vmatprep.subr.mxu0 0.0
    %2096 = vmatpush1.msra.mxu0 0.0
    %2097 = vmatprep.subr.mxu0 0.0
    %2098 = vmatpush1.msra.mxu0 0.0
    %2099 = vmatprep.subr.mxu0 0.0
    %2100 = vmatpush1.msra.mxu0 0.0
    %2101 = vmatprep.subr.mxu0 0.0
    %2102 = vmatpush1.msra.mxu0 0.0
    %2103 = vmatprep.subr.mxu0 0.0
    %2104 = vmatpush1.msra.mxu0 0.0
    %2105 = vmatprep.subr.mxu0 0.0
    %2106 = vmatpush1.msra.mxu0 0.0
    %2107 = vmatprep.subr.mxu0 0.0
    %2108 = vmatpush1.msra.mxu0 0.0
    %2109 = vmatprep.subr.mxu0 0.0
    %2110 = vmatpush1.msra.mxu0 0.0
    %2111 = vmatprep.subr.mxu0 0.0
    %2112 = vmatpush1.msra.mxu0 0.0
    %2113 = vmatprep.subr.mxu0 0.0
    %2114 = vmatpush1.msra.mxu0 0.0
    %2115 = vmatprep.subr.mxu0 0.0
    %2116 = vmatpush1.msra.mxu0 0.0
    %2117 = vmatprep.subr.mxu0 0.0
    %2118 = vmatpush1.msra.mxu0 0.0
    %2119 = vmatprep.subr.mxu0 0.0
    %2120 = vmatpush1.msra.mxu0 0.0
    %2121 = vmatprep.subr.mxu0 0.0
    %2122 = vmatpush1.msra.mxu0 0.0
    %2123 = vmatprep.subr.mxu0 0.0
    %2124 = vmatpush1.msra.mxu0 0.0
    %2125 = vmatprep.subr.mxu0 0.0
    %2126 = vmatpush1.msra.mxu0 0.0
    %2127 = vmatprep.subr.mxu0 0.0
    %2128 = vmatpush1.msra.mxu0 0.0
    %2129 = vmatprep.mubr.f32.mxu0 0.0
    %2130 = vmatmul.mubr.f32.gmra.mrb[0].mxu0 %v2060
    %v2131 = vpop.f32.mrb[0].mxu0
    %v2132 = vadd.f32 %v2057, %v2131
    %v2133 = vpop.f32.mrb[0].mxu0
    %2134 = vmatprep.mubr.f32.mxu0 0.0
    %2135 = vmatmul.mubr.f32.gmra.mrb[0].mxu0 %v2063
    %v2136 = vpop.f32.mrb[0].mxu0
    %v2137 = vadd.f32 %v2057, %v2136
    %v2138 = vpop.f32.mrb[0].mxu0
    %2139 = vdwg.mxu0
    %v2140 = vmax.f32 %v2132, 0.0
    %v2141 = vmax.f32 %v2137, 0.0
    %v2142 = vld [vmem:[%s16] sm:$0xff]
    %v2143 = vld [vmem:[%s16 + $0x8] sm:$0xff]
    %v2144 = vld [vmem:[%s16 + $0x10] sm:$0xff]
    %v2145 = vld [vmem:[%s16 + $0x18] sm:$0xff]
    %v2146 = vld [vmem:[%s16 + $0x20] sm:$0xff]
    %v2147 = vld [vmem:[%s16 + $0x28] sm:$0xff]
    %v2148 = vld [vmem:[%s16 + $0x30] sm:$0xff]
    %v2149 = vld [vmem:[%s16 + $0x38] sm:$0xff]
    %v2150 = vld [vmem:[%s16 + $0x40] sm:$0xff]
    %v2151 = vld [vmem:[%s16 + $0x48] sm:$0xff]
    %v2152 = vld [vmem:[%s16 + $0x50] sm:$0xff]
    %v2153 = vld [vmem:[%s16 + $0x58] sm:$0xff]
    %v2154 = vld [vmem:[%s16 + $0x60] sm:$0xff]
    %v2155 = vld [vmem:[%s16 + $0x68] sm:$0xff]
    %v2156 = vld [vmem:[%s16 + $0x70] sm:$0xff]
    %v2157 = vld [vmem:[%s16 + $0x78] sm:$0xff]
    %v2158 = vld [vmem:[#allocation17] sm:$0x1]
    %v2160 = vlaneseq
    %v2161 = vshrl.u32 %v2160, 7
    %v2162 = vsub.s32 0, %v2161
    %v2163 = vrot.slane %v2158, %v2162
    %2165 = vmatprep.subr.mxu0 0.0
    %2166 = vmatpush1.msra.mxu0 %v2142
    %2167 = vmatprep.subr.mxu0 0.0
    %2168 = vmatpush1.msra.mxu0 %v2143
    %2169 = vmatprep.subr.mxu0 0.0
    %2170 = vmatpush1.msra.mxu0 %v2144
    %2171 = vmatprep.subr.mxu0 0.0
    %2172 = vmatpush1.msra.mxu0 %v2145
    %2173 = vmatprep.subr.mxu0 0.0
    %2174 = vmatpush1.msra.mxu0 %v2146
    %2175 = vmatprep.subr.mxu0 0.0
    %2176 = vmatpush1.msra.mxu0 %v2147
    %2177 = vmatprep.subr.mxu0 0.0
    %2178 = vmatpush1.msra.mxu0 %v2148
    %2179 = vmatprep.subr.mxu0 0.0
    %2180 = vmatpush1.msra.mxu0 %v2149
    %2181 = vmatprep.subr.mxu0 0.0
    %2182 = vmatpush1.msra.mxu0 %v2150
    %2183 = vmatprep.subr.mxu0 0.0
    %2184 = vmatpush1.msra.mxu0 %v2151
    %2185 = vmatprep.subr.mxu0 0.0
    %2186 = vmatpush1.msra.mxu0 %v2152
    %2187 = vmatprep.subr.mxu0 0.0
    %2188 = vmatpush1.msra.mxu0 %v2153
    %2189 = vmatprep.subr.mxu0 0.0
    %2190 = vmatpush1.msra.mxu0 %v2154
    %2191 = vmatprep.subr.mxu0 0.0
    %2192 = vmatpush1.msra.mxu0 %v2155
    %2193 = vmatprep.subr.mxu0 0.0
    %2194 = vmatpush1.msra.mxu0 %v2156
    %2195 = vmatprep.subr.mxu0 0.0
    %2196 = vmatpush1.msra.mxu0 %v2157
    %2197 = vmatprep.subr.mxu0 0.0
    %2198 = vmatpush1.msra.mxu0 0.0
    %2199 = vmatprep.subr.mxu0 0.0
    %2200 = vmatpush1.msra.mxu0 0.0
    %2201 = vmatprep.subr.mxu0 0.0
    %2202 = vmatpush1.msra.mxu0 0.0
    %2203 = vmatprep.subr.mxu0 0.0
    %2204 = vmatpush1.msra.mxu0 0.0
    %2205 = vmatprep.subr.mxu0 0.0
    %2206 = vmatpush1.msra.mxu0 0.0
    %2207 = vmatprep.subr.mxu0 0.0
    %2208 = vmatpush1.msra.mxu0 0.0
    %2209 = vmatprep.subr.mxu0 0.0
    %2210 = vmatpush1.msra.mxu0 0.0
    %2211 = vmatprep.subr.mxu0 0.0
    %2212 = vmatpush1.msra.mxu0 0.0
    %2213 = vmatprep.subr.mxu0 0.0
    %2214 = vmatpush1.msra.mxu0 0.0
    %2215 = vmatprep.subr.mxu0 0.0
    %2216 = vmatpush1.msra.mxu0 0.0
    %2217 = vmatprep.subr.mxu0 0.0
    %2218 = vmatpush1.msra.mxu0 0.0
    %2219 = vmatprep.subr.mxu0 0.0
    %2220 = vmatpush1.msra.mxu0 0.0
    %2221 = vmatprep.subr.mxu0 0.0
    %2222 = vmatpush1.msra.mxu0 0.0
    %2223 = vmatprep.subr.mxu0 0.0
    %2224 = vmatpush1.msra.mxu0 0.0
    %2225 = vmatprep.subr.mxu0 0.0
    %2226 = vmatpush1.msra.mxu0 0.0
    %2227 = vmatprep.subr.mxu0 0.0
    %2228 = vmatpush1.msra.mxu0 0.0
    %2229 = vmatprep.mubr.f32.mxu0 0.0
    %2230 = vmatmul.mubr.f32.gmra.mrb[0].mxu0 %v2140
    %v2231 = vpop.f32.mrb[0].mxu0
    %v2232 = vadd.f32 %v2163, %v2231
    %v2233 = vpop.f32.mrb[0].mxu0
    %2234 = vmatprep.mubr.f32.mxu0 0.0
    %2235 = vmatmul.mubr.f32.gmra.mrb[0].mxu0 %v2141
    %v2236 = vpop.f32.mrb[0].mxu0
    %v2237 = vadd.f32 %v2163, %v2236
    %v2238 = vpop.f32.mrb[0].mxu0
    %2239 = vdwg.mxu0
    %v2240 = vadd.f32 %v2042, %v2232
    %v2241 = vadd.f32 %v2043, %v2237
    %v2242 = vld [vmem:[#allocation19] sm:$0x1]
    %v2243 = vld [vmem:[#allocation20] sm:$0x1]
    %v2244 = vsel %vm462, %v2240, 0.0
    %2245 = vadd.xlane.f32.xlu0 %v2244
    %v2246 = vpop.xlane.xlu0 %2245
    %v2247 = vsel %vm462, %v2241, 0.0
    %2248 = vadd.xlane.f32.xlu0 %v2247
    %v2249 = vpop.xlane.xlu0 %2248
    %v2250 = vmul.f32 %v2246, %v2007
    %v2251 = vmul.f32 %v2249, %v2007
    %v2252 = vsub.f32 %v2240, %v2250
    %v2253 = vsub.f32 %v2241, %v2251
    %v2254 = vmul.f32 %v2252, %v2252
    %v2255 = vmul.f32 %v2253, %v2253
    %v2256 = vsel %vm462, %v2254, 0.0
    %2257 = vadd.xlane.f32.xlu0 %v2256
    %v2258 = vpop.xlane.xlu0 %2257
    %v2259 = vsel %vm462, %v2255, 0.0
    %2260 = vadd.xlane.f32.xlu0 %v2259
    %v2261 = vpop.xlane.xlu0 %2260
    %v2262 = vmul.f32 %v2258, %v2007
    %v2263 = vmul.f32 %v2261, %v2007
    %v2264 = vadd.f32 %v2262, 1e-05
    %v2265 = vadd.f32 %v2263, 1e-05
    %v2266 = vrsqrt.pop %v2264
    %v2267 = vrsqrt.pop %v2265
    %v2268 = vmul.f32 %v2252, %v2266
    %v2269 = vmul.f32 %v2253, %v2267
    %v2271 = vlaneseq
    %v2272 = vshrl.u32 %v2271, 7
    %v2273 = vsub.s32 0, %v2272
    %v2274 = vrot.slane %v2242, %v2273
    %v2276 = vmul.f32 %v2268, %v2274
    %v2277 = vmul.f32 %v2269, %v2274
    %v2279 = vlaneseq
    %v2280 = vshrl.u32 %v2279, 7
    %v2281 = vsub.s32 0, %v2280
    %v2282 = vrot.slane %v2243, %v2281
    %v2284 = vadd.f32 %v2276, %v2282
    %v2285 = vadd.f32 %v2277, %v2282
    %s2286 = scalar_lea.vmem %s8, 128
    %v2287 = vld [vmem:[%s2286] sm:$0xff]
    %v2288 = vld [vmem:[%s2286 + $0x8] sm:$0xff]
    %v2289 = vld [vmem:[%s2286 + $0x10] sm:$0xff]
    %v2290 = vld [vmem:[%s2286 + $0x18] sm:$0xff]
    %v2291 = vld [vmem:[%s2286 + $0x20] sm:$0xff]
    %v2292 = vld [vmem:[%s2286 + $0x28] sm:$0xff]
    %v2293 = vld [vmem:[%s2286 + $0x30] sm:$0xff]
    %v2294 = vld [vmem:[%s2286 + $0x38] sm:$0xff]
    %v2295 = vld [vmem:[%s2286 + $0x40] sm:$0xff]
    %v2296 = vld [vmem:[%s2286 + $0x48] sm:$0xff]
    %v2297 = vld [vmem:[%s2286 + $0x50] sm:$0xff]
    %v2298 = vld [vmem:[%s2286 + $0x58] sm:$0xff]
    %v2299 = vld [vmem:[%s2286 + $0x60] sm:$0xff]
    %v2300 = vld [vmem:[%s2286 + $0x68] sm:$0xff]
    %v2301 = vld [vmem:[%s2286 + $0x70] sm:$0xff]
    %v2302 = vld [vmem:[%s2286 + $0x78] sm:$0xff]
    %s2303 = scalar_lea.vmem %s9, 2
    %v2304 = vld [vmem:[%s2303] sm:$0x3]
    %v2306 = vlaneseq
    %v2307 = vshrl.u32 %v2306, 7
    %v2308 = vsub.s32 0, %v2307
    %v2309 = vrot.slane %v2304, %v2308
    %v2310 = vlaneseq
    %v2311 = vshrl.u32 %v2310, 7
    %v2312 = vsub.s32 1, %v2311
    %v2313 = vrot.slane %v2304, %v2312
    %v2317 = vsel %vm462, %v2284, 0
    %v2320 = vsel %vm462, %v2285, 0
    %2322 = vmatprep.subr.mxu0 %v2288
    %2323 = vmatpush1.msra.mxu0 %v2287
    %2324 = vmatprep.subr.mxu0 %v2290
    %2325 = vmatpush1.msra.mxu0 %v2289
    %2326 = vmatprep.subr.mxu0 %v2292
    %2327 = vmatpush1.msra.mxu0 %v2291
    %2328 = vmatprep.subr.mxu0 %v2294
    %2329 = vmatpush1.msra.mxu0 %v2293
    %2330 = vmatprep.subr.mxu0 %v2296
    %2331 = vmatpush1.msra.mxu0 %v2295
    %2332 = vmatprep.subr.mxu0 %v2298
    %2333 = vmatpush1.msra.mxu0 %v2297
    %2334 = vmatprep.subr.mxu0 %v2300
    %2335 = vmatpush1.msra.mxu0 %v2299
    %2336 = vmatprep.subr.mxu0 %v2302
    %2337 = vmatpush1.msra.mxu0 %v2301
    %2338 = vmatprep.subr.mxu0 0.0
    %2339 = vmatpush1.msra.mxu0 0.0
    %2340 = vmatprep.subr.mxu0 0.0
    %2341 = vmatpush1.msra.mxu0 0.0
    %2342 = vmatprep.subr.mxu0 0.0
    %2343 = vmatpush1.msra.mxu0 0.0
    %2344 = vmatprep.subr.mxu0 0.0
    %2345 = vmatpush1.msra.mxu0 0.0
    %2346 = vmatprep.subr.mxu0 0.0
    %2347 = vmatpush1.msra.mxu0 0.0
    %2348 = vmatprep.subr.mxu0 0.0
    %2349 = vmatpush1.msra.mxu0 0.0
    %2350 = vmatprep.subr.mxu0 0.0
    %2351 = vmatpush1.msra.mxu0 0.0
    %2352 = vmatprep.subr.mxu0 0.0
    %2353 = vmatpush1.msra.mxu0 0.0
    %2354 = vmatprep.subr.mxu0 0.0
    %2355 = vmatpush1.msra.mxu0 0.0
    %2356 = vmatprep.subr.mxu0 0.0
    %2357 = vmatpush1.msra.mxu0 0.0
    %2358 = vmatprep.subr.mxu0 0.0
    %2359 = vmatpush1.msra.mxu0 0.0
    %2360 = vmatprep.subr.mxu0 0.0
    %2361 = vmatpush1.msra.mxu0 0.0
    %2362 = vmatprep.subr.mxu0 0.0
    %2363 = vmatpush1.msra.mxu0 0.0
    %2364 = vmatprep.subr.mxu0 0.0
    %2365 = vmatpush1.msra.mxu0 0.0
    %2366 = vmatprep.subr.mxu0 0.0
    %2367 = vmatpush1.msra.mxu0 0.0
    %2368 = vmatprep.subr.mxu0 0.0
    %2369 = vmatpush1.msra.mxu0 0.0
    %2370 = vmatprep.subr.mxu0 0.0
    %2371 = vmatpush1.msra.mxu0 0.0
    %2372 = vmatprep.subr.mxu0 0.0
    %2373 = vmatpush1.msra.mxu0 0.0
    %2374 = vmatprep.subr.mxu0 0.0
    %2375 = vmatpush1.msra.mxu0 0.0
    %2376 = vmatprep.subr.mxu0 0.0
    %2377 = vmatpush1.msra.mxu0 0.0
    %2378 = vmatprep.subr.mxu0 0.0
    %2379 = vmatpush1.msra.mxu0 0.0
    %2380 = vmatprep.subr.mxu0 0.0
    %2381 = vmatpush1.msra.mxu0 0.0
    %2382 = vmatprep.subr.mxu0 0.0
    %2383 = vmatpush1.msra.mxu0 0.0
    %2384 = vmatprep.subr.mxu0 0.0
    %2385 = vmatpush1.msra.mxu0 0.0
    %2386 = vmatprep.mubr.f32.mxu0 0.0
    %2387 = vmatmul.mubr.f32.gmra.mrb[0].mxu0 %v2317
    %v2388 = vpop.f32.mrb[0].mxu0
    %v2389 = vadd.f32 %v2309, %v2388
    %v2390 = vpop.f32.mrb[0].mxu0
    %v2391 = vadd.f32 %v2313, %v2390
    %2392 = vmatprep.mubr.f32.mxu0 0.0
    %2393 = vmatmul.mubr.f32.gmra.mrb[0].mxu0 %v2320
    %v2394 = vpop.f32.mrb[0].mxu0
    %v2395 = vadd.f32 %v2309, %v2394
    %v2396 = vpop.f32.mrb[0].mxu0
    %v2397 = vadd.f32 %v2313, %v2396
    %2398 = vdwg.mxu0
    %2400 = vrot.lane.b32.xlu0 %v2389, 64
    %v2401 = vpop.permute.xlu0 %2400
    %v2402 = vsel %vm256, %v2389, 0
    %v2404 = vsel %vm256, %v2401, 0
    %2406 = vmatprep.subr.mxu0 0.0
    %2407 = vmatpush1.xpose.msra.mxu0 %v2404
    %2408 = vmatprep.subr.mxu0 0.0
    %2409 = vmatpush1.xpose.msra.mxu0 0.0
    %2410 = vmatprep.subr.mxu0 0.0
    %2411 = vmatpush1.xpose.msra.mxu0 0.0
    %2412 = vmatprep.subr.mxu0 0.0
    %2413 = vmatpush1.xpose.msra.mxu0 0.0
    %2414 = vmatprep.subr.mxu0 0.0
    %2415 = vmatpush1.xpose.msra.mxu0 0.0
    %2416 = vmatprep.subr.mxu0 0.0
    %2417 = vmatpush1.xpose.msra.mxu0 0.0
    %2418 = vmatprep.subr.mxu0 0.0
    %2419 = vmatpush1.xpose.msra.mxu0 0.0
    %2420 = vmatprep.subr.mxu0 0.0
    %2421 = vmatpush1.xpose.msra.mxu0 0.0
    %2422 = vmatprep.subr.mxu0 0.0
    %2423 = vmatpush1.xpose.msra.mxu0 0.0
    %2424 = vmatprep.subr.mxu0 0.0
    %2425 = vmatpush1.xpose.msra.mxu0 0.0
    %2426 = vmatprep.subr.mxu0 0.0
    %2427 = vmatpush1.xpose.msra.mxu0 0.0
    %2428 = vmatprep.subr.mxu0 0.0
    %2429 = vmatpush1.xpose.msra.mxu0 0.0
    %2430 = vmatprep.subr.mxu0 0.0
    %2431 = vmatpush1.xpose.msra.mxu0 0.0
    %2432 = vmatprep.subr.mxu0 0.0
    %2433 = vmatpush1.xpose.msra.mxu0 0.0
    %2434 = vmatprep.subr.mxu0 0.0
    %2435 = vmatpush1.xpose.msra.mxu0 0.0
    %2436 = vmatprep.subr.mxu0 0.0
    %2437 = vmatpush1.xpose.msra.mxu0 0.0
    %2438 = vmatprep.subr.mxu0 0.0
    %2439 = vmatpush1.xpose.msra.mxu0 0.0
    %2440 = vmatprep.subr.mxu0 0.0
    %2441 = vmatpush1.xpose.msra.mxu0 0.0
    %2442 = vmatprep.subr.mxu0 0.0
    %2443 = vmatpush1.xpose.msra.mxu0 0.0
    %2444 = vmatprep.subr.mxu0 0.0
    %2445 = vmatpush1.xpose.msra.mxu0 0.0
    %2446 = vmatprep.subr.mxu0 0.0
    %2447 = vmatpush1.xpose.msra.mxu0 0.0
    %2448 = vmatprep.subr.mxu0 0.0
    %2449 = vmatpush1.xpose.msra.mxu0 0.0
    %2450 = vmatprep.subr.mxu0 0.0
    %2451 = vmatpush1.xpose.msra.mxu0 0.0
    %2452 = vmatprep.subr.mxu0 0.0
    %2453 = vmatpush1.xpose.msra.mxu0 0.0
    %2454 = vmatprep.subr.mxu0 0.0
    %2455 = vmatpush1.xpose.msra.mxu0 0.0
    %2456 = vmatprep.subr.mxu0 0.0
    %2457 = vmatpush1.xpose.msra.mxu0 0.0
    %2458 = vmatprep.subr.mxu0 0.0
    %2459 = vmatpush1.xpose.msra.mxu0 0.0
    %2460 = vmatprep.subr.mxu0 0.0
    %2461 = vmatpush1.xpose.msra.mxu0 0.0
    %2462 = vmatprep.subr.mxu0 0.0
    %2463 = vmatpush1.xpose.msra.mxu0 0.0
    %2464 = vmatprep.subr.mxu0 0.0
    %2465 = vmatpush1.xpose.msra.mxu0 0.0
    %2466 = vmatprep.subr.mxu0 0.0
    %2467 = vmatpush1.xpose.msra.mxu0 0.0
    %2468 = vmatprep.subr.mxu0 0.0
    %2469 = vmatpush1.xpose.msra.mxu0 0.0
    %2470 = vmatprep.mubr.f32.mxu0 0.0
    %2471 = vmatmul.mubr.f32.gmra.mrb[0].mxu0 %v2402
    %v2472 = vpop.f32.mrb[0].mxu0
    %v2473 = vadd.f32 0.0, %v2472
    %v2474 = vpop.f32.mrb[0].mxu0
    %2475 = vdwg.mxu0
    %2477 = vrot.lane.b32.xlu0 %v2395, 64
    %v2478 = vpop.permute.xlu0 %2477
    %v2479 = vsel %vm256, %v2395, 0
    %v2481 = vsel %vm256, %v2478, 0
    %2483 = vmatprep.subr.mxu0 0.0
    %2484 = vmatpush1.xpose.msra.mxu0 %v2481
    %2485 = vmatprep.subr.mxu0 0.0
    %2486 = vmatpush1.xpose.msra.mxu0 0.0
    %2487 = vmatprep.subr.mxu0 0.0
    %2488 = vmatpush1.xpose.msra.mxu0 0.0
    %2489 = vmatprep.subr.mxu0 0.0
    %2490 = vmatpush1.xpose.msra.mxu0 0.0
    %2491 = vmatprep.subr.mxu0 0.0
    %2492 = vmatpush1.xpose.msra.mxu0 0.0
    %2493 = vmatprep.subr.mxu0 0.0
    %2494 = vmatpush1.xpose.msra.mxu0 0.0
    %2495 = vmatprep.subr.mxu0 0.0
    %2496 = vmatpush1.xpose.msra.mxu0 0.0
    %2497 = vmatprep.subr.mxu0 0.0
    %2498 = vmatpush1.xpose.msra.mxu0 0.0
    %2499 = vmatprep.subr.mxu0 0.0
    %2500 = vmatpush1.xpose.msra.mxu0 0.0
    %2501 = vmatprep.subr.mxu0 0.0
    %2502 = vmatpush1.xpose.msra.mxu0 0.0
    %2503 = vmatprep.subr.mxu0 0.0
    %2504 = vmatpush1.xpose.msra.mxu0 0.0
    %2505 = vmatprep.subr.mxu0 0.0
    %2506 = vmatpush1.xpose.msra.mxu0 0.0
    %2507 = vmatprep.subr.mxu0 0.0
    %2508 = vmatpush1.xpose.msra.mxu0 0.0
    %2509 = vmatprep.subr.mxu0 0.0
    %2510 = vmatpush1.xpose.msra.mxu0 0.0
    %2511 = vmatprep.subr.mxu0 0.0
    %2512 = vmatpush1.xpose.msra.mxu0 0.0
    %2513 = vmatprep.subr.mxu0 0.0
    %2514 = vmatpush1.xpose.msra.mxu0 0.0
    %2515 = vmatprep.subr.mxu0 0.0
    %2516 = vmatpush1.xpose.msra.mxu0 0.0
    %2517 = vmatprep.subr.mxu0 0.0
    %2518 = vmatpush1.xpose.msra.mxu0 0.0
    %2519 = vmatprep.subr.mxu0 0.0
    %2520 = vmatpush1.xpose.msra.mxu0 0.0
    %2521 = vmatprep.subr.mxu0 0.0
    %2522 = vmatpush1.xpose.msra.mxu0 0.0
    %2523 = vmatprep.subr.mxu0 0.0
    %2524 = vmatpush1.xpose.msra.mxu0 0.0
    %2525 = vmatprep.subr.mxu0 0.0
    %2526 = vmatpush1.xpose.msra.mxu0 0.0
    %2527 = vmatprep.subr.mxu0 0.0
    %2528 = vmatpush1.xpose.msra.mxu0 0.0
    %2529 = vmatprep.subr.mxu0 0.0
    %2530 = vmatpush1.xpose.msra.mxu0 0.0
    %2531 = vmatprep.subr.mxu0 0.0
    %2532 = vmatpush1.xpose.msra.mxu0 0.0
    %2533 = vmatprep.subr.mxu0 0.0
    %2534 = vmatpush1.xpose.msra.mxu0 0.0
    %2535 = vmatprep.subr.mxu0 0.0
    %2536 = vmatpush1.xpose.msra.mxu0 0.0
    %2537 = vmatprep.subr.mxu0 0.0
    %2538 = vmatpush1.xpose.msra.mxu0 0.0
    %2539 = vmatprep.subr.mxu0 0.0
    %2540 = vmatpush1.xpose.msra.mxu0 0.0
    %2541 = vmatprep.subr.mxu0 0.0
    %2542 = vmatpush1.xpose.msra.mxu0 0.0
    %2543 = vmatprep.subr.mxu0 0.0
    %2544 = vmatpush1.xpose.msra.mxu0 0.0
    %2545 = vmatprep.subr.mxu0 0.0
    %2546 = vmatpush1.xpose.msra.mxu0 0.0
    %2547 = vmatprep.mubr.f32.mxu0 0.0
    %2548 = vmatmul.mubr.f32.gmra.mrb[0].mxu0 %v2479
    %v2549 = vpop.f32.mrb[0].mxu0
    %v2550 = vadd.f32 0.0, %v2549
    %v2551 = vpop.f32.mrb[0].mxu0
    %2552 = vdwg.mxu0
    %v2553 = vmul.f32 %v2473, 0.25
    %v2554 = vmul.f32 %v2550, 0.25
    %v2555 = vsel %vm702, %v2553, -inf
    %2556 = vmax.xlane.f32.xlu0 %v2555
    %v2557 = vpop.xlane.xlu0 %2556
    %v2558 = vsel %vm702, %v2554, -inf
    %2559 = vmax.xlane.f32.xlu0 %v2558
    %v2560 = vpop.xlane.xlu0 %2559
    %v2561 = vsub.f32 %v2553, %v2557
    %v2562 = vsub.f32 %v2554, %v2560
    %v2563 = vmul.f32 %v2561, 1.442695
    %v2564 = vpow.pop %v2563
    %v2565 = vmul.f32 %v2562, 1.442695
    %v2566 = vpow.pop %v2565
    %v2567 = vsel %vm702, %v2564, 0.0
    %2568 = vadd.xlane.f32.xlu0 %v2567
    %v2569 = vpop.xlane.xlu0 %2568
    %v2570 = vsel %vm702, %v2566, 0.0
    %2571 = vadd.xlane.f32.xlu0 %v2570
    %v2572 = vpop.xlane.xlu0 %2571
    %v2573 = vrcp.pop %v2569
    %v2574 = vmul.f32 %v2564, %v2573
    %v2575 = vrcp.pop %v2572
    %v2576 = vmul.f32 %v2566, %v2575
    %v2578 = vsel %vm702, %v2574, 0
    %2580 = vmatprep.subr.mxu0 0.0
    %2581 = vmatpush1.msra.mxu0 %v2391
    %2582 = vmatprep.subr.mxu0 0.0
    %2583 = vmatpush1.msra.mxu0 0.0
    %2584 = vmatprep.subr.mxu0 0.0
    %2585 = vmatpush1.msra.mxu0 0.0
    %2586 = vmatprep.subr.mxu0 0.0
    %2587 = vmatpush1.msra.mxu0 0.0
    %2588 = vmatprep.subr.mxu0 0.0
    %2589 = vmatpush1.msra.mxu0 0.0
    %2590 = vmatprep.subr.mxu0 0.0
    %2591 = vmatpush1.msra.mxu0 0.0
    %2592 = vmatprep.subr.mxu0 0.0
    %2593 = vmatpush1.msra.mxu0 0.0
    %2594 = vmatprep.subr.mxu0 0.0
    %2595 = vmatpush1.msra.mxu0 0.0
    %2596 = vmatprep.subr.mxu0 0.0
    %2597 = vmatpush1.msra.mxu0 0.0
    %2598 = vmatprep.subr.mxu0 0.0
    %2599 = vmatpush1.msra.mxu0 0.0
    %2600 = vmatprep.subr.mxu0 0.0
    %2601 = vmatpush1.msra.mxu0 0.0
    %2602 = vmatprep.subr.mxu0 0.0
    %2603 = vmatpush1.msra.mxu0 0.0
    %2604 = vmatprep.subr.mxu0 0.0
    %2605 = vmatpush1.msra.mxu0 0.0
    %2606 = vmatprep.subr.mxu0 0.0
    %2607 = vmatpush1.msra.mxu0 0.0
    %2608 = vmatprep.subr.mxu0 0.0
    %2609 = vmatpush1.msra.mxu0 0.0
    %2610 = vmatprep.subr.mxu0 0.0
    %2611 = vmatpush1.msra.mxu0 0.0
    %2612 = vmatprep.subr.mxu0 0.0
    %2613 = vmatpush1.msra.mxu0 0.0
    %2614 = vmatprep.subr.mxu0 0.0
    %2615 = vmatpush1.msra.mxu0 0.0
    %2616 = vmatprep.subr.mxu0 0.0
    %2617 = vmatpush1.msra.mxu0 0.0
    %2618 = vmatprep.subr.mxu0 0.0
    %2619 = vmatpush1.msra.mxu0 0.0
    %2620 = vmatprep.subr.mxu0 0.0
    %2621 = vmatpush1.msra.mxu0 0.0
    %2622 = vmatprep.subr.mxu0 0.0
    %2623 = vmatpush1.msra.mxu0 0.0
    %2624 = vmatprep.subr.mxu0 0.0
    %2625 = vmatpush1.msra.mxu0 0.0
    %2626 = vmatprep.subr.mxu0 0.0
    %2627 = vmatpush1.msra.mxu0 0.0
    %2628 = vmatprep.subr.mxu0 0.0
    %2629 = vmatpush1.msra.mxu0 0.0
    %2630 = vmatprep.subr.mxu0 0.0
    %2631 = vmatpush1.msra.mxu0 0.0
    %2632 = vmatprep.subr.mxu0 0.0
    %2633 = vmatpush1.msra.mxu0 0.0
    %2634 = vmatprep.subr.mxu0 0.0
    %2635 = vmatpush1.msra.mxu0 0.0
    %2636 = vmatprep.subr.mxu0 0.0
    %2637 = vmatpush1.msra.mxu0 0.0
    %2638 = vmatprep.subr.mxu0 0.0
    %2639 = vmatpush1.msra.mxu0 0.0
    %2640 = vmatprep.subr.mxu0 0.0
    %2641 = vmatpush1.msra.mxu0 0.0
    %2642 = vmatprep.subr.mxu0 0.0
    %2643 = vmatpush1.msra.mxu0 0.0
    %2644 = vmatprep.mubr.f32.mxu0 0.0
    %2645 = vmatmul.mubr.f32.gmra.mrb[0].mxu0 %v2578
    %v2646 = vpop.f32.mrb[0].mxu0
    %v2647 = vadd.f32 0.0, %v2646
    %v2648 = vpop.f32.mrb[0].mxu0
    %2649 = vdwg.mxu0
    %v2651 = vsel %vm702, %v2576, 0
    %2653 = vmatprep.subr.mxu0 0.0
    %2654 = vmatpush1.msra.mxu0 %v2397
    %2655 = vmatprep.subr.mxu0 0.0
    %2656 = vmatpush1.msra.mxu0 0.0
    %2657 = vmatprep.subr.mxu0 0.0
    %2658 = vmatpush1.msra.mxu0 0.0
    %2659 = vmatprep.subr.mxu0 0.0
    %2660 = vmatpush1.msra.mxu0 0.0
    %2661 = vmatprep.subr.mxu0 0.0
    %2662 = vmatpush1.msra.mxu0 0.0
    %2663 = vmatprep.subr.mxu0 0.0
    %2664 = vmatpush1.msra.mxu0 0.0
    %2665 = vmatprep.subr.mxu0 0.0
    %2666 = vmatpush1.msra.mxu0 0.0
    %2667 = vmatprep.subr.mxu0 0.0
    %2668 = vmatpush1.msra.mxu0 0.0
    %2669 = vmatprep.subr.mxu0 0.0
    %2670 = vmatpush1.msra.mxu0 0.0
    %2671 = vmatprep.subr.mxu0 0.0
    %2672 = vmatpush1.msra.mxu0 0.0
    %2673 = vmatprep.subr.mxu0 0.0
    %2674 = vmatpush1.msra.mxu0 0.0
    %2675 = vmatprep.subr.mxu0 0.0
    %2676 = vmatpush1.msra.mxu0 0.0
    %2677 = vmatprep.subr.mxu0 0.0
    %2678 = vmatpush1.msra.mxu0 0.0
    %2679 = vmatprep.subr.mxu0 0.0
    %2680 = vmatpush1.msra.mxu0 0.0
    %2681 = vmatprep.subr.mxu0 0.0
    %2682 = vmatpush1.msra.mxu0 0.0
    %2683 = vmatprep.subr.mxu0 0.0
    %2684 = vmatpush1.msra.mxu0 0.0
    %2685 = vmatprep.subr.mxu0 0.0
    %2686 = vmatpush1.msra.mxu0 0.0
    %2687 = vmatprep.subr.mxu0 0.0
    %2688 = vmatpush1.msra.mxu0 0.0
    %2689 = vmatprep.subr.mxu0 0.0
    %2690 = vmatpush1.msra.mxu0 0.0
    %2691 = vmatprep.subr.mxu0 0.0
    %2692 = vmatpush1.msra.mxu0 0.0
    %2693 = vmatprep.subr.mxu0 0.0
    %2694 = vmatpush1.msra.mxu0 0.0
    %2695 = vmatprep.subr.mxu0 0.0
    %2696 = vmatpush1.msra.mxu0 0.0
    %2697 = vmatprep.subr.mxu0 0.0
    %2698 = vmatpush1.msra.mxu0 0.0
    %2699 = vmatprep.subr.mxu0 0.0
    %2700 = vmatpush1.msra.mxu0 0.0
    %2701 = vmatprep.subr.mxu0 0.0
    %2702 = vmatpush1.msra.mxu0 0.0
    %2703 = vmatprep.subr.mxu0 0.0
    %2704 = vmatpush1.msra.mxu0 0.0
    %2705 = vmatprep.subr.mxu0 0.0
    %2706 = vmatpush1.msra.mxu0 0.0
    %2707 = vmatprep.subr.mxu0 0.0
    %2708 = vmatpush1.msra.mxu0 0.0
    %2709 = vmatprep.subr.mxu0 0.0
    %2710 = vmatpush1.msra.mxu0 0.0
    %2711 = vmatprep.subr.mxu0 0.0
    %2712 = vmatpush1.msra.mxu0 0.0
    %2713 = vmatprep.subr.mxu0 0.0
    %2714 = vmatpush1.msra.mxu0 0.0
    %2715 = vmatprep.subr.mxu0 0.0
    %2716 = vmatpush1.msra.mxu0 0.0
    %2717 = vmatprep.mubr.f32.mxu0 0.0
    %2718 = vmatmul.mubr.f32.gmra.mrb[0].mxu0 %v2651
    %v2719 = vpop.f32.mrb[0].mxu0
    %v2720 = vadd.f32 0.0, %v2719
    %v2721 = vpop.f32.mrb[0].mxu0
    %2722 = vdwg.mxu0
    %2723 = vrot.lane.b32.xlu0 %v2389, 112
    %v2724 = vpop.permute.xlu0 %2723
    %2725 = vrot.lane.b32.xlu0 %v2389, 48
    %v2726 = vpop.permute.xlu0 %2725
    %v2727 = vsel %vm256, %v2724, 0
    %v2729 = vsel %vm256, %v2726, 0
    %2731 = vmatprep.subr.mxu0 0.0
    %2732 = vmatpush1.xpose.msra.mxu0 %v2729
    %2733 = vmatprep.subr.mxu0 0.0
    %2734 = vmatpush1.xpose.msra.mxu0 0.0
    %2735 = vmatprep.subr.mxu0 0.0
    %2736 = vmatpush1.xpose.msra.mxu0 0.0
    %2737 = vmatprep.subr.mxu0 0.0
    %2738 = vmatpush1.xpose.msra.mxu0 0.0
    %2739 = vmatprep.subr.mxu0 0.0
    %2740 = vmatpush1.xpose.msra.mxu0 0.0
    %2741 = vmatprep.subr.mxu0 0.0
    %2742 = vmatpush1.xpose.msra.mxu0 0.0
    %2743 = vmatprep.subr.mxu0 0.0
    %2744 = vmatpush1.xpose.msra.mxu0 0.0
    %2745 = vmatprep.subr.mxu0 0.0
    %2746 = vmatpush1.xpose.msra.mxu0 0.0
    %2747 = vmatprep.subr.mxu0 0.0
    %2748 = vmatpush1.xpose.msra.mxu0 0.0
    %2749 = vmatprep.subr.mxu0 0.0
    %2750 = vmatpush1.xpose.msra.mxu0 0.0
    %2751 = vmatprep.subr.mxu0 0.0
    %2752 = vmatpush1.xpose.msra.mxu0 0.0
    %2753 = vmatprep.subr.mxu0 0.0
    %2754 = vmatpush1.xpose.msra.mxu0 0.0
    %2755 = vmatprep.subr.mxu0 0.0
    %2756 = vmatpush1.xpose.msra.mxu0 0.0
    %2757 = vmatprep.subr.mxu0 0.0
    %2758 = vmatpush1.xpose.msra.mxu0 0.0
    %2759 = vmatprep.subr.mxu0 0.0
    %2760 = vmatpush1.xpose.msra.mxu0 0.0
    %2761 = vmatprep.subr.mxu0 0.0
    %2762 = vmatpush1.xpose.msra.mxu0 0.0
    %2763 = vmatprep.subr.mxu0 0.0
    %2764 = vmatpush1.xpose.msra.mxu0 0.0
    %2765 = vmatprep.subr.mxu0 0.0
    %2766 = vmatpush1.xpose.msra.mxu0 0.0
    %2767 = vmatprep.subr.mxu0 0.0
    %2768 = vmatpush1.xpose.msra.mxu0 0.0
    %2769 = vmatprep.subr.mxu0 0.0
    %2770 = vmatpush1.xpose.msra.mxu0 0.0
    %2771 = vmatprep.subr.mxu0 0.0
    %2772 = vmatpush1.xpose.msra.mxu0 0.0
    %2773 = vmatprep.subr.mxu0 0.0
    %2774 = vmatpush1.xpose.msra.mxu0 0.0
    %2775 = vmatprep.subr.mxu0 0.0
    %2776 = vmatpush1.xpose.msra.mxu0 0.0
    %2777 = vmatprep.subr.mxu0 0.0
    %2778 = vmatpush1.xpose.msra.mxu0 0.0
    %2779 = vmatprep.subr.mxu0 0.0
    %2780 = vmatpush1.xpose.msra.mxu0 0.0
    %2781 = vmatprep.subr.mxu0 0.0
    %2782 = vmatpush1.xpose.msra.mxu0 0.0
    %2783 = vmatprep.subr.mxu0 0.0
    %2784 = vmatpush1.xpose.msra.mxu0 0.0
    %2785 = vmatprep.subr.mxu0 0.0
    %2786 = vmatpush1.xpose.msra.mxu0 0.0
    %2787 = vmatprep.subr.mxu0 0.0
    %2788 = vmatpush1.xpose.msra.mxu0 0.0
    %2789 = vmatprep.subr.mxu0 0.0
    %2790 = vmatpush1.xpose.msra.mxu0 0.0
    %2791 = vmatprep.subr.mxu0 0.0
    %2792 = vmatpush1.xpose.msra.mxu0 0.0
    %2793 = vmatprep.subr.mxu0 0.0
    %2794 = vmatpush1.xpose.msra.mxu0 0.0
    %2795 = vmatprep.mubr.f32.mxu0 0.0
    %2796 = vmatmul.mubr.f32.gmra.mrb[0].mxu0 %v2727
    %v2797 = vpop.f32.mrb[0].mxu0
    %v2798 = vadd.f32 0.0, %v2797
    %v2799 = vpop.f32.mrb[0].mxu0
    %2800 = vdwg.mxu0
    %2801 = vrot.lane.b32.xlu0 %v2395, 112
    %v2802 = vpop.permute.xlu0 %2801
    %2803 = vrot.lane.b32.xlu0 %v2395, 48
    %v2804 = vpop.permute.xlu0 %2803
    %v2805 = vsel %vm256, %v2802, 0
    %v2807 = vsel %vm256, %v2804, 0
    %2809 = vmatprep.subr.mxu0 0.0
    %2810 = vmatpush1.xpose.msra.mxu0 %v2807
    %2811 = vmatprep.subr.mxu0 0.0
    %2812 = vmatpush1.xpose.msra.mxu0 0.0
    %2813 = vmatprep.subr.mxu0 0.0
    %2814 = vmatpush1.xpose.msra.mxu0 0.0
    %2815 = vmatprep.subr.mxu0 0.0
    %2816 = vmatpush1.xpose.msra.mxu0 0.0
    %2817 = vmatprep.subr.mxu0 0.0
    %2818 = vmatpush1.xpose.msra.mxu0 0.0
    %2819 = vmatprep.subr.mxu0 0.0
    %2820 = vmatpush1.xpose.msra.mxu0 0.0
    %2821 = vmatprep.subr.mxu0 0.0
    %2822 = vmatpush1.xpose.msra.mxu0 0.0
    %2823 = vmatprep.subr.mxu0 0.0
    %2824 = vmatpush1.xpose.msra.mxu0 0.0
    %2825 = vmatprep.subr.mxu0 0.0
    %2826 = vmatpush1.xpose.msra.mxu0 0.0
    %2827 = vmatprep.subr.mxu0 0.0
    %2828 = vmatpush1.xpose.msra.mxu0 0.0
    %2829 = vmatprep.subr.mxu0 0.0
    %2830 = vmatpush1.xpose.msra.mxu0 0.0
    %2831 = vmatprep.subr.mxu0 0.0
    %2832 = vmatpush1.xpose.msra.mxu0 0.0
    %2833 = vmatprep.subr.mxu0 0.0
    %2834 = vmatpush1.xpose.msra.mxu0 0.0
    %2835 = vmatprep.subr.mxu0 0.0
    %2836 = vmatpush1.xpose.msra.mxu0 0.0
    %2837 = vmatprep.subr.mxu0 0.0
    %2838 = vmatpush1.xpose.msra.mxu0 0.0
    %2839 = vmatprep.subr.mxu0 0.0
    %2840 = vmatpush1.xpose.msra.mxu0 0.0
    %2841 = vmatprep.subr.mxu0 0.0
    %2842 = vmatpush1.xpose.msra.mxu0 0.0
    %2843 = vmatprep.subr.mxu0 0.0
    %2844 = vmatpush1.xpose.msra.mxu0 0.0
    %2845 = vmatprep.subr.mxu0 0.0
    %2846 = vmatpush1.xpose.msra.mxu0 0.0
    %2847 = vmatprep.subr.mxu0 0.0
    %2848 = vmatpush1.xpose.msra.mxu0 0.0
    %2849 = vmatprep.subr.mxu0 0.0
    %2850 = vmatpush1.xpose.msra.mxu0 0.0
    %2851 = vmatprep.subr.mxu0 0.0
    %2852 = vmatpush1.xpose.msra.mxu0 0.0
    %2853 = vmatprep.subr.mxu0 0.0
    %2854 = vmatpush1.xpose.msra.mxu0 0.0
    %2855 = vmatprep.subr.mxu0 0.0
    %2856 = vmatpush1.xpose.msra.mxu0 0.0
    %2857 = vmatprep.subr.mxu0 0.0
    %2858 = vmatpush1.xpose.msra.mxu0 0.0
    %2859 = vmatprep.subr.mxu0 0.0
    %2860 = vmatpush1.xpose.msra.mxu0 0.0
    %2861 = vmatprep.subr.mxu0 0.0
    %2862 = vmatpush1.xpose.msra.mxu0 0.0
    %2863 = vmatprep.subr.mxu0 0.0
    %2864 = vmatpush1.xpose.msra.mxu0 0.0
    %2865 = vmatprep.subr.mxu0 0.0
    %2866 = vmatpush1.xpose.msra.mxu0 0.0
    %2867 = vmatprep.subr.mxu0 0.0
    %2868 = vmatpush1.xpose.msra.mxu0 0.0
    %2869 = vmatprep.subr.mxu0 0.0
    %2870 = vmatpush1.xpose.msra.mxu0 0.0
    %2871 = vmatprep.subr.mxu0 0.0
    %2872 = vmatpush1.xpose.msra.mxu0 0.0
    %2873 = vmatprep.mubr.f32.mxu0 0.0
    %2874 = vmatmul.mubr.f32.gmra.mrb[0].mxu0 %v2805
    %v2875 = vpop.f32.mrb[0].mxu0
    %v2876 = vadd.f32 0.0, %v2875
    %v2877 = vpop.f32.mrb[0].mxu0
    %2878 = vdwg.mxu0
    %v2879 = vmul.f32 %v2798, 0.25
    %v2880 = vmul.f32 %v2876, 0.25
    %v2881 = vsel %vm702, %v2879, -inf
    %2882 = vmax.xlane.f32.xlu0 %v2881
    %v2883 = vpop.xlane.xlu0 %2882
    %v2884 = vsel %vm702, %v2880, -inf
    %2885 = vmax.xlane.f32.xlu0 %v2884
    %v2886 = vpop.xlane.xlu0 %2885
    %v2887 = vsub.f32 %v2879, %v2883
    %v2888 = vsub.f32 %v2880, %v2886
    %v2889 = vmul.f32 %v2887, 1.442695
    %v2890 = vpow.pop %v2889
    %v2891 = vmul.f32 %v2888, 1.442695
    %v2892 = vpow.pop %v2891
    %v2893 = vsel %vm702, %v2890, 0.0
    %2894 = vadd.xlane.f32.xlu0 %v2893
    %v2895 = vpop.xlane.xlu0 %2894
    %v2896 = vsel %vm702, %v2892, 0.0
    %2897 = vadd.xlane.f32.xlu0 %v2896
    %v2898 = vpop.xlane.xlu0 %2897
    %v2899 = vrcp.pop %v2895
    %v2900 = vmul.f32 %v2890, %v2899
    %v2901 = vrcp.pop %v2898
    %v2902 = vmul.f32 %v2892, %v2901
    %2904 = vrot.lane.b32.xlu0 %v2391, 112
    %v2905 = vpop.permute.xlu0 %2904
    %v2908 = vsel %vm702, %v2900, 0
    %2910 = vmatprep.subr.mxu0 0.0
    %2911 = vmatpush1.msra.mxu0 %v2905
    %2912 = vmatprep.subr.mxu0 0.0
    %2913 = vmatpush1.msra.mxu0 0.0
    %2914 = vmatprep.subr.mxu0 0.0
    %2915 = vmatpush1.msra.mxu0 0.0
    %2916 = vmatprep.subr.mxu0 0.0
    %2917 = vmatpush1.msra.mxu0 0.0
    %2918 = vmatprep.subr.mxu0 0.0
    %2919 = vmatpush1.msra.mxu0 0.0
    %2920 = vmatprep.subr.mxu0 0.0
    %2921 = vmatpush1.msra.mxu0 0.0
    %2922 = vmatprep.subr.mxu0 0.0
    %2923 = vmatpush1.msra.mxu0 0.0
    %2924 = vmatprep.subr.mxu0 0.0
    %2925 = vmatpush1.msra.mxu0 0.0
    %2926 = vmatprep.subr.mxu0 0.0
    %2927 = vmatpush1.msra.mxu0 0.0
    %2928 = vmatprep.subr.mxu0 0.0
    %2929 = vmatpush1.msra.mxu0 0.0
    %2930 = vmatprep.subr.mxu0 0.0
    %2931 = vmatpush1.msra.mxu0 0.0
    %2932 = vmatprep.subr.mxu0 0.0
    %2933 = vmatpush1.msra.mxu0 0.0
    %2934 = vmatprep.subr.mxu0 0.0
    %2935 = vmatpush1.msra.mxu0 0.0
    %2936 = vmatprep.subr.mxu0 0.0
    %2937 = vmatpush1.msra.mxu0 0.0
    %2938 = vmatprep.subr.mxu0 0.0
    %2939 = vmatpush1.msra.mxu0 0.0
    %2940 = vmatprep.subr.mxu0 0.0
    %2941 = vmatpush1.msra.mxu0 0.0
    %2942 = vmatprep.subr.mxu0 0.0
    %2943 = vmatpush1.msra.mxu0 0.0
    %2944 = vmatprep.subr.mxu0 0.0
    %2945 = vmatpush1.msra.mxu0 0.0
    %2946 = vmatprep.subr.mxu0 0.0
    %2947 = vmatpush1.msra.mxu0 0.0
    %2948 = vmatprep.subr.mxu0 0.0
    %2949 = vmatpush1.msra.mxu0 0.0
    %2950 = vmatprep.subr.mxu0 0.0
    %2951 = vmatpush1.msra.mxu0 0.0
    %2952 = vmatprep.subr.mxu0 0.0
    %2953 = vmatpush1.msra.mxu0 0.0
    %2954 = vmatprep.subr.mxu0 0.0
    %2955 = vmatpush1.msra.mxu0 0.0
    %2956 = vmatprep.subr.mxu0 0.0
    %2957 = vmatpush1.msra.mxu0 0.0
    %2958 = vmatprep.subr.mxu0 0.0
    %2959 = vmatpush1.msra.mxu0 0.0
    %2960 = vmatprep.subr.mxu0 0.0
    %2961 = vmatpush1.msra.mxu0 0.0
    %2962 = vmatprep.subr.mxu0 0.0
    %2963 = vmatpush1.msra.mxu0 0.0
    %2964 = vmatprep.subr.mxu0 0.0
    %2965 = vmatpush1.msra.mxu0 0.0
    %2966 = vmatprep.subr.mxu0 0.0
    %2967 = vmatpush1.msra.mxu0 0.0
    %2968 = vmatprep.subr.mxu0 0.0
    %2969 = vmatpush1.msra.mxu0 0.0
    %2970 = vmatprep.subr.mxu0 0.0
    %2971 = vmatpush1.msra.mxu0 0.0
    %2972 = vmatprep.subr.mxu0 0.0
    %2973 = vmatpush1.msra.mxu0 0.0
    %2974 = vmatprep.mubr.f32.mxu0 0.0
    %2975 = vmatmul.mubr.f32.gmra.mrb[0].mxu0 %v2908
    %v2976 = vpop.f32.mrb[0].mxu0
    %v2977 = vadd.f32 0.0, %v2976
    %v2978 = vpop.f32.mrb[0].mxu0
    %2979 = vdwg.mxu0
    %2981 = vrot.lane.b32.xlu0 %v2397, 112
    %v2982 = vpop.permute.xlu0 %2981
    %v2985 = vsel %vm702, %v2902, 0
    %2987 = vmatprep.subr.mxu0 0.0
    %2988 = vmatpush1.msra.mxu0 %v2982
    %2989 = vmatprep.subr.mxu0 0.0
    %2990 = vmatpush1.msra.mxu0 0.0
    %2991 = vmatprep.subr.mxu0 0.0
    %2992 = vmatpush1.msra.mxu0 0.0
    %2993 = vmatprep.subr.mxu0 0.0
    %2994 = vmatpush1.msra.mxu0 0.0
    %2995 = vmatprep.subr.mxu0 0.0
    %2996 = vmatpush1.msra.mxu0 0.0
    %2997 = vmatprep.subr.mxu0 0.0
    %2998 = vmatpush1.msra.mxu0 0.0
    %2999 = vmatprep.subr.mxu0 0.0
    %3000 = vmatpush1.msra.mxu0 0.0
    %3001 = vmatprep.subr.mxu0 0.0
    %3002 = vmatpush1.msra.mxu0 0.0
    %3003 = vmatprep.subr.mxu0 0.0
    %3004 = vmatpush1.msra.mxu0 0.0
    %3005 = vmatprep.subr.mxu0 0.0
    %3006 = vmatpush1.msra.mxu0 0.0
    %3007 = vmatprep.subr.mxu0 0.0
    %3008 = vmatpush1.msra.mxu0 0.0
    %3009 = vmatprep.subr.mxu0 0.0
    %3010 = vmatpush1.msra.mxu0 0.0
    %3011 = vmatprep.subr.mxu0 0.0
    %3012 = vmatpush1.msra.mxu0 0.0
    %3013 = vmatprep.subr.mxu0 0.0
    %3014 = vmatpush1.msra.mxu0 0.0
    %3015 = vmatprep.subr.mxu0 0.0
    %3016 = vmatpush1.msra.mxu0 0.0
    %3017 = vmatprep.subr.mxu0 0.0
    %3018 = vmatpush1.msra.mxu0 0.0
    %3019 = vmatprep.subr.mxu0 0.0
    %3020 = vmatpush1.msra.mxu0 0.0
    %3021 = vmatprep.subr.mxu0 0.0
    %3022 = vmatpush1.msra.mxu0 0.0
    %3023 = vmatprep.subr.mxu0 0.0
    %3024 = vmatpush1.msra.mxu0 0.0
    %3025 = vmatprep.subr.mxu0 0.0
    %3026 = vmatpush1.msra.mxu0 0.0
    %3027 = vmatprep.subr.mxu0 0.0
    %3028 = vmatpush1.msra.mxu0 0.0
    %3029 = vmatprep.subr.mxu0 0.0
    %3030 = vmatpush1.msra.mxu0 0.0
    %3031 = vmatprep.subr.mxu0 0.0
    %3032 = vmatpush1.msra.mxu0 0.0
    %3033 = vmatprep.subr.mxu0 0.0
    %3034 = vmatpush1.msra.mxu0 0.0
    %3035 = vmatprep.subr.mxu0 0.0
    %3036 = vmatpush1.msra.mxu0 0.0
    %3037 = vmatprep.subr.mxu0 0.0
    %3038 = vmatpush1.msra.mxu0 0.0
    %3039 = vmatprep.subr.mxu0 0.0
    %3040 = vmatpush1.msra.mxu0 0.0
    %3041 = vmatprep.subr.mxu0 0.0
    %3042 = vmatpush1.msra.mxu0 0.0
    %3043 = vmatprep.subr.mxu0 0.0
    %3044 = vmatpush1.msra.mxu0 0.0
    %3045 = vmatprep.subr.mxu0 0.0
    %3046 = vmatpush1.msra.mxu0 0.0
    %3047 = vmatprep.subr.mxu0 0.0
    %3048 = vmatpush1.msra.mxu0 0.0
    %3049 = vmatprep.subr.mxu0 0.0
    %3050 = vmatpush1.msra.mxu0 0.0
    %3051 = vmatprep.mubr.f32.mxu0 0.0
    %3052 = vmatmul.mubr.f32.gmra.mrb[0].mxu0 %v2985
    %v3053 = vpop.f32.mrb[0].mxu0
    %v3054 = vadd.f32 0.0, %v3053
    %v3055 = vpop.f32.mrb[0].mxu0
    %3056 = vdwg.mxu0
    %3057 = vrot.lane.b32.xlu0 %v2389, 96
    %v3058 = vpop.permute.xlu0 %3057
    %3059 = vrot.lane.b32.xlu0 %v2389, 32
    %v3060 = vpop.permute.xlu0 %3059
    %v3061 = vsel %vm256, %v3058, 0
    %v3063 = vsel %vm256, %v3060, 0
    %3065 = vmatprep.subr.mxu0 0.0
    %3066 = vmatpush1.xpose.msra.mxu0 %v3063
    %3067 = vmatprep.subr.mxu0 0.0
    %3068 = vmatpush1.xpose.msra.mxu0 0.0
    %3069 = vmatprep.subr.mxu0 0.0
    %3070 = vmatpush1.xpose.msra.mxu0 0.0
    %3071 = vmatprep.subr.mxu0 0.0
    %3072 = vmatpush1.xpose.msra.mxu0 0.0
    %3073 = vmatprep.subr.mxu0 0.0
    %3074 = vmatpush1.xpose.msra.mxu0 0.0
    %3075 = vmatprep.subr.mxu0 0.0
    %3076 = vmatpush1.xpose.msra.mxu0 0.0
    %3077 = vmatprep.subr.mxu0 0.0
    %3078 = vmatpush1.xpose.msra.mxu0 0.0
    %3079 = vmatprep.subr.mxu0 0.0
    %3080 = vmatpush1.xpose.msra.mxu0 0.0
    %3081 = vmatprep.subr.mxu0 0.0
    %3082 = vmatpush1.xpose.msra.mxu0 0.0
    %3083 = vmatprep.subr.mxu0 0.0
    %3084 = vmatpush1.xpose.msra.mxu0 0.0
    %3085 = vmatprep.subr.mxu0 0.0
    %3086 = vmatpush1.xpose.msra.mxu0 0.0
    %3087 = vmatprep.subr.mxu0 0.0
    %3088 = vmatpush1.xpose.msra.mxu0 0.0
    %3089 = vmatprep.subr.mxu0 0.0
    %3090 = vmatpush1.xpose.msra.mxu0 0.0
    %3091 = vmatprep.subr.mxu0 0.0
    %3092 = vmatpush1.xpose.msra.mxu0 0.0
    %3093 = vmatprep.subr.mxu0 0.0
    %3094 = vmatpush1.xpose.msra.mxu0 0.0
    %3095 = vmatprep.subr.mxu0 0.0
    %3096 = vmatpush1.xpose.msra.mxu0 0.0
    %3097 = vmatprep.subr.mxu0 0.0
    %3098 = vmatpush1.xpose.msra.mxu0 0.0
    %3099 = vmatprep.subr.mxu0 0.0
    %3100 = vmatpush1.xpose.msra.mxu0 0.0
    %3101 = vmatprep.subr.mxu0 0.0
    %3102 = vmatpush1.xpose.msra.mxu0 0.0
    %3103 = vmatprep.subr.mxu0 0.0
    %3104 = vmatpush1.xpose.msra.mxu0 0.0
    %3105 = vmatprep.subr.mxu0 0.0
    %3106 = vmatpush1.xpose.msra.mxu0 0.0
    %3107 = vmatprep.subr.mxu0 0.0
    %3108 = vmatpush1.xpose.msra.mxu0 0.0
    %3109 = vmatprep.subr.mxu0 0.0
    %3110 = vmatpush1.xpose.msra.mxu0 0.0
    %3111 = vmatprep.subr.mxu0 0.0
    %3112 = vmatpush1.xpose.msra.mxu0 0.0
    %3113 = vmatprep.subr.mxu0 0.0
    %3114 = vmatpush1.xpose.msra.mxu0 0.0
    %3115 = vmatprep.subr.mxu0 0.0
    %3116 = vmatpush1.xpose.msra.mxu0 0.0
    %3117 = vmatprep.subr.mxu0 0.0
    %3118 = vmatpush1.xpose.msra.mxu0 0.0
    %3119 = vmatprep.subr.mxu0 0.0
    %3120 = vmatpush1.xpose.msra.mxu0 0.0
    %3121 = vmatprep.subr.mxu0 0.0
    %3122 = vmatpush1.xpose.msra.mxu0 0.0
    %3123 = vmatprep.subr.mxu0 0.0
    %3124 = vmatpush1.xpose.msra.mxu0 0.0
    %3125 = vmatprep.subr.mxu0 0.0
    %3126 = vmatpush1.xpose.msra.mxu0 0.0
    %3127 = vmatprep.subr.mxu0 0.0
    %3128 = vmatpush1.xpose.msra.mxu0 0.0
    %3129 = vmatprep.mubr.f32.mxu0 0.0
    %3130 = vmatmul.mubr.f32.gmra.mrb[0].mxu0 %v3061
    %v3131 = vpop.f32.mrb[0].mxu0
    %v3132 = vadd.f32 0.0, %v3131
    %v3133 = vpop.f32.mrb[0].mxu0
    %3134 = vdwg.mxu0
    %3135 = vrot.lane.b32.xlu0 %v2395, 96
    %v3136 = vpop.permute.xlu0 %3135
    %3137 = vrot.lane.b32.xlu0 %v2395, 32
    %v3138 = vpop.permute.xlu0 %3137
    %v3139 = vsel %vm256, %v3136, 0
    %v3141 = vsel %vm256, %v3138, 0
    %3143 = vmatprep.subr.mxu0 0.0
    %3144 = vmatpush1.xpose.msra.mxu0 %v3141
    %3145 = vmatprep.subr.mxu0 0.0
    %3146 = vmatpush1.xpose.msra.mxu0 0.0
    %3147 = vmatprep.subr.mxu0 0.0
    %3148 = vmatpush1.xpose.msra.mxu0 0.0
    %3149 = vmatprep.subr.mxu0 0.0
    %3150 = vmatpush1.xpose.msra.mxu0 0.0
    %3151 = vmatprep.subr.mxu0 0.0
    %3152 = vmatpush1.xpose.msra.mxu0 0.0
    %3153 = vmatprep.subr.mxu0 0.0
    %3154 = vmatpush1.xpose.msra.mxu0 0.0
    %3155 = vmatprep.subr.mxu0 0.0
    %3156 = vmatpush1.xpose.msra.mxu0 0.0
    %3157 = vmatprep.subr.mxu0 0.0
    %3158 = vmatpush1.xpose.msra.mxu0 0.0
    %3159 = vmatprep.subr.mxu0 0.0
    %3160 = vmatpush1.xpose.msra.mxu0 0.0
    %3161 = vmatprep.subr.mxu0 0.0
    %3162 = vmatpush1.xpose.msra.mxu0 0.0
    %3163 = vmatprep.subr.mxu0 0.0
    %3164 = vmatpush1.xpose.msra.mxu0 0.0
    %3165 = vmatprep.subr.mxu0 0.0
    %3166 = vmatpush1.xpose.msra.mxu0 0.0
    %3167 = vmatprep.subr.mxu0 0.0
    %3168 = vmatpush1.xpose.msra.mxu0 0.0
    %3169 = vmatprep.subr.mxu0 0.0
    %3170 = vmatpush1.xpose.msra.mxu0 0.0
    %3171 = vmatprep.subr.mxu0 0.0
    %3172 = vmatpush1.xpose.msra.mxu0 0.0
    %3173 = vmatprep.subr.mxu0 0.0
    %3174 = vmatpush1.xpose.msra.mxu0 0.0
    %3175 = vmatprep.subr.mxu0 0.0
    %3176 = vmatpush1.xpose.msra.mxu0 0.0
    %3177 = vmatprep.subr.mxu0 0.0
    %3178 = vmatpush1.xpose.msra.mxu0 0.0
    %3179 = vmatprep.subr.mxu0 0.0
    %3180 = vmatpush1.xpose.msra.mxu0 0.0
    %3181 = vmatprep.subr.mxu0 0.0
    %3182 = vmatpush1.xpose.msra.mxu0 0.0
    %3183 = vmatprep.subr.mxu0 0.0
    %3184 = vmatpush1.xpose.msra.mxu0 0.0
    %3185 = vmatprep.subr.mxu0 0.0
    %3186 = vmatpush1.xpose.msra.mxu0 0.0
    %3187 = vmatprep.subr.mxu0 0.0
    %3188 = vmatpush1.xpose.msra.mxu0 0.0
    %3189 = vmatprep.subr.mxu0 0.0
    %3190 = vmatpush1.xpose.msra.mxu0 0.0
    %3191 = vmatprep.subr.mxu0 0.0
    %3192 = vmatpush1.xpose.msra.mxu0 0.0
    %3193 = vmatprep.subr.mxu0 0.0
    %3194 = vmatpush1.xpose.msra.mxu0 0.0
    %3195 = vmatprep.subr.mxu0 0.0
    %3196 = vmatpush1.xpose.msra.mxu0 0.0
    %3197 = vmatprep.subr.mxu0 0.0
    %3198 = vmatpush1.xpose.msra.mxu0 0.0
    %3199 = vmatprep.subr.mxu0 0.0
    %3200 = vmatpush1.xpose.msra.mxu0 0.0
    %3201 = vmatprep.subr.mxu0 0.0
    %3202 = vmatpush1.xpose.msra.mxu0 0.0
    %3203 = vmatprep.subr.mxu0 0.0
    %3204 = vmatpush1.xpose.msra.mxu0 0.0
    %3205 = vmatprep.subr.mxu0 0.0
    %3206 = vmatpush1.xpose.msra.mxu0 0.0
    %3207 = vmatprep.mubr.f32.mxu0 0.0
    %3208 = vmatmul.mubr.f32.gmra.mrb[0].mxu0 %v3139
    %v3209 = vpop.f32.mrb[0].mxu0
    %v3210 = vadd.f32 0.0, %v3209
    %v3211 = vpop.f32.mrb[0].mxu0
    %3212 = vdwg.mxu0
    %v3213 = vmul.f32 %v3132, 0.25
    %v3214 = vmul.f32 %v3210, 0.25
    %v3215 = vsel %vm702, %v3213, -inf
    %3216 = vmax.xlane.f32.xlu0 %v3215
    %v3217 = vpop.xlane.xlu0 %3216
    %v3218 = vsel %vm702, %v3214, -inf
    %3219 = vmax.xlane.f32.xlu0 %v3218
    %v3220 = vpop.xlane.xlu0 %3219
    %v3221 = vsub.f32 %v3213, %v3217
    %v3222 = vsub.f32 %v3214, %v3220
    %v3223 = vmul.f32 %v3221, 1.442695
    %v3224 = vpow.pop %v3223
    %v3225 = vmul.f32 %v3222, 1.442695
    %v3226 = vpow.pop %v3225
    %v3227 = vsel %vm702, %v3224, 0.0
    %3228 = vadd.xlane.f32.xlu0 %v3227
    %v3229 = vpop.xlane.xlu0 %3228
    %v3230 = vsel %vm702, %v3226, 0.0
    %3231 = vadd.xlane.f32.xlu0 %v3230
    %v3232 = vpop.xlane.xlu0 %3231
    %v3233 = vrcp.pop %v3229
    %v3234 = vmul.f32 %v3224, %v3233
    %v3235 = vrcp.pop %v3232
    %v3236 = vmul.f32 %v3226, %v3235
    %3237 = vrot.lane.b32.xlu0 %v2391, 96
    %v3238 = vpop.permute.xlu0 %3237
    %v3241 = vsel %vm702, %v3234, 0
    %3243 = vmatprep.subr.mxu0 0.0
    %3244 = vmatpush1.msra.mxu0 %v3238
    %3245 = vmatprep.subr.mxu0 0.0
    %3246 = vmatpush1.msra.mxu0 0.0
    %3247 = vmatprep.subr.mxu0 0.0
    %3248 = vmatpush1.msra.mxu0 0.0
    %3249 = vmatprep.subr.mxu0 0.0
    %3250 = vmatpush1.msra.mxu0 0.0
    %3251 = vmatprep.subr.mxu0 0.0
    %3252 = vmatpush1.msra.mxu0 0.0
    %3253 = vmatprep.subr.mxu0 0.0
    %3254 = vmatpush1.msra.mxu0 0.0
    %3255 = vmatprep.subr.mxu0 0.0
    %3256 = vmatpush1.msra.mxu0 0.0
    %3257 = vmatprep.subr.mxu0 0.0
    %3258 = vmatpush1.msra.mxu0 0.0
    %3259 = vmatprep.subr.mxu0 0.0
    %3260 = vmatpush1.msra.mxu0 0.0
    %3261 = vmatprep.subr.mxu0 0.0
    %3262 = vmatpush1.msra.mxu0 0.0
    %3263 = vmatprep.subr.mxu0 0.0
    %3264 = vmatpush1.msra.mxu0 0.0
    %3265 = vmatprep.subr.mxu0 0.0
    %3266 = vmatpush1.msra.mxu0 0.0
    %3267 = vmatprep.subr.mxu0 0.0
    %3268 = vmatpush1.msra.mxu0 0.0
    %3269 = vmatprep.subr.mxu0 0.0
    %3270 = vmatpush1.msra.mxu0 0.0
    %3271 = vmatprep.subr.mxu0 0.0
    %3272 = vmatpush1.msra.mxu0 0.0
    %3273 = vmatprep.subr.mxu0 0.0
    %3274 = vmatpush1.msra.mxu0 0.0
    %3275 = vmatprep.subr.mxu0 0.0
    %3276 = vmatpush1.msra.mxu0 0.0
    %3277 = vmatprep.subr.mxu0 0.0
    %3278 = vmatpush1.msra.mxu0 0.0
    %3279 = vmatprep.subr.mxu0 0.0
    %3280 = vmatpush1.msra.mxu0 0.0
    %3281 = vmatprep.subr.mxu0 0.0
    %3282 = vmatpush1.msra.mxu0 0.0
    %3283 = vmatprep.subr.mxu0 0.0
    %3284 = vmatpush1.msra.mxu0 0.0
    %3285 = vmatprep.subr.mxu0 0.0
    %3286 = vmatpush1.msra.mxu0 0.0
    %3287 = vmatprep.subr.mxu0 0.0
    %3288 = vmatpush1.msra.mxu0 0.0
    %3289 = vmatprep.subr.mxu0 0.0
    %3290 = vmatpush1.msra.mxu0 0.0
    %3291 = vmatprep.subr.mxu0 0.0
    %3292 = vmatpush1.msra.mxu0 0.0
    %3293 = vmatprep.subr.mxu0 0.0
    %3294 = vmatpush1.msra.mxu0 0.0
    %3295 = vmatprep.subr.mxu0 0.0
    %3296 = vmatpush1.msra.mxu0 0.0
    %3297 = vmatprep.subr.mxu0 0.0
    %3298 = vmatpush1.msra.mxu0 0.0
    %3299 = vmatprep.subr.mxu0 0.0
    %3300 = vmatpush1.msra.mxu0 0.0
    %3301 = vmatprep.subr.mxu0 0.0
    %3302 = vmatpush1.msra.mxu0 0.0
    %3303 = vmatprep.subr.mxu0 0.0
    %3304 = vmatpush1.msra.mxu0 0.0
    %3305 = vmatprep.subr.mxu0 0.0
    %3306 = vmatpush1.msra.mxu0 0.0
    %3307 = vmatprep.mubr.f32.mxu0 0.0
    %3308 = vmatmul.mubr.f32.gmra.mrb[0].mxu0 %v3241
    %v3309 = vpop.f32.mrb[0].mxu0
    %v3310 = vadd.f32 0.0, %v3309
    %v3311 = vpop.f32.mrb[0].mxu0
    %3312 = vdwg.mxu0
    %3313 = vrot.lane.b32.xlu0 %v2397, 96
    %v3314 = vpop.permute.xlu0 %3313
    %v3317 = vsel %vm702, %v3236, 0
    %3319 = vmatprep.subr.mxu0 0.0
    %3320 = vmatpush1.msra.mxu0 %v3314
    %3321 = vmatprep.subr.mxu0 0.0
    %3322 = vmatpush1.msra.mxu0 0.0
    %3323 = vmatprep.subr.mxu0 0.0
    %3324 = vmatpush1.msra.mxu0 0.0
    %3325 = vmatprep.subr.mxu0 0.0
    %3326 = vmatpush1.msra.mxu0 0.0
    %3327 = vmatprep.subr.mxu0 0.0
    %3328 = vmatpush1.msra.mxu0 0.0
    %3329 = vmatprep.subr.mxu0 0.0
    %3330 = vmatpush1.msra.mxu0 0.0
    %3331 = vmatprep.subr.mxu0 0.0
    %3332 = vmatpush1.msra.mxu0 0.0
    %3333 = vmatprep.subr.mxu0 0.0
    %3334 = vmatpush1.msra.mxu0 0.0
    %3335 = vmatprep.subr.mxu0 0.0
    %3336 = vmatpush1.msra.mxu0 0.0
    %3337 = vmatprep.subr.mxu0 0.0
    %3338 = vmatpush1.msra.mxu0 0.0
    %3339 = vmatprep.subr.mxu0 0.0
    %3340 = vmatpush1.msra.mxu0 0.0
    %3341 = vmatprep.subr.mxu0 0.0
    %3342 = vmatpush1.msra.mxu0 0.0
    %3343 = vmatprep.subr.mxu0 0.0
    %3344 = vmatpush1.msra.mxu0 0.0
    %3345 = vmatprep.subr.mxu0 0.0
    %3346 = vmatpush1.msra.mxu0 0.0
    %3347 = vmatprep.subr.mxu0 0.0
    %3348 = vmatpush1.msra.mxu0 0.0
    %3349 = vmatprep.subr.mxu0 0.0
    %3350 = vmatpush1.msra.mxu0 0.0
    %3351 = vmatprep.subr.mxu0 0.0
    %3352 = vmatpush1.msra.mxu0 0.0
    %3353 = vmatprep.subr.mxu0 0.0
    %3354 = vmatpush1.msra.mxu0 0.0
    %3355 = vmatprep.subr.mxu0 0.0
    %3356 = vmatpush1.msra.mxu0 0.0
    %3357 = vmatprep.subr.mxu0 0.0
    %3358 = vmatpush1.msra.mxu0 0.0
    %3359 = vmatprep.subr.mxu0 0.0
    %3360 = vmatpush1.msra.mxu0 0.0
    %3361 = vmatprep.subr.mxu0 0.0
    %3362 = vmatpush1.msra.mxu0 0.0
    %3363 = vmatprep.subr.mxu0 0.0
    %3364 = vmatpush1.msra.mxu0 0.0
    %3365 = vmatprep.subr.mxu0 0.0
    %3366 = vmatpush1.msra.mxu0 0.0
    %3367 = vmatprep.subr.mxu0 0.0
    %3368 = vmatpush1.msra.mxu0 0.0
    %3369 = vmatprep.subr.mxu0 0.0
    %3370 = vmatpush1.msra.mxu0 0.0
    %3371 = vmatprep.subr.mxu0 0.0
    %3372 = vmatpush1.msra.mxu0 0.0
    %3373 = vmatprep.subr.mxu0 0.0
    %3374 = vmatpush1.msra.mxu0 0.0
    %3375 = vmatprep.subr.mxu0 0.0
    %3376 = vmatpush1.msra.mxu0 0.0
    %3377 = vmatprep.subr.mxu0 0.0
    %3378 = vmatpush1.msra.mxu0 0.0
    %3379 = vmatprep.subr.mxu0 0.0
    %3380 = vmatpush1.msra.mxu0 0.0
    %3381 = vmatprep.subr.mxu0 0.0
    %3382 = vmatpush1.msra.mxu0 0.0
    %3383 = vmatprep.mubr.f32.mxu0 0.0
    %3384 = vmatmul.mubr.f32.gmra.mrb[0].mxu0 %v3317
    %v3385 = vpop.f32.mrb[0].mxu0
    %v3386 = vadd.f32 0.0, %v3385
    %v3387 = vpop.f32.mrb[0].mxu0
    %3388 = vdwg.mxu0
    %3389 = vrot.lane.b32.xlu0 %v2389, 80
    %v3390 = vpop.permute.xlu0 %3389
    %3391 = vrot.lane.b32.xlu0 %v2389, 16
    %v3392 = vpop.permute.xlu0 %3391
    %v3393 = vsel %vm256, %v3390, 0
    %v3395 = vsel %vm256, %v3392, 0
    %3397 = vmatprep.subr.mxu0 0.0
    %3398 = vmatpush1.xpose.msra.mxu0 %v3395
    %3399 = vmatprep.subr.mxu0 0.0
    %3400 = vmatpush1.xpose.msra.mxu0 0.0
    %3401 = vmatprep.subr.mxu0 0.0
    %3402 = vmatpush1.xpose.msra.mxu0 0.0
    %3403 = vmatprep.subr.mxu0 0.0
    %3404 = vmatpush1.xpose.msra.mxu0 0.0
    %3405 = vmatprep.subr.mxu0 0.0
    %3406 = vmatpush1.xpose.msra.mxu0 0.0
    %3407 = vmatprep.subr.mxu0 0.0
    %3408 = vmatpush1.xpose.msra.mxu0 0.0
    %3409 = vmatprep.subr.mxu0 0.0
    %3410 = vmatpush1.xpose.msra.mxu0 0.0
    %3411 = vmatprep.subr.mxu0 0.0
    %3412 = vmatpush1.xpose.msra.mxu0 0.0
    %3413 = vmatprep.subr.mxu0 0.0
    %3414 = vmatpush1.xpose.msra.mxu0 0.0
    %3415 = vmatprep.subr.mxu0 0.0
    %3416 = vmatpush1.xpose.msra.mxu0 0.0
    %3417 = vmatprep.subr.mxu0 0.0
    %3418 = vmatpush1.xpose.msra.mxu0 0.0
    %3419 = vmatprep.subr.mxu0 0.0
    %3420 = vmatpush1.xpose.msra.mxu0 0.0
    %3421 = vmatprep.subr.mxu0 0.0
    %3422 = vmatpush1.xpose.msra.mxu0 0.0
    %3423 = vmatprep.subr.mxu0 0.0
    %3424 = vmatpush1.xpose.msra.mxu0 0.0
    %3425 = vmatprep.subr.mxu0 0.0
    %3426 = vmatpush1.xpose.msra.mxu0 0.0
    %3427 = vmatprep.subr.mxu0 0.0
    %3428 = vmatpush1.xpose.msra.mxu0 0.0
    %3429 = vmatprep.subr.mxu0 0.0
    %3430 = vmatpush1.xpose.msra.mxu0 0.0
    %3431 = vmatprep.subr.mxu0 0.0
    %3432 = vmatpush1.xpose.msra.mxu0 0.0
    %3433 = vmatprep.subr.mxu0 0.0
    %3434 = vmatpush1.xpose.msra.mxu0 0.0
    %3435 = vmatprep.subr.mxu0 0.0
    %3436 = vmatpush1.xpose.msra.mxu0 0.0
    %3437 = vmatprep.subr.mxu0 0.0
    %3438 = vmatpush1.xpose.msra.mxu0 0.0
    %3439 = vmatprep.subr.mxu0 0.0
    %3440 = vmatpush1.xpose.msra.mxu0 0.0
    %3441 = vmatprep.subr.mxu0 0.0
    %3442 = vmatpush1.xpose.msra.mxu0 0.0
    %3443 = vmatprep.subr.mxu0 0.0
    %3444 = vmatpush1.xpose.msra.mxu0 0.0
    %3445 = vmatprep.subr.mxu0 0.0
    %3446 = vmatpush1.xpose.msra.mxu0 0.0
    %3447 = vmatprep.subr.mxu0 0.0
    %3448 = vmatpush1.xpose.msra.mxu0 0.0
    %3449 = vmatprep.subr.mxu0 0.0
    %3450 = vmatpush1.xpose.msra.mxu0 0.0
    %3451 = vmatprep.subr.mxu0 0.0
    %3452 = vmatpush1.xpose.msra.mxu0 0.0
    %3453 = vmatprep.subr.mxu0 0.0
    %3454 = vmatpush1.xpose.msra.mxu0 0.0
    %3455 = vmatprep.subr.mxu0 0.0
    %3456 = vmatpush1.xpose.msra.mxu0 0.0
    %3457 = vmatprep.subr.mxu0 0.0
    %3458 = vmatpush1.xpose.msra.mxu0 0.0
    %3459 = vmatprep.subr.mxu0 0.0
    %3460 = vmatpush1.xpose.msra.mxu0 0.0
    %3461 = vmatprep.mubr.f32.mxu0 0.0
    %3462 = vmatmul.mubr.f32.gmra.mrb[0].mxu0 %v3393
    %v3463 = vpop.f32.mrb[0].mxu0
    %v3464 = vadd.f32 0.0, %v3463
    %v3465 = vpop.f32.mrb[0].mxu0
    %3466 = vdwg.mxu0
    %3467 = vrot.lane.b32.xlu0 %v2395, 80
    %v3468 = vpop.permute.xlu0 %3467
    %3469 = vrot.lane.b32.xlu0 %v2395, 16
    %v3470 = vpop.permute.xlu0 %3469
    %v3471 = vsel %vm256, %v3468, 0
    %v3473 = vsel %vm256, %v3470, 0
    %3475 = vmatprep.subr.mxu0 0.0
    %3476 = vmatpush1.xpose.msra.mxu0 %v3473
    %3477 = vmatprep.subr.mxu0 0.0
    %3478 = vmatpush1.xpose.msra.mxu0 0.0
    %3479 = vmatprep.subr.mxu0 0.0
    %3480 = vmatpush1.xpose.msra.mxu0 0.0
    %3481 = vmatprep.subr.mxu0 0.0
    %3482 = vmatpush1.xpose.msra.mxu0 0.0
    %3483 = vmatprep.subr.mxu0 0.0
    %3484 = vmatpush1.xpose.msra.mxu0 0.0
    %3485 = vmatprep.subr.mxu0 0.0
    %3486 = vmatpush1.xpose.msra.mxu0 0.0
    %3487 = vmatprep.subr.mxu0 0.0
    %3488 = vmatpush1.xpose.msra.mxu0 0.0
    %3489 = vmatprep.subr.mxu0 0.0
    %3490 = vmatpush1.xpose.msra.mxu0 0.0
    %3491 = vmatprep.subr.mxu0 0.0
    %3492 = vmatpush1.xpose.msra.mxu0 0.0
    %3493 = vmatprep.subr.mxu0 0.0
    %3494 = vmatpush1.xpose.msra.mxu0 0.0
    %3495 = vmatprep.subr.mxu0 0.0
    %3496 = vmatpush1.xpose.msra.mxu0 0.0
    %3497 = vmatprep.subr.mxu0 0.0
    %3498 = vmatpush1.xpose.msra.mxu0 0.0
    %3499 = vmatprep.subr.mxu0 0.0
    %3500 = vmatpush1.xpose.msra.mxu0 0.0
    %3501 = vmatprep.subr.mxu0 0.0
    %3502 = vmatpush1.xpose.msra.mxu0 0.0
    %3503 = vmatprep.subr.mxu0 0.0
    %3504 = vmatpush1.xpose.msra.mxu0 0.0
    %3505 = vmatprep.subr.mxu0 0.0
    %3506 = vmatpush1.xpose.msra.mxu0 0.0
    %3507 = vmatprep.subr.mxu0 0.0
    %3508 = vmatpush1.xpose.msra.mxu0 0.0
    %3509 = vmatprep.subr.mxu0 0.0
    %3510 = vmatpush1.xpose.msra.mxu0 0.0
    %3511 = vmatprep.subr.mxu0 0.0
    %3512 = vmatpush1.xpose.msra.mxu0 0.0
    %3513 = vmatprep.subr.mxu0 0.0
    %3514 = vmatpush1.xpose.msra.mxu0 0.0
    %3515 = vmatprep.subr.mxu0 0.0
    %3516 = vmatpush1.xpose.msra.mxu0 0.0
    %3517 = vmatprep.subr.mxu0 0.0
    %3518 = vmatpush1.xpose.msra.mxu0 0.0
    %3519 = vmatprep.subr.mxu0 0.0
    %3520 = vmatpush1.xpose.msra.mxu0 0.0
    %3521 = vmatprep.subr.mxu0 0.0
    %3522 = vmatpush1.xpose.msra.mxu0 0.0
    %3523 = vmatprep.subr.mxu0 0.0
    %3524 = vmatpush1.xpose.msra.mxu0 0.0
    %3525 = vmatprep.subr.mxu0 0.0
    %3526 = vmatpush1.xpose.msra.mxu0 0.0
    %3527 = vmatprep.subr.mxu0 0.0
    %3528 = vmatpush1.xpose.msra.mxu0 0.0
    %3529 = vmatprep.subr.mxu0 0.0
    %3530 = vmatpush1.xpose.msra.mxu0 0.0
    %3531 = vmatprep.subr.mxu0 0.0
    %3532 = vmatpush1.xpose.msra.mxu0 0.0
    %3533 = vmatprep.subr.mxu0 0.0
    %3534 = vmatpush1.xpose.msra.mxu0 0.0
    %3535 = vmatprep.subr.mxu0 0.0
    %3536 = vmatpush1.xpose.msra.mxu0 0.0
    %3537 = vmatprep.subr.mxu0 0.0
    %3538 = vmatpush1.xpose.msra.mxu0 0.0
    %3539 = vmatprep.mubr.f32.mxu0 0.0
    %3540 = vmatmul.mubr.f32.gmra.mrb[0].mxu0 %v3471
    %v3541 = vpop.f32.mrb[0].mxu0
    %v3542 = vadd.f32 0.0, %v3541
    %v3543 = vpop.f32.mrb[0].mxu0
    %3544 = vdwg.mxu0
    %v3545 = vmul.f32 %v3464, 0.25
    %v3546 = vmul.f32 %v3542, 0.25
    %v3547 = vsel %vm702, %v3545, -inf
    %3548 = vmax.xlane.f32.xlu0 %v3547
    %v3549 = vpop.xlane.xlu0 %3548
    %v3550 = vsel %vm702, %v3546, -inf
    %3551 = vmax.xlane.f32.xlu0 %v3550
    %v3552 = vpop.xlane.xlu0 %3551
    %v3553 = vsub.f32 %v3545, %v3549
    %v3554 = vsub.f32 %v3546, %v3552
    %v3555 = vmul.f32 %v3553, 1.442695
    %v3556 = vpow.pop %v3555
    %v3557 = vmul.f32 %v3554, 1.442695
    %v3558 = vpow.pop %v3557
    %v3559 = vsel %vm702, %v3556, 0.0
    %3560 = vadd.xlane.f32.xlu0 %v3559
    %v3561 = vpop.xlane.xlu0 %3560
    %v3562 = vsel %vm702, %v3558, 0.0
    %3563 = vadd.xlane.f32.xlu0 %v3562
    %v3564 = vpop.xlane.xlu0 %3563
    %v3565 = vrcp.pop %v3561
    %v3566 = vmul.f32 %v3556, %v3565
    %v3567 = vrcp.pop %v3564
    %v3568 = vmul.f32 %v3558, %v3567
    %3569 = vrot.lane.b32.xlu0 %v2391, 80
    %v3570 = vpop.permute.xlu0 %3569
    %v3573 = vsel %vm702, %v3566, 0
    %3575 = vmatprep.subr.mxu0 0.0
    %3576 = vmatpush1.msra.mxu0 %v3570
    %3577 = vmatprep.subr.mxu0 0.0
    %3578 = vmatpush1.msra.mxu0 0.0
    %3579 = vmatprep.subr.mxu0 0.0
    %3580 = vmatpush1.msra.mxu0 0.0
    %3581 = vmatprep.subr.mxu0 0.0
    %3582 = vmatpush1.msra.mxu0 0.0
    %3583 = vmatprep.subr.mxu0 0.0
    %3584 = vmatpush1.msra.mxu0 0.0
    %3585 = vmatprep.subr.mxu0 0.0
    %3586 = vmatpush1.msra.mxu0 0.0
    %3587 = vmatprep.subr.mxu0 0.0
    %3588 = vmatpush1.msra.mxu0 0.0
    %3589 = vmatprep.subr.mxu0 0.0
    %3590 = vmatpush1.msra.mxu0 0.0
    %3591 = vmatprep.subr.mxu0 0.0
    %3592 = vmatpush1.msra.mxu0 0.0
    %3593 = vmatprep.subr.mxu0 0.0
    %3594 = vmatpush1.msra.mxu0 0.0
    %3595 = vmatprep.subr.mxu0 0.0
    %3596 = vmatpush1.msra.mxu0 0.0
    %3597 = vmatprep.subr.mxu0 0.0
    %3598 = vmatpush1.msra.mxu0 0.0
    %3599 = vmatprep.subr.mxu0 0.0
    %3600 = vmatpush1.msra.mxu0 0.0
    %3601 = vmatprep.subr.mxu0 0.0
    %3602 = vmatpush1.msra.mxu0 0.0
    %3603 = vmatprep.subr.mxu0 0.0
    %3604 = vmatpush1.msra.mxu0 0.0
    %3605 = vmatprep.subr.mxu0 0.0
    %3606 = vmatpush1.msra.mxu0 0.0
    %3607 = vmatprep.subr.mxu0 0.0
    %3608 = vmatpush1.msra.mxu0 0.0
    %3609 = vmatprep.subr.mxu0 0.0
    %3610 = vmatpush1.msra.mxu0 0.0
    %3611 = vmatprep.subr.mxu0 0.0
    %3612 = vmatpush1.msra.mxu0 0.0
    %3613 = vmatprep.subr.mxu0 0.0
    %3614 = vmatpush1.msra.mxu0 0.0
    %3615 = vmatprep.subr.mxu0 0.0
    %3616 = vmatpush1.msra.mxu0 0.0
    %3617 = vmatprep.subr.mxu0 0.0
    %3618 = vmatpush1.msra.mxu0 0.0
    %3619 = vmatprep.subr.mxu0 0.0
    %3620 = vmatpush1.msra.mxu0 0.0
    %3621 = vmatprep.subr.mxu0 0.0
    %3622 = vmatpush1.msra.mxu0 0.0
    %3623 = vmatprep.subr.mxu0 0.0
    %3624 = vmatpush1.msra.mxu0 0.0
    %3625 = vmatprep.subr.mxu0 0.0
    %3626 = vmatpush1.msra.mxu0 0.0
    %3627 = vmatprep.subr.mxu0 0.0
    %3628 = vmatpush1.msra.mxu0 0.0
    %3629 = vmatprep.subr.mxu0 0.0
    %3630 = vmatpush1.msra.mxu0 0.0
    %3631 = vmatprep.subr.mxu0 0.0
    %3632 = vmatpush1.msra.mxu0 0.0
    %3633 = vmatprep.subr.mxu0 0.0
    %3634 = vmatpush1.msra.mxu0 0.0
    %3635 = vmatprep.subr.mxu0 0.0
    %3636 = vmatpush1.msra.mxu0 0.0
    %3637 = vmatprep.subr.mxu0 0.0
    %3638 = vmatpush1.msra.mxu0 0.0
    %3639 = vmatprep.mubr.f32.mxu0 0.0
    %3640 = vmatmul.mubr.f32.gmra.mrb[0].mxu0 %v3573
    %v3641 = vpop.f32.mrb[0].mxu0
    %v3642 = vadd.f32 0.0, %v3641
    %v3643 = vpop.f32.mrb[0].mxu0
    %3644 = vdwg.mxu0
    %3645 = vrot.lane.b32.xlu0 %v2397, 80
    %v3646 = vpop.permute.xlu0 %3645
    %v3649 = vsel %vm702, %v3568, 0
    %3651 = vmatprep.subr.mxu0 0.0
    %3652 = vmatpush1.msra.mxu0 %v3646
    %3653 = vmatprep.subr.mxu0 0.0
    %3654 = vmatpush1.msra.mxu0 0.0
    %3655 = vmatprep.subr.mxu0 0.0
    %3656 = vmatpush1.msra.mxu0 0.0
    %3657 = vmatprep.subr.mxu0 0.0
    %3658 = vmatpush1.msra.mxu0 0.0
    %3659 = vmatprep.subr.mxu0 0.0
    %3660 = vmatpush1.msra.mxu0 0.0
    %3661 = vmatprep.subr.mxu0 0.0
    %3662 = vmatpush1.msra.mxu0 0.0
    %3663 = vmatprep.subr.mxu0 0.0
    %3664 = vmatpush1.msra.mxu0 0.0
    %3665 = vmatprep.subr.mxu0 0.0
    %3666 = vmatpush1.msra.mxu0 0.0
    %3667 = vmatprep.subr.mxu0 0.0
    %3668 = vmatpush1.msra.mxu0 0.0
    %3669 = vmatprep.subr.mxu0 0.0
    %3670 = vmatpush1.msra.mxu0 0.0
    %3671 = vmatprep.subr.mxu0 0.0
    %3672 = vmatpush1.msra.mxu0 0.0
    %3673 = vmatprep.subr.mxu0 0.0
    %3674 = vmatpush1.msra.mxu0 0.0
    %3675 = vmatprep.subr.mxu0 0.0
    %3676 = vmatpush1.msra.mxu0 0.0
    %3677 = vmatprep.subr.mxu0 0.0
    %3678 = vmatpush1.msra.mxu0 0.0
    %3679 = vmatprep.subr.mxu0 0.0
    %3680 = vmatpush1.msra.mxu0 0.0
    %3681 = vmatprep.subr.mxu0 0.0
    %3682 = vmatpush1.msra.mxu0 0.0
    %3683 = vmatprep.subr.mxu0 0.0
    %3684 = vmatpush1.msra.mxu0 0.0
    %3685 = vmatprep.subr.mxu0 0.0
    %3686 = vmatpush1.msra.mxu0 0.0
    %3687 = vmatprep.subr.mxu0 0.0
    %3688 = vmatpush1.msra.mxu0 0.0
    %3689 = vmatprep.subr.mxu0 0.0
    %3690 = vmatpush1.msra.mxu0 0.0
    %3691 = vmatprep.subr.mxu0 0.0
    %3692 = vmatpush1.msra.mxu0 0.0
    %3693 = vmatprep.subr.mxu0 0.0
    %3694 = vmatpush1.msra.mxu0 0.0
    %3695 = vmatprep.subr.mxu0 0.0
    %3696 = vmatpush1.msra.mxu0 0.0
    %3697 = vmatprep.subr.mxu0 0.0
    %3698 = vmatpush1.msra.mxu0 0.0
    %3699 = vmatprep.subr.mxu0 0.0
    %3700 = vmatpush1.msra.mxu0 0.0
    %3701 = vmatprep.subr.mxu0 0.0
    %3702 = vmatpush1.msra.mxu0 0.0
    %3703 = vmatprep.subr.mxu0 0.0
    %3704 = vmatpush1.msra.mxu0 0.0
    %3705 = vmatprep.subr.mxu0 0.0
    %3706 = vmatpush1.msra.mxu0 0.0
    %3707 = vmatprep.subr.mxu0 0.0
    %3708 = vmatpush1.msra.mxu0 0.0
    %3709 = vmatprep.subr.mxu0 0.0
    %3710 = vmatpush1.msra.mxu0 0.0
    %3711 = vmatprep.subr.mxu0 0.0
    %3712 = vmatpush1.msra.mxu0 0.0
    %3713 = vmatprep.subr.mxu0 0.0
    %3714 = vmatpush1.msra.mxu0 0.0
    %3715 = vmatprep.mubr.f32.mxu0 0.0
    %3716 = vmatmul.mubr.f32.gmra.mrb[0].mxu0 %v3649
    %v3717 = vpop.f32.mrb[0].mxu0
    %v3718 = vadd.f32 0.0, %v3717
    %v3719 = vpop.f32.mrb[0].mxu0
    %3720 = vdwg.mxu0
    %3723 = vrot.lane.b32.xlu0 %v2977, 16
    %v3724 = vpop.permute.xlu0 %3723
    %3725 = vrot.lane.b32.xlu0 %v3054, 16
    %v3726 = vpop.permute.xlu0 %3725
    %3731 = vrot.lane.b32.xlu0 %v3310, 32
    %v3732 = vpop.permute.xlu0 %3731
    %3733 = vrot.lane.b32.xlu0 %v3386, 32
    %v3734 = vpop.permute.xlu0 %3733
    %3739 = vrot.lane.b32.xlu0 %v3642, 48
    %v3740 = vpop.permute.xlu0 %3739
    %3741 = vrot.lane.b32.xlu0 %v3718, 48
    %v3742 = vpop.permute.xlu0 %3741
    %v3745 = vsel %vm256, %v2647, %v3724
    %v3746 = vsel %vm256, %v2720, %v3726
    %v3747 = vsel %vm1895, %v3745, %v3732
    %v3748 = vsel %vm1895, %v3746, %v3734
    %v3749 = vsel %vm1898, %v3747, %v3740
    %v3750 = vsel %vm1898, %v3748, %v3742
    %s3751 = scalar_lea.vmem %s10, 64
    %v3752 = vld [vmem:[%s3751] sm:$0xff]
    %v3753 = vld [vmem:[%s3751 + $0x8] sm:$0xff]
    %v3754 = vld [vmem:[%s3751 + $0x10] sm:$0xff]
    %v3755 = vld [vmem:[%s3751 + $0x18] sm:$0xff]
    %v3756 = vld [vmem:[%s3751 + $0x20] sm:$0xff]
    %v3757 = vld [vmem:[%s3751 + $0x28] sm:$0xff]
    %v3758 = vld [vmem:[%s3751 + $0x30] sm:$0xff]
    %v3759 = vld [vmem:[%s3751 + $0x38] sm:$0xff]
    %s3760 = scalar_lea.vmem %s11, 1
    %v3761 = vld [vmem:[%s3760] sm:$0x1]
    %v3763 = vlaneseq
    %v3764 = vshrl.u32 %v3763, 7
    %v3765 = vsub.s32 0, %v3764
    %v3766 = vrot.slane %v3761, %v3765
    %v3769 = vsel %vm462, %v3749, 0
    %v3772 = vsel %vm462, %v3750, 0
    %3774 = vmatprep.subr.mxu0 0.0
    %3775 = vmatpush1.msra.mxu0 %v3752
    %3776 = vmatprep.subr.mxu0 0.0
    %3777 = vmatpush1.msra.mxu0 %v3753
    %3778 = vmatprep.subr.mxu0 0.0
    %3779 = vmatpush1.msra.mxu0 %v3754
    %3780 = vmatprep.subr.mxu0 0.0
    %3781 = vmatpush1.msra.mxu0 %v3755
    %3782 = vmatprep.subr.mxu0 0.0
    %3783 = vmatpush1.msra.mxu0 %v3756
    %3784 = vmatprep.subr.mxu0 0.0
    %3785 = vmatpush1.msra.mxu0 %v3757
    %3786 = vmatprep.subr.mxu0 0.0
    %3787 = vmatpush1.msra.mxu0 %v3758
    %3788 = vmatprep.subr.mxu0 0.0
    %3789 = vmatpush1.msra.mxu0 %v3759
    %3790 = vmatprep.subr.mxu0 0.0
    %3791 = vmatpush1.msra.mxu0 0.0
    %3792 = vmatprep.subr.mxu0 0.0
    %3793 = vmatpush1.msra.mxu0 0.0
    %3794 = vmatprep.subr.mxu0 0.0
    %3795 = vmatpush1.msra.mxu0 0.0
    %3796 = vmatprep.subr.mxu0 0.0
    %3797 = vmatpush1.msra.mxu0 0.0
    %3798 = vmatprep.subr.mxu0 0.0
    %3799 = vmatpush1.msra.mxu0 0.0
    %3800 = vmatprep.subr.mxu0 0.0
    %3801 = vmatpush1.msra.mxu0 0.0
    %3802 = vmatprep.subr.mxu0 0.0
    %3803 = vmatpush1.msra.mxu0 0.0
    %3804 = vmatprep.subr.mxu0 0.0
    %3805 = vmatpush1.msra.mxu0 0.0
    %3806 = vmatprep.subr.mxu0 0.0
    %3807 = vmatpush1.msra.mxu0 0.0
    %3808 = vmatprep.subr.mxu0 0.0
    %3809 = vmatpush1.msra.mxu0 0.0
    %3810 = vmatprep.subr.mxu0 0.0
    %3811 = vmatpush1.msra.mxu0 0.0
    %3812 = vmatprep.subr.mxu0 0.0
    %3813 = vmatpush1.msra.mxu0 0.0
    %3814 = vmatprep.subr.mxu0 0.0
    %3815 = vmatpush1.msra.mxu0 0.0
    %3816 = vmatprep.subr.mxu0 0.0
    %3817 = vmatpush1.msra.mxu0 0.0
    %3818 = vmatprep.subr.mxu0 0.0
    %3819 = vmatpush1.msra.mxu0 0.0
    %3820 = vmatprep.subr.mxu0 0.0
    %3821 = vmatpush1.msra.mxu0 0.0
    %3822 = vmatprep.subr.mxu0 0.0
    %3823 = vmatpush1.msra.mxu0 0.0
    %3824 = vmatprep.subr.mxu0 0.0
    %3825 = vmatpush1.msra.mxu0 0.0
    %3826 = vmatprep.subr.mxu0 0.0
    %3827 = vmatpush1.msra.mxu0 0.0
    %3828 = vmatprep.subr.mxu0 0.0
    %3829 = vmatpush1.msra.mxu0 0.0
    %3830 = vmatprep.subr.mxu0 0.0
    %3831 = vmatpush1.msra.mxu0 0.0
    %3832 = vmatprep.subr.mxu0 0.0
    %3833 = vmatpush1.msra.mxu0 0.0
    %3834 = vmatprep.subr.mxu0 0.0
    %3835 = vmatpush1.msra.mxu0 0.0
    %3836 = vmatprep.subr.mxu0 0.0
    %3837 = vmatpush1.msra.mxu0 0.0
    %3838 = vmatprep.mubr.f32.mxu0 0.0
    %3839 = vmatmul.mubr.f32.gmra.mrb[0].mxu0 %v3769
    %v3840 = vpop.f32.mrb[0].mxu0
    %v3841 = vadd.f32 %v3766, %v3840
    %v3842 = vpop.f32.mrb[0].mxu0
    %3843 = vmatprep.mubr.f32.mxu0 0.0
    %3844 = vmatmul.mubr.f32.gmra.mrb[0].mxu0 %v3772
    %v3845 = vpop.f32.mrb[0].mxu0
    %v3846 = vadd.f32 %v3766, %v3845
    %v3847 = vpop.f32.mrb[0].mxu0
    %3848 = vdwg.mxu0
    %v3849 = vadd.f32 %v2284, %v3841
    %v3850 = vadd.f32 %v2285, %v3846
    %s3851 = scalar_lea.vmem [#allocation13], 1
    %v3852 = vld [vmem:[%s3851] sm:$0x1]
    %s3853 = scalar_lea.vmem [#allocation14], 1
    %v3854 = vld [vmem:[%s3853] sm:$0x1]
    %v3855 = vsel %vm462, %v3849, 0.0
    %3856 = vadd.xlane.f32.xlu0 %v3855
    %v3857 = vpop.xlane.xlu0 %3856
    %v3858 = vsel %vm462, %v3850, 0.0
    %3859 = vadd.xlane.f32.xlu0 %v3858
    %v3860 = vpop.xlane.xlu0 %3859
    %v3861 = vmul.f32 %v3857, %v2007
    %v3862 = vmul.f32 %v3860, %v2007
    %v3863 = vsub.f32 %v3849, %v3861
    %v3864 = vsub.f32 %v3850, %v3862
    %v3865 = vmul.f32 %v3863, %v3863
    %v3866 = vmul.f32 %v3864, %v3864
    %v3867 = vsel %vm462, %v3865, 0.0
    %3868 = vadd.xlane.f32.xlu0 %v3867
    %v3869 = vpop.xlane.xlu0 %3868
    %v3870 = vsel %vm462, %v3866, 0.0
    %3871 = vadd.xlane.f32.xlu0 %v3870
    %v3872 = vpop.xlane.xlu0 %3871
    %v3873 = vmul.f32 %v3869, %v2007
    %v3874 = vmul.f32 %v3872, %v2007
    %v3875 = vadd.f32 %v3873, 1e-05
    %v3876 = vadd.f32 %v3874, 1e-05
    %v3877 = vrsqrt.pop %v3875
    %v3878 = vrsqrt.pop %v3876
    %v3879 = vmul.f32 %v3863, %v3877
    %v3880 = vmul.f32 %v3864, %v3878
    %v3882 = vlaneseq
    %v3883 = vshrl.u32 %v3882, 7
    %v3884 = vsub.s32 0, %v3883
    %v3885 = vrot.slane %v3852, %v3884
    %v3887 = vmul.f32 %v3879, %v3885
    %v3888 = vmul.f32 %v3880, %v3885
    %v3890 = vlaneseq
    %v3891 = vshrl.u32 %v3890, 7
    %v3892 = vsub.s32 0, %v3891
    %v3893 = vrot.slane %v3854, %v3892
    %v3895 = vadd.f32 %v3887, %v3893
    %v3896 = vadd.f32 %v3888, %v3893
    %s3897 = scalar_lea.vmem %s14, 64
    %v3898 = vld [vmem:[%s3897] sm:$0xff]
    %v3899 = vld [vmem:[%s3897 + $0x8] sm:$0xff]
    %v3900 = vld [vmem:[%s3897 + $0x10] sm:$0xff]
    %v3901 = vld [vmem:[%s3897 + $0x18] sm:$0xff]
    %v3902 = vld [vmem:[%s3897 + $0x20] sm:$0xff]
    %v3903 = vld [vmem:[%s3897 + $0x28] sm:$0xff]
    %v3904 = vld [vmem:[%s3897 + $0x30] sm:$0xff]
    %v3905 = vld [vmem:[%s3897 + $0x38] sm:$0xff]
    %s3906 = scalar_lea.vmem [#allocation16], 1
    %v3907 = vld [vmem:[%s3906] sm:$0x1]
    %v3909 = vlaneseq
    %v3910 = vshrl.u32 %v3909, 7
    %v3911 = vsub.s32 0, %v3910
    %v3912 = vrot.slane %v3907, %v3911
    %v3915 = vsel %vm462, %v3895, 0
    %v3918 = vsel %vm462, %v3896, 0
    %3920 = vmatprep.subr.mxu0 0.0
    %3921 = vmatpush1.msra.mxu0 %v3898
    %3922 = vmatprep.subr.mxu0 0.0
    %3923 = vmatpush1.msra.mxu0 %v3899
    %3924 = vmatprep.subr.mxu0 0.0
    %3925 = vmatpush1.msra.mxu0 %v3900
    %3926 = vmatprep.subr.mxu0 0.0
    %3927 = vmatpush1.msra.mxu0 %v3901
    %3928 = vmatprep.subr.mxu0 0.0
    %3929 = vmatpush1.msra.mxu0 %v3902
    %3930 = vmatprep.subr.mxu0 0.0
    %3931 = vmatpush1.msra.mxu0 %v3903
    %3932 = vmatprep.subr.mxu0 0.0
    %3933 = vmatpush1.msra.mxu0 %v3904
    %3934 = vmatprep.subr.mxu0 0.0
    %3935 = vmatpush1.msra.mxu0 %v3905
    %3936 = vmatprep.subr.mxu0 0.0
    %3937 = vmatpush1.msra.mxu0 0.0
    %3938 = vmatprep.subr.mxu0 0.0
    %3939 = vmatpush1.msra.mxu0 0.0
    %3940 = vmatprep.subr.mxu0 0.0
    %3941 = vmatpush1.msra.mxu0 0.0
    %3942 = vmatprep.subr.mxu0 0.0
    %3943 = vmatpush1.msra.mxu0 0.0
    %3944 = vmatprep.subr.mxu0 0.0
    %3945 = vmatpush1.msra.mxu0 0.0
    %3946 = vmatprep.subr.mxu0 0.0
    %3947 = vmatpush1.msra.mxu0 0.0
    %3948 = vmatprep.subr.mxu0 0.0
    %3949 = vmatpush1.msra.mxu0 0.0
    %3950 = vmatprep.subr.mxu0 0.0
    %3951 = vmatpush1.msra.mxu0 0.0
    %3952 = vmatprep.subr.mxu0 0.0
    %3953 = vmatpush1.msra.mxu0 0.0
    %3954 = vmatprep.subr.mxu0 0.0
    %3955 = vmatpush1.msra.mxu0 0.0
    %3956 = vmatprep.subr.mxu0 0.0
    %3957 = vmatpush1.msra.mxu0 0.0
    %3958 = vmatprep.subr.mxu0 0.0
    %3959 = vmatpush1.msra.mxu0 0.0
    %3960 = vmatprep.subr.mxu0 0.0
    %3961 = vmatpush1.msra.mxu0 0.0
    %3962 = vmatprep.subr.mxu0 0.0
    %3963 = vmatpush1.msra.mxu0 0.0
    %3964 = vmatprep.subr.mxu0 0.0
    %3965 = vmatpush1.msra.mxu0 0.0
    %3966 = vmatprep.subr.mxu0 0.0
    %3967 = vmatpush1.msra.mxu0 0.0
    %3968 = vmatprep.subr.mxu0 0.0
    %3969 = vmatpush1.msra.mxu0 0.0
    %3970 = vmatprep.subr.mxu0 0.0
    %3971 = vmatpush1.msra.mxu0 0.0
    %3972 = vmatprep.subr.mxu0 0.0
    %3973 = vmatpush1.msra.mxu0 0.0
    %3974 = vmatprep.subr.mxu0 0.0
    %3975 = vmatpush1.msra.mxu0 0.0
    %3976 = vmatprep.subr.mxu0 0.0
    %3977 = vmatpush1.msra.mxu0 0.0
    %3978 = vmatprep.subr.mxu0 0.0
    %3979 = vmatpush1.msra.mxu0 0.0
    %3980 = vmatprep.subr.mxu0 0.0
    %3981 = vmatpush1.msra.mxu0 0.0
    %3982 = vmatprep.subr.mxu0 0.0
    %3983 = vmatpush1.msra.mxu0 0.0
    %3984 = vmatprep.mubr.f32.mxu0 0.0
    %3985 = vmatmul.mubr.f32.gmra.mrb[0].mxu0 %v3915
    %v3986 = vpop.f32.mrb[0].mxu0
    %v3987 = vadd.f32 %v3912, %v3986
    %v3988 = vpop.f32.mrb[0].mxu0
    %3989 = vmatprep.mubr.f32.mxu0 0.0
    %3990 = vmatmul.mubr.f32.gmra.mrb[0].mxu0 %v3918
    %v3991 = vpop.f32.mrb[0].mxu0
    %v3992 = vadd.f32 %v3912, %v3991
    %v3993 = vpop.f32.mrb[0].mxu0
    %3994 = vdwg.mxu0
    %v3995 = vmax.f32 %v3987, 0.0
    %v3996 = vmax.f32 %v3992, 0.0
    %s3997 = scalar_lea.vmem %s16, 128
    %v3998 = vld [vmem:[%s3997] sm:$0xff]
    %v3999 = vld [vmem:[%s3997 + $0x8] sm:$0xff]
    %v4000 = vld [vmem:[%s3997 + $0x10] sm:$0xff]
    %v4001 = vld [vmem:[%s3997 + $0x18] sm:$0xff]
    %v4002 = vld [vmem:[%s3997 + $0x20] sm:$0xff]
    %v4003 = vld [vmem:[%s3997 + $0x28] sm:$0xff]
    %v4004 = vld [vmem:[%s3997 + $0x30] sm:$0xff]
    %v4005 = vld [vmem:[%s3997 + $0x38] sm:$0xff]
    %v4006 = vld [vmem:[%s3997 + $0x40] sm:$0xff]
    %v4007 = vld [vmem:[%s3997 + $0x48] sm:$0xff]
    %v4008 = vld [vmem:[%s3997 + $0x50] sm:$0xff]
    %v4009 = vld [vmem:[%s3997 + $0x58] sm:$0xff]
    %v4010 = vld [vmem:[%s3997 + $0x60] sm:$0xff]
    %v4011 = vld [vmem:[%s3997 + $0x68] sm:$0xff]
    %v4012 = vld [vmem:[%s3997 + $0x70] sm:$0xff]
    %v4013 = vld [vmem:[%s3997 + $0x78] sm:$0xff]
    %s4014 = scalar_lea.vmem [#allocation17], 1
    %v4015 = vld [vmem:[%s4014] sm:$0x1]
    %v4017 = vlaneseq
    %v4018 = vshrl.u32 %v4017, 7
    %v4019 = vsub.s32 0, %v4018
    %v4020 = vrot.slane %v4015, %v4019
    %4022 = vmatprep.subr.mxu0 0.0
    %4023 = vmatpush1.msra.mxu0 %v3998
    %4024 = vmatprep.subr.mxu0 0.0
    %4025 = vmatpush1.msra.mxu0 %v3999
    %4026 = vmatprep.subr.mxu0 0.0
    %4027 = vmatpush1.msra.mxu0 %v4000
    %4028 = vmatprep.subr.mxu0 0.0
    %4029 = vmatpush1.msra.mxu0 %v4001
    %4030 = vmatprep.subr.mxu0 0.0
    %4031 = vmatpush1.msra.mxu0 %v4002
    %4032 = vmatprep.subr.mxu0 0.0
    %4033 = vmatpush1.msra.mxu0 %v4003
    %4034 = vmatprep.subr.mxu0 0.0
    %4035 = vmatpush1.msra.mxu0 %v4004
    %4036 = vmatprep.subr.mxu0 0.0
    %4037 = vmatpush1.msra.mxu0 %v4005
    %4038 = vmatprep.subr.mxu0 0.0
    %4039 = vmatpush1.msra.mxu0 %v4006
    %4040 = vmatprep.subr.mxu0 0.0
    %4041 = vmatpush1.msra.mxu0 %v4007
    %4042 = vmatprep.subr.mxu0 0.0
    %4043 = vmatpush1.msra.mxu0 %v4008
    %4044 = vmatprep.subr.mxu0 0.0
    %4045 = vmatpush1.msra.mxu0 %v4009
    %4046 = vmatprep.subr.mxu0 0.0
    %4047 = vmatpush1.msra.mxu0 %v4010
    %4048 = vmatprep.subr.mxu0 0.0
    %4049 = vmatpush1.msra.mxu0 %v4011
    %4050 = vmatprep.subr.mxu0 0.0
    %4051 = vmatpush1.msra.mxu0 %v4012
    %4052 = vmatprep.subr.mxu0 0.0
    %4053 = vmatpush1.msra.mxu0 %v4013
    %4054 = vmatprep.subr.mxu0 0.0
    %4055 = vmatpush1.msra.mxu0 0.0
    %4056 = vmatprep.subr.mxu0 0.0
    %4057 = vmatpush1.msra.mxu0 0.0
    %4058 = vmatprep.subr.mxu0 0.0
    %4059 = vmatpush1.msra.mxu0 0.0
    %4060 = vmatprep.subr.mxu0 0.0
    %4061 = vmatpush1.msra.mxu0 0.0
    %4062 = vmatprep.subr.mxu0 0.0
    %4063 = vmatpush1.msra.mxu0 0.0
    %4064 = vmatprep.subr.mxu0 0.0
    %4065 = vmatpush1.msra.mxu0 0.0
    %4066 = vmatprep.subr.mxu0 0.0
    %4067 = vmatpush1.msra.mxu0 0.0
    %4068 = vmatprep.subr.mxu0 0.0
    %4069 = vmatpush1.msra.mxu0 0.0
    %4070 = vmatprep.subr.mxu0 0.0
    %4071 = vmatpush1.msra.mxu0 0.0
    %4072 = vmatprep.subr.mxu0 0.0
    %4073 = vmatpush1.msra.mxu0 0.0
    %4074 = vmatprep.subr.mxu0 0.0
    %4075 = vmatpush1.msra.mxu0 0.0
    %4076 = vmatprep.subr.mxu0 0.0
    %4077 = vmatpush1.msra.mxu0 0.0
    %4078 = vmatprep.subr.mxu0 0.0
    %4079 = vmatpush1.msra.mxu0 0.0
    %4080 = vmatprep.subr.mxu0 0.0
    %4081 = vmatpush1.msra.mxu0 0.0
    %4082 = vmatprep.subr.mxu0 0.0
    %4083 = vmatpush1.msra.mxu0 0.0
    %4084 = vmatprep.subr.mxu0 0.0
    %4085 = vmatpush1.msra.mxu0 0.0
    %4086 = vmatprep.mubr.f32.mxu0 0.0
    %4087 = vmatmul.mubr.f32.gmra.mrb[0].mxu0 %v3995
    %v4088 = vpop.f32.mrb[0].mxu0
    %v4089 = vadd.f32 %v4020, %v4088
    %v4090 = vpop.f32.mrb[0].mxu0
    %4091 = vmatprep.mubr.f32.mxu0 0.0
    %4092 = vmatmul.mubr.f32.gmra.mrb[0].mxu0 %v3996
    %v4093 = vpop.f32.mrb[0].mxu0
    %v4094 = vadd.f32 %v4020, %v4093
    %v4095 = vpop.f32.mrb[0].mxu0
    %4096 = vdwg.mxu0
    %v4097 = vadd.f32 %v3895, %v4089
    %v4098 = vadd.f32 %v3896, %v4094
    %s4099 = scalar_lea.vmem [#allocation19], 1
    %v4100 = vld [vmem:[%s4099] sm:$0x1]
    %s4101 = scalar_lea.vmem [#allocation20], 1
    %v4102 = vld [vmem:[%s4101] sm:$0x1]
    %v4103 = vsel %vm462, %v4097, 0.0
    %4104 = vadd.xlane.f32.xlu0 %v4103
    %v4105 = vpop.xlane.xlu0 %4104
    %v4106 = vsel %vm462, %v4098, 0.0
    %4107 = vadd.xlane.f32.xlu0 %v4106
    %v4108 = vpop.xlane.xlu0 %4107
    %v4109 = vmul.f32 %v4105, %v2007
    %v4110 = vmul.f32 %v4108, %v2007
    %v4111 = vsub.f32 %v4097, %v4109
    %v4112 = vsub.f32 %v4098, %v4110
    %v4113 = vmul.f32 %v4111, %v4111
    %v4114 = vmul.f32 %v4112, %v4112
    %v4115 = vsel %vm462, %v4113, 0.0
    %4116 = vadd.xlane.f32.xlu0 %v4115
    %v4117 = vpop.xlane.xlu0 %4116
    %v4118 = vsel %vm462, %v4114, 0.0
    %4119 = vadd.xlane.f32.xlu0 %v4118
    %v4120 = vpop.xlane.xlu0 %4119
    %v4121 = vmul.f32 %v4117, %v2007
    %v4122 = vmul.f32 %v4120, %v2007
    %v4123 = vadd.f32 %v4121, 1e-05
    %v4124 = vadd.f32 %v4122, 1e-05
    %v4125 = vrsqrt.pop %v4123
    %v4126 = vrsqrt.pop %v4124
    %v4127 = vmul.f32 %v4111, %v4125
    %v4128 = vmul.f32 %v4112, %v4126
    %v4130 = vlaneseq
    %v4131 = vshrl.u32 %v4130, 7
    %v4132 = vsub.s32 0, %v4131
    %v4133 = vrot.slane %v4100, %v4132
    %v4135 = vmul.f32 %v4127, %v4133
    %v4136 = vmul.f32 %v4128, %v4133
    %v4138 = vlaneseq
    %v4139 = vshrl.u32 %v4138, 7
    %v4140 = vsub.s32 0, %v4139
    %v4141 = vrot.slane %v4102, %v4140
    %v4143 = vadd.f32 %v4135, %v4141
    %v4144 = vadd.f32 %v4136, %v4141
    %s4145 = scalar_lea.vmem %s8, 256
    %v4146 = vld [vmem:[%s4145] sm:$0xff]
    %v4147 = vld [vmem:[%s4145 + $0x8] sm:$0xff]
    %v4148 = vld [vmem:[%s4145 + $0x10] sm:$0xff]
    %v4149 = vld [vmem:[%s4145 + $0x18] sm:$0xff]
    %v4150 = vld [vmem:[%s4145 + $0x20] sm:$0xff]
    %v4151 = vld [vmem:[%s4145 + $0x28] sm:$0xff]
    %v4152 = vld [vmem:[%s4145 + $0x30] sm:$0xff]
    %v4153 = vld [vmem:[%s4145 + $0x38] sm:$0xff]
    %v4154 = vld [vmem:[%s4145 + $0x40] sm:$0xff]
    %v4155 = vld [vmem:[%s4145 + $0x48] sm:$0xff]
    %v4156 = vld [vmem:[%s4145 + $0x50] sm:$0xff]
    %v4157 = vld [vmem:[%s4145 + $0x58] sm:$0xff]
    %v4158 = vld [vmem:[%s4145 + $0x60] sm:$0xff]
    %v4159 = vld [vmem:[%s4145 + $0x68] sm:$0xff]
    %v4160 = vld [vmem:[%s4145 + $0x70] sm:$0xff]
    %v4161 = vld [vmem:[%s4145 + $0x78] sm:$0xff]
    %s4162 = scalar_lea.vmem %s9, 4
    %v4163 = vld [vmem:[%s4162] sm:$0x3]
    %v4165 = vlaneseq
    %v4166 = vshrl.u32 %v4165, 7
    %v4167 = vsub.s32 0, %v4166
    %v4168 = vrot.slane %v4163, %v4167
    %v4169 = vlaneseq
    %v4170 = vshrl.u32 %v4169, 7
    %v4171 = vsub.s32 1, %v4170
    %v4172 = vrot.slane %v4163, %v4171
    %v4176 = vsel %vm462, %v4143, 0
    %v4179 = vsel %vm462, %v4144, 0
    %4181 = vmatprep.subr.mxu0 %v4147
    %4182 = vmatpush1.msra.mxu0 %v4146
    %4183 = vmatprep.subr.mxu0 %v4149
    %4184 = vmatpush1.msra.mxu0 %v4148
    %4185 = vmatprep.subr.mxu0 %v4151
    %4186 = vmatpush1.msra.mxu0 %v4150
    %4187 = vmatprep.subr.mxu0 %v4153
    %4188 = vmatpush1.msra.mxu0 %v4152
    %4189 = vmatprep.subr.mxu0 %v4155
    %4190 = vmatpush1.msra.mxu0 %v4154
    %4191 = vmatprep.subr.mxu0 %v4157
    %4192 = vmatpush1.msra.mxu0 %v4156
    %4193 = vmatprep.subr.mxu0 %v4159
    %4194 = vmatpush1.msra.mxu0 %v4158
    %4195 = vmatprep.subr.mxu0 %v4161
    %4196 = vmatpush1.msra.mxu0 %v4160
    %4197 = vmatprep.subr.mxu0 0.0
    %4198 = vmatpush1.msra.mxu0 0.0
    %4199 = vmatprep.subr.mxu0 0.0
    %4200 = vmatpush1.msra.mxu0 0.0
    %4201 = vmatprep.subr.mxu0 0.0
    %4202 = vmatpush1.msra.mxu0 0.0
    %4203 = vmatprep.subr.mxu0 0.0
    %4204 = vmatpush1.msra.mxu0 0.0
    %4205 = vmatprep.subr.mxu0 0.0
    %4206 = vmatpush1.msra.mxu0 0.0
    %4207 = vmatprep.subr.mxu0 0.0
    %4208 = vmatpush1.msra.mxu0 0.0
    %4209 = vmatprep.subr.mxu0 0.0
    %4210 = vmatpush1.msra.mxu0 0.0
    %4211 = vmatprep.subr.mxu0 0.0
    %4212 = vmatpush1.msra.mxu0 0.0
    %4213 = vmatprep.subr.mxu0 0.0
    %4214 = vmatpush1.msra.mxu0 0.0
    %4215 = vmatprep.subr.mxu0 0.0
    %4216 = vmatpush1.msra.mxu0 0.0
    %4217 = vmatprep.subr.mxu0 0.0
    %4218 = vmatpush1.msra.mxu0 0.0
    %4219 = vmatprep.subr.mxu0 0.0
    %4220 = vmatpush1.msra.mxu0 0.0
    %4221 = vmatprep.subr.mxu0 0.0
    %4222 = vmatpush1.msra.mxu0 0.0
    %4223 = vmatprep.subr.mxu0 0.0
    %4224 = vmatpush1.msra.mxu0 0.0
    %4225 = vmatprep.subr.mxu0 0.0
    %4226 = vmatpush1.msra.mxu0 0.0
    %4227 = vmatprep.subr.mxu0 0.0
    %4228 = vmatpush1.msra.mxu0 0.0
    %4229 = vmatprep.subr.mxu0 0.0
    %4230 = vmatpush1.msra.mxu0 0.0
    %4231 = vmatprep.subr.mxu0 0.0
    %4232 = vmatpush1.msra.mxu0 0.0
    %4233 = vmatprep.subr.mxu0 0.0
    %4234 = vmatpush1.msra.mxu0 0.0
    %4235 = vmatprep.subr.mxu0 0.0
    %4236 = vmatpush1.msra.mxu0 0.0
    %4237 = vmatprep.subr.mxu0 0.0
    %4238 = vmatpush1.msra.mxu0 0.0
    %4239 = vmatprep.subr.mxu0 0.0
    %4240 = vmatpush1.msra.mxu0 0.0
    %4241 = vmatprep.subr.mxu0 0.0
    %4242 = vmatpush1.msra.mxu0 0.0
    %4243 = vmatprep.subr.mxu0 0.0
    %4244 = vmatpush1.msra.mxu0 0.0
    %4245 = vmatprep.mubr.f32.mxu0 0.0
    %4246 = vmatmul.mubr.f32.gmra.mrb[0].mxu0 %v4176
    %v4247 = vpop.f32.mrb[0].mxu0
    %v4248 = vadd.f32 %v4168, %v4247
    %v4249 = vpop.f32.mrb[0].mxu0
    %v4250 = vadd.f32 %v4172, %v4249
    %4251 = vmatprep.mubr.f32.mxu0 0.0
    %4252 = vmatmul.mubr.f32.gmra.mrb[0].mxu0 %v4179
    %v4253 = vpop.f32.mrb[0].mxu0
    %v4254 = vadd.f32 %v4168, %v4253
    %v4255 = vpop.f32.mrb[0].mxu0
    %v4256 = vadd.f32 %v4172, %v4255
    %4257 = vdwg.mxu0
    %4259 = vrot.lane.b32.xlu0 %v4248, 64
    %v4260 = vpop.permute.xlu0 %4259
    %v4261 = vsel %vm256, %v4248, 0
    %v4263 = vsel %vm256, %v4260, 0
    %4265 = vmatprep.subr.mxu0 0.0
    %4266 = vmatpush1.xpose.msra.mxu0 %v4263
    %4267 = vmatprep.subr.mxu0 0.0
    %4268 = vmatpush1.xpose.msra.mxu0 0.0
    %4269 = vmatprep.subr.mxu0 0.0
    %4270 = vmatpush1.xpose.msra.mxu0 0.0
    %4271 = vmatprep.subr.mxu0 0.0
    %4272 = vmatpush1.xpose.msra.mxu0 0.0
    %4273 = vmatprep.subr.mxu0 0.0
    %4274 = vmatpush1.xpose.msra.mxu0 0.0
    %4275 = vmatprep.subr.mxu0 0.0
    %4276 = vmatpush1.xpose.msra.mxu0 0.0
    %4277 = vmatprep.subr.mxu0 0.0
    %4278 = vmatpush1.xpose.msra.mxu0 0.0
    %4279 = vmatprep.subr.mxu0 0.0
    %4280 = vmatpush1.xpose.msra.mxu0 0.0
    %4281 = vmatprep.subr.mxu0 0.0
    %4282 = vmatpush1.xpose.msra.mxu0 0.0
    %4283 = vmatprep.subr.mxu0 0.0
    %4284 = vmatpush1.xpose.msra.mxu0 0.0
    %4285 = vmatprep.subr.mxu0 0.0
    %4286 = vmatpush1.xpose.msra.mxu0 0.0
    %4287 = vmatprep.subr.mxu0 0.0
    %4288 = vmatpush1.xpose.msra.mxu0 0.0
    %4289 = vmatprep.subr.mxu0 0.0
    %4290 = vmatpush1.xpose.msra.mxu0 0.0
    %4291 = vmatprep.subr.mxu0 0.0
    %4292 = vmatpush1.xpose.msra.mxu0 0.0
    %4293 = vmatprep.subr.mxu0 0.0
    %4294 = vmatpush1.xpose.msra.mxu0 0.0
    %4295 = vmatprep.subr.mxu0 0.0
    %4296 = vmatpush1.xpose.msra.mxu0 0.0
    %4297 = vmatprep.subr.mxu0 0.0
    %4298 = vmatpush1.xpose.msra.mxu0 0.0
    %4299 = vmatprep.subr.mxu0 0.0
    %4300 = vmatpush1.xpose.msra.mxu0 0.0
    %4301 = vmatprep.subr.mxu0 0.0
    %4302 = vmatpush1.xpose.msra.mxu0 0.0
    %4303 = vmatprep.subr.mxu0 0.0
    %4304 = vmatpush1.xpose.msra.mxu0 0.0
    %4305 = vmatprep.subr.mxu0 0.0
    %4306 = vmatpush1.xpose.msra.mxu0 0.0
    %4307 = vmatprep.subr.mxu0 0.0
    %4308 = vmatpush1.xpose.msra.mxu0 0.0
    %4309 = vmatprep.subr.mxu0 0.0
    %4310 = vmatpush1.xpose.msra.mxu0 0.0
    %4311 = vmatprep.subr.mxu0 0.0
    %4312 = vmatpush1.xpose.msra.mxu0 0.0
    %4313 = vmatprep.subr.mxu0 0.0
    %4314 = vmatpush1.xpose.msra.mxu0 0.0
    %4315 = vmatprep.subr.mxu0 0.0
    %4316 = vmatpush1.xpose.msra.mxu0 0.0
    %4317 = vmatprep.subr.mxu0 0.0
    %4318 = vmatpush1.xpose.msra.mxu0 0.0
    %4319 = vmatprep.subr.mxu0 0.0
    %4320 = vmatpush1.xpose.msra.mxu0 0.0
    %4321 = vmatprep.subr.mxu0 0.0
    %4322 = vmatpush1.xpose.msra.mxu0 0.0
    %4323 = vmatprep.subr.mxu0 0.0
    %4324 = vmatpush1.xpose.msra.mxu0 0.0
    %4325 = vmatprep.subr.mxu0 0.0
    %4326 = vmatpush1.xpose.msra.mxu0 0.0
    %4327 = vmatprep.subr.mxu0 0.0
    %4328 = vmatpush1.xpose.msra.mxu0 0.0
    %4329 = vmatprep.mubr.f32.mxu0 0.0
    %4330 = vmatmul.mubr.f32.gmra.mrb[0].mxu0 %v4261
    %v4331 = vpop.f32.mrb[0].mxu0
    %v4332 = vadd.f32 0.0, %v4331
    %v4333 = vpop.f32.mrb[0].mxu0
    %4334 = vdwg.mxu0
    %4336 = vrot.lane.b32.xlu0 %v4254, 64
    %v4337 = vpop.permute.xlu0 %4336
    %v4338 = vsel %vm256, %v4254, 0
    %v4340 = vsel %vm256, %v4337, 0
    %4342 = vmatprep.subr.mxu0 0.0
    %4343 = vmatpush1.xpose.msra.mxu0 %v4340
    %4344 = vmatprep.subr.mxu0 0.0
    %4345 = vmatpush1.xpose.msra.mxu0 0.0
    %4346 = vmatprep.subr.mxu0 0.0
    %4347 = vmatpush1.xpose.msra.mxu0 0.0
    %4348 = vmatprep.subr.mxu0 0.0
    %4349 = vmatpush1.xpose.msra.mxu0 0.0
    %4350 = vmatprep.subr.mxu0 0.0
    %4351 = vmatpush1.xpose.msra.mxu0 0.0
    %4352 = vmatprep.subr.mxu0 0.0
    %4353 = vmatpush1.xpose.msra.mxu0 0.0
    %4354 = vmatprep.subr.mxu0 0.0
    %4355 = vmatpush1.xpose.msra.mxu0 0.0
    %4356 = vmatprep.subr.mxu0 0.0
    %4357 = vmatpush1.xpose.msra.mxu0 0.0
    %4358 = vmatprep.subr.mxu0 0.0
    %4359 = vmatpush1.xpose.msra.mxu0 0.0
    %4360 = vmatprep.subr.mxu0 0.0
    %4361 = vmatpush1.xpose.msra.mxu0 0.0
    %4362 = vmatprep.subr.mxu0 0.0
    %4363 = vmatpush1.xpose.msra.mxu0 0.0
    %4364 = vmatprep.subr.mxu0 0.0
    %4365 = vmatpush1.xpose.msra.mxu0 0.0
    %4366 = vmatprep.subr.mxu0 0.0
    %4367 = vmatpush1.xpose.msra.mxu0 0.0
    %4368 = vmatprep.subr.mxu0 0.0
    %4369 = vmatpush1.xpose.msra.mxu0 0.0
    %4370 = vmatprep.subr.mxu0 0.0
    %4371 = vmatpush1.xpose.msra.mxu0 0.0
    %4372 = vmatprep.subr.mxu0 0.0
    %4373 = vmatpush1.xpose.msra.mxu0 0.0
    %4374 = vmatprep.subr.mxu0 0.0
    %4375 = vmatpush1.xpose.msra.mxu0 0.0
    %4376 = vmatprep.subr.mxu0 0.0
    %4377 = vmatpush1.xpose.msra.mxu0 0.0
    %4378 = vmatprep.subr.mxu0 0.0
    %4379 = vmatpush1.xpose.msra.mxu0 0.0
    %4380 = vmatprep.subr.mxu0 0.0
    %4381 = vmatpush1.xpose.msra.mxu0 0.0
    %4382 = vmatprep.subr.mxu0 0.0
    %4383 = vmatpush1.xpose.msra.mxu0 0.0
    %4384 = vmatprep.subr.mxu0 0.0
    %4385 = vmatpush1.xpose.msra.mxu0 0.0
    %4386 = vmatprep.subr.mxu0 0.0
    %4387 = vmatpush1.xpose.msra.mxu0 0.0
    %4388 = vmatprep.subr.mxu0 0.0
    %4389 = vmatpush1.xpose.msra.mxu0 0.0
    %4390 = vmatprep.subr.mxu0 0.0
    %4391 = vmatpush1.xpose.msra.mxu0 0.0
    %4392 = vmatprep.subr.mxu0 0.0
    %4393 = vmatpush1.xpose.msra.mxu0 0.0
    %4394 = vmatprep.subr.mxu0 0.0
    %4395 = vmatpush1.xpose.msra.mxu0 0.0
    %4396 = vmatprep.subr.mxu0 0.0
    %4397 = vmatpush1.xpose.msra.mxu0 0.0
    %4398 = vmatprep.subr.mxu0 0.0
    %4399 = vmatpush1.xpose.msra.mxu0 0.0
    %4400 = vmatprep.subr.mxu0 0.0
    %4401 = vmatpush1.xpose.msra.mxu0 0.0
    %4402 = vmatprep.subr.mxu0 0.0
    %4403 = vmatpush1.xpose.msra.mxu0 0.0
    %4404 = vmatprep.subr.mxu0 0.0
    %4405 = vmatpush1.xpose.msra.mxu0 0.0
    %4406 = vmatprep.mubr.f32.mxu0 0.0
    %4407 = vmatmul.mubr.f32.gmra.mrb[0].mxu0 %v4338
    %v4408 = vpop.f32.mrb[0].mxu0
    %v4409 = vadd.f32 0.0, %v4408
    %v4410 = vpop.f32.mrb[0].mxu0
    %4411 = vdwg.mxu0
    %v4412 = vmul.f32 %v4332, 0.25
    %v4413 = vmul.f32 %v4409, 0.25
    %v4414 = vsel %vm702, %v4412, -inf
    %4415 = vmax.xlane.f32.xlu0 %v4414
    %v4416 = vpop.xlane.xlu0 %4415
    %v4417 = vsel %vm702, %v4413, -inf
    %4418 = vmax.xlane.f32.xlu0 %v4417
    %v4419 = vpop.xlane.xlu0 %4418
    %v4420 = vsub.f32 %v4412, %v4416
    %v4421 = vsub.f32 %v4413, %v4419
    %v4422 = vmul.f32 %v4420, 1.442695
    %v4423 = vpow.pop %v4422
    %v4424 = vmul.f32 %v4421, 1.442695
    %v4425 = vpow.pop %v4424
    %v4426 = vsel %vm702, %v4423, 0.0
    %4427 = vadd.xlane.f32.xlu0 %v4426
    %v4428 = vpop.xlane.xlu0 %4427
    %v4429 = vsel %vm702, %v4425, 0.0
    %4430 = vadd.xlane.f32.xlu0 %v4429
    %v4431 = vpop.xlane.xlu0 %4430
    %v4432 = vrcp.pop %v4428
    %v4433 = vmul.f32 %v4423, %v4432
    %v4434 = vrcp.pop %v4431
    %v4435 = vmul.f32 %v4425, %v4434
    %v4437 = vsel %vm702, %v4433, 0
    %4439 = vmatprep.subr.mxu0 0.0
    %4440 = vmatpush1.msra.mxu0 %v4250
    %4441 = vmatprep.subr.mxu0 0.0
    %4442 = vmatpush1.msra.mxu0 0.0
    %4443 = vmatprep.subr.mxu0 0.0
    %4444 = vmatpush1.msra.mxu0 0.0
    %4445 = vmatprep.subr.mxu0 0.0
    %4446 = vmatpush1.msra.mxu0 0.0
    %4447 = vmatprep.subr.mxu0 0.0
    %4448 = vmatpush1.msra.mxu0 0.0
    %4449 = vmatprep.subr.mxu0 0.0
    %4450 = vmatpush1.msra.mxu0 0.0
    %4451 = vmatprep.subr.mxu0 0.0
    %4452 = vmatpush1.msra.mxu0 0.0
    %4453 = vmatprep.subr.mxu0 0.0
    %4454 = vmatpush1.msra.mxu0 0.0
    %4455 = vmatprep.subr.mxu0 0.0
    %4456 = vmatpush1.msra.mxu0 0.0
    %4457 = vmatprep.subr.mxu0 0.0
    %4458 = vmatpush1.msra.mxu0 0.0
    %4459 = vmatprep.subr.mxu0 0.0
    %4460 = vmatpush1.msra.mxu0 0.0
    %4461 = vmatprep.subr.mxu0 0.0
    %4462 = vmatpush1.msra.mxu0 0.0
    %4463 = vmatprep.subr.mxu0 0.0
    %4464 = vmatpush1.msra.mxu0 0.0
    %4465 = vmatprep.subr.mxu0 0.0
    %4466 = vmatpush1.msra.mxu0 0.0
    %4467 = vmatprep.subr.mxu0 0.0
    %4468 = vmatpush1.msra.mxu0 0.0
    %4469 = vmatprep.subr.mxu0 0.0
    %4470 = vmatpush1.msra.mxu0 0.0
    %4471 = vmatprep.subr.mxu0 0.0
    %4472 = vmatpush1.msra.mxu0 0.0
    %4473 = vmatprep.subr.mxu0 0.0
    %4474 = vmatpush1.msra.mxu0 0.0
    %4475 = vmatprep.subr.mxu0 0.0
    %4476 = vmatpush1.msra.mxu0 0.0
    %4477 = vmatprep.subr.mxu0 0.0
    %4478 = vmatpush1.msra.mxu0 0.0
    %4479 = vmatprep.subr.mxu0 0.0
    %4480 = vmatpush1.msra.mxu0 0.0
    %4481 = vmatprep.subr.mxu0 0.0
    %4482 = vmatpush1.msra.mxu0 0.0
    %4483 = vmatprep.subr.mxu0 0.0
    %4484 = vmatpush1.msra.mxu0 0.0
    %4485 = vmatprep.subr.mxu0 0.0
    %4486 = vmatpush1.msra.mxu0 0.0
    %4487 = vmatprep.subr.mxu0 0.0
    %4488 = vmatpush1.msra.mxu0 0.0
    %4489 = vmatprep.subr.mxu0 0.0
    %4490 = vmatpush1.msra.mxu0 0.0
    %4491 = vmatprep.subr.mxu0 0.0
    %4492 = vmatpush1.msra.mxu0 0.0
    %4493 = vmatprep.subr.mxu0 0.0
    %4494 = vmatpush1.msra.mxu0 0.0
    %4495 = vmatprep.subr.mxu0 0.0
    %4496 = vmatpush1.msra.mxu0 0.0
    %4497 = vmatprep.subr.mxu0 0.0
    %4498 = vmatpush1.msra.mxu0 0.0
    %4499 = vmatprep.subr.mxu0 0.0
    %4500 = vmatpush1.msra.mxu0 0.0
    %4501 = vmatprep.subr.mxu0 0.0
    %4502 = vmatpush1.msra.mxu0 0.0
    %4503 = vmatprep.mubr.f32.mxu0 0.0
    %4504 = vmatmul.mubr.f32.gmra.mrb[0].mxu0 %v4437
    %v4505 = vpop.f32.mrb[0].mxu0
    %v4506 = vadd.f32 0.0, %v4505
    %v4507 = vpop.f32.mrb[0].mxu0
    %4508 = vdwg.mxu0
    %v4510 = vsel %vm702, %v4435, 0
    %4512 = vmatprep.subr.mxu0 0.0
    %4513 = vmatpush1.msra.mxu0 %v4256
    %4514 = vmatprep.subr.mxu0 0.0
    %4515 = vmatpush1.msra.mxu0 0.0
    %4516 = vmatprep.subr.mxu0 0.0
    %4517 = vmatpush1.msra.mxu0 0.0
    %4518 = vmatprep.subr.mxu0 0.0
    %4519 = vmatpush1.msra.mxu0 0.0
    %4520 = vmatprep.subr.mxu0 0.0
    %4521 = vmatpush1.msra.mxu0 0.0
    %4522 = vmatprep.subr.mxu0 0.0
    %4523 = vmatpush1.msra.mxu0 0.0
    %4524 = vmatprep.subr.mxu0 0.0
    %4525 = vmatpush1.msra.mxu0 0.0
    %4526 = vmatprep.subr.mxu0 0.0
    %4527 = vmatpush1.msra.mxu0 0.0
    %4528 = vmatprep.subr.mxu0 0.0
    %4529 = vmatpush1.msra.mxu0 0.0
    %4530 = vmatprep.subr.mxu0 0.0
    %4531 = vmatpush1.msra.mxu0 0.0
    %4532 = vmatprep.subr.mxu0 0.0
    %4533 = vmatpush1.msra.mxu0 0.0
    %4534 = vmatprep.subr.mxu0 0.0
    %4535 = vmatpush1.msra.mxu0 0.0
    %4536 = vmatprep.subr.mxu0 0.0
    %4537 = vmatpush1.msra.mxu0 0.0
    %4538 = vmatprep.subr.mxu0 0.0
    %4539 = vmatpush1.msra.mxu0 0.0
    %4540 = vmatprep.subr.mxu0 0.0
    %4541 = vmatpush1.msra.mxu0 0.0
    %4542 = vmatprep.subr.mxu0 0.0
    %4543 = vmatpush1.msra.mxu0 0.0
    %4544 = vmatprep.subr.mxu0 0.0
    %4545 = vmatpush1.msra.mxu0 0.0
    %4546 = vmatprep.subr.mxu0 0.0
    %4547 = vmatpush1.msra.mxu0 0.0
    %4548 = vmatprep.subr.mxu0 0.0
    %4549 = vmatpush1.msra.mxu0 0.0
    %4550 = vmatprep.subr.mxu0 0.0
    %4551 = vmatpush1.msra.mxu0 0.0
    %4552 = vmatprep.subr.mxu0 0.0
    %4553 = vmatpush1.msra.mxu0 0.0
    %4554 = vmatprep.subr.mxu0 0.0
    %4555 = vmatpush1.msra.mxu0 0.0
    %4556 = vmatprep.subr.mxu0 0.0
    %4557 = vmatpush1.msra.mxu0 0.0
    %4558 = vmatprep.subr.mxu0 0.0
    %4559 = vmatpush1.msra.mxu0 0.0
    %4560 = vmatprep.subr.mxu0 0.0
    %4561 = vmatpush1.msra.mxu0 0.0
    %4562 = vmatprep.subr.mxu0 0.0
    %4563 = vmatpush1.msra.mxu0 0.0
    %4564 = vmatprep.subr.mxu0 0.0
    %4565 = vmatpush1.msra.mxu0 0.0
    %4566 = vmatprep.subr.mxu0 0.0
    %4567 = vmatpush1.msra.mxu0 0.0
    %4568 = vmatprep.subr.mxu0 0.0
    %4569 = vmatpush1.msra.mxu0 0.0
    %4570 = vmatprep.subr.mxu0 0.0
    %4571 = vmatpush1.msra.mxu0 0.0
    %4572 = vmatprep.subr.mxu0 0.0
    %4573 = vmatpush1.msra.mxu0 0.0
    %4574 = vmatprep.subr.mxu0 0.0
    %4575 = vmatpush1.msra.mxu0 0.0
    %4576 = vmatprep.mubr.f32.mxu0 0.0
    %4577 = vmatmul.mubr.f32.gmra.mrb[0].mxu0 %v4510
    %v4578 = vpop.f32.mrb[0].mxu0
    %v4579 = vadd.f32 0.0, %v4578
    %v4580 = vpop.f32.mrb[0].mxu0
    %4581 = vdwg.mxu0
    %4582 = vrot.lane.b32.xlu0 %v4248, 112
    %v4583 = vpop.permute.xlu0 %4582
    %4584 = vrot.lane.b32.xlu0 %v4248, 48
    %v4585 = vpop.permute.xlu0 %4584
    %v4586 = vsel %vm256, %v4583, 0
    %v4588 = vsel %vm256, %v4585, 0
    %4590 = vmatprep.subr.mxu0 0.0
    %4591 = vmatpush1.xpose.msra.mxu0 %v4588
    %4592 = vmatprep.subr.mxu0 0.0
    %4593 = vmatpush1.xpose.msra.mxu0 0.0
    %4594 = vmatprep.subr.mxu0 0.0
    %4595 = vmatpush1.xpose.msra.mxu0 0.0
    %4596 = vmatprep.subr.mxu0 0.0
    %4597 = vmatpush1.xpose.msra.mxu0 0.0
    %4598 = vmatprep.subr.mxu0 0.0
    %4599 = vmatpush1.xpose.msra.mxu0 0.0
    %4600 = vmatprep.subr.mxu0 0.0
    %4601 = vmatpush1.xpose.msra.mxu0 0.0
    %4602 = vmatprep.subr.mxu0 0.0
    %4603 = vmatpush1.xpose.msra.mxu0 0.0
    %4604 = vmatprep.subr.mxu0 0.0
    %4605 = vmatpush1.xpose.msra.mxu0 0.0
    %4606 = vmatprep.subr.mxu0 0.0
    %4607 = vmatpush1.xpose.msra.mxu0 0.0
    %4608 = vmatprep.subr.mxu0 0.0
    %4609 = vmatpush1.xpose.msra.mxu0 0.0
    %4610 = vmatprep.subr.mxu0 0.0
    %4611 = vmatpush1.xpose.msra.mxu0 0.0
    %4612 = vmatprep.subr.mxu0 0.0
    %4613 = vmatpush1.xpose.msra.mxu0 0.0
    %4614 = vmatprep.subr.mxu0 0.0
    %4615 = vmatpush1.xpose.msra.mxu0 0.0
    %4616 = vmatprep.subr.mxu0 0.0
    %4617 = vmatpush1.xpose.msra.mxu0 0.0
    %4618 = vmatprep.subr.mxu0 0.0
    %4619 = vmatpush1.xpose.msra.mxu0 0.0
    %4620 = vmatprep.subr.mxu0 0.0
    %4621 = vmatpush1.xpose.msra.mxu0 0.0
    %4622 = vmatprep.subr.mxu0 0.0
    %4623 = vmatpush1.xpose.msra.mxu0 0.0
    %4624 = vmatprep.subr.mxu0 0.0
    %4625 = vmatpush1.xpose.msra.mxu0 0.0
    %4626 = vmatprep.subr.mxu0 0.0
    %4627 = vmatpush1.xpose.msra.mxu0 0.0
    %4628 = vmatprep.subr.mxu0 0.0
    %4629 = vmatpush1.xpose.msra.mxu0 0.0
    %4630 = vmatprep.subr.mxu0 0.0
    %4631 = vmatpush1.xpose.msra.mxu0 0.0
    %4632 = vmatprep.subr.mxu0 0.0
    %4633 = vmatpush1.xpose.msra.mxu0 0.0
    %4634 = vmatprep.subr.mxu0 0.0
    %4635 = vmatpush1.xpose.msra.mxu0 0.0
    %4636 = vmatprep.subr.mxu0 0.0
    %4637 = vmatpush1.xpose.msra.mxu0 0.0
    %4638 = vmatprep.subr.mxu0 0.0
    %4639 = vmatpush1.xpose.msra.mxu0 0.0
    %4640 = vmatprep.subr.mxu0 0.0
    %4641 = vmatpush1.xpose.msra.mxu0 0.0
    %4642 = vmatprep.subr.mxu0 0.0
    %4643 = vmatpush1.xpose.msra.mxu0 0.0
    %4644 = vmatprep.subr.mxu0 0.0
    %4645 = vmatpush1.xpose.msra.mxu0 0.0
    %4646 = vmatprep.subr.mxu0 0.0
    %4647 = vmatpush1.xpose.msra.mxu0 0.0
    %4648 = vmatprep.subr.mxu0 0.0
    %4649 = vmatpush1.xpose.msra.mxu0 0.0
    %4650 = vmatprep.subr.mxu0 0.0
    %4651 = vmatpush1.xpose.msra.mxu0 0.0
    %4652 = vmatprep.subr.mxu0 0.0
    %4653 = vmatpush1.xpose.msra.mxu0 0.0
    %4654 = vmatprep.mubr.f32.mxu0 0.0
    %4655 = vmatmul.mubr.f32.gmra.mrb[0].mxu0 %v4586
    %v4656 = vpop.f32.mrb[0].mxu0
    %v4657 = vadd.f32 0.0, %v4656
    %v4658 = vpop.f32.mrb[0].mxu0
    %4659 = vdwg.mxu0
    %4660 = vrot.lane.b32.xlu0 %v4254, 112
    %v4661 = vpop.permute.xlu0 %4660
    %4662 = vrot.lane.b32.xlu0 %v4254, 48
    %v4663 = vpop.permute.xlu0 %4662
    %v4664 = vsel %vm256, %v4661, 0
    %v4666 = vsel %vm256, %v4663, 0
    %4668 = vmatprep.subr.mxu0 0.0
    %4669 = vmatpush1.xpose.msra.mxu0 %v4666
    %4670 = vmatprep.subr.mxu0 0.0
    %4671 = vmatpush1.xpose.msra.mxu0 0.0
    %4672 = vmatprep.subr.mxu0 0.0
    %4673 = vmatpush1.xpose.msra.mxu0 0.0
    %4674 = vmatprep.subr.mxu0 0.0
    %4675 = vmatpush1.xpose.msra.mxu0 0.0
    %4676 = vmatprep.subr.mxu0 0.0
    %4677 = vmatpush1.xpose.msra.mxu0 0.0
    %4678 = vmatprep.subr.mxu0 0.0
    %4679 = vmatpush1.xpose.msra.mxu0 0.0
    %4680 = vmatprep.subr.mxu0 0.0
    %4681 = vmatpush1.xpose.msra.mxu0 0.0
    %4682 = vmatprep.subr.mxu0 0.0
    %4683 = vmatpush1.xpose.msra.mxu0 0.0
    %4684 = vmatprep.subr.mxu0 0.0
    %4685 = vmatpush1.xpose.msra.mxu0 0.0
    %4686 = vmatprep.subr.mxu0 0.0
    %4687 = vmatpush1.xpose.msra.mxu0 0.0
    %4688 = vmatprep.subr.mxu0 0.0
    %4689 = vmatpush1.xpose.msra.mxu0 0.0
    %4690 = vmatprep.subr.mxu0 0.0
    %4691 = vmatpush1.xpose.msra.mxu0 0.0
    %4692 = vmatprep.subr.mxu0 0.0
    %4693 = vmatpush1.xpose.msra.mxu0 0.0
    %4694 = vmatprep.subr.mxu0 0.0
    %4695 = vmatpush1.xpose.msra.mxu0 0.0
    %4696 = vmatprep.subr.mxu0 0.0
    %4697 = vmatpush1.xpose.msra.mxu0 0.0
    %4698 = vmatprep.subr.mxu0 0.0
    %4699 = vmatpush1.xpose.msra.mxu0 0.0
    %4700 = vmatprep.subr.mxu0 0.0
    %4701 = vmatpush1.xpose.msra.mxu0 0.0
    %4702 = vmatprep.subr.mxu0 0.0
    %4703 = vmatpush1.xpose.msra.mxu0 0.0
    %4704 = vmatprep.subr.mxu0 0.0
    %4705 = vmatpush1.xpose.msra.mxu0 0.0
    %4706 = vmatprep.subr.mxu0 0.0
    %4707 = vmatpush1.xpose.msra.mxu0 0.0
    %4708 = vmatprep.subr.mxu0 0.0
    %4709 = vmatpush1.xpose.msra.mxu0 0.0
    %4710 = vmatprep.subr.mxu0 0.0
    %4711 = vmatpush1.xpose.msra.mxu0 0.0
    %4712 = vmatprep.subr.mxu0 0.0
    %4713 = vmatpush1.xpose.msra.mxu0 0.0
    %4714 = vmatprep.subr.mxu0 0.0
    %4715 = vmatpush1.xpose.msra.mxu0 0.0
    %4716 = vmatprep.subr.mxu0 0.0
    %4717 = vmatpush1.xpose.msra.mxu0 0.0
    %4718 = vmatprep.subr.mxu0 0.0
    %4719 = vmatpush1.xpose.msra.mxu0 0.0
    %4720 = vmatprep.subr.mxu0 0.0
    %4721 = vmatpush1.xpose.msra.mxu0 0.0
    %4722 = vmatprep.subr.mxu0 0.0
    %4723 = vmatpush1.xpose.msra.mxu0 0.0
    %4724 = vmatprep.subr.mxu0 0.0
    %4725 = vmatpush1.xpose.msra.mxu0 0.0
    %4726 = vmatprep.subr.mxu0 0.0
    %4727 = vmatpush1.xpose.msra.mxu0 0.0
    %4728 = vmatprep.subr.mxu0 0.0
    %4729 = vmatpush1.xpose.msra.mxu0 0.0
    %4730 = vmatprep.subr.mxu0 0.0
    %4731 = vmatpush1.xpose.msra.mxu0 0.0
    %4732 = vmatprep.mubr.f32.mxu0 0.0
    %4733 = vmatmul.mubr.f32.gmra.mrb[0].mxu0 %v4664
    %v4734 = vpop.f32.mrb[0].mxu0
    %v4735 = vadd.f32 0.0, %v4734
    %v4736 = vpop.f32.mrb[0].mxu0
    %4737 = vdwg.mxu0
    %v4738 = vmul.f32 %v4657, 0.25
    %v4739 = vmul.f32 %v4735, 0.25
    %v4740 = vsel %vm702, %v4738, -inf
    %4741 = vmax.xlane.f32.xlu0 %v4740
    %v4742 = vpop.xlane.xlu0 %4741
    %v4743 = vsel %vm702, %v4739, -inf
    %4744 = vmax.xlane.f32.xlu0 %v4743
    %v4745 = vpop.xlane.xlu0 %4744
    %v4746 = vsub.f32 %v4738, %v4742
    %v4747 = vsub.f32 %v4739, %v4745
    %v4748 = vmul.f32 %v4746, 1.442695
    %v4749 = vpow.pop %v4748
    %v4750 = vmul.f32 %v4747, 1.442695
    %v4751 = vpow.pop %v4750
    %v4752 = vsel %vm702, %v4749, 0.0
    %4753 = vadd.xlane.f32.xlu0 %v4752
    %v4754 = vpop.xlane.xlu0 %4753
    %v4755 = vsel %vm702, %v4751, 0.0
    %4756 = vadd.xlane.f32.xlu0 %v4755
    %v4757 = vpop.xlane.xlu0 %4756
    %v4758 = vrcp.pop %v4754
    %v4759 = vmul.f32 %v4749, %v4758
    %v4760 = vrcp.pop %v4757
    %v4761 = vmul.f32 %v4751, %v4760
    %4763 = vrot.lane.b32.xlu0 %v4250, 112
    %v4764 = vpop.permute.xlu0 %4763
    %v4767 = vsel %vm702, %v4759, 0
    %4769 = vmatprep.subr.mxu0 0.0
    %4770 = vmatpush1.msra.mxu0 %v4764
    %4771 = vmatprep.subr.mxu0 0.0
    %4772 = vmatpush1.msra.mxu0 0.0
    %4773 = vmatprep.subr.mxu0 0.0
    %4774 = vmatpush1.msra.mxu0 0.0
    %4775 = vmatprep.subr.mxu0 0.0
    %4776 = vmatpush1.msra.mxu0 0.0
    %4777 = vmatprep.subr.mxu0 0.0
    %4778 = vmatpush1.msra.mxu0 0.0
    %4779 = vmatprep.subr.mxu0 0.0
    %4780 = vmatpush1.msra.mxu0 0.0
    %4781 = vmatprep.subr.mxu0 0.0
    %4782 = vmatpush1.msra.mxu0 0.0
    %4783 = vmatprep.subr.mxu0 0.0
    %4784 = vmatpush1.msra.mxu0 0.0
    %4785 = vmatprep.subr.mxu0 0.0
    %4786 = vmatpush1.msra.mxu0 0.0
    %4787 = vmatprep.subr.mxu0 0.0
    %4788 = vmatpush1.msra.mxu0 0.0
    %4789 = vmatprep.subr.mxu0 0.0
    %4790 = vmatpush1.msra.mxu0 0.0
    %4791 = vmatprep.subr.mxu0 0.0
    %4792 = vmatpush1.msra.mxu0 0.0
    %4793 = vmatprep.subr.mxu0 0.0
    %4794 = vmatpush1.msra.mxu0 0.0
    %4795 = vmatprep.subr.mxu0 0.0
    %4796 = vmatpush1.msra.mxu0 0.0
    %4797 = vmatprep.subr.mxu0 0.0
    %4798 = vmatpush1.msra.mxu0 0.0
    %4799 = vmatprep.subr.mxu0 0.0
    %4800 = vmatpush1.msra.mxu0 0.0
    %4801 = vmatprep.subr.mxu0 0.0
    %4802 = vmatpush1.msra.mxu0 0.0
    %4803 = vmatprep.subr.mxu0 0.0
    %4804 = vmatpush1.msra.mxu0 0.0
    %4805 = vmatprep.subr.mxu0 0.0
    %4806 = vmatpush1.msra.mxu0 0.0
    %4807 = vmatprep.subr.mxu0 0.0
    %4808 = vmatpush1.msra.mxu0 0.0
    %4809 = vmatprep.subr.mxu0 0.0
    %4810 = vmatpush1.msra.mxu0 0.0
    %4811 = vmatprep.subr.mxu0 0.0
    %4812 = vmatpush1.msra.mxu0 0.0
    %4813 = vmatprep.subr.mxu0 0.0
    %4814 = vmatpush1.msra.mxu0 0.0
    %4815 = vmatprep.subr.mxu0 0.0
    %4816 = vmatpush1.msra.mxu0 0.0
    %4817 = vmatprep.subr.mxu0 0.0
    %4818 = vmatpush1.msra.mxu0 0.0
    %4819 = vmatprep.subr.mxu0 0.0
    %4820 = vmatpush1.msra.mxu0 0.0
    %4821 = vmatprep.subr.mxu0 0.0
    %4822 = vmatpush1.msra.mxu0 0.0
    %4823 = vmatprep.subr.mxu0 0.0
    %4824 = vmatpush1.msra.mxu0 0.0
    %4825 = vmatprep.subr.mxu0 0.0
    %4826 = vmatpush1.msra.mxu0 0.0
    %4827 = vmatprep.subr.mxu0 0.0
    %4828 = vmatpush1.msra.mxu0 0.0
    %4829 = vmatprep.subr.mxu0 0.0
    %4830 = vmatpush1.msra.mxu0 0.0
    %4831 = vmatprep.subr.mxu0 0.0
    %4832 = vmatpush1.msra.mxu0 0.0
    %4833 = vmatprep.mubr.f32.mxu0 0.0
    %4834 = vmatmul.mubr.f32.gmra.mrb[0].mxu0 %v4767
    %v4835 = vpop.f32.mrb[0].mxu0
    %v4836 = vadd.f32 0.0, %v4835
    %v4837 = vpop.f32.mrb[0].mxu0
    %4838 = vdwg.mxu0
    %4840 = vrot.lane.b32.xlu0 %v4256, 112
    %v4841 = vpop.permute.xlu0 %4840
    %v4844 = vsel %vm702, %v4761, 0
    %4846 = vmatprep.subr.mxu0 0.0
    %4847 = vmatpush1.msra.mxu0 %v4841
    %4848 = vmatprep.subr.mxu0 0.0
    %4849 = vmatpush1.msra.mxu0 0.0
    %4850 = vmatprep.subr.mxu0 0.0
    %4851 = vmatpush1.msra.mxu0 0.0
    %4852 = vmatprep.subr.mxu0 0.0
    %4853 = vmatpush1.msra.mxu0 0.0
    %4854 = vmatprep.subr.mxu0 0.0
    %4855 = vmatpush1.msra.mxu0 0.0
    %4856 = vmatprep.subr.mxu0 0.0
    %4857 = vmatpush1.msra.mxu0 0.0
    %4858 = vmatprep.subr.mxu0 0.0
    %4859 = vmatpush1.msra.mxu0 0.0
    %4860 = vmatprep.subr.mxu0 0.0
    %4861 = vmatpush1.msra.mxu0 0.0
    %4862 = vmatprep.subr.mxu0 0.0
    %4863 = vmatpush1.msra.mxu0 0.0
    %4864 = vmatprep.subr.mxu0 0.0
    %4865 = vmatpush1.msra.mxu0 0.0
    %4866 = vmatprep.subr.mxu0 0.0
    %4867 = vmatpush1.msra.mxu0 0.0
    %4868 = vmatprep.subr.mxu0 0.0
    %4869 = vmatpush1.msra.mxu0 0.0
    %4870 = vmatprep.subr.mxu0 0.0
    %4871 = vmatpush1.msra.mxu0 0.0
    %4872 = vmatprep.subr.mxu0 0.0
    %4873 = vmatpush1.msra.mxu0 0.0
    %4874 = vmatprep.subr.mxu0 0.0
    %4875 = vmatpush1.msra.mxu0 0.0
    %4876 = vmatprep.subr.mxu0 0.0
    %4877 = vmatpush1.msra.mxu0 0.0
    %4878 = vmatprep.subr.mxu0 0.0
    %4879 = vmatpush1.msra.mxu0 0.0
    %4880 = vmatprep.subr.mxu0 0.0
    %4881 = vmatpush1.msra.mxu0 0.0
    %4882 = vmatprep.subr.mxu0 0.0
    %4883 = vmatpush1.msra.mxu0 0.0
    %4884 = vmatprep.subr.mxu0 0.0
    %4885 = vmatpush1.msra.mxu0 0.0
    %4886 = vmatprep.subr.mxu0 0.0
    %4887 = vmatpush1.msra.mxu0 0.0
    %4888 = vmatprep.subr.mxu0 0.0
    %4889 = vmatpush1.msra.mxu0 0.0
    %4890 = vmatprep.subr.mxu0 0.0
    %4891 = vmatpush1.msra.mxu0 0.0
    %4892 = vmatprep.subr.mxu0 0.0
    %4893 = vmatpush1.msra.mxu0 0.0
    %4894 = vmatprep.subr.mxu0 0.0
    %4895 = vmatpush1.msra.mxu0 0.0
    %4896 = vmatprep.subr.mxu0 0.0
    %4897 = vmatpush1.msra.mxu0 0.0
    %4898 = vmatprep.subr.mxu0 0.0
    %4899 = vmatpush1.msra.mxu0 0.0
    %4900 = vmatprep.subr.mxu0 0.0
    %4901 = vmatpush1.msra.mxu0 0.0
    %4902 = vmatprep.subr.mxu0 0.0
    %4903 = vmatpush1.msra.mxu0 0.0
    %4904 = vmatprep.subr.mxu0 0.0
    %4905 = vmatpush1.msra.mxu0 0.0
    %4906 = vmatprep.subr.mxu0 0.0
    %4907 = vmatpush1.msra.mxu0 0.0
    %4908 = vmatprep.subr.mxu0 0.0
    %4909 = vmatpush1.msra.mxu0 0.0
    %4910 = vmatprep.mubr.f32.mxu0 0.0
    %4911 = vmatmul.mubr.f32.gmra.mrb[0].mxu0 %v4844
    %v4912 = vpop.f32.mrb[0].mxu0
    %v4913 = vadd.f32 0.0, %v4912
    %v4914 = vpop.f32.mrb[0].mxu0
    %4915 = vdwg.mxu0
    %4916 = vrot.lane.b32.xlu0 %v4248, 96
    %v4917 = vpop.permute.xlu0 %4916
    %4918 = vrot.lane.b32.xlu0 %v4248, 32
    %v4919 = vpop.permute.xlu0 %4918
    %v4920 = vsel %vm256, %v4917, 0
    %v4922 = vsel %vm256, %v4919, 0
    %4924 = vmatprep.subr.mxu0 0.0
    %4925 = vmatpush1.xpose.msra.mxu0 %v4922
    %4926 = vmatprep.subr.mxu0 0.0
    %4927 = vmatpush1.xpose.msra.mxu0 0.0
    %4928 = vmatprep.subr.mxu0 0.0
    %4929 = vmatpush1.xpose.msra.mxu0 0.0
    %4930 = vmatprep.subr.mxu0 0.0
    %4931 = vmatpush1.xpose.msra.mxu0 0.0
    %4932 = vmatprep.subr.mxu0 0.0
    %4933 = vmatpush1.xpose.msra.mxu0 0.0
    %4934 = vmatprep.subr.mxu0 0.0
    %4935 = vmatpush1.xpose.msra.mxu0 0.0
    %4936 = vmatprep.subr.mxu0 0.0
    %4937 = vmatpush1.xpose.msra.mxu0 0.0
    %4938 = vmatprep.subr.mxu0 0.0
    %4939 = vmatpush1.xpose.msra.mxu0 0.0
    %4940 = vmatprep.subr.mxu0 0.0
    %4941 = vmatpush1.xpose.msra.mxu0 0.0
    %4942 = vmatprep.subr.mxu0 0.0
    %4943 = vmatpush1.xpose.msra.mxu0 0.0
    %4944 = vmatprep.subr.mxu0 0.0
    %4945 = vmatpush1.xpose.msra.mxu0 0.0
    %4946 = vmatprep.subr.mxu0 0.0
    %4947 = vmatpush1.xpose.msra.mxu0 0.0
    %4948 = vmatprep.subr.mxu0 0.0
    %4949 = vmatpush1.xpose.msra.mxu0 0.0
    %4950 = vmatprep.subr.mxu0 0.0
    %4951 = vmatpush1.xpose.msra.mxu0 0.0
    %4952 = vmatprep.subr.mxu0 0.0
    %4953 = vmatpush1.xpose.msra.mxu0 0.0
    %4954 = vmatprep.subr.mxu0 0.0
    %4955 = vmatpush1.xpose.msra.mxu0 0.0
    %4956 = vmatprep.subr.mxu0 0.0
    %4957 = vmatpush1.xpose.msra.mxu0 0.0
    %4958 = vmatprep.subr.mxu0 0.0
    %4959 = vmatpush1.xpose.msra.mxu0 0.0
    %4960 = vmatprep.subr.mxu0 0.0
    %4961 = vmatpush1.xpose.msra.mxu0 0.0
    %4962 = vmatprep.subr.mxu0 0.0
    %4963 = vmatpush1.xpose.msra.mxu0 0.0
    %4964 = vmatprep.subr.mxu0 0.0
    %4965 = vmatpush1.xpose.msra.mxu0 0.0
    %4966 = vmatprep.subr.mxu0 0.0
    %4967 = vmatpush1.xpose.msra.mxu0 0.0
    %4968 = vmatprep.subr.mxu0 0.0
    %4969 = vmatpush1.xpose.msra.mxu0 0.0
    %4970 = vmatprep.subr.mxu0 0.0
    %4971 = vmatpush1.xpose.msra.mxu0 0.0
    %4972 = vmatprep.subr.mxu0 0.0
    %4973 = vmatpush1.xpose.msra.mxu0 0.0
    %4974 = vmatprep.subr.mxu0 0.0
    %4975 = vmatpush1.xpose.msra.mxu0 0.0
    %4976 = vmatprep.subr.mxu0 0.0
    %4977 = vmatpush1.xpose.msra.mxu0 0.0
    %4978 = vmatprep.subr.mxu0 0.0
    %4979 = vmatpush1.xpose.msra.mxu0 0.0
    %4980 = vmatprep.subr.mxu0 0.0
    %4981 = vmatpush1.xpose.msra.mxu0 0.0
    %4982 = vmatprep.subr.mxu0 0.0
    %4983 = vmatpush1.xpose.msra.mxu0 0.0
    %4984 = vmatprep.subr.mxu0 0.0
    %4985 = vmatpush1.xpose.msra.mxu0 0.0
    %4986 = vmatprep.subr.mxu0 0.0
    %4987 = vmatpush1.xpose.msra.mxu0 0.0
    %4988 = vmatprep.mubr.f32.mxu0 0.0
    %4989 = vmatmul.mubr.f32.gmra.mrb[0].mxu0 %v4920
    %v4990 = vpop.f32.mrb[0].mxu0
    %v4991 = vadd.f32 0.0, %v4990
    %v4992 = vpop.f32.mrb[0].mxu0
    %4993 = vdwg.mxu0
    %4994 = vrot.lane.b32.xlu0 %v4254, 96
    %v4995 = vpop.permute.xlu0 %4994
    %4996 = vrot.lane.b32.xlu0 %v4254, 32
    %v4997 = vpop.permute.xlu0 %4996
    %v4998 = vsel %vm256, %v4995, 0
    %v5000 = vsel %vm256, %v4997, 0
    %5002 = vmatprep.subr.mxu0 0.0
    %5003 = vmatpush1.xpose.msra.mxu0 %v5000
    %5004 = vmatprep.subr.mxu0 0.0
    %5005 = vmatpush1.xpose.msra.mxu0 0.0
    %5006 = vmatprep.subr.mxu0 0.0
    %5007 = vmatpush1.xpose.msra.mxu0 0.0
    %5008 = vmatprep.subr.mxu0 0.0
    %5009 = vmatpush1.xpose.msra.mxu0 0.0
    %5010 = vmatprep.subr.mxu0 0.0
    %5011 = vmatpush1.xpose.msra.mxu0 0.0
    %5012 = vmatprep.subr.mxu0 0.0
    %5013 = vmatpush1.xpose.msra.mxu0 0.0
    %5014 = vmatprep.subr.mxu0 0.0
    %5015 = vmatpush1.xpose.msra.mxu0 0.0
    %5016 = vmatprep.subr.mxu0 0.0
    %5017 = vmatpush1.xpose.msra.mxu0 0.0
    %5018 = vmatprep.subr.mxu0 0.0
    %5019 = vmatpush1.xpose.msra.mxu0 0.0
    %5020 = vmatprep.subr.mxu0 0.0
    %5021 = vmatpush1.xpose.msra.mxu0 0.0
    %5022 = vmatprep.subr.mxu0 0.0
    %5023 = vmatpush1.xpose.msra.mxu0 0.0
    %5024 = vmatprep.subr.mxu0 0.0
    %5025 = vmatpush1.xpose.msra.mxu0 0.0
    %5026 = vmatprep.subr.mxu0 0.0
    %5027 = vmatpush1.xpose.msra.mxu0 0.0
    %5028 = vmatprep.subr.mxu0 0.0
    %5029 = vmatpush1.xpose.msra.mxu0 0.0
    %5030 = vmatprep.subr.mxu0 0.0
    %5031 = vmatpush1.xpose.msra.mxu0 0.0
    %5032 = vmatprep.subr.mxu0 0.0
    %5033 = vmatpush1.xpose.msra.mxu0 0.0
    %5034 = vmatprep.subr.mxu0 0.0
    %5035 = vmatpush1.xpose.msra.mxu0 0.0
    %5036 = vmatprep.subr.mxu0 0.0
    %5037 = vmatpush1.xpose.msra.mxu0 0.0
    %5038 = vmatprep.subr.mxu0 0.0
    %5039 = vmatpush1.xpose.msra.mxu0 0.0
    %5040 = vmatprep.subr.mxu0 0.0
    %5041 = vmatpush1.xpose.msra.mxu0 0.0
    %5042 = vmatprep.subr.mxu0 0.0
    %5043 = vmatpush1.xpose.msra.mxu0 0.0
    %5044 = vmatprep.subr.mxu0 0.0
    %5045 = vmatpush1.xpose.msra.mxu0 0.0
    %5046 = vmatprep.subr.mxu0 0.0
    %5047 = vmatpush1.xpose.msra.mxu0 0.0
    %5048 = vmatprep.subr.mxu0 0.0
    %5049 = vmatpush1.xpose.msra.mxu0 0.0
    %5050 = vmatprep.subr.mxu0 0.0
    %5051 = vmatpush1.xpose.msra.mxu0 0.0
    %5052 = vmatprep.subr.mxu0 0.0
    %5053 = vmatpush1.xpose.msra.mxu0 0.0
    %5054 = vmatprep.subr.mxu0 0.0
    %5055 = vmatpush1.xpose.msra.mxu0 0.0
    %5056 = vmatprep.subr.mxu0 0.0
    %5057 = vmatpush1.xpose.msra.mxu0 0.0
    %5058 = vmatprep.subr.mxu0 0.0
    %5059 = vmatpush1.xpose.msra.mxu0 0.0
    %5060 = vmatprep.subr.mxu0 0.0
    %5061 = vmatpush1.xpose.msra.mxu0 0.0
    %5062 = vmatprep.subr.mxu0 0.0
    %5063 = vmatpush1.xpose.msra.mxu0 0.0
    %5064 = vmatprep.subr.mxu0 0.0
    %5065 = vmatpush1.xpose.msra.mxu0 0.0
    %5066 = vmatprep.mubr.f32.mxu0 0.0
    %5067 = vmatmul.mubr.f32.gmra.mrb[0].mxu0 %v4998
    %v5068 = vpop.f32.mrb[0].mxu0
    %v5069 = vadd.f32 0.0, %v5068
    %v5070 = vpop.f32.mrb[0].mxu0
    %5071 = vdwg.mxu0
    %v5072 = vmul.f32 %v4991, 0.25
    %v5073 = vmul.f32 %v5069, 0.25
    %v5074 = vsel %vm702, %v5072, -inf
    %5075 = vmax.xlane.f32.xlu0 %v5074
    %v5076 = vpop.xlane.xlu0 %5075
    %v5077 = vsel %vm702, %v5073, -inf
    %5078 = vmax.xlane.f32.xlu0 %v5077
    %v5079 = vpop.xlane.xlu0 %5078
    %v5080 = vsub.f32 %v5072, %v5076
    %v5081 = vsub.f32 %v5073, %v5079
    %v5082 = vmul.f32 %v5080, 1.442695
    %v5083 = vpow.pop %v5082
    %v5084 = vmul.f32 %v5081, 1.442695
    %v5085 = vpow.pop %v5084
    %v5086 = vsel %vm702, %v5083, 0.0
    %5087 = vadd.xlane.f32.xlu0 %v5086
    %v5088 = vpop.xlane.xlu0 %5087
    %v5089 = vsel %vm702, %v5085, 0.0
    %5090 = vadd.xlane.f32.xlu0 %v5089
    %v5091 = vpop.xlane.xlu0 %5090
    %v5092 = vrcp.pop %v5088
    %v5093 = vmul.f32 %v5083, %v5092
    %v5094 = vrcp.pop %v5091
    %v5095 = vmul.f32 %v5085, %v5094
    %5096 = vrot.lane.b32.xlu0 %v4250, 96
    %v5097 = vpop.permute.xlu0 %5096
    %v5100 = vsel %vm702, %v5093, 0
    %5102 = vmatprep.subr.mxu0 0.0
    %5103 = vmatpush1.msra.mxu0 %v5097
    %5104 = vmatprep.subr.mxu0 0.0
    %5105 = vmatpush1.msra.mxu0 0.0
    %5106 = vmatprep.subr.mxu0 0.0
    %5107 = vmatpush1.msra.mxu0 0.0
    %5108 = vmatprep.subr.mxu0 0.0
    %5109 = vmatpush1.msra.mxu0 0.0
    %5110 = vmatprep.subr.mxu0 0.0
    %5111 = vmatpush1.msra.mxu0 0.0
    %5112 = vmatprep.subr.mxu0 0.0
    %5113 = vmatpush1.msra.mxu0 0.0
    %5114 = vmatprep.subr.mxu0 0.0
    %5115 = vmatpush1.msra.mxu0 0.0
    %5116 = vmatprep.subr.mxu0 0.0
    %5117 = vmatpush1.msra.mxu0 0.0
    %5118 = vmatprep.subr.mxu0 0.0
    %5119 = vmatpush1.msra.mxu0 0.0
    %5120 = vmatprep.subr.mxu0 0.0
    %5121 = vmatpush1.msra.mxu0 0.0
    %5122 = vmatprep.subr.mxu0 0.0
    %5123 = vmatpush1.msra.mxu0 0.0
    %5124 = vmatprep.subr.mxu0 0.0
    %5125 = vmatpush1.msra.mxu0 0.0
    %5126 = vmatprep.subr.mxu0 0.0
    %5127 = vmatpush1.msra.mxu0 0.0
    %5128 = vmatprep.subr.mxu0 0.0
    %5129 = vmatpush1.msra.mxu0 0.0
    %5130 = vmatprep.subr.mxu0 0.0
    %5131 = vmatpush1.msra.mxu0 0.0
    %5132 = vmatprep.subr.mxu0 0.0
    %5133 = vmatpush1.msra.mxu0 0.0
    %5134 = vmatprep.subr.mxu0 0.0
    %5135 = vmatpush1.msra.mxu0 0.0
    %5136 = vmatprep.subr.mxu0 0.0
    %5137 = vmatpush1.msra.mxu0 0.0
    %5138 = vmatprep.subr.mxu0 0.0
    %5139 = vmatpush1.msra.mxu0 0.0
    %5140 = vmatprep.subr.mxu0 0.0
    %5141 = vmatpush1.msra.mxu0 0.0
    %5142 = vmatprep.subr.mxu0 0.0
    %5143 = vmatpush1.msra.mxu0 0.0
    %5144 = vmatprep.subr.mxu0 0.0
    %5145 = vmatpush1.msra.mxu0 0.0
    %5146 = vmatprep.subr.mxu0 0.0
    %5147 = vmatpush1.msra.mxu0 0.0
    %5148 = vmatprep.subr.mxu0 0.0
    %5149 = vmatpush1.msra.mxu0 0.0
    %5150 = vmatprep.subr.mxu0 0.0
    %5151 = vmatpush1.msra.mxu0 0.0
    %5152 = vmatprep.subr.mxu0 0.0
    %5153 = vmatpush1.msra.mxu0 0.0
    %5154 = vmatprep.subr.mxu0 0.0
    %5155 = vmatpush1.msra.mxu0 0.0
    %5156 = vmatprep.subr.mxu0 0.0
    %5157 = vmatpush1.msra.mxu0 0.0
    %5158 = vmatprep.subr.mxu0 0.0
    %5159 = vmatpush1.msra.mxu0 0.0
    %5160 = vmatprep.subr.mxu0 0.0
    %5161 = vmatpush1.msra.mxu0 0.0
    %5162 = vmatprep.subr.mxu0 0.0
    %5163 = vmatpush1.msra.mxu0 0.0
    %5164 = vmatprep.subr.mxu0 0.0
    %5165 = vmatpush1.msra.mxu0 0.0
    %5166 = vmatprep.mubr.f32.mxu0 0.0
    %5167 = vmatmul.mubr.f32.gmra.mrb[0].mxu0 %v5100
    %v5168 = vpop.f32.mrb[0].mxu0
    %v5169 = vadd.f32 0.0, %v5168
    %v5170 = vpop.f32.mrb[0].mxu0
    %5171 = vdwg.mxu0
    %5172 = vrot.lane.b32.xlu0 %v4256, 96
    %v5173 = vpop.permute.xlu0 %5172
    %v5176 = vsel %vm702, %v5095, 0
    %5178 = vmatprep.subr.mxu0 0.0
    %5179 = vmatpush1.msra.mxu0 %v5173
    %5180 = vmatprep.subr.mxu0 0.0
    %5181 = vmatpush1.msra.mxu0 0.0
    %5182 = vmatprep.subr.mxu0 0.0
    %5183 = vmatpush1.msra.mxu0 0.0
    %5184 = vmatprep.subr.mxu0 0.0
    %5185 = vmatpush1.msra.mxu0 0.0
    %5186 = vmatprep.subr.mxu0 0.0
    %5187 = vmatpush1.msra.mxu0 0.0
    %5188 = vmatprep.subr.mxu0 0.0
    %5189 = vmatpush1.msra.mxu0 0.0
    %5190 = vmatprep.subr.mxu0 0.0
    %5191 = vmatpush1.msra.mxu0 0.0
    %5192 = vmatprep.subr.mxu0 0.0
    %5193 = vmatpush1.msra.mxu0 0.0
    %5194 = vmatprep.subr.mxu0 0.0
    %5195 = vmatpush1.msra.mxu0 0.0
    %5196 = vmatprep.subr.mxu0 0.0
    %5197 = vmatpush1.msra.mxu0 0.0
    %5198 = vmatprep.subr.mxu0 0.0
    %5199 = vmatpush1.msra.mxu0 0.0
    %5200 = vmatprep.subr.mxu0 0.0
    %5201 = vmatpush1.msra.mxu0 0.0
    %5202 = vmatprep.subr.mxu0 0.0
    %5203 = vmatpush1.msra.mxu0 0.0
    %5204 = vmatprep.subr.mxu0 0.0
    %5205 = vmatpush1.msra.mxu0 0.0
    %5206 = vmatprep.subr.mxu0 0.0
    %5207 = vmatpush1.msra.mxu0 0.0
    %5208 = vmatprep.subr.mxu0 0.0
    %5209 = vmatpush1.msra.mxu0 0.0
    %5210 = vmatprep.subr.mxu0 0.0
    %5211 = vmatpush1.msra.mxu0 0.0
    %5212 = vmatprep.subr.mxu0 0.0
    %5213 = vmatpush1.msra.mxu0 0.0
    %5214 = vmatprep.subr.mxu0 0.0
    %5215 = vmatpush1.msra.mxu0 0.0
    %5216 = vmatprep.subr.mxu0 0.0
    %5217 = vmatpush1.msra.mxu0 0.0
    %5218 = vmatprep.subr.mxu0 0.0
    %5219 = vmatpush1.msra.mxu0 0.0
    %5220 = vmatprep.subr.mxu0 0.0
    %5221 = vmatpush1.msra.mxu0 0.0
    %5222 = vmatprep.subr.mxu0 0.0
    %5223 = vmatpush1.msra.mxu0 0.0
    %5224 = vmatprep.subr.mxu0 0.0
    %5225 = vmatpush1.msra.mxu0 0.0
    %5226 = vmatprep.subr.mxu0 0.0
    %5227 = vmatpush1.msra.mxu0 0.0
    %5228 = vmatprep.subr.mxu0 0.0
    %5229 = vmatpush1.msra.mxu0 0.0
    %5230 = vmatprep.subr.mxu0 0.0
    %5231 = vmatpush1.msra.mxu0 0.0
    %5232 = vmatprep.subr.mxu0 0.0
    %5233 = vmatpush1.msra.mxu0 0.0
    %5234 = vmatprep.subr.mxu0 0.0
    %5235 = vmatpush1.msra.mxu0 0.0
    %5236 = vmatprep.subr.mxu0 0.0
    %5237 = vmatpush1.msra.mxu0 0.0
    %5238 = vmatprep.subr.mxu0 0.0
    %5239 = vmatpush1.msra.mxu0 0.0
    %5240 = vmatprep.subr.mxu0 0.0
    %5241 = vmatpush1.msra.mxu0 0.0
    %5242 = vmatprep.mubr.f32.mxu0 0.0
    %5243 = vmatmul.mubr.f32.gmra.mrb[0].mxu0 %v5176
    %v5244 = vpop.f32.mrb[0].mxu0
    %v5245 = vadd.f32 0.0, %v5244
    %v5246 = vpop.f32.mrb[0].mxu0
    %5247 = vdwg.mxu0
    %5248 = vrot.lane.b32.xlu0 %v4248, 80
    %v5249 = vpop.permute.xlu0 %5248
    %5250 = vrot.lane.b32.xlu0 %v4248, 16
    %v5251 = vpop.permute.xlu0 %5250
    %v5252 = vsel %vm256, %v5249, 0
    %v5254 = vsel %vm256, %v5251, 0
    %5256 = vmatprep.subr.mxu0 0.0
    %5257 = vmatpush1.xpose.msra.mxu0 %v5254
    %5258 = vmatprep.subr.mxu0 0.0
    %5259 = vmatpush1.xpose.msra.mxu0 0.0
    %5260 = vmatprep.subr.mxu0 0.0
    %5261 = vmatpush1.xpose.msra.mxu0 0.0
    %5262 = vmatprep.subr.mxu0 0.0
    %5263 = vmatpush1.xpose.msra.mxu0 0.0
    %5264 = vmatprep.subr.mxu0 0.0
    %5265 = vmatpush1.xpose.msra.mxu0 0.0
    %5266 = vmatprep.subr.mxu0 0.0
    %5267 = vmatpush1.xpose.msra.mxu0 0.0
    %5268 = vmatprep.subr.mxu0 0.0
    %5269 = vmatpush1.xpose.msra.mxu0 0.0
    %5270 = vmatprep.subr.mxu0 0.0
    %5271 = vmatpush1.xpose.msra.mxu0 0.0
    %5272 = vmatprep.subr.mxu0 0.0
    %5273 = vmatpush1.xpose.msra.mxu0 0.0
    %5274 = vmatprep.subr.mxu0 0.0
    %5275 = vmatpush1.xpose.msra.mxu0 0.0
    %5276 = vmatprep.subr.mxu0 0.0
    %5277 = vmatpush1.xpose.msra.mxu0 0.0
    %5278 = vmatprep.subr.mxu0 0.0
    %5279 = vmatpush1.xpose.msra.mxu0 0.0
    %5280 = vmatprep.subr.mxu0 0.0
    %5281 = vmatpush1.xpose.msra.mxu0 0.0
    %5282 = vmatprep.subr.mxu0 0.0
    %5283 = vmatpush1.xpose.msra.mxu0 0.0
    %5284 = vmatprep.subr.mxu0 0.0
    %5285 = vmatpush1.xpose.msra.mxu0 0.0
    %5286 = vmatprep.subr.mxu0 0.0
    %5287 = vmatpush1.xpose.msra.mxu0 0.0
    %5288 = vmatprep.subr.mxu0 0.0
    %5289 = vmatpush1.xpose.msra.mxu0 0.0
    %5290 = vmatprep.subr.mxu0 0.0
    %5291 = vmatpush1.xpose.msra.mxu0 0.0
    %5292 = vmatprep.subr.mxu0 0.0
    %5293 = vmatpush1.xpose.msra.mxu0 0.0
    %5294 = vmatprep.subr.mxu0 0.0
    %5295 = vmatpush1.xpose.msra.mxu0 0.0
    %5296 = vmatprep.subr.mxu0 0.0
    %5297 = vmatpush1.xpose.msra.mxu0 0.0
    %5298 = vmatprep.subr.mxu0 0.0
    %5299 = vmatpush1.xpose.msra.mxu0 0.0
    %5300 = vmatprep.subr.mxu0 0.0
    %5301 = vmatpush1.xpose.msra.mxu0 0.0
    %5302 = vmatprep.subr.mxu0 0.0
    %5303 = vmatpush1.xpose.msra.mxu0 0.0
    %5304 = vmatprep.subr.mxu0 0.0
    %5305 = vmatpush1.xpose.msra.mxu0 0.0
    %5306 = vmatprep.subr.mxu0 0.0
    %5307 = vmatpush1.xpose.msra.mxu0 0.0
    %5308 = vmatprep.subr.mxu0 0.0
    %5309 = vmatpush1.xpose.msra.mxu0 0.0
    %5310 = vmatprep.subr.mxu0 0.0
    %5311 = vmatpush1.xpose.msra.mxu0 0.0
    %5312 = vmatprep.subr.mxu0 0.0
    %5313 = vmatpush1.xpose.msra.mxu0 0.0
    %5314 = vmatprep.subr.mxu0 0.0
    %5315 = vmatpush1.xpose.msra.mxu0 0.0
    %5316 = vmatprep.subr.mxu0 0.0
    %5317 = vmatpush1.xpose.msra.mxu0 0.0
    %5318 = vmatprep.subr.mxu0 0.0
    %5319 = vmatpush1.xpose.msra.mxu0 0.0
    %5320 = vmatprep.mubr.f32.mxu0 0.0
    %5321 = vmatmul.mubr.f32.gmra.mrb[0].mxu0 %v5252
    %v5322 = vpop.f32.mrb[0].mxu0
    %v5323 = vadd.f32 0.0, %v5322
    %v5324 = vpop.f32.mrb[0].mxu0
    %5325 = vdwg.mxu0
    %5326 = vrot.lane.b32.xlu0 %v4254, 80
    %v5327 = vpop.permute.xlu0 %5326
    %5328 = vrot.lane.b32.xlu0 %v4254, 16
    %v5329 = vpop.permute.xlu0 %5328
    %v5330 = vsel %vm256, %v5327, 0
    %v5332 = vsel %vm256, %v5329, 0
    %5334 = vmatprep.subr.mxu0 0.0
    %5335 = vmatpush1.xpose.msra.mxu0 %v5332
    %5336 = vmatprep.subr.mxu0 0.0
    %5337 = vmatpush1.xpose.msra.mxu0 0.0
    %5338 = vmatprep.subr.mxu0 0.0
    %5339 = vmatpush1.xpose.msra.mxu0 0.0
    %5340 = vmatprep.subr.mxu0 0.0
    %5341 = vmatpush1.xpose.msra.mxu0 0.0
    %5342 = vmatprep.subr.mxu0 0.0
    %5343 = vmatpush1.xpose.msra.mxu0 0.0
    %5344 = vmatprep.subr.mxu0 0.0
    %5345 = vmatpush1.xpose.msra.mxu0 0.0
    %5346 = vmatprep.subr.mxu0 0.0
    %5347 = vmatpush1.xpose.msra.mxu0 0.0
    %5348 = vmatprep.subr.mxu0 0.0
    %5349 = vmatpush1.xpose.msra.mxu0 0.0
    %5350 = vmatprep.subr.mxu0 0.0
    %5351 = vmatpush1.xpose.msra.mxu0 0.0
    %5352 = vmatprep.subr.mxu0 0.0
    %5353 = vmatpush1.xpose.msra.mxu0 0.0
    %5354 = vmatprep.subr.mxu0 0.0
    %5355 = vmatpush1.xpose.msra.mxu0 0.0
    %5356 = vmatprep.subr.mxu0 0.0
    %5357 = vmatpush1.xpose.msra.mxu0 0.0
    %5358 = vmatprep.subr.mxu0 0.0
    %5359 = vmatpush1.xpose.msra.mxu0 0.0
    %5360 = vmatprep.subr.mxu0 0.0
    %5361 = vmatpush1.xpose.msra.mxu0 0.0
    %5362 = vmatprep.subr.mxu0 0.0
    %5363 = vmatpush1.xpose.msra.mxu0 0.0
    %5364 = vmatprep.subr.mxu0 0.0
    %5365 = vmatpush1.xpose.msra.mxu0 0.0
    %5366 = vmatprep.subr.mxu0 0.0
    %5367 = vmatpush1.xpose.msra.mxu0 0.0
    %5368 = vmatprep.subr.mxu0 0.0
    %5369 = vmatpush1.xpose.msra.mxu0 0.0
    %5370 = vmatprep.subr.mxu0 0.0
    %5371 = vmatpush1.xpose.msra.mxu0 0.0
    %5372 = vmatprep.subr.mxu0 0.0
    %5373 = vmatpush1.xpose.msra.mxu0 0.0
    %5374 = vmatprep.subr.mxu0 0.0
    %5375 = vmatpush1.xpose.msra.mxu0 0.0
    %5376 = vmatprep.subr.mxu0 0.0
    %5377 = vmatpush1.xpose.msra.mxu0 0.0
    %5378 = vmatprep.subr.mxu0 0.0
    %5379 = vmatpush1.xpose.msra.mxu0 0.0
    %5380 = vmatprep.subr.mxu0 0.0
    %5381 = vmatpush1.xpose.msra.mxu0 0.0
    %5382 = vmatprep.subr.mxu0 0.0
    %5383 = vmatpush1.xpose.msra.mxu0 0.0
    %5384 = vmatprep.subr.mxu0 0.0
    %5385 = vmatpush1.xpose.msra.mxu0 0.0
    %5386 = vmatprep.subr.mxu0 0.0
    %5387 = vmatpush1.xpose.msra.mxu0 0.0
    %5388 = vmatprep.subr.mxu0 0.0
    %5389 = vmatpush1.xpose.msra.mxu0 0.0
    %5390 = vmatprep.subr.mxu0 0.0
    %5391 = vmatpush1.xpose.msra.mxu0 0.0
    %5392 = vmatprep.subr.mxu0 0.0
    %5393 = vmatpush1.xpose.msra.mxu0 0.0
    %5394 = vmatprep.subr.mxu0 0.0
    %5395 = vmatpush1.xpose.msra.mxu0 0.0
    %5396 = vmatprep.subr.mxu0 0.0
    %5397 = vmatpush1.xpose.msra.mxu0 0.0
    %5398 = vmatprep.mubr.f32.mxu0 0.0
    %5399 = vmatmul.mubr.f32.gmra.mrb[0].mxu0 %v5330
    %v5400 = vpop.f32.mrb[0].mxu0
    %v5401 = vadd.f32 0.0, %v5400
    %v5402 = vpop.f32.mrb[0].mxu0
    %5403 = vdwg.mxu0
    %v5404 = vmul.f32 %v5323, 0.25
    %v5405 = vmul.f32 %v5401, 0.25
    %v5406 = vsel %vm702, %v5404, -inf
    %5407 = vmax.xlane.f32.xlu0 %v5406
    %v5408 = vpop.xlane.xlu0 %5407
    %v5409 = vsel %vm702, %v5405, -inf
    %5410 = vmax.xlane.f32.xlu0 %v5409
    %v5411 = vpop.xlane.xlu0 %5410
    %v5412 = vsub.f32 %v5404, %v5408
    %v5413 = vsub.f32 %v5405, %v5411
    %v5414 = vmul.f32 %v5412, 1.442695
    %v5415 = vpow.pop %v5414
    %v5416 = vmul.f32 %v5413, 1.442695
    %v5417 = vpow.pop %v5416
    %v5418 = vsel %vm702, %v5415, 0.0
    %5419 = vadd.xlane.f32.xlu0 %v5418
    %v5420 = vpop.xlane.xlu0 %5419
    %v5421 = vsel %vm702, %v5417, 0.0
    %5422 = vadd.xlane.f32.xlu0 %v5421
    %v5423 = vpop.xlane.xlu0 %5422
    %v5424 = vrcp.pop %v5420
    %v5425 = vmul.f32 %v5415, %v5424
    %v5426 = vrcp.pop %v5423
    %v5427 = vmul.f32 %v5417, %v5426
    %5428 = vrot.lane.b32.xlu0 %v4250, 80
    %v5429 = vpop.permute.xlu0 %5428
    %v5432 = vsel %vm702, %v5425, 0
    %5434 = vmatprep.subr.mxu0 0.0
    %5435 = vmatpush1.msra.mxu0 %v5429
    %5436 = vmatprep.subr.mxu0 0.0
    %5437 = vmatpush1.msra.mxu0 0.0
    %5438 = vmatprep.subr.mxu0 0.0
    %5439 = vmatpush1.msra.mxu0 0.0
    %5440 = vmatprep.subr.mxu0 0.0
    %5441 = vmatpush1.msra.mxu0 0.0
    %5442 = vmatprep.subr.mxu0 0.0
    %5443 = vmatpush1.msra.mxu0 0.0
    %5444 = vmatprep.subr.mxu0 0.0
    %5445 = vmatpush1.msra.mxu0 0.0
    %5446 = vmatprep.subr.mxu0 0.0
    %5447 = vmatpush1.msra.mxu0 0.0
    %5448 = vmatprep.subr.mxu0 0.0
    %5449 = vmatpush1.msra.mxu0 0.0
    %5450 = vmatprep.subr.mxu0 0.0
    %5451 = vmatpush1.msra.mxu0 0.0
    %5452 = vmatprep.subr.mxu0 0.0
    %5453 = vmatpush1.msra.mxu0 0.0
    %5454 = vmatprep.subr.mxu0 0.0
    %5455 = vmatpush1.msra.mxu0 0.0
    %5456 = vmatprep.subr.mxu0 0.0
    %5457 = vmatpush1.msra.mxu0 0.0
    %5458 = vmatprep.subr.mxu0 0.0
    %5459 = vmatpush1.msra.mxu0 0.0
    %5460 = vmatprep.subr.mxu0 0.0
    %5461 = vmatpush1.msra.mxu0 0.0
    %5462 = vmatprep.subr.mxu0 0.0
    %5463 = vmatpush1.msra.mxu0 0.0
    %5464 = vmatprep.subr.mxu0 0.0
    %5465 = vmatpush1.msra.mxu0 0.0
    %5466 = vmatprep.subr.mxu0 0.0
    %5467 = vmatpush1.msra.mxu0 0.0
    %5468 = vmatprep.subr.mxu0 0.0
    %5469 = vmatpush1.msra.mxu0 0.0
    %5470 = vmatprep.subr.mxu0 0.0
    %5471 = vmatpush1.msra.mxu0 0.0
    %5472 = vmatprep.subr.mxu0 0.0
    %5473 = vmatpush1.msra.mxu0 0.0
    %5474 = vmatprep.subr.mxu0 0.0
    %5475 = vmatpush1.msra.mxu0 0.0
    %5476 = vmatprep.subr.mxu0 0.0
    %5477 = vmatpush1.msra.mxu0 0.0
    %5478 = vmatprep.subr.mxu0 0.0
    %5479 = vmatpush1.msra.mxu0 0.0
    %5480 = vmatprep.subr.mxu0 0.0
    %5481 = vmatpush1.msra.mxu0 0.0
    %5482 = vmatprep.subr.mxu0 0.0
    %5483 = vmatpush1.msra.mxu0 0.0
    %5484 = vmatprep.subr.mxu0 0.0
    %5485 = vmatpush1.msra.mxu0 0.0
    %5486 = vmatprep.subr.mxu0 0.0
    %5487 = vmatpush1.msra.mxu0 0.0
    %5488 = vmatprep.subr.mxu0 0.0
    %5489 = vmatpush1.msra.mxu0 0.0
    %5490 = vmatprep.subr.mxu0 0.0
    %5491 = vmatpush1.msra.mxu0 0.0
    %5492 = vmatprep.subr.mxu0 0.0
    %5493 = vmatpush1.msra.mxu0 0.0
    %5494 = vmatprep.subr.mxu0 0.0
    %5495 = vmatpush1.msra.mxu0 0.0
    %5496 = vmatprep.subr.mxu0 0.0
    %5497 = vmatpush1.msra.mxu0 0.0
    %5498 = vmatprep.mubr.f32.mxu0 0.0
    %5499 = vmatmul.mubr.f32.gmra.mrb[0].mxu0 %v5432
    %v5500 = vpop.f32.mrb[0].mxu0
    %v5501 = vadd.f32 0.0, %v5500
    %v5502 = vpop.f32.mrb[0].mxu0
    %5503 = vdwg.mxu0
    %5504 = vrot.lane.b32.xlu0 %v4256, 80
    %v5505 = vpop.permute.xlu0 %5504
    %v5508 = vsel %vm702, %v5427, 0
    %5510 = vmatprep.subr.mxu0 0.0
    %5511 = vmatpush1.msra.mxu0 %v5505
    %5512 = vmatprep.subr.mxu0 0.0
    %5513 = vmatpush1.msra.mxu0 0.0
    %5514 = vmatprep.subr.mxu0 0.0
    %5515 = vmatpush1.msra.mxu0 0.0
    %5516 = vmatprep.subr.mxu0 0.0
    %5517 = vmatpush1.msra.mxu0 0.0
    %5518 = vmatprep.subr.mxu0 0.0
    %5519 = vmatpush1.msra.mxu0 0.0
    %5520 = vmatprep.subr.mxu0 0.0
    %5521 = vmatpush1.msra.mxu0 0.0
    %5522 = vmatprep.subr.mxu0 0.0
    %5523 = vmatpush1.msra.mxu0 0.0
    %5524 = vmatprep.subr.mxu0 0.0
    %5525 = vmatpush1.msra.mxu0 0.0
    %5526 = vmatprep.subr.mxu0 0.0
    %5527 = vmatpush1.msra.mxu0 0.0
    %5528 = vmatprep.subr.mxu0 0.0
    %5529 = vmatpush1.msra.mxu0 0.0
    %5530 = vmatprep.subr.mxu0 0.0
    %5531 = vmatpush1.msra.mxu0 0.0
    %5532 = vmatprep.subr.mxu0 0.0
    %5533 = vmatpush1.msra.mxu0 0.0
    %5534 = vmatprep.subr.mxu0 0.0
    %5535 = vmatpush1.msra.mxu0 0.0
    %5536 = vmatprep.subr.mxu0 0.0
    %5537 = vmatpush1.msra.mxu0 0.0
    %5538 = vmatprep.subr.mxu0 0.0
    %5539 = vmatpush1.msra.mxu0 0.0
    %5540 = vmatprep.subr.mxu0 0.0
    %5541 = vmatpush1.msra.mxu0 0.0
    %5542 = vmatprep.subr.mxu0 0.0
    %5543 = vmatpush1.msra.mxu0 0.0
    %5544 = vmatprep.subr.mxu0 0.0
    %5545 = vmatpush1.msra.mxu0 0.0
    %5546 = vmatprep.subr.mxu0 0.0
    %5547 = vmatpush1.msra.mxu0 0.0
    %5548 = vmatprep.subr.mxu0 0.0
    %5549 = vmatpush1.msra.mxu0 0.0
    %5550 = vmatprep.subr.mxu0 0.0
    %5551 = vmatpush1.msra.mxu0 0.0
    %5552 = vmatprep.subr.mxu0 0.0
    %5553 = vmatpush1.msra.mxu0 0.0
    %5554 = vmatprep.subr.mxu0 0.0
    %5555 = vmatpush1.msra.mxu0 0.0
    %5556 = vmatprep.subr.mxu0 0.0
    %5557 = vmatpush1.msra.mxu0 0.0
    %5558 = vmatprep.subr.mxu0 0.0
    %5559 = vmatpush1.msra.mxu0 0.0
    %5560 = vmatprep.subr.mxu0 0.0
    %5561 = vmatpush1.msra.mxu0 0.0
    %5562 = vmatprep.subr.mxu0 0.0
    %5563 = vmatpush1.msra.mxu0 0.0
    %5564 = vmatprep.subr.mxu0 0.0
    %5565 = vmatpush1.msra.mxu0 0.0
    %5566 = vmatprep.subr.mxu0 0.0
    %5567 = vmatpush1.msra.mxu0 0.0
    %5568 = vmatprep.subr.mxu0 0.0
    %5569 = vmatpush1.msra.mxu0 0.0
    %5570 = vmatprep.subr.mxu0 0.0
    %5571 = vmatpush1.msra.mxu0 0.0
    %5572 = vmatprep.subr.mxu0 0.0
    %5573 = vmatpush1.msra.mxu0 0.0
    %5574 = vmatprep.mubr.f32.mxu0 0.0
    %5575 = vmatmul.mubr.f32.gmra.mrb[0].mxu0 %v5508
    %v5576 = vpop.f32.mrb[0].mxu0
    %v5577 = vadd.f32 0.0, %v5576
    %v5578 = vpop.f32.mrb[0].mxu0
    %5579 = vdwg.mxu0
    %5582 = vrot.lane.b32.xlu0 %v4836, 16
    %v5583 = vpop.permute.xlu0 %5582
    %5584 = vrot.lane.b32.xlu0 %v4913, 16
    %v5585 = vpop.permute.xlu0 %5584
    %5590 = vrot.lane.b32.xlu0 %v5169, 32
    %v5591 = vpop.permute.xlu0 %5590
    %5592 = vrot.lane.b32.xlu0 %v5245, 32
    %v5593 = vpop.permute.xlu0 %5592
    %5598 = vrot.lane.b32.xlu0 %v5501, 48
    %v5599 = vpop.permute.xlu0 %5598
    %5600 = vrot.lane.b32.xlu0 %v5577, 48
    %v5601 = vpop.permute.xlu0 %5600
    %v5604 = vsel %vm256, %v4506, %v5583
    %v5605 = vsel %vm256, %v4579, %v5585
    %v5606 = vsel %vm1895, %v5604, %v5591
    %v5607 = vsel %vm1895, %v5605, %v5593
    %v5608 = vsel %vm1898, %v5606, %v5599
    %v5609 = vsel %vm1898, %v5607, %v5601
    %s5610 = scalar_lea.vmem %s10, 128
    %v5611 = vld [vmem:[%s5610] sm:$0xff]
    %v5612 = vld [vmem:[%s5610 + $0x8] sm:$0xff]
    %v5613 = vld [vmem:[%s5610 + $0x10] sm:$0xff]
    %v5614 = vld [vmem:[%s5610 + $0x18] sm:$0xff]
    %v5615 = vld [vmem:[%s5610 + $0x20] sm:$0xff]
    %v5616 = vld [vmem:[%s5610 + $0x28] sm:$0xff]
    %v5617 = vld [vmem:[%s5610 + $0x30] sm:$0xff]
    %v5618 = vld [vmem:[%s5610 + $0x38] sm:$0xff]
    %s5619 = scalar_lea.vmem %s11, 2
    %v5620 = vld [vmem:[%s5619] sm:$0x1]
    %v5622 = vlaneseq
    %v5623 = vshrl.u32 %v5622, 7
    %v5624 = vsub.s32 0, %v5623
    %v5625 = vrot.slane %v5620, %v5624
    %v5628 = vsel %vm462, %v5608, 0
    %v5631 = vsel %vm462, %v5609, 0
    %5633 = vmatprep.subr.mxu0 0.0
    %5634 = vmatpush1.msra.mxu0 %v5611
    %5635 = vmatprep.subr.mxu0 0.0
    %5636 = vmatpush1.msra.mxu0 %v5612
    %5637 = vmatprep.subr.mxu0 0.0
    %5638 = vmatpush1.msra.mxu0 %v5613
    %5639 = vmatprep.subr.mxu0 0.0
    %5640 = vmatpush1.msra.mxu0 %v5614
    %5641 = vmatprep.subr.mxu0 0.0
    %5642 = vmatpush1.msra.mxu0 %v5615
    %5643 = vmatprep.subr.mxu0 0.0
    %5644 = vmatpush1.msra.mxu0 %v5616
    %5645 = vmatprep.subr.mxu0 0.0
    %5646 = vmatpush1.msra.mxu0 %v5617
    %5647 = vmatprep.subr.mxu0 0.0
    %5648 = vmatpush1.msra.mxu0 %v5618
    %5649 = vmatprep.subr.mxu0 0.0
    %5650 = vmatpush1.msra.mxu0 0.0
    %5651 = vmatprep.subr.mxu0 0.0
    %5652 = vmatpush1.msra.mxu0 0.0
    %5653 = vmatprep.subr.mxu0 0.0
    %5654 = vmatpush1.msra.mxu0 0.0
    %5655 = vmatprep.subr.mxu0 0.0
    %5656 = vmatpush1.msra.mxu0 0.0
    %5657 = vmatprep.subr.mxu0 0.0
    %5658 = vmatpush1.msra.mxu0 0.0
    %5659 = vmatprep.subr.mxu0 0.0
    %5660 = vmatpush1.msra.mxu0 0.0
    %5661 = vmatprep.subr.mxu0 0.0
    %5662 = vmatpush1.msra.mxu0 0.0
    %5663 = vmatprep.subr.mxu0 0.0
    %5664 = vmatpush1.msra.mxu0 0.0
    %5665 = vmatprep.subr.mxu0 0.0
    %5666 = vmatpush1.msra.mxu0 0.0
    %5667 = vmatprep.subr.mxu0 0.0
    %5668 = vmatpush1.msra.mxu0 0.0
    %5669 = vmatprep.subr.mxu0 0.0
    %5670 = vmatpush1.msra.mxu0 0.0
    %5671 = vmatprep.subr.mxu0 0.0
    %5672 = vmatpush1.msra.mxu0 0.0
    %5673 = vmatprep.subr.mxu0 0.0
    %5674 = vmatpush1.msra.mxu0 0.0
    %5675 = vmatprep.subr.mxu0 0.0
    %5676 = vmatpush1.msra.mxu0 0.0
    %5677 = vmatprep.subr.mxu0 0.0
    %5678 = vmatpush1.msra.mxu0 0.0
    %5679 = vmatprep.subr.mxu0 0.0
    %5680 = vmatpush1.msra.mxu0 0.0
    %5681 = vmatprep.subr.mxu0 0.0
    %5682 = vmatpush1.msra.mxu0 0.0
    %5683 = vmatprep.subr.mxu0 0.0
    %5684 = vmatpush1.msra.mxu0 0.0
    %5685 = vmatprep.subr.mxu0 0.0
    %5686 = vmatpush1.msra.mxu0 0.0
    %5687 = vmatprep.subr.mxu0 0.0
    %5688 = vmatpush1.msra.mxu0 0.0
    %5689 = vmatprep.subr.mxu0 0.0
    %5690 = vmatpush1.msra.mxu0 0.0
    %5691 = vmatprep.subr.mxu0 0.0
    %5692 = vmatpush1.msra.mxu0 0.0
    %5693 = vmatprep.subr.mxu0 0.0
    %5694 = vmatpush1.msra.mxu0 0.0
    %5695 = vmatprep.subr.mxu0 0.0
    %5696 = vmatpush1.msra.mxu0 0.0
    %5697 = vmatprep.mubr.f32.mxu0 0.0
    %5698 = vmatmul.mubr.f32.gmra.mrb[0].mxu0 %v5628
    %v5699 = vpop.f32.mrb[0].mxu0
    %v5700 = vadd.f32 %v5625, %v5699
    %v5701 = vpop.f32.mrb[0].mxu0
    %5702 = vmatprep.mubr.f32.mxu0 0.0
    %5703 = vmatmul.mubr.f32.gmra.mrb[0].mxu0 %v5631
    %v5704 = vpop.f32.mrb[0].mxu0
    %v5705 = vadd.f32 %v5625, %v5704
    %v5706 = vpop.f32.mrb[0].mxu0
    %5707 = vdwg.mxu0
    %v5708 = vadd.f32 %v4143, %v5700
    %v5709 = vadd.f32 %v4144, %v5705
    %s5710 = scalar_lea.vmem [#allocation13], 2
    %v5711 = vld [vmem:[%s5710] sm:$0x1]
    %s5712 = scalar_lea.vmem [#allocation14], 2
    %v5713 = vld [vmem:[%s5712] sm:$0x1]
    %v5714 = vsel %vm462, %v5708, 0.0
    %5715 = vadd.xlane.f32.xlu0 %v5714
    %v5716 = vpop.xlane.xlu0 %5715
    %v5717 = vsel %vm462, %v5709, 0.0
    %5718 = vadd.xlane.f32.xlu0 %v5717
    %v5719 = vpop.xlane.xlu0 %5718
    %v5720 = vmul.f32 %v5716, %v2007
    %v5721 = vmul.f32 %v5719, %v2007
    %v5722 = vsub.f32 %v5708, %v5720
    %v5723 = vsub.f32 %v5709, %v5721
    %v5724 = vmul.f32 %v5722, %v5722
    %v5725 = vmul.f32 %v5723, %v5723
    %v5726 = vsel %vm462, %v5724, 0.0
    %5727 = vadd.xlane.f32.xlu0 %v5726
    %v5728 = vpop.xlane.xlu0 %5727
    %v5729 = vsel %vm462, %v5725, 0.0
    %5730 = vadd.xlane.f32.xlu0 %v5729
    %v5731 = vpop.xlane.xlu0 %5730
    %v5732 = vmul.f32 %v5728, %v2007
    %v5733 = vmul.f32 %v5731, %v2007
    %v5734 = vadd.f32 %v5732, 1e-05
    %v5735 = vadd.f32 %v5733, 1e-05
    %v5736 = vrsqrt.pop %v5734
    %v5737 = vrsqrt.pop %v5735
    %v5738 = vmul.f32 %v5722, %v5736
    %v5739 = vmul.f32 %v5723, %v5737
    %v5741 = vlaneseq
    %v5742 = vshrl.u32 %v5741, 7
    %v5743 = vsub.s32 0, %v5742
    %v5744 = vrot.slane %v5711, %v5743
    %v5746 = vmul.f32 %v5738, %v5744
    %v5747 = vmul.f32 %v5739, %v5744
    %v5749 = vlaneseq
    %v5750 = vshrl.u32 %v5749, 7
    %v5751 = vsub.s32 0, %v5750
    %v5752 = vrot.slane %v5713, %v5751
    %v5754 = vadd.f32 %v5746, %v5752
    %v5755 = vadd.f32 %v5747, %v5752
    %s5756 = scalar_lea.vmem %s14, 128
    %v5757 = vld [vmem:[%s5756] sm:$0xff]
    %v5758 = vld [vmem:[%s5756 + $0x8] sm:$0xff]
    %v5759 = vld [vmem:[%s5756 + $0x10] sm:$0xff]
    %v5760 = vld [vmem:[%s5756 + $0x18] sm:$0xff]
    %v5761 = vld [vmem:[%s5756 + $0x20] sm:$0xff]
    %v5762 = vld [vmem:[%s5756 + $0x28] sm:$0xff]
    %v5763 = vld [vmem:[%s5756 + $0x30] sm:$0xff]
    %v5764 = vld [vmem:[%s5756 + $0x38] sm:$0xff]
    %s5765 = scalar_lea.vmem [#allocation16], 2
    %v5766 = vld [vmem:[%s5765] sm:$0x1]
    %v5768 = vlaneseq
    %v5769 = vshrl.u32 %v5768, 7
    %v5770 = vsub.s32 0, %v5769
    %v5771 = vrot.slane %v5766, %v5770
    %v5774 = vsel %vm462, %v5754, 0
    %v5777 = vsel %vm462, %v5755, 0
    %5779 = vmatprep.subr.mxu0 0.0
    %5780 = vmatpush1.msra.mxu0 %v5757
    %5781 = vmatprep.subr.mxu0 0.0
    %5782 = vmatpush1.msra.mxu0 %v5758
    %5783 = vmatprep.subr.mxu0 0.0
    %5784 = vmatpush1.msra.mxu0 %v5759
    %5785 = vmatprep.subr.mxu0 0.0
    %5786 = vmatpush1.msra.mxu0 %v5760
    %5787 = vmatprep.subr.mxu0 0.0
    %5788 = vmatpush1.msra.mxu0 %v5761
    %5789 = vmatprep.subr.mxu0 0.0
    %5790 = vmatpush1.msra.mxu0 %v5762
    %5791 = vmatprep.subr.mxu0 0.0
    %5792 = vmatpush1.msra.mxu0 %v5763
    %5793 = vmatprep.subr.mxu0 0.0
    %5794 = vmatpush1.msra.mxu0 %v5764
    %5795 = vmatprep.subr.mxu0 0.0
    %5796 = vmatpush1.msra.mxu0 0.0
    %5797 = vmatprep.subr.mxu0 0.0
    %5798 = vmatpush1.msra.mxu0 0.0
    %5799 = vmatprep.subr.mxu0 0.0
    %5800 = vmatpush1.msra.mxu0 0.0
    %5801 = vmatprep.subr.mxu0 0.0
    %5802 = vmatpush1.msra.mxu0 0.0
    %5803 = vmatprep.subr.mxu0 0.0
    %5804 = vmatpush1.msra.mxu0 0.0
    %5805 = vmatprep.subr.mxu0 0.0
    %5806 = vmatpush1.msra.mxu0 0.0
    %5807 = vmatprep.subr.mxu0 0.0
    %5808 = vmatpush1.msra.mxu0 0.0
    %5809 = vmatprep.subr.mxu0 0.0
    %5810 = vmatpush1.msra.mxu0 0.0
    %5811 = vmatprep.subr.mxu0 0.0
    %5812 = vmatpush1.msra.mxu0 0.0
    %5813 = vmatprep.subr.mxu0 0.0
    %5814 = vmatpush1.msra.mxu0 0.0
    %5815 = vmatprep.subr.mxu0 0.0
    %5816 = vmatpush1.msra.mxu0 0.0
    %5817 = vmatprep.subr.mxu0 0.0
    %5818 = vmatpush1.msra.mxu0 0.0
    %5819 = vmatprep.subr.mxu0 0.0
    %5820 = vmatpush1.msra.mxu0 0.0
    %5821 = vmatprep.subr.mxu0 0.0
    %5822 = vmatpush1.msra.mxu0 0.0
    %5823 = vmatprep.subr.mxu0 0.0
    %5824 = vmatpush1.msra.mxu0 0.0
    %5825 = vmatprep.subr.mxu0 0.0
    %5826 = vmatpush1.msra.mxu0 0.0
    %5827 = vmatprep.subr.mxu0 0.0
    %5828 = vmatpush1.msra.mxu0 0.0
    %5829 = vmatprep.subr.mxu0 0.0
    %5830 = vmatpush1.msra.mxu0 0.0
    %5831 = vmatprep.subr.mxu0 0.0
    %5832 = vmatpush1.msra.mxu0 0.0
    %5833 = vmatprep.subr.mxu0 0.0
    %5834 = vmatpush1.msra.mxu0 0.0
    %5835 = vmatprep.subr.mxu0 0.0
    %5836 = vmatpush1.msra.mxu0 0.0
    %5837 = vmatprep.subr.mxu0 0.0
    %5838 = vmatpush1.msra.mxu0 0.0
    %5839 = vmatprep.subr.mxu0 0.0
    %5840 = vmatpush1.msra.mxu0 0.0
    %5841 = vmatprep.subr.mxu0 0.0
    %5842 = vmatpush1.msra.mxu0 0.0
    %5843 = vmatprep.mubr.f32.mxu0 0.0
    %5844 = vmatmul.mubr.f32.gmra.mrb[0].mxu0 %v5774
    %v5845 = vpop.f32.mrb[0].mxu0
    %v5846 = vadd.f32 %v5771, %v5845
    %v5847 = vpop.f32.mrb[0].mxu0
    %5848 = vmatprep.mubr.f32.mxu0 0.0
    %5849 = vmatmul.mubr.f32.gmra.mrb[0].mxu0 %v5777
    %v5850 = vpop.f32.mrb[0].mxu0
    %v5851 = vadd.f32 %v5771, %v5850
    %v5852 = vpop.f32.mrb[0].mxu0
    %5853 = vdwg.mxu0
    %v5854 = vmax.f32 %v5846, 0.0
    %v5855 = vmax.f32 %v5851, 0.0
    %s5856 = scalar_lea.vmem %s16, 256
    %v5857 = vld [vmem:[%s5856] sm:$0xff]
    %v5858 = vld [vmem:[%s5856 + $0x8] sm:$0xff]
    %v5859 = vld [vmem:[%s5856 + $0x10] sm:$0xff]
    %v5860 = vld [vmem:[%s5856 + $0x18] sm:$0xff]
    %v5861 = vld [vmem:[%s5856 + $0x20] sm:$0xff]
    %v5862 = vld [vmem:[%s5856 + $0x28] sm:$0xff]
    %v5863 = vld [vmem:[%s5856 + $0x30] sm:$0xff]
    %v5864 = vld [vmem:[%s5856 + $0x38] sm:$0xff]
    %v5865 = vld [vmem:[%s5856 + $0x40] sm:$0xff]
    %v5866 = vld [vmem:[%s5856 + $0x48] sm:$0xff]
    %v5867 = vld [vmem:[%s5856 + $0x50] sm:$0xff]
    %v5868 = vld [vmem:[%s5856 + $0x58] sm:$0xff]
    %v5869 = vld [vmem:[%s5856 + $0x60] sm:$0xff]
    %v5870 = vld [vmem:[%s5856 + $0x68] sm:$0xff]
    %v5871 = vld [vmem:[%s5856 + $0x70] sm:$0xff]
    %v5872 = vld [vmem:[%s5856 + $0x78] sm:$0xff]
    %s5873 = scalar_lea.vmem [#allocation17], 2
    %v5874 = vld [vmem:[%s5873] sm:$0x1]
    %v5876 = vlaneseq
    %v5877 = vshrl.u32 %v5876, 7
    %v5878 = vsub.s32 0, %v5877
    %v5879 = vrot.slane %v5874, %v5878
    %5881 = vmatprep.subr.mxu0 0.0
    %5882 = vmatpush1.msra.mxu0 %v5857
    %5883 = vmatprep.subr.mxu0 0.0
    %5884 = vmatpush1.msra.mxu0 %v5858
    %5885 = vmatprep.subr.mxu0 0.0
    %5886 = vmatpush1.msra.mxu0 %v5859
    %5887 = vmatprep.subr.mxu0 0.0
    %5888 = vmatpush1.msra.mxu0 %v5860
    %5889 = vmatprep.subr.mxu0 0.0
    %5890 = vmatpush1.msra.mxu0 %v5861
    %5891 = vmatprep.subr.mxu0 0.0
    %5892 = vmatpush1.msra.mxu0 %v5862
    %5893 = vmatprep.subr.mxu0 0.0
    %5894 = vmatpush1.msra.mxu0 %v5863
    %5895 = vmatprep.subr.mxu0 0.0
    %5896 = vmatpush1.msra.mxu0 %v5864
    %5897 = vmatprep.subr.mxu0 0.0
    %5898 = vmatpush1.msra.mxu0 %v5865
    %5899 = vmatprep.subr.mxu0 0.0
    %5900 = vmatpush1.msra.mxu0 %v5866
    %5901 = vmatprep.subr.mxu0 0.0
    %5902 = vmatpush1.msra.mxu0 %v5867
    %5903 = vmatprep.subr.mxu0 0.0
    %5904 = vmatpush1.msra.mxu0 %v5868
    %5905 = vmatprep.subr.mxu0 0.0
    %5906 = vmatpush1.msra.mxu0 %v5869
    %5907 = vmatprep.subr.mxu0 0.0
    %5908 = vmatpush1.msra.mxu0 %v5870
    %5909 = vmatprep.subr.mxu0 0.0
    %5910 = vmatpush1.msra.mxu0 %v5871
    %5911 = vmatprep.subr.mxu0 0.0
    %5912 = vmatpush1.msra.mxu0 %v5872
    %5913 = vmatprep.subr.mxu0 0.0
    %5914 = vmatpush1.msra.mxu0 0.0
    %5915 = vmatprep.subr.mxu0 0.0
    %5916 = vmatpush1.msra.mxu0 0.0
    %5917 = vmatprep.subr.mxu0 0.0
    %5918 = vmatpush1.msra.mxu0 0.0
    %5919 = vmatprep.subr.mxu0 0.0
    %5920 = vmatpush1.msra.mxu0 0.0
    %5921 = vmatprep.subr.mxu0 0.0
    %5922 = vmatpush1.msra.mxu0 0.0
    %5923 = vmatprep.subr.mxu0 0.0
    %5924 = vmatpush1.msra.mxu0 0.0
    %5925 = vmatprep.subr.mxu0 0.0
    %5926 = vmatpush1.msra.mxu0 0.0
    %5927 = vmatprep.subr.mxu0 0.0
    %5928 = vmatpush1.msra.mxu0 0.0
    %5929 = vmatprep.subr.mxu0 0.0
    %5930 = vmatpush1.msra.mxu0 0.0
    %5931 = vmatprep.subr.mxu0 0.0
    %5932 = vmatpush1.msra.mxu0 0.0
    %5933 = vmatprep.subr.mxu0 0.0
    %5934 = vmatpush1.msra.mxu0 0.0
    %5935 = vmatprep.subr.mxu0 0.0
    %5936 = vmatpush1.msra.mxu0 0.0
    %5937 = vmatprep.subr.mxu0 0.0
    %5938 = vmatpush1.msra.mxu0 0.0
    %5939 = vmatprep.subr.mxu0 0.0
    %5940 = vmatpush1.msra.mxu0 0.0
    %5941 = vmatprep.subr.mxu0 0.0
    %5942 = vmatpush1.msra.mxu0 0.0
    %5943 = vmatprep.subr.mxu0 0.0
    %5944 = vmatpush1.msra.mxu0 0.0
    %5945 = vmatprep.mubr.f32.mxu0 0.0
    %5946 = vmatmul.mubr.f32.gmra.mrb[0].mxu0 %v5854
    %v5947 = vpop.f32.mrb[0].mxu0
    %v5948 = vadd.f32 %v5879, %v5947
    %v5949 = vpop.f32.mrb[0].mxu0
    %5950 = vmatprep.mubr.f32.mxu0 0.0
    %5951 = vmatmul.mubr.f32.gmra.mrb[0].mxu0 %v5855
    %v5952 = vpop.f32.mrb[0].mxu0
    %v5953 = vadd.f32 %v5879, %v5952
    %v5954 = vpop.f32.mrb[0].mxu0
    %5955 = vdwg.mxu0
    %v5956 = vadd.f32 %v5754, %v5948
    %v5957 = vadd.f32 %v5755, %v5953
    %s5958 = scalar_lea.vmem [#allocation19], 2
    %v5959 = vld [vmem:[%s5958] sm:$0x1]
    %s5960 = scalar_lea.vmem [#allocation20], 2
    %v5961 = vld [vmem:[%s5960] sm:$0x1]
    %v5962 = vsel %vm462, %v5956, 0.0
    %5963 = vadd.xlane.f32.xlu0 %v5962
    %v5964 = vpop.xlane.xlu0 %5963
    %v5965 = vsel %vm462, %v5957, 0.0
    %5966 = vadd.xlane.f32.xlu0 %v5965
    %v5967 = vpop.xlane.xlu0 %5966
    %v5968 = vmul.f32 %v5964, %v2007
    %v5969 = vmul.f32 %v5967, %v2007
    %v5970 = vsub.f32 %v5956, %v5968
    %v5971 = vsub.f32 %v5957, %v5969
    %v5972 = vmul.f32 %v5970, %v5970
    %v5973 = vmul.f32 %v5971, %v5971
    %v5974 = vsel %vm462, %v5972, 0.0
    %5975 = vadd.xlane.f32.xlu0 %v5974
    %v5976 = vpop.xlane.xlu0 %5975
    %v5977 = vsel %vm462, %v5973, 0.0
    %5978 = vadd.xlane.f32.xlu0 %v5977
    %v5979 = vpop.xlane.xlu0 %5978
    %v5980 = vmul.f32 %v5976, %v2007
    %v5981 = vmul.f32 %v5979, %v2007
    %v5982 = vadd.f32 %v5980, 1e-05
    %v5983 = vadd.f32 %v5981, 1e-05
    %v5984 = vrsqrt.pop %v5982
    %v5985 = vrsqrt.pop %v5983
    %v5986 = vmul.f32 %v5970, %v5984
    %v5987 = vmul.f32 %v5971, %v5985
    %v5989 = vlaneseq
    %v5990 = vshrl.u32 %v5989, 7
    %v5991 = vsub.s32 0, %v5990
    %v5992 = vrot.slane %v5959, %v5991
    %v5994 = vmul.f32 %v5986, %v5992
    %v5995 = vmul.f32 %v5987, %v5992
    %v5997 = vlaneseq
    %v5998 = vshrl.u32 %v5997, 7
    %v5999 = vsub.s32 0, %v5998
    %v6000 = vrot.slane %v5961, %v5999
    %v6002 = vadd.f32 %v5994, %v6000
    %v6003 = vadd.f32 %v5995, %v6000
    %v6004 = vld [vmem:[#allocation7] sm:$0x3]
    %v6006 = vsel %vm256, %v6004, 0
    %6008 = vmatprep.subr.mxu0 0.0
    %6009 = vmatpush1.msra.mxu0 %v6002
    %6010 = vmatprep.subr.mxu0 0.0
    %6011 = vmatpush1.msra.mxu0 %v6003
    %6012 = vmatprep.subr.mxu0 0.0
    %6013 = vmatpush1.msra.mxu0 0.0
    %6014 = vmatprep.subr.mxu0 0.0
    %6015 = vmatpush1.msra.mxu0 0.0
    %6016 = vmatprep.subr.mxu0 0.0
    %6017 = vmatpush1.msra.mxu0 0.0
    %6018 = vmatprep.subr.mxu0 0.0
    %6019 = vmatpush1.msra.mxu0 0.0
    %6020 = vmatprep.subr.mxu0 0.0
    %6021 = vmatpush1.msra.mxu0 0.0
    %6022 = vmatprep.subr.mxu0 0.0
    %6023 = vmatpush1.msra.mxu0 0.0
    %6024 = vmatprep.subr.mxu0 0.0
    %6025 = vmatpush1.msra.mxu0 0.0
    %6026 = vmatprep.subr.mxu0 0.0
    %6027 = vmatpush1.msra.mxu0 0.0
    %6028 = vmatprep.subr.mxu0 0.0
    %6029 = vmatpush1.msra.mxu0 0.0
    %6030 = vmatprep.subr.mxu0 0.0
    %6031 = vmatpush1.msra.mxu0 0.0
    %6032 = vmatprep.subr.mxu0 0.0
    %6033 = vmatpush1.msra.mxu0 0.0
    %6034 = vmatprep.subr.mxu0 0.0
    %6035 = vmatpush1.msra.mxu0 0.0
    %6036 = vmatprep.subr.mxu0 0.0
    %6037 = vmatpush1.msra.mxu0 0.0
    %6038 = vmatprep.subr.mxu0 0.0
    %6039 = vmatpush1.msra.mxu0 0.0
    %6040 = vmatprep.subr.mxu0 0.0
    %6041 = vmatpush1.msra.mxu0 0.0
    %6042 = vmatprep.subr.mxu0 0.0
    %6043 = vmatpush1.msra.mxu0 0.0
    %6044 = vmatprep.subr.mxu0 0.0
    %6045 = vmatpush1.msra.mxu0 0.0
    %6046 = vmatprep.subr.mxu0 0.0
    %6047 = vmatpush1.msra.mxu0 0.0
    %6048 = vmatprep.subr.mxu0 0.0
    %6049 = vmatpush1.msra.mxu0 0.0
    %6050 = vmatprep.subr.mxu0 0.0
    %6051 = vmatpush1.msra.mxu0 0.0
    %6052 = vmatprep.subr.mxu0 0.0
    %6053 = vmatpush1.msra.mxu0 0.0
    %6054 = vmatprep.subr.mxu0 0.0
    %6055 = vmatpush1.msra.mxu0 0.0
    %6056 = vmatprep.subr.mxu0 0.0
    %6057 = vmatpush1.msra.mxu0 0.0
    %6058 = vmatprep.subr.mxu0 0.0
    %6059 = vmatpush1.msra.mxu0 0.0
    %6060 = vmatprep.subr.mxu0 0.0
    %6061 = vmatpush1.msra.mxu0 0.0
    %6062 = vmatprep.subr.mxu0 0.0
    %6063 = vmatpush1.msra.mxu0 0.0
    %6064 = vmatprep.subr.mxu0 0.0
    %6065 = vmatpush1.msra.mxu0 0.0
    %6066 = vmatprep.subr.mxu0 0.0
    %6067 = vmatpush1.msra.mxu0 0.0
    %6068 = vmatprep.subr.mxu0 0.0
    %6069 = vmatpush1.msra.mxu0 0.0
    %6070 = vmatprep.subr.mxu0 0.0
    %6071 = vmatpush1.msra.mxu0 0.0
    %6072 = vmatprep.mubr.f32.mxu0 0.0
    %6073 = vmatmul.mubr.f32.gmra.mrb[0].mxu0 %v6006
    %v6074 = vpop.f32.mrb[0].mxu0
    %v6075 = vadd.f32 0.0, %v6074
    %v6076 = vpop.f32.mrb[0].mxu0
    %6077 = vdwg.mxu0
    %6078 = vmatprep.subr.mxu0 0.0
    %6079 = vmatpush1.msra.mxu0 %v330
    %6080 = vmatprep.subr.mxu0 0.0
    %6081 = vmatpush1.msra.mxu0 %v335
    %6082 = vmatprep.subr.mxu0 0.0
    %6083 = vmatpush1.msra.mxu0 0.0
    %6084 = vmatprep.subr.mxu0 0.0
    %6085 = vmatpush1.msra.mxu0 0.0
    %6086 = vmatprep.subr.mxu0 0.0
    %6087 = vmatpush1.msra.mxu0 0.0
    %6088 = vmatprep.subr.mxu0 0.0
    %6089 = vmatpush1.msra.mxu0 0.0
    %6090 = vmatprep.subr.mxu0 0.0
    %6091 = vmatpush1.msra.mxu0 0.0
    %6092 = vmatprep.subr.mxu0 0.0
    %6093 = vmatpush1.msra.mxu0 0.0
    %6094 = vmatprep.subr.mxu0 0.0
    %6095 = vmatpush1.msra.mxu0 0.0
    %6096 = vmatprep.subr.mxu0 0.0
    %6097 = vmatpush1.msra.mxu0 0.0
    %6098 = vmatprep.subr.mxu0 0.0
    %6099 = vmatpush1.msra.mxu0 0.0
    %6100 = vmatprep.subr.mxu0 0.0
    %6101 = vmatpush1.msra.mxu0 0.0
    %6102 = vmatprep.subr.mxu0 0.0
    %6103 = vmatpush1.msra.mxu0 0.0
    %6104 = vmatprep.subr.mxu0 0.0
    %6105 = vmatpush1.msra.mxu0 0.0
    %6106 = vmatprep.subr.mxu0 0.0
    %6107 = vmatpush1.msra.mxu0 0.0
    %6108 = vmatprep.subr.mxu0 0.0
    %6109 = vmatpush1.msra.mxu0 0.0
    %6110 = vmatprep.subr.mxu0 0.0
    %6111 = vmatpush1.msra.mxu0 0.0
    %6112 = vmatprep.subr.mxu0 0.0
    %6113 = vmatpush1.msra.mxu0 0.0
    %6114 = vmatprep.subr.mxu0 0.0
    %6115 = vmatpush1.msra.mxu0 0.0
    %6116 = vmatprep.subr.mxu0 0.0
    %6117 = vmatpush1.msra.mxu0 0.0
    %6118 = vmatprep.subr.mxu0 0.0
    %6119 = vmatpush1.msra.mxu0 0.0
    %6120 = vmatprep.subr.mxu0 0.0
    %6121 = vmatpush1.msra.mxu0 0.0
    %6122 = vmatprep.subr.mxu0 0.0
    %6123 = vmatpush1.msra.mxu0 0.0
    %6124 = vmatprep.subr.mxu0 0.0
    %6125 = vmatpush1.msra.mxu0 0.0
    %6126 = vmatprep.subr.mxu0 0.0
    %6127 = vmatpush1.msra.mxu0 0.0
    %6128 = vmatprep.subr.mxu0 0.0
    %6129 = vmatpush1.msra.mxu0 0.0
    %6130 = vmatprep.subr.mxu0 0.0
    %6131 = vmatpush1.msra.mxu0 0.0
    %6132 = vmatprep.subr.mxu0 0.0
    %6133 = vmatpush1.msra.mxu0 0.0
    %6134 = vmatprep.subr.mxu0 0.0
    %6135 = vmatpush1.msra.mxu0 0.0
    %6136 = vmatprep.subr.mxu0 0.0
    %6137 = vmatpush1.msra.mxu0 0.0
    %6138 = vmatprep.subr.mxu0 0.0
    %6139 = vmatpush1.msra.mxu0 0.0
    %6140 = vmatprep.subr.mxu0 0.0
    %6141 = vmatpush1.msra.mxu0 0.0
    %6142 = vmatprep.mubr.f32.mxu0 0.0
    %6143 = vmatmul.mubr.f32.gmra.mrb[0].mxu0 %v6006
    %v6144 = vpop.f32.mrb[0].mxu0
    %v6145 = vadd.f32 0.0, %v6144
    %v6146 = vpop.f32.mrb[0].mxu0
    %6147 = vdwg.mxu0
    %v6148 = vld [vmem:[#allocation11] sm:$0xff]
    %v6149 = vld [vmem:[#allocation11 + $0x8] sm:$0xff]
    %v6150 = vld [vmem:[%s7] sm:$0x1]
    %v6152 = vlaneseq
    %v6153 = vshrl.u32 %v6152, 7
    %v6154 = vsub.s32 0, %v6153
    %v6155 = vrot.slane %v6150, %v6154
    %v6158 = vsel %vm256, %v6145, 0
    %6160 = vmatprep.subr.mxu0 0.0
    %6161 = vmatpush1.msra.mxu0 %v6148
    %6162 = vmatprep.subr.mxu0 0.0
    %6163 = vmatpush1.msra.mxu0 %v6149
    %6164 = vmatprep.subr.mxu0 0.0
    %6165 = vmatpush1.msra.mxu0 0.0
    %6166 = vmatprep.subr.mxu0 0.0
    %6167 = vmatpush1.msra.mxu0 0.0
    %6168 = vmatprep.subr.mxu0 0.0
    %6169 = vmatpush1.msra.mxu0 0.0
    %6170 = vmatprep.subr.mxu0 0.0
    %6171 = vmatpush1.msra.mxu0 0.0
    %6172 = vmatprep.subr.mxu0 0.0
    %6173 = vmatpush1.msra.mxu0 0.0
    %6174 = vmatprep.subr.mxu0 0.0
    %6175 = vmatpush1.msra.mxu0 0.0
    %6176 = vmatprep.subr.mxu0 0.0
    %6177 = vmatpush1.msra.mxu0 0.0
    %6178 = vmatprep.subr.mxu0 0.0
    %6179 = vmatpush1.msra.mxu0 0.0
    %6180 = vmatprep.subr.mxu0 0.0
    %6181 = vmatpush1.msra.mxu0 0.0
    %6182 = vmatprep.subr.mxu0 0.0
    %6183 = vmatpush1.msra.mxu0 0.0
    %6184 = vmatprep.subr.mxu0 0.0
    %6185 = vmatpush1.msra.mxu0 0.0
    %6186 = vmatprep.subr.mxu0 0.0
    %6187 = vmatpush1.msra.mxu0 0.0
    %6188 = vmatprep.subr.mxu0 0.0
    %6189 = vmatpush1.msra.mxu0 0.0
    %6190 = vmatprep.subr.mxu0 0.0
    %6191 = vmatpush1.msra.mxu0 0.0
    %6192 = vmatprep.subr.mxu0 0.0
    %6193 = vmatpush1.msra.mxu0 0.0
    %6194 = vmatprep.subr.mxu0 0.0
    %6195 = vmatpush1.msra.mxu0 0.0
    %6196 = vmatprep.subr.mxu0 0.0
    %6197 = vmatpush1.msra.mxu0 0.0
    %6198 = vmatprep.subr.mxu0 0.0
    %6199 = vmatpush1.msra.mxu0 0.0
    %6200 = vmatprep.subr.mxu0 0.0
    %6201 = vmatpush1.msra.mxu0 0.0
    %6202 = vmatprep.subr.mxu0 0.0
    %6203 = vmatpush1.msra.mxu0 0.0
    %6204 = vmatprep.subr.mxu0 0.0
    %6205 = vmatpush1.msra.mxu0 0.0
    %6206 = vmatprep.subr.mxu0 0.0
    %6207 = vmatpush1.msra.mxu0 0.0
    %6208 = vmatprep.subr.mxu0 0.0
    %6209 = vmatpush1.msra.mxu0 0.0
    %6210 = vmatprep.subr.mxu0 0.0
    %6211 = vmatpush1.msra.mxu0 0.0
    %6212 = vmatprep.subr.mxu0 0.0
    %6213 = vmatpush1.msra.mxu0 0.0
    %6214 = vmatprep.subr.mxu0 0.0
    %6215 = vmatpush1.msra.mxu0 0.0
    %6216 = vmatprep.subr.mxu0 0.0
    %6217 = vmatpush1.msra.mxu0 0.0
    %6218 = vmatprep.subr.mxu0 0.0
    %6219 = vmatpush1.msra.mxu0 0.0
    %6220 = vmatprep.subr.mxu0 0.0
    %6221 = vmatpush1.msra.mxu0 0.0
    %6222 = vmatprep.subr.mxu0 0.0
    %6223 = vmatpush1.msra.mxu0 0.0
    %6224 = vmatprep.mubr.f32.mxu0 0.0
    %6225 = vmatmul.mubr.f32.gmra.mrb[0].mxu0 %v6158
    %v6226 = vpop.f32.mrb[0].mxu0
    %v6227 = vadd.f32 %v6155, %v6226
    %v6228 = vpop.f32.mrb[0].mxu0
    %6229 = vdwg.mxu0
    %6231 = vrot.lane.b32.xlu0 %v6227, 64
    %v6232 = vpop.permute.xlu0 %6231
    %v6234 = vsel %vm462, %v6075, %v6232
    %v6235 = vld [vmem:[%s20] sm:$0xff]
    %v6236 = vld [vmem:[%s20 + $0x8] sm:$0xff]
    %v6237 = vld [vmem:[%s20 + $0x10] sm:$0xff]
    %v6238 = vld [vmem:[%s20 + $0x18] sm:$0xff]
    %v6239 = vld [vmem:[%s20 + $0x20] sm:$0xff]
    %v6240 = vld [vmem:[%s20 + $0x28] sm:$0xff]
    %v6241 = vld [vmem:[%s20 + $0x30] sm:$0xff]
    %v6242 = vld [vmem:[%s20 + $0x38] sm:$0xff]
    %v6243 = vld [vmem:[%s20 + $0x40] sm:$0xff]
    %v6244 = vld [vmem:[%s20 + $0x48] sm:$0xff]
    %v6245 = vld [vmem:[%s20 + $0x50] sm:$0xff]
    %v6246 = vld [vmem:[%s20 + $0x58] sm:$0xff]
    %v6247 = vld [vmem:[%s20 + $0x60] sm:$0xff]
    %v6248 = vld [vmem:[%s20 + $0x68] sm:$0xff]
    %v6249 = vld [vmem:[%s20 + $0x70] sm:$0xff]
    %v6250 = vld [vmem:[%s20 + $0x78] sm:$0xff]
    %v6251 = vld [vmem:[%s21] sm:$0x1]
    %v6253 = vlaneseq
    %v6254 = vshrl.u32 %v6253, 7
    %v6255 = vsub.s32 0, %v6254
    %v6256 = vrot.slane %v6251, %v6255
    %6258 = vmatprep.subr.mxu0 0.0
    %6259 = vmatpush1.msra.mxu0 %v6235
    %6260 = vmatprep.subr.mxu0 0.0
    %6261 = vmatpush1.msra.mxu0 %v6236
    %6262 = vmatprep.subr.mxu0 0.0
    %6263 = vmatpush1.msra.mxu0 %v6237
    %6264 = vmatprep.subr.mxu0 0.0
    %6265 = vmatpush1.msra.mxu0 %v6238
    %6266 = vmatprep.subr.mxu0 0.0
    %6267 = vmatpush1.msra.mxu0 %v6239
    %6268 = vmatprep.subr.mxu0 0.0
    %6269 = vmatpush1.msra.mxu0 %v6240
    %6270 = vmatprep.subr.mxu0 0.0
    %6271 = vmatpush1.msra.mxu0 %v6241
    %6272 = vmatprep.subr.mxu0 0.0
    %6273 = vmatpush1.msra.mxu0 %v6242
    %6274 = vmatprep.subr.mxu0 0.0
    %6275 = vmatpush1.msra.mxu0 %v6243
    %6276 = vmatprep.subr.mxu0 0.0
    %6277 = vmatpush1.msra.mxu0 %v6244
    %6278 = vmatprep.subr.mxu0 0.0
    %6279 = vmatpush1.msra.mxu0 %v6245
    %6280 = vmatprep.subr.mxu0 0.0
    %6281 = vmatpush1.msra.mxu0 %v6246
    %6282 = vmatprep.subr.mxu0 0.0
    %6283 = vmatpush1.msra.mxu0 %v6247
    %6284 = vmatprep.subr.mxu0 0.0
    %6285 = vmatpush1.msra.mxu0 %v6248
    %6286 = vmatprep.subr.mxu0 0.0
    %6287 = vmatpush1.msra.mxu0 %v6249
    %6288 = vmatprep.subr.mxu0 0.0
    %6289 = vmatpush1.msra.mxu0 %v6250
    %6290 = vmatprep.subr.mxu0 0.0
    %6291 = vmatpush1.msra.mxu0 0.0
    %6292 = vmatprep.subr.mxu0 0.0
    %6293 = vmatpush1.msra.mxu0 0.0
    %6294 = vmatprep.subr.mxu0 0.0
    %6295 = vmatpush1.msra.mxu0 0.0
    %6296 = vmatprep.subr.mxu0 0.0
    %6297 = vmatpush1.msra.mxu0 0.0
    %6298 = vmatprep.subr.mxu0 0.0
    %6299 = vmatpush1.msra.mxu0 0.0
    %6300 = vmatprep.subr.mxu0 0.0
    %6301 = vmatpush1.msra.mxu0 0.0
    %6302 = vmatprep.subr.mxu0 0.0
    %6303 = vmatpush1.msra.mxu0 0.0
    %6304 = vmatprep.subr.mxu0 0.0
    %6305 = vmatpush1.msra.mxu0 0.0
    %6306 = vmatprep.subr.mxu0 0.0
    %6307 = vmatpush1.msra.mxu0 0.0
    %6308 = vmatprep.subr.mxu0 0.0
    %6309 = vmatpush1.msra.mxu0 0.0
    %6310 = vmatprep.subr.mxu0 0.0
    %6311 = vmatpush1.msra.mxu0 0.0
    %6312 = vmatprep.subr.mxu0 0.0
    %6313 = vmatpush1.msra.mxu0 0.0
    %6314 = vmatprep.subr.mxu0 0.0
    %6315 = vmatpush1.msra.mxu0 0.0
    %6316 = vmatprep.subr.mxu0 0.0
    %6317 = vmatpush1.msra.mxu0 0.0
    %6318 = vmatprep.subr.mxu0 0.0
    %6319 = vmatpush1.msra.mxu0 0.0
    %6320 = vmatprep.subr.mxu0 0.0
    %6321 = vmatpush1.msra.mxu0 0.0
    %6322 = vmatprep.mubr.f32.mxu0 0.0
    %6323 = vmatmul.mubr.f32.gmra.mrb[0].mxu0 %v6234
    %v6324 = vpop.f32.mrb[0].mxu0
    %v6325 = vadd.f32 %v6256, %v6324
    %v6326 = vpop.f32.mrb[0].mxu0
    %6327 = vdwg.mxu0
    %v6328 = vmul.f32 %v6325, 0.5
    %v6329 = vmul.f32 %v6325, 0.70710677
    %vm6330 = vcmp.ge.f32.partialorder %v6329, 0.0
    %v6331 = vsel %vm6330, 1.0, -1.0
    %v6332 = vand.u32 2147483647, %v6329
    %v6333 = vmul.f32 %v6332, 0.3275911
    %v6334 = vadd.f32 %v6333, 1.0
    %v6335 = vrcp.pop %v6334
    %v6336 = vmul.f32 1.0, %v6335
    %v6337 = vmul.f32 %v6336, 1.0614054
    %v6338 = vadd.f32 %v6337, -1.4531521
    %v6339 = vmul.f32 %v6338, %v6336
    %v6340 = vadd.f32 %v6339, 1.4214138
    %v6341 = vmul.f32 %v6340, %v6336
    %v6342 = vadd.f32 %v6341, -0.28449672
    %v6343 = vmul.f32 %v6342, %v6336
    %v6344 = vadd.f32 %v6343, 0.2548296
    %v6345 = vmul.f32 %v6344, %v6336
    %v6346 = vsub.f32 0.0, %v6332
    %v6347 = vmul.f32 %v6346, %v6332
    %v6348 = vmul.f32 %v6347, 1.442695
    %v6349 = vpow.pop %v6348
    %v6350 = vmul.f32 %v6345, %v6349
    %v6351 = vsub.f32 1.0, %v6350
    %v6352 = vmul.f32 %v6331, %v6351
    %v6353 = vadd.f32 %v6352, 1.0
    %v6354 = vmul.f32 %v6328, %v6353
    %v6355 = vld [vmem:[#allocation22] sm:$0xff]
    %v6356 = vld [vmem:[#allocation22 + $0x8] sm:$0xff]
    %v6357 = vld [vmem:[#allocation22 + $0x10] sm:$0xff]
    %v6358 = vld [vmem:[#allocation22 + $0x18] sm:$0xff]
    %v6359 = vld [vmem:[#allocation22 + $0x20] sm:$0xff]
    %v6360 = vld [vmem:[#allocation22 + $0x28] sm:$0xff]
    %v6361 = vld [vmem:[#allocation22 + $0x30] sm:$0xff]
    %v6362 = vld [vmem:[#allocation22 + $0x38] sm:$0xff]
    %v6363 = vld [vmem:[%s23] sm:$0x1]
    %v6365 = vlaneseq
    %v6366 = vshrl.u32 %v6365, 7
    %v6367 = vsub.s32 0, %v6366
    %v6368 = vrot.slane %v6363, %v6367
    %v6371 = vsel %vm462, %v6354, 0
    %6373 = vmatprep.subr.mxu0 0.0
    %6374 = vmatpush1.msra.mxu0 %v6355
    %6375 = vmatprep.subr.mxu0 0.0
    %6376 = vmatpush1.msra.mxu0 %v6356
    %6377 = vmatprep.subr.mxu0 0.0
    %6378 = vmatpush1.msra.mxu0 %v6357
    %6379 = vmatprep.subr.mxu0 0.0
    %6380 = vmatpush1.msra.mxu0 %v6358
    %6381 = vmatprep.subr.mxu0 0.0
    %6382 = vmatpush1.msra.mxu0 %v6359
    %6383 = vmatprep.subr.mxu0 0.0
    %6384 = vmatpush1.msra.mxu0 %v6360
    %6385 = vmatprep.subr.mxu0 0.0
    %6386 = vmatpush1.msra.mxu0 %v6361
    %6387 = vmatprep.subr.mxu0 0.0
    %6388 = vmatpush1.msra.mxu0 %v6362
    %6389 = vmatprep.subr.mxu0 0.0
    %6390 = vmatpush1.msra.mxu0 0.0
    %6391 = vmatprep.subr.mxu0 0.0
    %6392 = vmatpush1.msra.mxu0 0.0
    %6393 = vmatprep.subr.mxu0 0.0
    %6394 = vmatpush1.msra.mxu0 0.0
    %6395 = vmatprep.subr.mxu0 0.0
    %6396 = vmatpush1.msra.mxu0 0.0
    %6397 = vmatprep.subr.mxu0 0.0
    %6398 = vmatpush1.msra.mxu0 0.0
    %6399 = vmatprep.subr.mxu0 0.0
    %6400 = vmatpush1.msra.mxu0 0.0
    %6401 = vmatprep.subr.mxu0 0.0
    %6402 = vmatpush1.msra.mxu0 0.0
    %6403 = vmatprep.subr.mxu0 0.0
    %6404 = vmatpush1.msra.mxu0 0.0
    %6405 = vmatprep.subr.mxu0 0.0
    %6406 = vmatpush1.msra.mxu0 0.0
    %6407 = vmatprep.subr.mxu0 0.0
    %6408 = vmatpush1.msra.mxu0 0.0
    %6409 = vmatprep.subr.mxu0 0.0
    %6410 = vmatpush1.msra.mxu0 0.0
    %6411 = vmatprep.subr.mxu0 0.0
    %6412 = vmatpush1.msra.mxu0 0.0
    %6413 = vmatprep.subr.mxu0 0.0
    %6414 = vmatpush1.msra.mxu0 0.0
    %6415 = vmatprep.subr.mxu0 0.0
    %6416 = vmatpush1.msra.mxu0 0.0
    %6417 = vmatprep.subr.mxu0 0.0
    %6418 = vmatpush1.msra.mxu0 0.0
    %6419 = vmatprep.subr.mxu0 0.0
    %6420 = vmatpush1.msra.mxu0 0.0
    %6421 = vmatprep.subr.mxu0 0.0
    %6422 = vmatpush1.msra.mxu0 0.0
    %6423 = vmatprep.subr.mxu0 0.0
    %6424 = vmatpush1.msra.mxu0 0.0
    %6425 = vmatprep.subr.mxu0 0.0
    %6426 = vmatpush1.msra.mxu0 0.0
    %6427 = vmatprep.subr.mxu0 0.0
    %6428 = vmatpush1.msra.mxu0 0.0
    %6429 = vmatprep.subr.mxu0 0.0
    %6430 = vmatpush1.msra.mxu0 0.0
    %6431 = vmatprep.subr.mxu0 0.0
    %6432 = vmatpush1.msra.mxu0 0.0
    %6433 = vmatprep.subr.mxu0 0.0
    %6434 = vmatpush1.msra.mxu0 0.0
    %6435 = vmatprep.subr.mxu0 0.0
    %6436 = vmatpush1.msra.mxu0 0.0
    %6437 = vmatprep.mubr.f32.mxu0 0.0
    %6438 = vmatmul.mubr.f32.gmra.mrb[0].mxu0 %v6371
    %v6439 = vpop.f32.mrb[0].mxu0
    %v6440 = vadd.f32 %v6368, %v6439
    %v6441 = vpop.f32.mrb[0].mxu0
    %6442 = vdwg.mxu0
    %6443 = vst [vmem:[#allocation23] sm:$0x3] %v6440
    // Predicated region
    $region150: #{tpu_custom_call.1} parent=1 // pred_check
      _
    $region151: #{tpu_custom_call.1} parent=1 // pred_check_branch
      %6445 = sbr.rel (0) target = $region153
    $region152: #{tpu_custom_call.1} parent=1 // pred_region
      %s6447 = ssub.s32 32, 32
      %6448 = vsyncadd [#allocation4], %s6447
      %s6450 = sshll.u32 [#allocation23], 4
      %s6451 = int_to_ptr.vmem [resolvable:$true] %s6450
      %6453 = dma.vmem_to_hbm [thread:$0]  %s6451, 32, %s24, [#allocation4]
    $region153: #{tpu_custom_call.1} parent=1 // pred_fallthru
      _
    // Predicated region
    $region154: #{tpu_custom_call.1} parent=1 // pred_check
      _
    $region155: #{tpu_custom_call.1} parent=1 // pred_check_branch
      %6455 = sbr.rel (0) target = $region157
    $region156: #{tpu_custom_call.1} parent=1 // pred_region
      %6456 = dma.done [#allocation4], 32
    $region157: #{tpu_custom_call.1} parent=1 // pred_fallthru
      _
    %6457 = vsyncpa [#allocation3], 1
    %6458 = vsyncpa [#allocation6], 1
    %6459 = vsyncpa [#allocation9], 1
    %6460 = vsyncpa [#allocation12], 1
    %6461 = vsyncpa [#allocation15], 1
    %6462 = vsyncpa [#allocation18], 1
    %6463 = vsyncpa [#allocation21], 1
    %6464 = vsyncpa [#allocation4], 1

</llo_original>
